<compile_context>
chip_gen: v5e
topology: v5e:2x2
jax: 0.10.0
libtpu: 0.0.40
codegen_flags: <defaults>
</compile_context>

<pallas_src>
import functools

import jax
import jax.numpy as jnp
from jax.experimental import pallas as pl
from jax.experimental.pallas import tpu as pltpu

LANES = 128   # padded channel / logit lane width (full vreg lane dim)


def _round_up(x, m):
    return (x + m - 1) // m * m


# ---------------------------------------------------------------------------
# Fused feature extractor:
#   conv1(VALID,1) + bias + ReLU + 2x2/2 max-pool + conv2 + bias + ReLU + pool
# One pallas_call, grid over batch.
# ---------------------------------------------------------------------------
def _features_kernel(x_ref, w1_ref, b1_ref, w2_ref, b2_ref, o_ref,
                     z1_ref, h1_ref, z2_ref, *, kh, kw, oh1, ow1, oh2, ow2):
    n1 = w1_ref.shape[-1]   # padded conv1 out-channels (== conv2 in-channels)
    n2 = w2_ref.shape[-1]   # padded conv2 out-channels

    # ---- conv1: one lane-dense MXU dot over the pre-built patch axis -------
    acc1 = jnp.dot(x_ref[...], w1_ref[...], preferred_element_type=jnp.float32)
    acc1 = jnp.maximum(acc1 + b1_ref[...], 0.0)               # (oh1*ow1, n1) f32

    # ---- 2x2/2 max-pool #1 (H via tile-aligned sublane regroup, W via
    #      stride-2 reads from a VMEM scratch); result cached as bf16 --------
    z1_ref[...] = jnp.max(acc1.reshape(oh1 // 2, 2, ow1, n1), axis=1)
    h1_ref[...] = jnp.maximum(
        z1_ref[:, pl.ds(0, ow1 // 2, stride=2), :],
        z1_ref[:, pl.ds(1, ow1 // 2, stride=2), :]).astype(h1_ref.dtype)

    # ---- conv2: in-register im2col, kh*kw shifted windows, f32 accumulate --
    h1 = h1_ref[...]                                          # (12, 12, n1) bf16
    acc2 = jnp.zeros((oh2 * ow2, n2), jnp.float32)
    for i in range(kh):
        for j in range(kw):
            patch = h1[i:i + oh2, j:j + ow2, :].reshape(oh2 * ow2, n1)
            wk = w2_ref[pl.ds((i * kw + j) * n1, n1), :]
            acc2 = acc2 + jnp.dot(patch, wk, preferred_element_type=jnp.float32)
    acc2 = jnp.maximum(acc2 + b2_ref[...], 0.0)               # (oh2*ow2, n2) f32

    # ---- 2x2/2 max-pool #2, fused before the lane-dense store --------------
    z2_ref[...] = jnp.max(acc2.reshape(oh2 // 2, 2, ow2, n2), axis=1)
    o_ref[...] = jnp.maximum(
        z2_ref[:, pl.ds(0, ow2 // 2, stride=2), :],
        z2_ref[:, pl.ds(1, ow2 // 2, stride=2), :]).astype(o_ref.dtype)


def features(x_patches, w1, b1, w2, b2, *, kh, kw, oh1, ow1):
    """x_patches: [B, oh1*ow1, Kpad] bf16 conv1 patch matrices; weights padded."""
    B, M1, K1 = x_patches.shape
    assert w1.shape[0] == K1
    n1 = w1.shape[1]
    n2 = w2.shape[1]
    ph1, pw1 = oh1 // 2, ow1 // 2
    oh2, ow2 = ph1 - kh + 1, pw1 - kw + 1
    ph2, pw2 = oh2 // 2, ow2 // 2
    kernel = functools.partial(_features_kernel, kh=kh, kw=kw,
                               oh1=oh1, ow1=ow1, oh2=oh2, ow2=ow2)
    return pl.pallas_call(
        kernel,
        out_shape=jax.ShapeDtypeStruct((B, ph2, pw2, n2), jnp.bfloat16),
        grid=(B,),
        in_specs=[
            pl.BlockSpec((None, M1, K1), lambda b: (b, 0, 0)),
            pl.BlockSpec((K1, n1), lambda b: (0, 0)),
            pl.BlockSpec((1, n1), lambda b: (0, 0)),
            pl.BlockSpec((kh * kw * n1, n2), lambda b: (0, 0)),
            pl.BlockSpec((1, n2), lambda b: (0, 0)),
        ],
        out_specs=pl.BlockSpec((None, ph2, pw2, n2), lambda b: (b, 0, 0, 0)),
        scratch_shapes=[
            pltpu.VMEM((ph1, ow1, n1), jnp.float32),    # pool1 W-stride scratch
            pltpu.VMEM((ph1, pw1, n1), jnp.bfloat16),   # pooled conv1 activation
            pltpu.VMEM((ph2, ow2, n2), jnp.float32),    # pool2 W-stride scratch
        ],
        compiler_params=pltpu.CompilerParams(
            dimension_semantics=("parallel",)),
    )(x_patches, w1, b1, w2, b2)


# ---------------------------------------------------------------------------
# Fused fc1(ReLU) + fc2 kernel (fc1 activation never leaves VMEM)
# ---------------------------------------------------------------------------
def _fc_fused_kernel(x_ref, w1_ref, b1_ref, w2_ref, b2_ref, o_ref):
    h = jnp.dot(x_ref[...], w1_ref[...], preferred_element_type=jnp.float32)
    h = jnp.maximum(h + b1_ref[...], 0.0)                       # fc1 + ReLU
    y = jnp.dot(h.astype(w2_ref.dtype), w2_ref[...],
                preferred_element_type=jnp.float32)
    o_ref[...] = (y + b2_ref[...]).astype(o_ref.dtype)          # fc2 logits


def fc_fused(x, w1, b1, w2, b2):
    """relu(x @ w1 + b1) @ w2 + b2 in one pallas_call.  x: [M, K1] bf16."""
    M, K1 = x.shape
    N1 = w1.shape[1]
    N2 = w2.shape[1]
    tm = min(128, _round_up(M, 8))
    m_pad = _round_up(M, tm)
    if m_pad != M:
        x = jnp.pad(x, ((0, m_pad - M), (0, 0)))
    out = pl.pallas_call(
        _fc_fused_kernel,
        out_shape=jax.ShapeDtypeStruct((m_pad, N2), jnp.float32),
        grid=(m_pad // tm,),
        in_specs=[
            pl.BlockSpec((tm, K1), lambda i: (i, 0)),
            pl.BlockSpec((K1, N1), lambda i: (0, 0)),
            pl.BlockSpec((1, N1), lambda i: (0, 0)),
            pl.BlockSpec((N1, N2), lambda i: (0, 0)),
            pl.BlockSpec((1, N2), lambda i: (0, 0)),
        ],
        out_specs=pl.BlockSpec((tm, N2), lambda i: (i, 0)),
        compiler_params=pltpu.CompilerParams(
            dimension_semantics=("parallel",)),
    )(x, w1, b1, w2, b2)
    return out[:M]


# ---------------------------------------------------------------------------
# Host-side (XLA) conv1 patch construction — tiny for a 1-channel 28x28 input.
# Column order is (i, j, cin), matching the conv1 weight-row order below.
# ---------------------------------------------------------------------------
def _conv1_patches(x_nchw, kh, kw):
    B, C, H, W = x_nchw.shape
    oh, ow = H - kh + 1, W - kw + 1
    cols = [x_nchw[:, c, i:i + oh, j:j + ow]
            for i in range(kh) for j in range(kw) for c in range(C)]
    p = jnp.stack(cols, axis=-1)                     # (B, oh, ow, kh*kw*C)
    k = kh * kw * C
    kp = _round_up(k, 8)
    p = jnp.pad(p, ((0, 0), (0, 0), (0, 0), (0, kp - k)))
    return p.reshape(B, oh * ow, kp).astype(jnp.bfloat16)


# ---------------------------------------------------------------------------
# Parameter prep (reorder / zero-pad / bf16-cast the torch-layout params)
# ---------------------------------------------------------------------------
def prepare_params(params, nb_classes):
    bf16, f32 = jnp.bfloat16, jnp.float32
    kh = kw = 5
    # conv1: OIHW [32,1,5,5] -> patch-matrix rows ordered (i, j, cin), padded
    # to a multiple of 8; out-channels padded to 128 lanes.
    o1, c1 = params["conv1_w"].shape[:2]
    k1 = kh * kw * c1
    k1p = _round_up(k1, 8)
    w1 = jnp.transpose(params["conv1_w"], (2, 3, 1, 0)).reshape(k1, o1)
    w1 = jnp.pad(w1, ((0, k1p - k1), (0, LANES - o1))).astype(bf16)
    b1 = jnp.pad(params["conv1_b"], (0, LANES - o1)).reshape(1, LANES).astype(f32)
    # conv2: OIHW [64,32,5,5]; in-channels padded to 128 (conv1 out is padded),
    # rows ordered (i, j, cin) to match the kernel's shifted-window slices.
    o2, c2 = params["conv2_w"].shape[:2]
    w2 = jnp.transpose(params["conv2_w"], (2, 3, 1, 0))            # (5,5,32,64)
    w2 = jnp.pad(w2, ((0, 0), (0, 0), (0, LANES - c2), (0, LANES - o2)))
    w2 = w2.reshape(kh * kw * LANES, LANES).astype(bf16)
    b2 = jnp.pad(params["conv2_b"], (0, LANES - o2)).reshape(1, LANES).astype(f32)
    # fc1: fold torch's NCHW flatten (c,h,w) into the weight rows and re-order
    # them to the kernel's NHWC-flat (h,w,c_pad) activation layout.
    wf1 = params["fc1_w"].T.reshape(o2, 4, 4, 1024)                # (c,h,w,out)
    wf1 = jnp.transpose(wf1, (1, 2, 0, 3))                         # (h,w,c,out)
    wf1 = jnp.pad(wf1, ((0, 0), (0, 0), (0, LANES - o2), (0, 0)))
    wf1 = wf1.reshape(4 * 4 * LANES, 1024).astype(bf16)
    bf1 = params["fc1_b"].reshape(1, 1024).astype(f32)
    # fc2: pad logits to 128 lanes (sliced off after the kernel)
    n2p = _round_up(nb_classes, LANES)
    wf2 = jnp.pad(params["fc2_w"].T,
                  ((0, 0), (0, n2p - nb_classes))).astype(bf16)
    bf2 = jnp.pad(params["fc2_b"],
                  (0, n2p - nb_classes)).reshape(1, n2p).astype(f32)
    return {"w1c": w1, "b1c": b1, "w2c": w2, "b2c": b2,
            "wf1": wf1, "bf1": bf1, "wf2": wf2, "bf2": bf2}


def init_params(key, nb_classes):
    ks = jax.random.split(key, 8)
    s = 0.05
    return {
        "conv1_w": s * jax.random.normal(ks[0], (32, 1, 5, 5), jnp.float32),
        "conv1_b": s * jax.random.normal(ks[1], (32,), jnp.float32),
        "conv2_w": s * jax.random.normal(ks[2], (64, 32, 5, 5), jnp.float32),
        "conv2_b": s * jax.random.normal(ks[3], (64,), jnp.float32),
        "fc1_w": s * jax.random.normal(ks[4], (1024, 4 * 4 * 64), jnp.float32),
        "fc1_b": s * jax.random.normal(ks[5], (1024,), jnp.float32),
        "fc2_w": s * jax.random.normal(ks[6], (nb_classes, 1024), jnp.float32),
        "fc2_b": s * jax.random.normal(ks[7], (nb_classes,), jnp.float32),
    }


# ---------------------------------------------------------------------------
# Model forward
# ---------------------------------------------------------------------------
def cnn_forward(x_nchw, prep, nb_classes):
    B, _, H, W = x_nchw.shape
    oh1, ow1 = H - 4, W - 4
    xp = _conv1_patches(x_nchw, 5, 5)                              # (B,576,32)
    feats = features(xp, prep["w1c"], prep["b1c"], prep["w2c"], prep["b2c"],
                     kh=5, kw=5, oh1=oh1, ow1=ow1)                 # (B,4,4,128)
    x = feats.reshape(B, -1)            # NHWC-flat; torch flatten folded into wf1
    logits = fc_fused(x, prep["wf1"], prep["bf1"], prep["wf2"], prep["bf2"])
    return logits[:, :nb_classes]


# Pure-JAX reference mirroring the kernel's bf16 quantization points.
def reference_forward(x_nchw, params):
    bf16 = jnp.bfloat16
    dn = ("NCHW", "OIHW", "NCHW")
    y = jax.lax.conv_general_dilated(
        x_nchw.astype(bf16), params["conv1_w"].astype(bf16), (1, 1), "VALID",
        dimension_numbers=dn, preferred_element_type=jnp.float32)
    y = jax.nn.relu(y + params["conv1_b"].reshape(1, -1, 1, 1))
    y = jax.lax.reduce_window(y, -jnp.inf, jax.lax.max,
                              (1, 1, 2, 2), (1, 1, 2, 2), "VALID")
    y = jax.lax.conv_general_dilated(
        y.astype(bf16), params["conv2_w"].astype(bf16), (1, 1), "VALID",
        dimension_numbers=dn, preferred_element_type=jnp.float32)
    y = jax.nn.relu(y + params["conv2_b"].reshape(1, -1, 1, 1))
    y = jax.lax.reduce_window(y, -jnp.inf, jax.lax.max,
                              (1, 1, 2, 2), (1, 1, 2, 2), "VALID")
    y = y.astype(bf16).reshape(y.shape[0], -1)                 # torch NCHW flatten
    h = jnp.dot(y, params["fc1_w"].T.astype(bf16),
                preferred_element_type=jnp.float32)
    h = jax.nn.relu(h + params["fc1_b"])
    out = jnp.dot(h.astype(bf16), params["fc2_w"].T.astype(bf16),
                  preferred_element_type=jnp.float32)
    return out + params["fc2_b"]


if __name__ == "__main__":
    nb_classes = 10
    key = jax.random.PRNGKey(0)
    k_x, k_p = jax.random.split(key)
    # fc1 = Linear(4*4*64, 1024) implies a 28x28 single-channel input.
    x = jax.random.normal(k_x, (2, 1, 28, 28), jnp.float32)
    params = init_params(k_p, nb_classes)
    prep = prepare_params(params, nb_classes)

    fwd = jax.jit(functools.partial(cnn_forward, nb_classes=nb_classes))
    out = jax.block_until_ready(fwd(x, prep))
    ref = jax.block_until_ready(reference_forward(x, params))

    assert out.shape == (2, nb_classes)
    err = float(jnp.max(jnp.abs(out - ref)))
    assert jnp.allclose(out, ref, atol=5e-3, rtol=5e-3), f"max abs err {err}"
    print("KERNEL_OK")
</pallas_src>

<mosaic_0001>
module attributes {stable_mosaic.version = 11 : i64} {
  func.func @_features_kernel(%arg0: i32, %arg1: memref<1x576x32xbf16, #tpu.memory_space<vmem>>, %arg2: memref<32x128xbf16, #tpu.memory_space<vmem>>, %arg3: memref<1x128xf32, #tpu.memory_space<vmem>>, %arg4: memref<3200x128xbf16, #tpu.memory_space<vmem>>, %arg5: memref<1x128xf32, #tpu.memory_space<vmem>>, %arg6: memref<1x4x4x128xbf16, #tpu.memory_space<vmem>>, %arg7: memref<12x24x128xf32, #tpu.memory_space<vmem>>, %arg8: memref<12x12x128xbf16, #tpu.memory_space<vmem>>, %arg9: memref<4x8x128xf32, #tpu.memory_space<vmem>>) attributes {dimension_semantics = [#tpu.dimension_semantics<parallel>], iteration_bounds = array<i64: 2>, scalar_prefetch = 0 : i64, scratch_operands = 3 : i64, tpu.core_type = #tpu.core_type<tc>, window_params = [{transform_indices = @transform_0, window_bounds = array<i64: 1, 576, 32>}, {pipeline_mode = #tpu.pipeline_mode<synchronous>, transform_indices = @transform_1, window_bounds = array<i64: 32, 128>}, {pipeline_mode = #tpu.pipeline_mode<synchronous>, transform_indices = @transform_2, window_bounds = array<i64: 1, 128>}, {pipeline_mode = #tpu.pipeline_mode<synchronous>, transform_indices = @transform_3, window_bounds = array<i64: 3200, 128>}, {pipeline_mode = #tpu.pipeline_mode<synchronous>, transform_indices = @transform_4, window_bounds = array<i64: 1, 128>}, {transform_indices = @transform_5, window_bounds = array<i64: 1, 4, 4, 128>}]} {
    %c0 = arith.constant 0 : index
    %c0_0 = arith.constant 0 : index
    %c0_1 = arith.constant 0 : index
    %0 = vector.load %arg1[%c0, %c0_0, %c0_1] : memref<1x576x32xbf16, #tpu.memory_space<vmem>>, vector<1x576x32xbf16>
    %1 = vector.shape_cast %0 : vector<1x576x32xbf16> to vector<576x32xbf16>
    %c0_2 = arith.constant 0 : index
    %c0_3 = arith.constant 0 : index
    %2 = vector.load %arg2[%c0_2, %c0_3] : memref<32x128xbf16, #tpu.memory_space<vmem>>, vector<32x128xbf16>
    %cst = arith.constant dense<0.000000e+00> : vector<576x128xf32>
    %3 = tpu.matmul %1, %2, %cst {dimension_numbers = #tpu.dot_dimension_numbers<[1], [0], [0], [1], [0, 0, 1, 1], [], []>} : vector<576x32xbf16>, vector<32x128xbf16>, vector<576x128xf32> -> vector<576x128xf32>
    %c0_4 = arith.constant 0 : index
    %c0_5 = arith.constant 0 : index
    %4 = vector.load %arg3[%c0_4, %c0_5] : memref<1x128xf32, #tpu.memory_space<vmem>>, vector<1x128xf32>
    %5 = vector.broadcast %4 : vector<1x128xf32> to vector<576x128xf32>
    %6 = arith.addf %3, %5 : vector<576x128xf32>
    %cst_6 = arith.constant 0.000000e+00 : f32
    %7 = vector.broadcast %cst_6 : f32 to vector<576x128xf32>
    %8 = arith.maximumf %6, %7 : vector<576x128xf32>
    %9 = vector.shape_cast %8 : vector<576x128xf32> to vector<12x2x24x128xf32>
    %cst_7 = arith.constant dense<0xFF800000> : vector<12x24x128xf32>
    %10 = vector.multi_reduction <maximumf>, %9, %cst_7 [1] : vector<12x2x24x128xf32> to vector<12x24x128xf32>
    %c0_8 = arith.constant 0 : index
    %c0_9 = arith.constant 0 : index
    %c0_10 = arith.constant 0 : index
    %11 = vector.load %arg7[%c0_8, %c0_9, %c0_10] : memref<12x24x128xf32, #tpu.memory_space<vmem>>, vector<12x24x128xf32>
    tpu.vector_store %arg7[%c0_8, %c0_9, %c0_10], %10 {strides = array<i32>} : memref<12x24x128xf32, #tpu.memory_space<vmem>>, vector<12x24x128xf32>,
    %c0_11 = arith.constant 0 : index
    %c0_12 = arith.constant 0 : index
    %c0_13 = arith.constant 0 : index
    %12 = tpu.strided_load %arg7[%c0_11, %c0_12, %c0_13] {strides = array<i32: 1, 2, 1>} : memref<12x24x128xf32, #tpu.memory_space<vmem>>, vector<12x12x128xf32>
    %c0_14 = arith.constant 0 : index
    %c1 = arith.constant 1 : index
    %c0_15 = arith.constant 0 : index
    %13 = tpu.strided_load %arg7[%c0_14, %c1, %c0_15] {strides = array<i32: 1, 2, 1>} : memref<12x24x128xf32, #tpu.memory_space<vmem>>, vector<12x12x128xf32>
    %14 = arith.maximumf %12, %13 : vector<12x12x128xf32>
    %15 = arith.truncf %14 : vector<12x12x128xf32> to vector<12x12x128xbf16>
    %c0_16 = arith.constant 0 : index
    %c0_17 = arith.constant 0 : index
    %c0_18 = arith.constant 0 : index
    %16 = vector.load %arg8[%c0_16, %c0_17, %c0_18] : memref<12x12x128xbf16, #tpu.memory_space<vmem>>, vector<12x12x128xbf16>
    tpu.vector_store %arg8[%c0_16, %c0_17, %c0_18], %15 {strides = array<i32>} : memref<12x12x128xbf16, #tpu.memory_space<vmem>>, vector<12x12x128xbf16>,
    %c0_19 = arith.constant 0 : index
    %c0_20 = arith.constant 0 : index
    %c0_21 = arith.constant 0 : index
    %17 = vector.load %arg8[%c0_19, %c0_20, %c0_21] : memref<12x12x128xbf16, #tpu.memory_space<vmem>>, vector<12x12x128xbf16>
    %cst_22 = arith.constant 0.000000e+00 : f32
    %18 = vector.broadcast %cst_22 : f32 to vector<64x128xf32>
    %19 = vector.extract_strided_slice %17 {offsets = [0, 0, 0], sizes = [8, 8, 128], strides = [1, 1, 1]} : vector<12x12x128xbf16> to vector<8x8x128xbf16>
    %20 = vector.shape_cast %19 : vector<8x8x128xbf16> to vector<64x128xbf16>
    %c0_23 = arith.constant 0 : index
    %c0_24 = arith.constant 0 : index
    %21 = vector.load %arg4[%c0_23, %c0_24] : memref<3200x128xbf16, #tpu.memory_space<vmem>>, vector<128x128xbf16>
    %cst_25 = arith.constant dense<0.000000e+00> : vector<64x128xf32>
    %22 = tpu.matmul %20, %21, %cst_25 {dimension_numbers = #tpu.dot_dimension_numbers<[1], [0], [0], [1], [0, 0, 1, 1], [], []>} : vector<64x128xbf16>, vector<128x128xbf16>, vector<64x128xf32> -> vector<64x128xf32>
    %23 = arith.addf %18, %22 : vector<64x128xf32>
    %24 = vector.extract_strided_slice %17 {offsets = [0, 1, 0], sizes = [8, 8, 128], strides = [1, 1, 1]} : vector<12x12x128xbf16> to vector<8x8x128xbf16>
    %25 = vector.shape_cast %24 : vector<8x8x128xbf16> to vector<64x128xbf16>
    %c128 = arith.constant 128 : index
    %c0_26 = arith.constant 0 : index
    %26 = vector.load %arg4[%c128, %c0_26] : memref<3200x128xbf16, #tpu.memory_space<vmem>>, vector<128x128xbf16>
    %cst_27 = arith.constant dense<0.000000e+00> : vector<64x128xf32>
    %27 = tpu.matmul %25, %26, %cst_27 {dimension_numbers = #tpu.dot_dimension_numbers<[1], [0], [0], [1], [0, 0, 1, 1], [], []>} : vector<64x128xbf16>, vector<128x128xbf16>, vector<64x128xf32> -> vector<64x128xf32>
    %28 = arith.addf %23, %27 : vector<64x128xf32>
    %29 = vector.extract_strided_slice %17 {offsets = [0, 2, 0], sizes = [8, 8, 128], strides = [1, 1, 1]} : vector<12x12x128xbf16> to vector<8x8x128xbf16>
    %30 = vector.shape_cast %29 : vector<8x8x128xbf16> to vector<64x128xbf16>
    %c256 = arith.constant 256 : index
    %c0_28 = arith.constant 0 : index
    %31 = vector.load %arg4[%c256, %c0_28] : memref<3200x128xbf16, #tpu.memory_space<vmem>>, vector<128x128xbf16>
    %cst_29 = arith.constant dense<0.000000e+00> : vector<64x128xf32>
    %32 = tpu.matmul %30, %31, %cst_29 {dimension_numbers = #tpu.dot_dimension_numbers<[1], [0], [0], [1], [0, 0, 1, 1], [], []>} : vector<64x128xbf16>, vector<128x128xbf16>, vector<64x128xf32> -> vector<64x128xf32>
    %33 = arith.addf %28, %32 : vector<64x128xf32>
    %34 = vector.extract_strided_slice %17 {offsets = [0, 3, 0], sizes = [8, 8, 128], strides = [1, 1, 1]} : vector<12x12x128xbf16> to vector<8x8x128xbf16>
    %35 = vector.shape_cast %34 : vector<8x8x128xbf16> to vector<64x128xbf16>
    %c384 = arith.constant 384 : index
    %c0_30 = arith.constant 0 : index
    %36 = vector.load %arg4[%c384, %c0_30] : memref<3200x128xbf16, #tpu.memory_space<vmem>>, vector<128x128xbf16>
    %cst_31 = arith.constant dense<0.000000e+00> : vector<64x128xf32>
    %37 = tpu.matmul %35, %36, %cst_31 {dimension_numbers = #tpu.dot_dimension_numbers<[1], [0], [0], [1], [0, 0, 1, 1], [], []>} : vector<64x128xbf16>, vector<128x128xbf16>, vector<64x128xf32> -> vector<64x128xf32>
    %38 = arith.addf %33, %37 : vector<64x128xf32>
    %39 = vector.extract_strided_slice %17 {offsets = [0, 4, 0], sizes = [8, 8, 128], strides = [1, 1, 1]} : vector<12x12x128xbf16> to vector<8x8x128xbf16>
    %40 = vector.shape_cast %39 : vector<8x8x128xbf16> to vector<64x128xbf16>
    %c512 = arith.constant 512 : index
    %c0_32 = arith.constant 0 : index
    %41 = vector.load %arg4[%c512, %c0_32] : memref<3200x128xbf16, #tpu.memory_space<vmem>>, vector<128x128xbf16>
    %cst_33 = arith.constant dense<0.000000e+00> : vector<64x128xf32>
    %42 = tpu.matmul %40, %41, %cst_33 {dimension_numbers = #tpu.dot_dimension_numbers<[1], [0], [0], [1], [0, 0, 1, 1], [], []>} : vector<64x128xbf16>, vector<128x128xbf16>, vector<64x128xf32> -> vector<64x128xf32>
    %43 = arith.addf %38, %42 : vector<64x128xf32>
    %44 = vector.extract_strided_slice %17 {offsets = [1, 0, 0], sizes = [8, 8, 128], strides = [1, 1, 1]} : vector<12x12x128xbf16> to vector<8x8x128xbf16>
    %45 = vector.shape_cast %44 : vector<8x8x128xbf16> to vector<64x128xbf16>
    %c640 = arith.constant 640 : index
    %c0_34 = arith.constant 0 : index
    %46 = vector.load %arg4[%c640, %c0_34] : memref<3200x128xbf16, #tpu.memory_space<vmem>>, vector<128x128xbf16>
    %cst_35 = arith.constant dense<0.000000e+00> : vector<64x128xf32>
    %47 = tpu.matmul %45, %46, %cst_35 {dimension_numbers = #tpu.dot_dimension_numbers<[1], [0], [0], [1], [0, 0, 1, 1], [], []>} : vector<64x128xbf16>, vector<128x128xbf16>, vector<64x128xf32> -> vector<64x128xf32>
    %48 = arith.addf %43, %47 : vector<64x128xf32>
    %49 = vector.extract_strided_slice %17 {offsets = [1, 1, 0], sizes = [8, 8, 128], strides = [1, 1, 1]} : vector<12x12x128xbf16> to vector<8x8x128xbf16>
    %50 = vector.shape_cast %49 : vector<8x8x128xbf16> to vector<64x128xbf16>
    %c768 = arith.constant 768 : index
    %c0_36 = arith.constant 0 : index
    %51 = vector.load %arg4[%c768, %c0_36] : memref<3200x128xbf16, #tpu.memory_space<vmem>>, vector<128x128xbf16>
    %cst_37 = arith.constant dense<0.000000e+00> : vector<64x128xf32>
    %52 = tpu.matmul %50, %51, %cst_37 {dimension_numbers = #tpu.dot_dimension_numbers<[1], [0], [0], [1], [0, 0, 1, 1], [], []>} : vector<64x128xbf16>, vector<128x128xbf16>, vector<64x128xf32> -> vector<64x128xf32>
    %53 = arith.addf %48, %52 : vector<64x128xf32>
    %54 = vector.extract_strided_slice %17 {offsets = [1, 2, 0], sizes = [8, 8, 128], strides = [1, 1, 1]} : vector<12x12x128xbf16> to vector<8x8x128xbf16>
    %55 = vector.shape_cast %54 : vector<8x8x128xbf16> to vector<64x128xbf16>
    %c896 = arith.constant 896 : index
    %c0_38 = arith.constant 0 : index
    %56 = vector.load %arg4[%c896, %c0_38] : memref<3200x128xbf16, #tpu.memory_space<vmem>>, vector<128x128xbf16>
    %cst_39 = arith.constant dense<0.000000e+00> : vector<64x128xf32>
    %57 = tpu.matmul %55, %56, %cst_39 {dimension_numbers = #tpu.dot_dimension_numbers<[1], [0], [0], [1], [0, 0, 1, 1], [], []>} : vector<64x128xbf16>, vector<128x128xbf16>, vector<64x128xf32> -> vector<64x128xf32>
    %58 = arith.addf %53, %57 : vector<64x128xf32>
    %59 = vector.extract_strided_slice %17 {offsets = [1, 3, 0], sizes = [8, 8, 128], strides = [1, 1, 1]} : vector<12x12x128xbf16> to vector<8x8x128xbf16>
    %60 = vector.shape_cast %59 : vector<8x8x128xbf16> to vector<64x128xbf16>
    %c1024 = arith.constant 1024 : index
    %c0_40 = arith.constant 0 : index
    %61 = vector.load %arg4[%c1024, %c0_40] : memref<3200x128xbf16, #tpu.memory_space<vmem>>, vector<128x128xbf16>
    %cst_41 = arith.constant dense<0.000000e+00> : vector<64x128xf32>
    %62 = tpu.matmul %60, %61, %cst_41 {dimension_numbers = #tpu.dot_dimension_numbers<[1], [0], [0], [1], [0, 0, 1, 1], [], []>} : vector<64x128xbf16>, vector<128x128xbf16>, vector<64x128xf32> -> vector<64x128xf32>
    %63 = arith.addf %58, %62 : vector<64x128xf32>
    %64 = vector.extract_strided_slice %17 {offsets = [1, 4, 0], sizes = [8, 8, 128], strides = [1, 1, 1]} : vector<12x12x128xbf16> to vector<8x8x128xbf16>
    %65 = vector.shape_cast %64 : vector<8x8x128xbf16> to vector<64x128xbf16>
    %c1152 = arith.constant 1152 : index
    %c0_42 = arith.constant 0 : index
    %66 = vector.load %arg4[%c1152, %c0_42] : memref<3200x128xbf16, #tpu.memory_space<vmem>>, vector<128x128xbf16>
    %cst_43 = arith.constant dense<0.000000e+00> : vector<64x128xf32>
    %67 = tpu.matmul %65, %66, %cst_43 {dimension_numbers = #tpu.dot_dimension_numbers<[1], [0], [0], [1], [0, 0, 1, 1], [], []>} : vector<64x128xbf16>, vector<128x128xbf16>, vector<64x128xf32> -> vector<64x128xf32>
    %68 = arith.addf %63, %67 : vector<64x128xf32>
    %69 = vector.extract_strided_slice %17 {offsets = [2, 0, 0], sizes = [8, 8, 128], strides = [1, 1, 1]} : vector<12x12x128xbf16> to vector<8x8x128xbf16>
    %70 = vector.shape_cast %69 : vector<8x8x128xbf16> to vector<64x128xbf16>
    %c1280 = arith.constant 1280 : index
    %c0_44 = arith.constant 0 : index
    %71 = vector.load %arg4[%c1280, %c0_44] : memref<3200x128xbf16, #tpu.memory_space<vmem>>, vector<128x128xbf16>
    %cst_45 = arith.constant dense<0.000000e+00> : vector<64x128xf32>
    %72 = tpu.matmul %70, %71, %cst_45 {dimension_numbers = #tpu.dot_dimension_numbers<[1], [0], [0], [1], [0, 0, 1, 1], [], []>} : vector<64x128xbf16>, vector<128x128xbf16>, vector<64x128xf32> -> vector<64x128xf32>
    %73 = arith.addf %68, %72 : vector<64x128xf32>
    %74 = vector.extract_strided_slice %17 {offsets = [2, 1, 0], sizes = [8, 8, 128], strides = [1, 1, 1]} : vector<12x12x128xbf16> to vector<8x8x128xbf16>
    %75 = vector.shape_cast %74 : vector<8x8x128xbf16> to vector<64x128xbf16>
    %c1408 = arith.constant 1408 : index
    %c0_46 = arith.constant 0 : index
    %76 = vector.load %arg4[%c1408, %c0_46] : memref<3200x128xbf16, #tpu.memory_space<vmem>>, vector<128x128xbf16>
    %cst_47 = arith.constant dense<0.000000e+00> : vector<64x128xf32>
    %77 = tpu.matmul %75, %76, %cst_47 {dimension_numbers = #tpu.dot_dimension_numbers<[1], [0], [0], [1], [0, 0, 1, 1], [], []>} : vector<64x128xbf16>, vector<128x128xbf16>, vector<64x128xf32> -> vector<64x128xf32>
    %78 = arith.addf %73, %77 : vector<64x128xf32>
    %79 = vector.extract_strided_slice %17 {offsets = [2, 2, 0], sizes = [8, 8, 128], strides = [1, 1, 1]} : vector<12x12x128xbf16> to vector<8x8x128xbf16>
    %80 = vector.shape_cast %79 : vector<8x8x128xbf16> to vector<64x128xbf16>
    %c1536 = arith.constant 1536 : index
    %c0_48 = arith.constant 0 : index
    %81 = vector.load %arg4[%c1536, %c0_48] : memref<3200x128xbf16, #tpu.memory_space<vmem>>, vector<128x128xbf16>
    %cst_49 = arith.constant dense<0.000000e+00> : vector<64x128xf32>
    %82 = tpu.matmul %80, %81, %cst_49 {dimension_numbers = #tpu.dot_dimension_numbers<[1], [0], [0], [1], [0, 0, 1, 1], [], []>} : vector<64x128xbf16>, vector<128x128xbf16>, vector<64x128xf32> -> vector<64x128xf32>
    %83 = arith.addf %78, %82 : vector<64x128xf32>
    %84 = vector.extract_strided_slice %17 {offsets = [2, 3, 0], sizes = [8, 8, 128], strides = [1, 1, 1]} : vector<12x12x128xbf16> to vector<8x8x128xbf16>
    %85 = vector.shape_cast %84 : vector<8x8x128xbf16> to vector<64x128xbf16>
    %c1664 = arith.constant 1664 : index
    %c0_50 = arith.constant 0 : index
    %86 = vector.load %arg4[%c1664, %c0_50] : memref<3200x128xbf16, #tpu.memory_space<vmem>>, vector<128x128xbf16>
    %cst_51 = arith.constant dense<0.000000e+00> : vector<64x128xf32>
    %87 = tpu.matmul %85, %86, %cst_51 {dimension_numbers = #tpu.dot_dimension_numbers<[1], [0], [0], [1], [0, 0, 1, 1], [], []>} : vector<64x128xbf16>, vector<128x128xbf16>, vector<64x128xf32> -> vector<64x128xf32>
    %88 = arith.addf %83, %87 : vector<64x128xf32>
    %89 = vector.extract_strided_slice %17 {offsets = [2, 4, 0], sizes = [8, 8, 128], strides = [1, 1, 1]} : vector<12x12x128xbf16> to vector<8x8x128xbf16>
    %90 = vector.shape_cast %89 : vector<8x8x128xbf16> to vector<64x128xbf16>
    %c1792 = arith.constant 1792 : index
    %c0_52 = arith.constant 0 : index
    %91 = vector.load %arg4[%c1792, %c0_52] : memref<3200x128xbf16, #tpu.memory_space<vmem>>, vector<128x128xbf16>
    %cst_53 = arith.constant dense<0.000000e+00> : vector<64x128xf32>
    %92 = tpu.matmul %90, %91, %cst_53 {dimension_numbers = #tpu.dot_dimension_numbers<[1], [0], [0], [1], [0, 0, 1, 1], [], []>} : vector<64x128xbf16>, vector<128x128xbf16>, vector<64x128xf32> -> vector<64x128xf32>
    %93 = arith.addf %88, %92 : vector<64x128xf32>
    %94 = vector.extract_strided_slice %17 {offsets = [3, 0, 0], sizes = [8, 8, 128], strides = [1, 1, 1]} : vector<12x12x128xbf16> to vector<8x8x128xbf16>
    %95 = vector.shape_cast %94 : vector<8x8x128xbf16> to vector<64x128xbf16>
    %c1920 = arith.constant 1920 : index
    %c0_54 = arith.constant 0 : index
    %96 = vector.load %arg4[%c1920, %c0_54] : memref<3200x128xbf16, #tpu.memory_space<vmem>>, vector<128x128xbf16>
    %cst_55 = arith.constant dense<0.000000e+00> : vector<64x128xf32>
    %97 = tpu.matmul %95, %96, %cst_55 {dimension_numbers = #tpu.dot_dimension_numbers<[1], [0], [0], [1], [0, 0, 1, 1], [], []>} : vector<64x128xbf16>, vector<128x128xbf16>, vector<64x128xf32> -> vector<64x128xf32>
    %98 = arith.addf %93, %97 : vector<64x128xf32>
    %99 = vector.extract_strided_slice %17 {offsets = [3, 1, 0], sizes = [8, 8, 128], strides = [1, 1, 1]} : vector<12x12x128xbf16> to vector<8x8x128xbf16>
    %100 = vector.shape_cast %99 : vector<8x8x128xbf16> to vector<64x128xbf16>
    %c2048 = arith.constant 2048 : index
    %c0_56 = arith.constant 0 : index
    %101 = vector.load %arg4[%c2048, %c0_56] : memref<3200x128xbf16, #tpu.memory_space<vmem>>, vector<128x128xbf16>
    %cst_57 = arith.constant dense<0.000000e+00> : vector<64x128xf32>
    %102 = tpu.matmul %100, %101, %cst_57 {dimension_numbers = #tpu.dot_dimension_numbers<[1], [0], [0], [1], [0, 0, 1, 1], [], []>} : vector<64x128xbf16>, vector<128x128xbf16>, vector<64x128xf32> -> vector<64x128xf32>
    %103 = arith.addf %98, %102 : vector<64x128xf32>
    %104 = vector.extract_strided_slice %17 {offsets = [3, 2, 0], sizes = [8, 8, 128], strides = [1, 1, 1]} : vector<12x12x128xbf16> to vector<8x8x128xbf16>
    %105 = vector.shape_cast %104 : vector<8x8x128xbf16> to vector<64x128xbf16>
    %c2176 = arith.constant 2176 : index
    %c0_58 = arith.constant 0 : index
    %106 = vector.load %arg4[%c2176, %c0_58] : memref<3200x128xbf16, #tpu.memory_space<vmem>>, vector<128x128xbf16>
    %cst_59 = arith.constant dense<0.000000e+00> : vector<64x128xf32>
    %107 = tpu.matmul %105, %106, %cst_59 {dimension_numbers = #tpu.dot_dimension_numbers<[1], [0], [0], [1], [0, 0, 1, 1], [], []>} : vector<64x128xbf16>, vector<128x128xbf16>, vector<64x128xf32> -> vector<64x128xf32>
    %108 = arith.addf %103, %107 : vector<64x128xf32>
    %109 = vector.extract_strided_slice %17 {offsets = [3, 3, 0], sizes = [8, 8, 128], strides = [1, 1, 1]} : vector<12x12x128xbf16> to vector<8x8x128xbf16>
    %110 = vector.shape_cast %109 : vector<8x8x128xbf16> to vector<64x128xbf16>
    %c2304 = arith.constant 2304 : index
    %c0_60 = arith.constant 0 : index
    %111 = vector.load %arg4[%c2304, %c0_60] : memref<3200x128xbf16, #tpu.memory_space<vmem>>, vector<128x128xbf16>
    %cst_61 = arith.constant dense<0.000000e+00> : vector<64x128xf32>
    %112 = tpu.matmul %110, %111, %cst_61 {dimension_numbers = #tpu.dot_dimension_numbers<[1], [0], [0], [1], [0, 0, 1, 1], [], []>} : vector<64x128xbf16>, vector<128x128xbf16>, vector<64x128xf32> -> vector<64x128xf32>
    %113 = arith.addf %108, %112 : vector<64x128xf32>
    %114 = vector.extract_strided_slice %17 {offsets = [3, 4, 0], sizes = [8, 8, 128], strides = [1, 1, 1]} : vector<12x12x128xbf16> to vector<8x8x128xbf16>
    %115 = vector.shape_cast %114 : vector<8x8x128xbf16> to vector<64x128xbf16>
    %c2432 = arith.constant 2432 : index
    %c0_62 = arith.constant 0 : index
    %116 = vector.load %arg4[%c2432, %c0_62] : memref<3200x128xbf16, #tpu.memory_space<vmem>>, vector<128x128xbf16>
    %cst_63 = arith.constant dense<0.000000e+00> : vector<64x128xf32>
    %117 = tpu.matmul %115, %116, %cst_63 {dimension_numbers = #tpu.dot_dimension_numbers<[1], [0], [0], [1], [0, 0, 1, 1], [], []>} : vector<64x128xbf16>, vector<128x128xbf16>, vector<64x128xf32> -> vector<64x128xf32>
    %118 = arith.addf %113, %117 : vector<64x128xf32>
    %119 = vector.extract_strided_slice %17 {offsets = [4, 0, 0], sizes = [8, 8, 128], strides = [1, 1, 1]} : vector<12x12x128xbf16> to vector<8x8x128xbf16>
    %120 = vector.shape_cast %119 : vector<8x8x128xbf16> to vector<64x128xbf16>
    %c2560 = arith.constant 2560 : index
    %c0_64 = arith.constant 0 : index
    %121 = vector.load %arg4[%c2560, %c0_64] : memref<3200x128xbf16, #tpu.memory_space<vmem>>, vector<128x128xbf16>
    %cst_65 = arith.constant dense<0.000000e+00> : vector<64x128xf32>
    %122 = tpu.matmul %120, %121, %cst_65 {dimension_numbers = #tpu.dot_dimension_numbers<[1], [0], [0], [1], [0, 0, 1, 1], [], []>} : vector<64x128xbf16>, vector<128x128xbf16>, vector<64x128xf32> -> vector<64x128xf32>
    %123 = arith.addf %118, %122 : vector<64x128xf32>
    %124 = vector.extract_strided_slice %17 {offsets = [4, 1, 0], sizes = [8, 8, 128], strides = [1, 1, 1]} : vector<12x12x128xbf16> to vector<8x8x128xbf16>
    %125 = vector.shape_cast %124 : vector<8x8x128xbf16> to vector<64x128xbf16>
    %c2688 = arith.constant 2688 : index
    %c0_66 = arith.constant 0 : index
    %126 = vector.load %arg4[%c2688, %c0_66] : memref<3200x128xbf16, #tpu.memory_space<vmem>>, vector<128x128xbf16>
    %cst_67 = arith.constant dense<0.000000e+00> : vector<64x128xf32>
    %127 = tpu.matmul %125, %126, %cst_67 {dimension_numbers = #tpu.dot_dimension_numbers<[1], [0], [0], [1], [0, 0, 1, 1], [], []>} : vector<64x128xbf16>, vector<128x128xbf16>, vector<64x128xf32> -> vector<64x128xf32>
    %128 = arith.addf %123, %127 : vector<64x128xf32>
    %129 = vector.extract_strided_slice %17 {offsets = [4, 2, 0], sizes = [8, 8, 128], strides = [1, 1, 1]} : vector<12x12x128xbf16> to vector<8x8x128xbf16>
    %130 = vector.shape_cast %129 : vector<8x8x128xbf16> to vector<64x128xbf16>
    %c2816 = arith.constant 2816 : index
    %c0_68 = arith.constant 0 : index
    %131 = vector.load %arg4[%c2816, %c0_68] : memref<3200x128xbf16, #tpu.memory_space<vmem>>, vector<128x128xbf16>
    %cst_69 = arith.constant dense<0.000000e+00> : vector<64x128xf32>
    %132 = tpu.matmul %130, %131, %cst_69 {dimension_numbers = #tpu.dot_dimension_numbers<[1], [0], [0], [1], [0, 0, 1, 1], [], []>} : vector<64x128xbf16>, vector<128x128xbf16>, vector<64x128xf32> -> vector<64x128xf32>
    %133 = arith.addf %128, %132 : vector<64x128xf32>
    %134 = vector.extract_strided_slice %17 {offsets = [4, 3, 0], sizes = [8, 8, 128], strides = [1, 1, 1]} : vector<12x12x128xbf16> to vector<8x8x128xbf16>
    %135 = vector.shape_cast %134 : vector<8x8x128xbf16> to vector<64x128xbf16>
    %c2944 = arith.constant 2944 : index
    %c0_70 = arith.constant 0 : index
    %136 = vector.load %arg4[%c2944, %c0_70] : memref<3200x128xbf16, #tpu.memory_space<vmem>>, vector<128x128xbf16>
    %cst_71 = arith.constant dense<0.000000e+00> : vector<64x128xf32>
    %137 = tpu.matmul %135, %136, %cst_71 {dimension_numbers = #tpu.dot_dimension_numbers<[1], [0], [0], [1], [0, 0, 1, 1], [], []>} : vector<64x128xbf16>, vector<128x128xbf16>, vector<64x128xf32> -> vector<64x128xf32>
    %138 = arith.addf %133, %137 : vector<64x128xf32>
    %139 = vector.extract_strided_slice %17 {offsets = [4, 4, 0], sizes = [8, 8, 128], strides = [1, 1, 1]} : vector<12x12x128xbf16> to vector<8x8x128xbf16>
    %140 = vector.shape_cast %139 : vector<8x8x128xbf16> to vector<64x128xbf16>
    %c3072 = arith.constant 3072 : index
    %c0_72 = arith.constant 0 : index
    %141 = vector.load %arg4[%c3072, %c0_72] : memref<3200x128xbf16, #tpu.memory_space<vmem>>, vector<128x128xbf16>
    %cst_73 = arith.constant dense<0.000000e+00> : vector<64x128xf32>
    %142 = tpu.matmul %140, %141, %cst_73 {dimension_numbers = #tpu.dot_dimension_numbers<[1], [0], [0], [1], [0, 0, 1, 1], [], []>} : vector<64x128xbf16>, vector<128x128xbf16>, vector<64x128xf32> -> vector<64x128xf32>
    %143 = arith.addf %138, %142 : vector<64x128xf32>
    %c0_74 = arith.constant 0 : index
    %c0_75 = arith.constant 0 : index
    %144 = vector.load %arg5[%c0_74, %c0_75] : memref<1x128xf32, #tpu.memory_space<vmem>>, vector<1x128xf32>
    %145 = vector.broadcast %144 : vector<1x128xf32> to vector<64x128xf32>
    %146 = arith.addf %143, %145 : vector<64x128xf32>
    %cst_76 = arith.constant 0.000000e+00 : f32
    %147 = vector.broadcast %cst_76 : f32 to vector<64x128xf32>
    %148 = arith.maximumf %146, %147 : vector<64x128xf32>
    %149 = vector.shape_cast %148 : vector<64x128xf32> to vector<4x2x8x128xf32>
    %cst_77 = arith.constant dense<0xFF800000> : vector<4x8x128xf32>
    %150 = vector.multi_reduction <maximumf>, %149, %cst_77 [1] : vector<4x2x8x128xf32> to vector<4x8x128xf32>
    %c0_78 = arith.constant 0 : index
    %c0_79 = arith.constant 0 : index
    %c0_80 = arith.constant 0 : index
    %151 = vector.load %arg9[%c0_78, %c0_79, %c0_80] : memref<4x8x128xf32, #tpu.memory_space<vmem>>, vector<4x8x128xf32>
    tpu.vector_store %arg9[%c0_78, %c0_79, %c0_80], %150 {strides = array<i32>} : memref<4x8x128xf32, #tpu.memory_space<vmem>>, vector<4x8x128xf32>,
    %c0_81 = arith.constant 0 : index
    %c0_82 = arith.constant 0 : index
    %c0_83 = arith.constant 0 : index
    %152 = tpu.strided_load %arg9[%c0_81, %c0_82, %c0_83] {strides = array<i32: 1, 2, 1>} : memref<4x8x128xf32, #tpu.memory_space<vmem>>, vector<4x4x128xf32>
    %c0_84 = arith.constant 0 : index
    %c1_85 = arith.constant 1 : index
    %c0_86 = arith.constant 0 : index
    %153 = tpu.strided_load %arg9[%c0_84, %c1_85, %c0_86] {strides = array<i32: 1, 2, 1>} : memref<4x8x128xf32, #tpu.memory_space<vmem>>, vector<4x4x128xf32>
    %154 = arith.maximumf %152, %153 : vector<4x4x128xf32>
    %155 = arith.truncf %154 : vector<4x4x128xf32> to vector<4x4x128xbf16>
    %c0_87 = arith.constant 0 : index
    %c0_88 = arith.constant 0 : index
    %c0_89 = arith.constant 0 : index
    %c0_90 = arith.constant 0 : index
    %156 = vector.load %arg6[%c0_87, %c0_88, %c0_89, %c0_90] : memref<1x4x4x128xbf16, #tpu.memory_space<vmem>>, vector<1x4x4x128xbf16>
    %157 = vector.shape_cast %156 : vector<1x4x4x128xbf16> to vector<4x4x128xbf16>
    %158 = vector.shape_cast %155 : vector<4x4x128xbf16> to vector<1x4x4x128xbf16>
    tpu.vector_store %arg6[%c0_87, %c0_88, %c0_89, %c0_90], %158 {strides = array<i32>} : memref<1x4x4x128xbf16, #tpu.memory_space<vmem>>, vector<1x4x4x128xbf16>,
    return
  }
  func.func @transform_0(%arg0: i32) -> (i32, i32, i32) {
    %c0_i32 = arith.constant 0 : i32
    %c0_i32_0 = arith.constant 0 : i32
    %c0_i32_1 = arith.constant 0 : i32
    return %arg0, %c0_i32, %c0_i32_0 : i32, i32, i32
  }
  func.func @transform_1(%arg0: i32) -> (i32, i32) {
    %c0_i32 = arith.constant 0 : i32
    %c0_i32_0 = arith.constant 0 : i32
    %c0_i32_1 = arith.constant 0 : i32
    return %c0_i32, %c0_i32_0 : i32, i32
  }
  func.func @transform_2(%arg0: i32) -> (i32, i32) {
    %c0_i32 = arith.constant 0 : i32
    %c0_i32_0 = arith.constant 0 : i32
    %c0_i32_1 = arith.constant 0 : i32
    return %c0_i32, %c0_i32_0 : i32, i32
  }
  func.func @transform_3(%arg0: i32) -> (i32, i32) {
    %c0_i32 = arith.constant 0 : i32
    %c0_i32_0 = arith.constant 0 : i32
    %c0_i32_1 = arith.constant 0 : i32
    return %c0_i32, %c0_i32_0 : i32, i32
  }
  func.func @transform_4(%arg0: i32) -> (i32, i32) {
    %c0_i32 = arith.constant 0 : i32
    %c0_i32_0 = arith.constant 0 : i32
    %c0_i32_1 = arith.constant 0 : i32
    return %c0_i32, %c0_i32_0 : i32, i32
  }
  func.func @transform_5(%arg0: i32) -> (i32, i32, i32, i32) {
    %c0_i32 = arith.constant 0 : i32
    %c0_i32_0 = arith.constant 0 : i32
    %c0_i32_1 = arith.constant 0 : i32
    %c0_i32_2 = arith.constant 0 : i32
    return %arg0, %c0_i32, %c0_i32_0, %c0_i32_1 : i32, i32, i32, i32
  }
}

module attributes {stable_mosaic.version = 11 : i64} {
  func.func @_fc_fused_kernel(%arg0: i32, %arg1: memref<8x2048xbf16, #tpu.memory_space<vmem>>, %arg2: memref<2048x1024xbf16, #tpu.memory_space<vmem>>, %arg3: memref<1x1024xf32, #tpu.memory_space<vmem>>, %arg4: memref<1024x128xbf16, #tpu.memory_space<vmem>>, %arg5: memref<1x128xf32, #tpu.memory_space<vmem>>, %arg6: memref<8x128xf32, #tpu.memory_space<vmem>>) attributes {dimension_semantics = [#tpu.dimension_semantics<parallel>], iteration_bounds = array<i64: 1>, scalar_prefetch = 0 : i64, scratch_operands = 0 : i64, tpu.core_type = #tpu.core_type<tc>, window_params = [{transform_indices = @transform_0, window_bounds = array<i64: 8, 2048>}, {pipeline_mode = #tpu.pipeline_mode<synchronous>, transform_indices = @transform_1, window_bounds = array<i64: 2048, 1024>}, {pipeline_mode = #tpu.pipeline_mode<synchronous>, transform_indices = @transform_2, window_bounds = array<i64: 1, 1024>}, {pipeline_mode = #tpu.pipeline_mode<synchronous>, transform_indices = @transform_3, window_bounds = array<i64: 1024, 128>}, {pipeline_mode = #tpu.pipeline_mode<synchronous>, transform_indices = @transform_4, window_bounds = array<i64: 1, 128>}, {transform_indices = @transform_5, window_bounds = array<i64: 8, 128>}]} {
    %c0 = arith.constant 0 : index
    %c0_0 = arith.constant 0 : index
    %0 = vector.load %arg1[%c0, %c0_0] : memref<8x2048xbf16, #tpu.memory_space<vmem>>, vector<8x2048xbf16>
    %c0_1 = arith.constant 0 : index
    %c0_2 = arith.constant 0 : index
    %1 = vector.load %arg2[%c0_1, %c0_2] : memref<2048x1024xbf16, #tpu.memory_space<vmem>>, vector<2048x1024xbf16>
    %cst = arith.constant dense<0.000000e+00> : vector<8x1024xf32>
    %2 = tpu.matmul %0, %1, %cst {dimension_numbers = #tpu.dot_dimension_numbers<[1], [0], [0], [1], [0, 0, 1, 1], [], []>} : vector<8x2048xbf16>, vector<2048x1024xbf16>, vector<8x1024xf32> -> vector<8x1024xf32>
    %c0_3 = arith.constant 0 : index
    %c0_4 = arith.constant 0 : index
    %3 = vector.load %arg3[%c0_3, %c0_4] : memref<1x1024xf32, #tpu.memory_space<vmem>>, vector<1x1024xf32>
    %4 = vector.broadcast %3 : vector<1x1024xf32> to vector<8x1024xf32>
    %5 = arith.addf %2, %4 : vector<8x1024xf32>
    %cst_5 = arith.constant 0.000000e+00 : f32
    %6 = vector.broadcast %cst_5 : f32 to vector<8x1024xf32>
    %7 = arith.maximumf %5, %6 : vector<8x1024xf32>
    %8 = arith.truncf %7 : vector<8x1024xf32> to vector<8x1024xbf16>
    %c0_6 = arith.constant 0 : index
    %c0_7 = arith.constant 0 : index
    %9 = vector.load %arg4[%c0_6, %c0_7] : memref<1024x128xbf16, #tpu.memory_space<vmem>>, vector<1024x128xbf16>
    %cst_8 = arith.constant dense<0.000000e+00> : vector<8x128xf32>
    %10 = tpu.matmul %8, %9, %cst_8 {dimension_numbers = #tpu.dot_dimension_numbers<[1], [0], [0], [1], [0, 0, 1, 1], [], []>} : vector<8x1024xbf16>, vector<1024x128xbf16>, vector<8x128xf32> -> vector<8x128xf32>
    %c0_9 = arith.constant 0 : index
    %c0_10 = arith.constant 0 : index
    %11 = vector.load %arg5[%c0_9, %c0_10] : memref<1x128xf32, #tpu.memory_space<vmem>>, vector<1x128xf32>
    %12 = vector.broadcast %11 : vector<1x128xf32> to vector<8x128xf32>
    %13 = arith.addf %10, %12 : vector<8x128xf32>
    %c0_11 = arith.constant 0 : index
    %c0_12 = arith.constant 0 : index
    %14 = vector.load %arg6[%c0_11, %c0_12] : memref<8x128xf32, #tpu.memory_space<vmem>>, vector<8x128xf32>
    tpu.vector_store %arg6[%c0_11, %c0_12], %13 {strides = array<i32>} : memref<8x128xf32, #tpu.memory_space<vmem>>, vector<8x128xf32>,
    return
  }
  func.func @transform_0(%arg0: i32) -> (i32, i32) {
    %c0_i32 = arith.constant 0 : i32
    %c0_i32_0 = arith.constant 0 : i32
    return %arg0, %c0_i32 : i32, i32
  }
  func.func @transform_1(%arg0: i32) -> (i32, i32) {
    %c0_i32 = arith.constant 0 : i32
    %c0_i32_0 = arith.constant 0 : i32
    %c0_i32_1 = arith.constant 0 : i32
    return %c0_i32, %c0_i32_0 : i32, i32
  }
  func.func @transform_2(%arg0: i32) -> (i32, i32) {
    %c0_i32 = arith.constant 0 : i32
    %c0_i32_0 = arith.constant 0 : i32
    %c0_i32_1 = arith.constant 0 : i32
    return %c0_i32, %c0_i32_0 : i32, i32
  }
  func.func @transform_3(%arg0: i32) -> (i32, i32) {
    %c0_i32 = arith.constant 0 : i32
    %c0_i32_0 = arith.constant 0 : i32
    %c0_i32_1 = arith.constant 0 : i32
    return %c0_i32, %c0_i32_0 : i32, i32
  }
  func.func @transform_4(%arg0: i32) -> (i32, i32) {
    %c0_i32 = arith.constant 0 : i32
    %c0_i32_0 = arith.constant 0 : i32
    %c0_i32_1 = arith.constant 0 : i32
    return %c0_i32, %c0_i32_0 : i32, i32
  }
  func.func @transform_5(%arg0: i32) -> (i32, i32) {
    %c0_i32 = arith.constant 0 : i32
    %c0_i32_0 = arith.constant 0 : i32
    return %arg0, %c0_i32 : i32, i32
  }
}

</mosaic_0001>

<llo_original>
// kernel: cnn_forward.2
$region0: #{cnn_forward.2}
  #allocation0 [shape = 'u32[]', space=smem, size = 0x4, offset = 0x4, fixed_abs, tag = 'smem constant byte address 0x4 - core index']
  #allocation1 [shape = 'u32[72,128]{1,0:T(1,128)}', space=vmem, size = 0x9000, scoped, tag = 'internal scratch']
  #allocation2 [shape = 'f32[12,24,128]{2,1,0:T(8,128)}', space=vmem, size = 0x24000, scoped, tag = 'scratch operand']
  #allocation3 [shape = 'bf16[12,12,128]{2,1,0:T(8,128)(2,1)}', space=vmem, size = 0xc000, scoped, tag = 'scratch operand']
  #allocation4 [shape = 'f32[4,8,128]{2,1,0:T(8,128)}', space=vmem, size = 0x4000, scoped, tag = 'scratch operand']
  %s0 = inlined_call_operand.vmem [shape: bf16[2,576,32], index: 0, kind: input, shape index: {}]
  %s1 = inlined_call_operand.hbm [shape: bf16[32,128], index: 1, kind: input, shape index: {}]
  %s2 = inlined_call_operand.hbm [shape: f32[1,128], index: 2, kind: input, shape index: {}]
  %s3 = inlined_call_operand.hbm [shape: bf16[3200,128], index: 3, kind: input, shape index: {}]
  %s4 = inlined_call_operand.hbm [shape: f32[1,128], index: 4, kind: input, shape index: {}]
  %s5 = inlined_call_operand.vmem [shape: bf16[2,4,4,128], index: 5, kind: output, shape index: {}]
  %s6 = sld [smem:[#allocation0]]
  $region69: #{cnn_forward.2} parent=0
    _
  %s8 = ssub.s32 1, %s6
  %s9 = scalar_select 0, %s8, %s6
  $region1: #{cnn_forward.2} parent=0
    #allocation5 [shape = 'u8[8192]{0}', space=vmem, size = 0x2000, scoped, tag = 'input window, operand 1, single buffered']
    #allocation6 [shape = 's32[2]{0}', space=sflag, size = 0x8, scoped, tag = 'scoped memory for cnn_forward.2']
    #allocation7 [shape = 'u8[512]{0}', space=vmem, size = 0x400, scoped, tag = 'input window, operand 2, single buffered']
    #allocation8 [shape = 's32[1]{0}', space=sflag, size = 0x4, scoped, tag = 'scoped memory for cnn_forward.2']
    #allocation9 [shape = 'u8[819200]{0}', space=vmem, size = 0xc8000, scoped, tag = 'input window, operand 3, single buffered']
    #allocation10 [shape = 'u8[512]{0}', space=vmem, size = 0x400, scoped, tag = 'input window, operand 4, single buffered']
    #allocation11 [shape = 's32[1]{0}', space=sflag, size = 0x4, scoped, tag = 'scoped memory for cnn_forward.2']
    %10 = vsyncpa [#allocation6], 0
    %11 = vsyncpa [#allocation8], 0
    %12 = vsyncpa [#allocation11], 0
    loop: start=0, step=1, limit=4
    $region2: #{cnn_forward.2} parent=1 // loop_pre_header
      _
    $region3: #{cnn_forward.2} parent=1 // loop_header
      %s14 = sphi 0, %s18
      %p15 = scmp.ge.s32.totalorder %s14, 4
      %s24 = sphi 0, %s26
      %s27 = sphi 0, %s24
      %s28 = sphi 0, %s27
      %s44 = sphi 0, %s28
      %s48 = sphi 0, %s48
      %s50 = sphi 0, %s48
      %s51 = sphi 0, %s50
      %s65 = sphi 0, %s51
      %s69 = sphi 0, %s69
      %s71 = sphi 0, %s69
      %s72 = sphi 0, %s71
      %s86 = sphi 0, %s72
      %s90 = sphi 0, %s90
      %s92 = sphi 0, %s90
      %s93 = sphi 0, %s92
      %s107 = sphi 0, %s93
      %s111 = sphi 0, %s111
      %s113 = sphi 0, %s111
      %s114 = sphi 0, %s113
      %s128 = sphi 0, %s114
      %s134 = sphi 0, %s136
      %s137 = sphi 0, %s134
      %s138 = sphi 0, %s137
      %s154 = sphi 0, %s138
    $region4: #{cnn_forward.2} parent=1 // loop_header_branch
      %17 = sbr.rel (%p15) target = $region8
    $region5: #{cnn_forward.2} parent=1 // loop_body
      %s19 = ssub.s32 %s14, 1
      %s20 = ssub.s32 %s14, 2
      %s21 = sadd.s32 %s14, 1
      %s22 = ssub.s32 %s14, %s21
      %p23 = scmp.eq.s32.totalorder %s22, 0
      %s25 = sadd.s32 %s24, 1
      %s26 = scalar_select %p23, %s24, %s25
      %p29 = pneg %p23
      %p30 = scmp.eq.s32.totalorder %s14, 1
      %p31 = por %p29, %p30
      %p32 = scmp.ne.s32.totalorder %s24, %s27
      %p33 = scmp.eq.s32.totalorder %s14, 0
      %p34 = por %p32, %p33
      %p35 = scmp.ne.s32.totalorder %s24, %s27
      %p36 = scmp.eq.s32.totalorder %s19, 1
      %p37 = por %p35, %p36
      %p38 = scmp.ne.s32.totalorder %s27, %s28
      %p39 = scmp.eq.s32.totalorder %s19, 0
      %p40 = por %p38, %p39
      %p41 = scmp.ne.s32.totalorder %s27, %s28
      %p42 = scmp.eq.s32.totalorder %s20, 1
      %p43 = por %p41, %p42
      %p45 = scmp.ne.s32.totalorder %s28, %s44
      %p46 = scmp.eq.s32.totalorder %s20, 0
      %p47 = por %p45, %p46
      %s49 = sadd.s32 %s48, 1
      %p52 = scmp.eq.s32.totalorder %s14, 1
      %p53 = scmp.ne.s32.totalorder %s48, %s50
      %p54 = scmp.eq.s32.totalorder %s14, 0
      %p55 = por %p53, %p54
      %p56 = scmp.ne.s32.totalorder %s48, %s50
      %p57 = scmp.eq.s32.totalorder %s19, 1
      %p58 = por %p56, %p57
      %p59 = scmp.ne.s32.totalorder %s50, %s51
      %p60 = scmp.eq.s32.totalorder %s19, 0
      %p61 = por %p59, %p60
      %p62 = scmp.ne.s32.totalorder %s50, %s51
      %p63 = scmp.eq.s32.totalorder %s20, 1
      %p64 = por %p62, %p63
      %p66 = scmp.ne.s32.totalorder %s51, %s65
      %p67 = scmp.eq.s32.totalorder %s20, 0
      %p68 = por %p66, %p67
      %s70 = sadd.s32 %s69, 1
      %p73 = scmp.eq.s32.totalorder %s14, 1
      %p74 = scmp.ne.s32.totalorder %s69, %s71
      %p75 = scmp.eq.s32.totalorder %s14, 0
      %p76 = por %p74, %p75
      %p77 = scmp.ne.s32.totalorder %s69, %s71
      %p78 = scmp.eq.s32.totalorder %s19, 1
      %p79 = por %p77, %p78
      %p80 = scmp.ne.s32.totalorder %s71, %s72
      %p81 = scmp.eq.s32.totalorder %s19, 0
      %p82 = por %p80, %p81
      %p83 = scmp.ne.s32.totalorder %s71, %s72
      %p84 = scmp.eq.s32.totalorder %s20, 1
      %p85 = por %p83, %p84
      %p87 = scmp.ne.s32.totalorder %s72, %s86
      %p88 = scmp.eq.s32.totalorder %s20, 0
      %p89 = por %p87, %p88
      %s91 = sadd.s32 %s90, 1
      %p94 = scmp.eq.s32.totalorder %s14, 1
      %p95 = scmp.ne.s32.totalorder %s90, %s92
      %p96 = scmp.eq.s32.totalorder %s14, 0
      %p97 = por %p95, %p96
      %p98 = scmp.ne.s32.totalorder %s90, %s92
      %p99 = scmp.eq.s32.totalorder %s19, 1
      %p100 = por %p98, %p99
      %p101 = scmp.ne.s32.totalorder %s92, %s93
      %p102 = scmp.eq.s32.totalorder %s19, 0
      %p103 = por %p101, %p102
      %p104 = scmp.ne.s32.totalorder %s92, %s93
      %p105 = scmp.eq.s32.totalorder %s20, 1
      %p106 = por %p104, %p105
      %p108 = scmp.ne.s32.totalorder %s93, %s107
      %p109 = scmp.eq.s32.totalorder %s20, 0
      %p110 = por %p108, %p109
      %s112 = sadd.s32 %s111, 1
      %p115 = scmp.eq.s32.totalorder %s14, 1
      %p116 = scmp.ne.s32.totalorder %s111, %s113
      %p117 = scmp.eq.s32.totalorder %s14, 0
      %p118 = por %p116, %p117
      %p119 = scmp.ne.s32.totalorder %s111, %s113
      %p120 = scmp.eq.s32.totalorder %s19, 1
      %p121 = por %p119, %p120
      %p122 = scmp.ne.s32.totalorder %s113, %s114
      %p123 = scmp.eq.s32.totalorder %s19, 0
      %p124 = por %p122, %p123
      %p125 = scmp.ne.s32.totalorder %s113, %s114
      %p126 = scmp.eq.s32.totalorder %s20, 1
      %p127 = por %p125, %p126
      %p129 = scmp.ne.s32.totalorder %s114, %s128
      %p130 = scmp.eq.s32.totalorder %s20, 0
      %p131 = por %p129, %p130
      %s132 = ssub.s32 %s14, %s21
      %p133 = scmp.eq.s32.totalorder %s132, 0
      %s135 = sadd.s32 %s134, 1
      %s136 = scalar_select %p133, %s134, %s135
      %p139 = pneg %p133
      %p140 = scmp.eq.s32.totalorder %s14, 1
      %p141 = por %p139, %p140
      %p142 = scmp.ne.s32.totalorder %s134, %s137
      %p143 = scmp.eq.s32.totalorder %s14, 0
      %p144 = por %p142, %p143
      %p145 = scmp.ne.s32.totalorder %s134, %s137
      %p146 = scmp.eq.s32.totalorder %s19, 1
      %p147 = por %p145, %p146
      %p148 = scmp.ne.s32.totalorder %s137, %s138
      %p149 = scmp.eq.s32.totalorder %s19, 0
      %p150 = por %p148, %p149
      %p151 = scmp.ne.s32.totalorder %s137, %s138
      %p152 = scmp.eq.s32.totalorder %s20, 1
      %p153 = por %p151, %p152
      %p155 = scmp.ne.s32.totalorder %s138, %s154
      %p156 = scmp.eq.s32.totalorder %s20, 0
      %p157 = por %p155, %p156
      %p158 = scmp.le.s32.totalorder 1, %s14
      %p159 = scmp.lt.s32.totalorder %s14, 3
      %p160 = pnand %p158, %p159
      %p161 = pneg %p160
      // Predicated region
      $region9: #{cnn_forward.2} parent=5 // pred_check
        _
      $region10: #{cnn_forward.2} parent=5 // pred_check_branch
        %163 = sbr.rel (%p160) target = $region12
      $region11: #{cnn_forward.2} parent=5 // pred_region
        %s164 = ssub.s32 %s14, 1
        // Predicated region
        $region13: #{cnn_forward.2} parent=11 // pred_check
          %p165 = pneg %p61
        $region14: #{cnn_forward.2} parent=11 // pred_check_branch
          %167 = sbr.rel (%p165) target = $region16
        $region15: #{cnn_forward.2} parent=11 // pred_region
          %169 = vsyncadd [#allocation6], 0
          %s170 = sshll.u32 %s1, 4
          %s171 = int_to_ptr.hbm [resolvable:$true] %s170
          %s172 = sshll.u32 [#allocation5], 4
          %s173 = int_to_ptr.vmem [resolvable:$true] %s172
          %178 = dma.hbm_to_vmem [thread:$0]  %s171, 256, %s173, [#allocation6], 64, 64, 4
        $region16: #{cnn_forward.2} parent=11 // pred_fallthru
          _
        // Predicated region
        $region17: #{cnn_forward.2} parent=11 // pred_check
          %p179 = pneg %p82
        $region18: #{cnn_forward.2} parent=11 // pred_check_branch
          %181 = sbr.rel (%p179) target = $region20
        $region19: #{cnn_forward.2} parent=11 // pred_region
          %183 = vsyncadd [#allocation8], 0
          %s185 = sshll.u32 %s2, 4
          %s186 = int_to_ptr.hbm [resolvable:$true] %s185
          %s187 = sshll.u32 [#allocation7], 4
          %s188 = int_to_ptr.vmem [resolvable:$true] %s187
          %190 = dma.hbm_to_vmem [thread:$0]  %s186, 16, %s188, [#allocation8]
        $region20: #{cnn_forward.2} parent=11 // pred_fallthru
          _
        // Predicated region
        $region21: #{cnn_forward.2} parent=11 // pred_check
          %p191 = pneg %p103
        $region22: #{cnn_forward.2} parent=11 // pred_check_branch
          %193 = sbr.rel (%p191) target = $region24
        $region23: #{cnn_forward.2} parent=11 // pred_region
          %195 = vsyncadd [#allocation8], 0
          %s196 = sshll.u32 %s3, 4
          %s197 = int_to_ptr.hbm [resolvable:$true] %s196
          %s198 = sshll.u32 [#allocation9], 4
          %s199 = int_to_ptr.vmem [resolvable:$true] %s198
          %204 = dma.hbm_to_vmem [thread:$0]  %s197, 25600, %s199, [#allocation8], 64, 64, 4
        $region24: #{cnn_forward.2} parent=11 // pred_fallthru
          _
        // Predicated region
        $region25: #{cnn_forward.2} parent=11 // pred_check
          %p205 = pneg %p124
        $region26: #{cnn_forward.2} parent=11 // pred_check_branch
          %207 = sbr.rel (%p205) target = $region28
        $region27: #{cnn_forward.2} parent=11 // pred_region
          %209 = vsyncadd [#allocation11], 0
          %s211 = sshll.u32 %s4, 4
          %s212 = int_to_ptr.hbm [resolvable:$true] %s211
          %s213 = sshll.u32 [#allocation10], 4
          %s214 = int_to_ptr.vmem [resolvable:$true] %s213
          %216 = dma.hbm_to_vmem [thread:$0]  %s212, 16, %s214, [#allocation11]
        $region28: #{cnn_forward.2} parent=11 // pred_fallthru
          _
      $region12: #{cnn_forward.2} parent=5 // pred_fallthru
        _
      %p217 = scmp.lt.s32.totalorder %s14, 2
      // Predicated region
      $region29: #{cnn_forward.2} parent=5 // pred_check
        %p218 = pneg %p217
      $region30: #{cnn_forward.2} parent=5 // pred_check_branch
        %220 = sbr.rel (%p218) target = $region32
      $region31: #{cnn_forward.2} parent=5 // pred_region
        // Predicated region
        $region33: #{cnn_forward.2} parent=31 // pred_check
          %p221 = pneg %p34
        $region34: #{cnn_forward.2} parent=31 // pred_check_branch
          %223 = sbr.rel (%p221) target = $region36
        $region35: #{cnn_forward.2} parent=31 // pred_region
          %p224 = scmp.lt.s32.totalorder %s14, 1
          %s225 = scalar_select %p224, %s14, 1
          %s226 = smul.addr %s225, 72
          %s227 = smul.addr %s226, 4
          %s228 = scalar_lea.vmem %s0, %s227
        $region36: #{cnn_forward.2} parent=31 // pred_fallthru
          _
      $region32: #{cnn_forward.2} parent=5 // pred_fallthru
        _
      %p229 = scmp.le.s32.totalorder 1, %s14
      %p230 = scmp.lt.s32.totalorder %s14, 3
      %p231 = pnand %p229, %p230
      %p232 = pneg %p231
      // Predicated region
      $region37: #{cnn_forward.2} parent=5 // pred_check
        _
      $region38: #{cnn_forward.2} parent=5 // pred_check_branch
        %234 = sbr.rel (%p231) target = $region40
      $region39: #{cnn_forward.2} parent=5 // pred_region
        %s235 = ssub.s32 %s14, 1
        // Predicated region
        $region41: #{cnn_forward.2} parent=39 // pred_check
          %p236 = pneg %p61
        $region42: #{cnn_forward.2} parent=39 // pred_check_branch
          %238 = sbr.rel (%p236) target = $region44
        $region43: #{cnn_forward.2} parent=39 // pred_region
          %240 = dma.done [#allocation6], 256
        $region44: #{cnn_forward.2} parent=39 // pred_fallthru
          _
        // Predicated region
        $region45: #{cnn_forward.2} parent=39 // pred_check
          %p241 = pneg %p82
        $region46: #{cnn_forward.2} parent=39 // pred_check_branch
          %243 = sbr.rel (%p241) target = $region48
        $region47: #{cnn_forward.2} parent=39 // pred_region
          %245 = dma.done [#allocation8], 16
        $region48: #{cnn_forward.2} parent=39 // pred_fallthru
          _
        // Predicated region
        $region49: #{cnn_forward.2} parent=39 // pred_check
          %p246 = pneg %p103
        $region50: #{cnn_forward.2} parent=39 // pred_check_branch
          %248 = sbr.rel (%p246) target = $region52
        $region51: #{cnn_forward.2} parent=39 // pred_region
          %250 = dma.done [#allocation8], 25600
        $region52: #{cnn_forward.2} parent=39 // pred_fallthru
          _
        // Predicated region
        $region53: #{cnn_forward.2} parent=39 // pred_check
          %p251 = pneg %p124
        $region54: #{cnn_forward.2} parent=39 // pred_check_branch
          %253 = sbr.rel (%p251) target = $region56
        $region55: #{cnn_forward.2} parent=39 // pred_region
          %255 = dma.done [#allocation11], 16
        $region56: #{cnn_forward.2} parent=39 // pred_fallthru
          _
        %p256 = scmp.lt.s32.totalorder %s19, 1
        %s257 = scalar_select %p256, %s19, 1
        %s258 = smul.addr %s257, 72
        %s259 = smul.addr %s258, 4
        %s260 = scalar_lea.vmem %s0, %s259
        %p261 = pneg %p40
        %p262 = pneg %p37
        %p263 = pneg %p61
        %p264 = pneg %p58
        %p265 = pneg %p82
        %p266 = pneg %p79
        %p267 = pneg %p103
        %p268 = pneg %p100
        %p269 = pneg %p124
        %p270 = pneg %p121
        %p271 = pneg %p150
        %p272 = pneg %p147
        %p273 = scmp.lt.s32.totalorder %s19, 1
        %s274 = scalar_select %p273, %s19, 1
        %s275 = smul.addr %s274, 4
        %s276 = smul.addr %s275, 2
        %s277 = scalar_lea.vmem %s5, %s276
        %p278 = scmp.lt.s32.totalorder %s19, 1
        %s279 = scalar_select %p278, %s19, 1
        %s280 = smul.addr %s279, 72
        %s281 = smul.addr %s280, 4
        %s282 = scalar_lea.vmem %s0, %s281
        %p283 = scmp.lt.s32.totalorder %s19, 1
        %s284 = scalar_select %p283, %s19, 1
        %s285 = smul.addr %s284, 4
        %s286 = smul.addr %s285, 2
        %s287 = scalar_lea.vmem %s5, %s286
        %v289 = vld [vmem:[%s282] sm:$0xf]
        %v290 = vld [vmem:[%s282 + $0x4] sm:$0xf]
        %v291 = vld [vmem:[%s282 + $0x8] sm:$0xf]
        %v292 = vld [vmem:[%s282 + $0xc] sm:$0xf]
        %v293 = vld [vmem:[%s282 + $0x10] sm:$0xf]
        %v294 = vld [vmem:[%s282 + $0x14] sm:$0xf]
        %v295 = vld [vmem:[%s282 + $0x18] sm:$0xf]
        %v296 = vld [vmem:[%s282 + $0x1c] sm:$0xf]
        %v297 = vld [vmem:[%s282 + $0x20] sm:$0xf]
        %v298 = vld [vmem:[%s282 + $0x24] sm:$0xf]
        %v299 = vld [vmem:[%s282 + $0x28] sm:$0xf]
        %v300 = vld [vmem:[%s282 + $0x2c] sm:$0xf]
        %v301 = vld [vmem:[%s282 + $0x30] sm:$0xf]
        %v302 = vld [vmem:[%s282 + $0x34] sm:$0xf]
        %v303 = vld [vmem:[%s282 + $0x38] sm:$0xf]
        %v304 = vld [vmem:[%s282 + $0x3c] sm:$0xf]
        %v305 = vld [vmem:[%s282 + $0x40] sm:$0xf]
        %v306 = vld [vmem:[%s282 + $0x44] sm:$0xf]
        %v307 = vld [vmem:[%s282 + $0x48] sm:$0xf]
        %v308 = vld [vmem:[%s282 + $0x4c] sm:$0xf]
        %v309 = vld [vmem:[%s282 + $0x50] sm:$0xf]
        %v310 = vld [vmem:[%s282 + $0x54] sm:$0xf]
        %v311 = vld [vmem:[%s282 + $0x58] sm:$0xf]
        %v312 = vld [vmem:[%s282 + $0x5c] sm:$0xf]
        %v313 = vld [vmem:[%s282 + $0x60] sm:$0xf]
        %v314 = vld [vmem:[%s282 + $0x64] sm:$0xf]
        %v315 = vld [vmem:[%s282 + $0x68] sm:$0xf]
        %v316 = vld [vmem:[%s282 + $0x6c] sm:$0xf]
        %v317 = vld [vmem:[%s282 + $0x70] sm:$0xf]
        %v318 = vld [vmem:[%s282 + $0x74] sm:$0xf]
        %v319 = vld [vmem:[%s282 + $0x78] sm:$0xf]
        %v320 = vld [vmem:[%s282 + $0x7c] sm:$0xf]
        %v321 = vld [vmem:[%s282 + $0x80] sm:$0xf]
        %v322 = vld [vmem:[%s282 + $0x84] sm:$0xf]
        %v323 = vld [vmem:[%s282 + $0x88] sm:$0xf]
        %v324 = vld [vmem:[%s282 + $0x8c] sm:$0xf]
        %v325 = vld [vmem:[%s282 + $0x90] sm:$0xf]
        %v326 = vld [vmem:[%s282 + $0x94] sm:$0xf]
        %v327 = vld [vmem:[%s282 + $0x98] sm:$0xf]
        %v328 = vld [vmem:[%s282 + $0x9c] sm:$0xf]
        %v329 = vld [vmem:[%s282 + $0xa0] sm:$0xf]
        %v330 = vld [vmem:[%s282 + $0xa4] sm:$0xf]
        %v331 = vld [vmem:[%s282 + $0xa8] sm:$0xf]
        %v332 = vld [vmem:[%s282 + $0xac] sm:$0xf]
        %v333 = vld [vmem:[%s282 + $0xb0] sm:$0xf]
        %v334 = vld [vmem:[%s282 + $0xb4] sm:$0xf]
        %v335 = vld [vmem:[%s282 + $0xb8] sm:$0xf]
        %v336 = vld [vmem:[%s282 + $0xbc] sm:$0xf]
        %v337 = vld [vmem:[%s282 + $0xc0] sm:$0xf]
        %v338 = vld [vmem:[%s282 + $0xc4] sm:$0xf]
        %v339 = vld [vmem:[%s282 + $0xc8] sm:$0xf]
        %v340 = vld [vmem:[%s282 + $0xcc] sm:$0xf]
        %v341 = vld [vmem:[%s282 + $0xd0] sm:$0xf]
        %v342 = vld [vmem:[%s282 + $0xd4] sm:$0xf]
        %v343 = vld [vmem:[%s282 + $0xd8] sm:$0xf]
        %v344 = vld [vmem:[%s282 + $0xdc] sm:$0xf]
        %v345 = vld [vmem:[%s282 + $0xe0] sm:$0xf]
        %v346 = vld [vmem:[%s282 + $0xe4] sm:$0xf]
        %v347 = vld [vmem:[%s282 + $0xe8] sm:$0xf]
        %v348 = vld [vmem:[%s282 + $0xec] sm:$0xf]
        %v349 = vld [vmem:[%s282 + $0xf0] sm:$0xf]
        %v350 = vld [vmem:[%s282 + $0xf4] sm:$0xf]
        %v351 = vld [vmem:[%s282 + $0xf8] sm:$0xf]
        %v352 = vld [vmem:[%s282 + $0xfc] sm:$0xf]
        %v353 = vld [vmem:[%s282 + $0x100] sm:$0xf]
        %v354 = vld [vmem:[%s282 + $0x104] sm:$0xf]
        %v355 = vld [vmem:[%s282 + $0x108] sm:$0xf]
        %v356 = vld [vmem:[%s282 + $0x10c] sm:$0xf]
        %v357 = vld [vmem:[%s282 + $0x110] sm:$0xf]
        %v358 = vld [vmem:[%s282 + $0x114] sm:$0xf]
        %v359 = vld [vmem:[%s282 + $0x118] sm:$0xf]
        %v360 = vld [vmem:[%s282 + $0x11c] sm:$0xf]
        %v361 = vld [vmem:[#allocation5] sm:$0xf]
        %v362 = vld [vmem:[#allocation5 + $0x4] sm:$0xf]
        %v363 = vld [vmem:[#allocation5 + $0x8] sm:$0xf]
        %v364 = vld [vmem:[#allocation5 + $0xc] sm:$0xf]
        %v365 = vld [vmem:[#allocation7] sm:$0x1]
        %v367 = vperm.slane %v365, 0
        %v441 = vunpack.c.l.b16 %v289
        %v442 = vunpack.c.l.b16 %v290
        %v443 = vunpack.c.l.b16 %v291
        %v444 = vunpack.c.l.b16 %v292
        %v445 = vunpack.c.l.b16 %v293
        %v446 = vunpack.c.l.b16 %v294
        %v447 = vunpack.c.l.b16 %v295
        %v448 = vunpack.c.l.b16 %v296
        %v449 = vunpack.c.l.b16 %v297
        %v450 = vunpack.c.l.b16 %v298
        %v451 = vunpack.c.l.b16 %v299
        %v452 = vunpack.c.l.b16 %v300
        %v453 = vunpack.c.l.b16 %v301
        %v454 = vunpack.c.l.b16 %v302
        %v455 = vunpack.c.l.b16 %v303
        %v456 = vunpack.c.l.b16 %v304
        %v457 = vunpack.c.l.b16 %v305
        %v458 = vunpack.c.l.b16 %v306
        %v459 = vunpack.c.l.b16 %v307
        %v460 = vunpack.c.l.b16 %v308
        %v461 = vunpack.c.l.b16 %v309
        %v462 = vunpack.c.l.b16 %v310
        %v463 = vunpack.c.l.b16 %v311
        %v464 = vunpack.c.l.b16 %v312
        %v465 = vunpack.c.l.b16 %v313
        %v466 = vunpack.c.l.b16 %v314
        %v467 = vunpack.c.l.b16 %v315
        %v468 = vunpack.c.l.b16 %v316
        %v469 = vunpack.c.l.b16 %v317
        %v470 = vunpack.c.l.b16 %v318
        %v471 = vunpack.c.l.b16 %v319
        %v472 = vunpack.c.l.b16 %v320
        %v473 = vunpack.c.l.b16 %v321
        %v474 = vunpack.c.l.b16 %v322
        %v475 = vunpack.c.l.b16 %v323
        %v476 = vunpack.c.l.b16 %v324
        %v477 = vunpack.c.l.b16 %v325
        %v478 = vunpack.c.l.b16 %v326
        %v479 = vunpack.c.l.b16 %v327
        %v480 = vunpack.c.l.b16 %v328
        %v481 = vunpack.c.l.b16 %v329
        %v482 = vunpack.c.l.b16 %v330
        %v483 = vunpack.c.l.b16 %v331
        %v484 = vunpack.c.l.b16 %v332
        %v485 = vunpack.c.l.b16 %v333
        %v486 = vunpack.c.l.b16 %v334
        %v487 = vunpack.c.l.b16 %v335
        %v488 = vunpack.c.l.b16 %v336
        %v489 = vunpack.c.l.b16 %v337
        %v490 = vunpack.c.l.b16 %v338
        %v491 = vunpack.c.l.b16 %v339
        %v492 = vunpack.c.l.b16 %v340
        %v493 = vunpack.c.l.b16 %v341
        %v494 = vunpack.c.l.b16 %v342
        %v495 = vunpack.c.l.b16 %v343
        %v496 = vunpack.c.l.b16 %v344
        %v497 = vunpack.c.l.b16 %v345
        %v498 = vunpack.c.l.b16 %v346
        %v499 = vunpack.c.l.b16 %v347
        %v500 = vunpack.c.l.b16 %v348
        %v501 = vunpack.c.l.b16 %v349
        %v502 = vunpack.c.l.b16 %v350
        %v503 = vunpack.c.l.b16 %v351
        %v504 = vunpack.c.l.b16 %v352
        %v505 = vunpack.c.l.b16 %v353
        %v506 = vunpack.c.l.b16 %v354
        %v507 = vunpack.c.l.b16 %v355
        %v508 = vunpack.c.l.b16 %v356
        %v509 = vunpack.c.l.b16 %v357
        %v510 = vunpack.c.l.b16 %v358
        %v511 = vunpack.c.l.b16 %v359
        %v512 = vunpack.c.l.b16 %v360
        %v513 = vpack.c.b16 %v442, %v441
        %v514 = vpack.c.b16 %v444, %v443
        %v515 = vpack.c.b16 %v446, %v445
        %v516 = vpack.c.b16 %v448, %v447
        %v517 = vpack.c.b16 %v450, %v449
        %v518 = vpack.c.b16 %v452, %v451
        %v519 = vpack.c.b16 %v454, %v453
        %v520 = vpack.c.b16 %v456, %v455
        %v521 = vpack.c.b16 %v458, %v457
        %v522 = vpack.c.b16 %v460, %v459
        %v523 = vpack.c.b16 %v462, %v461
        %v524 = vpack.c.b16 %v464, %v463
        %v525 = vpack.c.b16 %v466, %v465
        %v526 = vpack.c.b16 %v468, %v467
        %v527 = vpack.c.b16 %v470, %v469
        %v528 = vpack.c.b16 %v472, %v471
        %v529 = vpack.c.b16 %v474, %v473
        %v530 = vpack.c.b16 %v476, %v475
        %v531 = vpack.c.b16 %v478, %v477
        %v532 = vpack.c.b16 %v480, %v479
        %v533 = vpack.c.b16 %v482, %v481
        %v534 = vpack.c.b16 %v484, %v483
        %v535 = vpack.c.b16 %v486, %v485
        %v536 = vpack.c.b16 %v488, %v487
        %v537 = vpack.c.b16 %v490, %v489
        %v538 = vpack.c.b16 %v492, %v491
        %v539 = vpack.c.b16 %v494, %v493
        %v540 = vpack.c.b16 %v496, %v495
        %v541 = vpack.c.b16 %v498, %v497
        %v542 = vpack.c.b16 %v500, %v499
        %v543 = vpack.c.b16 %v502, %v501
        %v544 = vpack.c.b16 %v504, %v503
        %v545 = vpack.c.b16 %v506, %v505
        %v546 = vpack.c.b16 %v508, %v507
        %v547 = vpack.c.b16 %v510, %v509
        %v548 = vpack.c.b16 %v512, %v511
        %v553 = vunpack.c.l.b16 %v361
        %v554 = vunpack.c.l.b16 %v362
        %v555 = vunpack.c.l.b16 %v363
        %v556 = vunpack.c.l.b16 %v364
        %v557 = vpack.c.b16 %v554, %v553
        %v558 = vpack.c.b16 %v556, %v555
        %vm561 = vcmask 261120
        %v563 = vsel %vm561, %v513, 0
        %v566 = vsel %vm561, %v514, 0
        %v569 = vsel %vm561, %v515, 0
        %v572 = vsel %vm561, %v516, 0
        %v575 = vsel %vm561, %v517, 0
        %v578 = vsel %vm561, %v518, 0
        %v581 = vsel %vm561, %v519, 0
        %v584 = vsel %vm561, %v520, 0
        %v587 = vsel %vm561, %v521, 0
        %v590 = vsel %vm561, %v522, 0
        %v593 = vsel %vm561, %v523, 0
        %v596 = vsel %vm561, %v524, 0
        %v599 = vsel %vm561, %v525, 0
        %v602 = vsel %vm561, %v526, 0
        %v605 = vsel %vm561, %v527, 0
        %v608 = vsel %vm561, %v528, 0
        %v611 = vsel %vm561, %v529, 0
        %v614 = vsel %vm561, %v530, 0
        %v617 = vsel %vm561, %v531, 0
        %v620 = vsel %vm561, %v532, 0
        %v623 = vsel %vm561, %v533, 0
        %v626 = vsel %vm561, %v534, 0
        %v629 = vsel %vm561, %v535, 0
        %v632 = vsel %vm561, %v536, 0
        %v635 = vsel %vm561, %v537, 0
        %v638 = vsel %vm561, %v538, 0
        %v641 = vsel %vm561, %v539, 0
        %v644 = vsel %vm561, %v540, 0
        %v647 = vsel %vm561, %v541, 0
        %v650 = vsel %vm561, %v542, 0
        %v653 = vsel %vm561, %v543, 0
        %v656 = vsel %vm561, %v544, 0
        %v659 = vsel %vm561, %v545, 0
        %v662 = vsel %vm561, %v546, 0
        %v665 = vsel %vm561, %v547, 0
        %v668 = vsel %vm561, %v548, 0
        %670 = vmatpush.bf16.msra.mxu0 0
        %671 = vmatpush.bf16.msra.mxu0 0
        %672 = vmatpush.bf16.msra.mxu0 0
        %673 = vmatpush.bf16.msra.mxu0 0
        %674 = vmatpush.bf16.msra.mxu0 0
        %675 = vmatpush.bf16.msra.mxu0 0
        %676 = vmatpush.bf16.msra.mxu0 %v558
        %677 = vmatpush.bf16.msra.mxu0 %v557
        %678 = vmatmul.bf16.gmra.mxu0 %v563
        %v679 = vpop.f32.mrf.mxu0
        %v680 = vadd.f32 %v367, %v679
        %v681 = vpop.f32.mrf.mxu0
        %v682 = vadd.f32 %v367, %v681
        %683 = vmatmul.bf16.gmra.mxu0 %v566
        %v684 = vpop.f32.mrf.mxu0
        %v685 = vadd.f32 %v367, %v684
        %v686 = vpop.f32.mrf.mxu0
        %v687 = vadd.f32 %v367, %v686
        %688 = vmatmul.bf16.gmra.mxu0 %v569
        %v689 = vpop.f32.mrf.mxu0
        %v690 = vadd.f32 %v367, %v689
        %v691 = vpop.f32.mrf.mxu0
        %v692 = vadd.f32 %v367, %v691
        %693 = vmatmul.bf16.gmra.mxu0 %v572
        %v694 = vpop.f32.mrf.mxu0
        %v695 = vadd.f32 %v367, %v694
        %v696 = vpop.f32.mrf.mxu0
        %v697 = vadd.f32 %v367, %v696
        %698 = vmatmul.bf16.gmra.mxu0 %v575
        %v699 = vpop.f32.mrf.mxu0
        %v700 = vadd.f32 %v367, %v699
        %v701 = vpop.f32.mrf.mxu0
        %v702 = vadd.f32 %v367, %v701
        %703 = vmatmul.bf16.gmra.mxu0 %v578
        %v704 = vpop.f32.mrf.mxu0
        %v705 = vadd.f32 %v367, %v704
        %v706 = vpop.f32.mrf.mxu0
        %v707 = vadd.f32 %v367, %v706
        %708 = vmatmul.bf16.gmra.mxu0 %v581
        %v709 = vpop.f32.mrf.mxu0
        %v710 = vadd.f32 %v367, %v709
        %v711 = vpop.f32.mrf.mxu0
        %v712 = vadd.f32 %v367, %v711
        %713 = vmatmul.bf16.gmra.mxu0 %v584
        %v714 = vpop.f32.mrf.mxu0
        %v715 = vadd.f32 %v367, %v714
        %v716 = vpop.f32.mrf.mxu0
        %v717 = vadd.f32 %v367, %v716
        %718 = vmatmul.bf16.gmra.mxu0 %v587
        %v719 = vpop.f32.mrf.mxu0
        %v720 = vadd.f32 %v367, %v719
        %v721 = vpop.f32.mrf.mxu0
        %v722 = vadd.f32 %v367, %v721
        %723 = vmatmul.bf16.gmra.mxu0 %v590
        %v724 = vpop.f32.mrf.mxu0
        %v725 = vadd.f32 %v367, %v724
        %v726 = vpop.f32.mrf.mxu0
        %v727 = vadd.f32 %v367, %v726
        %728 = vmatmul.bf16.gmra.mxu0 %v593
        %v729 = vpop.f32.mrf.mxu0
        %v730 = vadd.f32 %v367, %v729
        %v731 = vpop.f32.mrf.mxu0
        %v732 = vadd.f32 %v367, %v731
        %733 = vmatmul.bf16.gmra.mxu0 %v596
        %v734 = vpop.f32.mrf.mxu0
        %v735 = vadd.f32 %v367, %v734
        %v736 = vpop.f32.mrf.mxu0
        %v737 = vadd.f32 %v367, %v736
        %738 = vmatmul.bf16.gmra.mxu0 %v599
        %v739 = vpop.f32.mrf.mxu0
        %v740 = vadd.f32 %v367, %v739
        %v741 = vpop.f32.mrf.mxu0
        %v742 = vadd.f32 %v367, %v741
        %743 = vmatmul.bf16.gmra.mxu0 %v602
        %v744 = vpop.f32.mrf.mxu0
        %v745 = vadd.f32 %v367, %v744
        %v746 = vpop.f32.mrf.mxu0
        %v747 = vadd.f32 %v367, %v746
        %748 = vmatmul.bf16.gmra.mxu0 %v605
        %v749 = vpop.f32.mrf.mxu0
        %v750 = vadd.f32 %v367, %v749
        %v751 = vpop.f32.mrf.mxu0
        %v752 = vadd.f32 %v367, %v751
        %753 = vmatmul.bf16.gmra.mxu0 %v608
        %v754 = vpop.f32.mrf.mxu0
        %v755 = vadd.f32 %v367, %v754
        %v756 = vpop.f32.mrf.mxu0
        %v757 = vadd.f32 %v367, %v756
        %758 = vmatmul.bf16.gmra.mxu0 %v611
        %v759 = vpop.f32.mrf.mxu0
        %v760 = vadd.f32 %v367, %v759
        %v761 = vpop.f32.mrf.mxu0
        %v762 = vadd.f32 %v367, %v761
        %763 = vmatmul.bf16.gmra.mxu0 %v614
        %v764 = vpop.f32.mrf.mxu0
        %v765 = vadd.f32 %v367, %v764
        %v766 = vpop.f32.mrf.mxu0
        %v767 = vadd.f32 %v367, %v766
        %768 = vmatmul.bf16.gmra.mxu0 %v617
        %v769 = vpop.f32.mrf.mxu0
        %v770 = vadd.f32 %v367, %v769
        %v771 = vpop.f32.mrf.mxu0
        %v772 = vadd.f32 %v367, %v771
        %773 = vmatmul.bf16.gmra.mxu0 %v620
        %v774 = vpop.f32.mrf.mxu0
        %v775 = vadd.f32 %v367, %v774
        %v776 = vpop.f32.mrf.mxu0
        %v777 = vadd.f32 %v367, %v776
        %778 = vmatmul.bf16.gmra.mxu0 %v623
        %v779 = vpop.f32.mrf.mxu0
        %v780 = vadd.f32 %v367, %v779
        %v781 = vpop.f32.mrf.mxu0
        %v782 = vadd.f32 %v367, %v781
        %783 = vmatmul.bf16.gmra.mxu0 %v626
        %v784 = vpop.f32.mrf.mxu0
        %v785 = vadd.f32 %v367, %v784
        %v786 = vpop.f32.mrf.mxu0
        %v787 = vadd.f32 %v367, %v786
        %788 = vmatmul.bf16.gmra.mxu0 %v629
        %v789 = vpop.f32.mrf.mxu0
        %v790 = vadd.f32 %v367, %v789
        %v791 = vpop.f32.mrf.mxu0
        %v792 = vadd.f32 %v367, %v791
        %793 = vmatmul.bf16.gmra.mxu0 %v632
        %v794 = vpop.f32.mrf.mxu0
        %v795 = vadd.f32 %v367, %v794
        %v796 = vpop.f32.mrf.mxu0
        %v797 = vadd.f32 %v367, %v796
        %798 = vmatmul.bf16.gmra.mxu0 %v635
        %v799 = vpop.f32.mrf.mxu0
        %v800 = vadd.f32 %v367, %v799
        %v801 = vpop.f32.mrf.mxu0
        %v802 = vadd.f32 %v367, %v801
        %803 = vmatmul.bf16.gmra.mxu0 %v638
        %v804 = vpop.f32.mrf.mxu0
        %v805 = vadd.f32 %v367, %v804
        %v806 = vpop.f32.mrf.mxu0
        %v807 = vadd.f32 %v367, %v806
        %808 = vmatmul.bf16.gmra.mxu0 %v641
        %v809 = vpop.f32.mrf.mxu0
        %v810 = vadd.f32 %v367, %v809
        %v811 = vpop.f32.mrf.mxu0
        %v812 = vadd.f32 %v367, %v811
        %813 = vmatmul.bf16.gmra.mxu0 %v644
        %v814 = vpop.f32.mrf.mxu0
        %v815 = vadd.f32 %v367, %v814
        %v816 = vpop.f32.mrf.mxu0
        %v817 = vadd.f32 %v367, %v816
        %818 = vmatmul.bf16.gmra.mxu0 %v647
        %v819 = vpop.f32.mrf.mxu0
        %v820 = vadd.f32 %v367, %v819
        %v821 = vpop.f32.mrf.mxu0
        %v822 = vadd.f32 %v367, %v821
        %823 = vmatmul.bf16.gmra.mxu0 %v650
        %v824 = vpop.f32.mrf.mxu0
        %v825 = vadd.f32 %v367, %v824
        %v826 = vpop.f32.mrf.mxu0
        %v827 = vadd.f32 %v367, %v826
        %828 = vmatmul.bf16.gmra.mxu0 %v653
        %v829 = vpop.f32.mrf.mxu0
        %v830 = vadd.f32 %v367, %v829
        %v831 = vpop.f32.mrf.mxu0
        %v832 = vadd.f32 %v367, %v831
        %833 = vmatmul.bf16.gmra.mxu0 %v656
        %v834 = vpop.f32.mrf.mxu0
        %v835 = vadd.f32 %v367, %v834
        %v836 = vpop.f32.mrf.mxu0
        %v837 = vadd.f32 %v367, %v836
        %838 = vmatmul.bf16.gmra.mxu0 %v659
        %v839 = vpop.f32.mrf.mxu0
        %v840 = vadd.f32 %v367, %v839
        %v841 = vpop.f32.mrf.mxu0
        %v842 = vadd.f32 %v367, %v841
        %843 = vmatmul.bf16.gmra.mxu0 %v662
        %v844 = vpop.f32.mrf.mxu0
        %v845 = vadd.f32 %v367, %v844
        %v846 = vpop.f32.mrf.mxu0
        %v847 = vadd.f32 %v367, %v846
        %848 = vmatmul.bf16.gmra.mxu0 %v665
        %v849 = vpop.f32.mrf.mxu0
        %v850 = vadd.f32 %v367, %v849
        %v851 = vpop.f32.mrf.mxu0
        %v852 = vadd.f32 %v367, %v851
        %853 = vmatmul.bf16.gmra.mxu0 %v668
        %v854 = vpop.f32.mrf.mxu0
        %v855 = vadd.f32 %v367, %v854
        %v856 = vpop.f32.mrf.mxu0
        %v857 = vadd.f32 %v367, %v856
        %858 = vdwg.mxu0
        %v859 = vmax.f32 %v680, 0.0
        %v860 = vmax.f32 %v682, 0.0
        %v861 = vmax.f32 %v685, 0.0
        %v862 = vmax.f32 %v687, 0.0
        %v863 = vmax.f32 %v690, 0.0
        %v864 = vmax.f32 %v692, 0.0
        %v865 = vmax.f32 %v695, 0.0
        %v866 = vmax.f32 %v697, 0.0
        %v867 = vmax.f32 %v700, 0.0
        %v868 = vmax.f32 %v702, 0.0
        %v869 = vmax.f32 %v705, 0.0
        %v870 = vmax.f32 %v707, 0.0
        %v871 = vmax.f32 %v710, 0.0
        %v872 = vmax.f32 %v712, 0.0
        %v873 = vmax.f32 %v715, 0.0
        %v874 = vmax.f32 %v717, 0.0
        %v875 = vmax.f32 %v720, 0.0
        %v876 = vmax.f32 %v722, 0.0
        %v877 = vmax.f32 %v725, 0.0
        %v878 = vmax.f32 %v727, 0.0
        %v879 = vmax.f32 %v730, 0.0
        %v880 = vmax.f32 %v732, 0.0
        %v881 = vmax.f32 %v735, 0.0
        %v882 = vmax.f32 %v737, 0.0
        %v883 = vmax.f32 %v740, 0.0
        %v884 = vmax.f32 %v742, 0.0
        %v885 = vmax.f32 %v745, 0.0
        %v886 = vmax.f32 %v747, 0.0
        %v887 = vmax.f32 %v750, 0.0
        %v888 = vmax.f32 %v752, 0.0
        %v889 = vmax.f32 %v755, 0.0
        %v890 = vmax.f32 %v757, 0.0
        %v891 = vmax.f32 %v760, 0.0
        %v892 = vmax.f32 %v762, 0.0
        %v893 = vmax.f32 %v765, 0.0
        %v894 = vmax.f32 %v767, 0.0
        %v895 = vmax.f32 %v770, 0.0
        %v896 = vmax.f32 %v772, 0.0
        %v897 = vmax.f32 %v775, 0.0
        %v898 = vmax.f32 %v777, 0.0
        %v899 = vmax.f32 %v780, 0.0
        %v900 = vmax.f32 %v782, 0.0
        %v901 = vmax.f32 %v785, 0.0
        %v902 = vmax.f32 %v787, 0.0
        %v903 = vmax.f32 %v790, 0.0
        %v904 = vmax.f32 %v792, 0.0
        %v905 = vmax.f32 %v795, 0.0
        %v906 = vmax.f32 %v797, 0.0
        %v907 = vmax.f32 %v800, 0.0
        %v908 = vmax.f32 %v802, 0.0
        %v909 = vmax.f32 %v805, 0.0
        %v910 = vmax.f32 %v807, 0.0
        %v911 = vmax.f32 %v810, 0.0
        %v912 = vmax.f32 %v812, 0.0
        %v913 = vmax.f32 %v815, 0.0
        %v914 = vmax.f32 %v817, 0.0
        %v915 = vmax.f32 %v820, 0.0
        %v916 = vmax.f32 %v822, 0.0
        %v917 = vmax.f32 %v825, 0.0
        %v918 = vmax.f32 %v827, 0.0
        %v919 = vmax.f32 %v830, 0.0
        %v920 = vmax.f32 %v832, 0.0
        %v921 = vmax.f32 %v835, 0.0
        %v922 = vmax.f32 %v837, 0.0
        %v923 = vmax.f32 %v840, 0.0
        %v924 = vmax.f32 %v842, 0.0
        %v925 = vmax.f32 %v845, 0.0
        %v926 = vmax.f32 %v847, 0.0
        %v927 = vmax.f32 %v850, 0.0
        %v928 = vmax.f32 %v852, 0.0
        %v929 = vmax.f32 %v855, 0.0
        %v930 = vmax.f32 %v857, 0.0
        %v931 = vmax.f32 %v859, %v862
        %v932 = vmax.f32 %v860, %v863
        %v933 = vmax.f32 %v861, %v864
        %v934 = vmax.f32 %v865, %v868
        %v935 = vmax.f32 %v866, %v869
        %v936 = vmax.f32 %v867, %v870
        %v937 = vmax.f32 %v871, %v874
        %v938 = vmax.f32 %v872, %v875
        %v939 = vmax.f32 %v873, %v876
        %v940 = vmax.f32 %v877, %v880
        %v941 = vmax.f32 %v878, %v881
        %v942 = vmax.f32 %v879, %v882
        %v943 = vmax.f32 %v883, %v886
        %v944 = vmax.f32 %v884, %v887
        %v945 = vmax.f32 %v885, %v888
        %v946 = vmax.f32 %v889, %v892
        %v947 = vmax.f32 %v890, %v893
        %v948 = vmax.f32 %v891, %v894
        %v949 = vmax.f32 %v895, %v898
        %v950 = vmax.f32 %v896, %v899
        %v951 = vmax.f32 %v897, %v900
        %v952 = vmax.f32 %v901, %v904
        %v953 = vmax.f32 %v902, %v905
        %v954 = vmax.f32 %v903, %v906
        %v955 = vmax.f32 %v907, %v910
        %v956 = vmax.f32 %v908, %v911
        %v957 = vmax.f32 %v909, %v912
        %v958 = vmax.f32 %v913, %v916
        %v959 = vmax.f32 %v914, %v917
        %v960 = vmax.f32 %v915, %v918
        %v961 = vmax.f32 %v919, %v922
        %v962 = vmax.f32 %v920, %v923
        %v963 = vmax.f32 %v921, %v924
        %v964 = vmax.f32 %v925, %v928
        %v965 = vmax.f32 %v926, %v929
        %v966 = vmax.f32 %v927, %v930
        %967 = vst [vmem:[#allocation2] sm:$0xff] %v931
        %968 = vst [vmem:[#allocation2 + $0x8] sm:$0xff] %v932
        %969 = vst [vmem:[#allocation2 + $0x10] sm:$0xff] %v933
        %970 = vst [vmem:[#allocation2 + $0x18] sm:$0xff] %v934
        %971 = vst [vmem:[#allocation2 + $0x20] sm:$0xff] %v935
        %972 = vst [vmem:[#allocation2 + $0x28] sm:$0xff] %v936
        %973 = vst [vmem:[#allocation2 + $0x30] sm:$0xff] %v937
        %974 = vst [vmem:[#allocation2 + $0x38] sm:$0xff] %v938
        %975 = vst [vmem:[#allocation2 + $0x40] sm:$0xff] %v939
        %976 = vst [vmem:[#allocation2 + $0x48] sm:$0xff] %v940
        %977 = vst [vmem:[#allocation2 + $0x50] sm:$0xff] %v941
        %978 = vst [vmem:[#allocation2 + $0x58] sm:$0xff] %v942
        %979 = vst [vmem:[#allocation2 + $0x60] sm:$0xff] %v943
        %980 = vst [vmem:[#allocation2 + $0x68] sm:$0xff] %v944
        %981 = vst [vmem:[#allocation2 + $0x70] sm:$0xff] %v945
        %982 = vst [vmem:[#allocation2 + $0x78] sm:$0xff] %v946
        %983 = vst [vmem:[#allocation2 + $0x80] sm:$0xff] %v947
        %984 = vst [vmem:[#allocation2 + $0x88] sm:$0xff] %v948
        %985 = vst [vmem:[#allocation2 + $0x90] sm:$0xff] %v949
        %986 = vst [vmem:[#allocation2 + $0x98] sm:$0xff] %v950
        %987 = vst [vmem:[#allocation2 + $0xa0] sm:$0xff] %v951
        %988 = vst [vmem:[#allocation2 + $0xa8] sm:$0xff] %v952
        %989 = vst [vmem:[#allocation2 + $0xb0] sm:$0xff] %v953
        %990 = vst [vmem:[#allocation2 + $0xb8] sm:$0xff] %v954
        %991 = vst [vmem:[#allocation2 + $0xc0] sm:$0xff] %v955
        %992 = vst [vmem:[#allocation2 + $0xc8] sm:$0xff] %v956
        %993 = vst [vmem:[#allocation2 + $0xd0] sm:$0xff] %v957
        %994 = vst [vmem:[#allocation2 + $0xd8] sm:$0xff] %v958
        %995 = vst [vmem:[#allocation2 + $0xe0] sm:$0xff] %v959
        %996 = vst [vmem:[#allocation2 + $0xe8] sm:$0xff] %v960
        %997 = vst [vmem:[#allocation2 + $0xf0] sm:$0xff] %v961
        %998 = vst [vmem:[#allocation2 + $0xf8] sm:$0xff] %v962
        %999 = vst [vmem:[#allocation2 + $0x100] sm:$0xff] %v963
        %1000 = vst [vmem:[#allocation2 + $0x108] sm:$0xff] %v964
        %1001 = vst [vmem:[#allocation2 + $0x110] sm:$0xff] %v965
        %1002 = vst [vmem:[#allocation2 + $0x118] sm:$0xff] %v966
        %v1003 = vld [vmem:[#allocation2] ss:$2 sm:$0xff]
        %s1004 = scalar_lea.vmem [#allocation2], 16
        %v1005 = vld [vmem:[%s1004] ss:$2 sm:$0xf]
        %s1006 = scalar_lea.vmem [#allocation2], 24
        %v1007 = vld [vmem:[%s1006] ss:$2 sm:$0xff]
        %s1008 = scalar_lea.vmem [#allocation2], 40
        %v1009 = vld [vmem:[%s1008] ss:$2 sm:$0xf]
        %s1010 = scalar_lea.vmem [#allocation2], 48
        %v1011 = vld [vmem:[%s1010] ss:$2 sm:$0xff]
        %s1012 = scalar_lea.vmem [#allocation2], 64
        %v1013 = vld [vmem:[%s1012] ss:$2 sm:$0xf]
        %s1014 = scalar_lea.vmem [#allocation2], 72
        %v1015 = vld [vmem:[%s1014] ss:$2 sm:$0xff]
        %s1016 = scalar_lea.vmem [#allocation2], 88
        %v1017 = vld [vmem:[%s1016] ss:$2 sm:$0xf]
        %s1018 = scalar_lea.vmem [#allocation2], 96
        %v1019 = vld [vmem:[%s1018] ss:$2 sm:$0xff]
        %s1020 = scalar_lea.vmem [#allocation2], 112
        %v1021 = vld [vmem:[%s1020] ss:$2 sm:$0xf]
        %s1022 = scalar_lea.vmem [#allocation2], 120
        %v1023 = vld [vmem:[%s1022] ss:$2 sm:$0xff]
        %s1024 = scalar_lea.vmem [#allocation2], 136
        %v1025 = vld [vmem:[%s1024] ss:$2 sm:$0xf]
        %s1026 = scalar_lea.vmem [#allocation2], 144
        %v1027 = vld [vmem:[%s1026] ss:$2 sm:$0xff]
        %s1028 = scalar_lea.vmem [#allocation2], 160
        %v1029 = vld [vmem:[%s1028] ss:$2 sm:$0xf]
        %s1030 = scalar_lea.vmem [#allocation2], 168
        %v1031 = vld [vmem:[%s1030] ss:$2 sm:$0xff]
        %s1032 = scalar_lea.vmem [#allocation2], 184
        %v1033 = vld [vmem:[%s1032] ss:$2 sm:$0xf]
        %s1034 = scalar_lea.vmem [#allocation2], 192
        %v1035 = vld [vmem:[%s1034] ss:$2 sm:$0xff]
        %s1036 = scalar_lea.vmem [#allocation2], 208
        %v1037 = vld [vmem:[%s1036] ss:$2 sm:$0xf]
        %s1038 = scalar_lea.vmem [#allocation2], 216
        %v1039 = vld [vmem:[%s1038] ss:$2 sm:$0xff]
        %s1040 = scalar_lea.vmem [#allocation2], 232
        %v1041 = vld [vmem:[%s1040] ss:$2 sm:$0xf]
        %s1042 = scalar_lea.vmem [#allocation2], 240
        %v1043 = vld [vmem:[%s1042] ss:$2 sm:$0xff]
        %s1044 = scalar_lea.vmem [#allocation2], 256
        %v1045 = vld [vmem:[%s1044] ss:$2 sm:$0xf]
        %s1046 = scalar_lea.vmem [#allocation2], 264
        %v1047 = vld [vmem:[%s1046] ss:$2 sm:$0xff]
        %s1048 = scalar_lea.vmem [#allocation2], 280
        %v1049 = vld [vmem:[%s1048] ss:$2 sm:$0xf]
        %s1050 = scalar_lea.vmem [#allocation2], 1
        %v1051 = vld [vmem:[%s1050] ss:$2 sm:$0xff]
        %s1052 = scalar_lea.vmem [#allocation2], 17
        %v1053 = vld [vmem:[%s1052] ss:$2 sm:$0xf]
        %s1054 = scalar_lea.vmem [#allocation2], 25
        %v1055 = vld [vmem:[%s1054] ss:$2 sm:$0xff]
        %s1056 = scalar_lea.vmem [#allocation2], 41
        %v1057 = vld [vmem:[%s1056] ss:$2 sm:$0xf]
        %s1058 = scalar_lea.vmem [#allocation2], 49
        %v1059 = vld [vmem:[%s1058] ss:$2 sm:$0xff]
        %s1060 = scalar_lea.vmem [#allocation2], 65
        %v1061 = vld [vmem:[%s1060] ss:$2 sm:$0xf]
        %s1062 = scalar_lea.vmem [#allocation2], 73
        %v1063 = vld [vmem:[%s1062] ss:$2 sm:$0xff]
        %s1064 = scalar_lea.vmem [#allocation2], 89
        %v1065 = vld [vmem:[%s1064] ss:$2 sm:$0xf]
        %s1066 = scalar_lea.vmem [#allocation2], 97
        %v1067 = vld [vmem:[%s1066] ss:$2 sm:$0xff]
        %s1068 = scalar_lea.vmem [#allocation2], 113
        %v1069 = vld [vmem:[%s1068] ss:$2 sm:$0xf]
        %s1070 = scalar_lea.vmem [#allocation2], 121
        %v1071 = vld [vmem:[%s1070] ss:$2 sm:$0xff]
        %s1072 = scalar_lea.vmem [#allocation2], 137
        %v1073 = vld [vmem:[%s1072] ss:$2 sm:$0xf]
        %s1074 = scalar_lea.vmem [#allocation2], 145
        %v1075 = vld [vmem:[%s1074] ss:$2 sm:$0xff]
        %s1076 = scalar_lea.vmem [#allocation2], 161
        %v1077 = vld [vmem:[%s1076] ss:$2 sm:$0xf]
        %s1078 = scalar_lea.vmem [#allocation2], 169
        %v1079 = vld [vmem:[%s1078] ss:$2 sm:$0xff]
        %s1080 = scalar_lea.vmem [#allocation2], 185
        %v1081 = vld [vmem:[%s1080] ss:$2 sm:$0xf]
        %s1082 = scalar_lea.vmem [#allocation2], 193
        %v1083 = vld [vmem:[%s1082] ss:$2 sm:$0xff]
        %s1084 = scalar_lea.vmem [#allocation2], 209
        %v1085 = vld [vmem:[%s1084] ss:$2 sm:$0xf]
        %s1086 = scalar_lea.vmem [#allocation2], 217
        %v1087 = vld [vmem:[%s1086] ss:$2 sm:$0xff]
        %s1088 = scalar_lea.vmem [#allocation2], 233
        %v1089 = vld [vmem:[%s1088] ss:$2 sm:$0xf]
        %s1090 = scalar_lea.vmem [#allocation2], 241
        %v1091 = vld [vmem:[%s1090] ss:$2 sm:$0xff]
        %s1092 = scalar_lea.vmem [#allocation2], 257
        %v1093 = vld [vmem:[%s1092] ss:$2 sm:$0xf]
        %s1094 = scalar_lea.vmem [#allocation2], 265
        %v1095 = vld [vmem:[%s1094] ss:$2 sm:$0xff]
        %s1096 = scalar_lea.vmem [#allocation2], 281
        %v1097 = vld [vmem:[%s1096] ss:$2 sm:$0xf]
        %v1098 = vmax.f32 %v1003, %v1051
        %v1099 = vmax.f32 %v1005, %v1053
        %v1100 = vmax.f32 %v1007, %v1055
        %v1101 = vmax.f32 %v1009, %v1057
        %v1102 = vmax.f32 %v1011, %v1059
        %v1103 = vmax.f32 %v1013, %v1061
        %v1104 = vmax.f32 %v1015, %v1063
        %v1105 = vmax.f32 %v1017, %v1065
        %v1106 = vmax.f32 %v1019, %v1067
        %v1107 = vmax.f32 %v1021, %v1069
        %v1108 = vmax.f32 %v1023, %v1071
        %v1109 = vmax.f32 %v1025, %v1073
        %v1110 = vmax.f32 %v1027, %v1075
        %v1111 = vmax.f32 %v1029, %v1077
        %v1112 = vmax.f32 %v1031, %v1079
        %v1113 = vmax.f32 %v1033, %v1081
        %v1114 = vmax.f32 %v1035, %v1083
        %v1115 = vmax.f32 %v1037, %v1085
        %v1116 = vmax.f32 %v1039, %v1087
        %v1117 = vmax.f32 %v1041, %v1089
        %v1118 = vmax.f32 %v1043, %v1091
        %v1119 = vmax.f32 %v1045, %v1093
        %v1120 = vmax.f32 %v1047, %v1095
        %v1121 = vmax.f32 %v1049, %v1097
        %v1122 = vpack.c.bf16 %v1098, %v1098
        %v1123 = vpack.c.bf16 %v1099, %v1099
        %v1124 = vpack.c.bf16 %v1100, %v1100
        %v1125 = vpack.c.bf16 %v1101, %v1101
        %v1126 = vpack.c.bf16 %v1102, %v1102
        %v1127 = vpack.c.bf16 %v1103, %v1103
        %v1128 = vpack.c.bf16 %v1104, %v1104
        %v1129 = vpack.c.bf16 %v1105, %v1105
        %v1130 = vpack.c.bf16 %v1106, %v1106
        %v1131 = vpack.c.bf16 %v1107, %v1107
        %v1132 = vpack.c.bf16 %v1108, %v1108
        %v1133 = vpack.c.bf16 %v1109, %v1109
        %v1134 = vpack.c.bf16 %v1110, %v1110
        %v1135 = vpack.c.bf16 %v1111, %v1111
        %v1136 = vpack.c.bf16 %v1112, %v1112
        %v1137 = vpack.c.bf16 %v1113, %v1113
        %v1138 = vpack.c.bf16 %v1114, %v1114
        %v1139 = vpack.c.bf16 %v1115, %v1115
        %v1140 = vpack.c.bf16 %v1116, %v1116
        %v1141 = vpack.c.bf16 %v1117, %v1117
        %v1142 = vpack.c.bf16 %v1118, %v1118
        %v1143 = vpack.c.bf16 %v1119, %v1119
        %v1144 = vpack.c.bf16 %v1120, %v1120
        %v1145 = vpack.c.bf16 %v1121, %v1121
        %1146 = vst [vmem:[#allocation3] sm:$0xf] %v1122
        %1147 = vst [vmem:[#allocation3 + $0x4] sm:$0x3] %v1123
        %1148 = vst [vmem:[#allocation3 + $0x8] sm:$0xf] %v1124
        %1149 = vst [vmem:[#allocation3 + $0xc] sm:$0x3] %v1125
        %1150 = vst [vmem:[#allocation3 + $0x10] sm:$0xf] %v1126
        %1151 = vst [vmem:[#allocation3 + $0x14] sm:$0x3] %v1127
        %1152 = vst [vmem:[#allocation3 + $0x18] sm:$0xf] %v1128
        %1153 = vst [vmem:[#allocation3 + $0x1c] sm:$0x3] %v1129
        %1154 = vst [vmem:[#allocation3 + $0x20] sm:$0xf] %v1130
        %1155 = vst [vmem:[#allocation3 + $0x24] sm:$0x3] %v1131
        %1156 = vst [vmem:[#allocation3 + $0x28] sm:$0xf] %v1132
        %1157 = vst [vmem:[#allocation3 + $0x2c] sm:$0x3] %v1133
        %1158 = vst [vmem:[#allocation3 + $0x30] sm:$0xf] %v1134
        %1159 = vst [vmem:[#allocation3 + $0x34] sm:$0x3] %v1135
        %1160 = vst [vmem:[#allocation3 + $0x38] sm:$0xf] %v1136
        %1161 = vst [vmem:[#allocation3 + $0x3c] sm:$0x3] %v1137
        %1162 = vst [vmem:[#allocation3 + $0x40] sm:$0xf] %v1138
        %1163 = vst [vmem:[#allocation3 + $0x44] sm:$0x3] %v1139
        %1164 = vst [vmem:[#allocation3 + $0x48] sm:$0xf] %v1140
        %1165 = vst [vmem:[#allocation3 + $0x4c] sm:$0x3] %v1141
        %1166 = vst [vmem:[#allocation3 + $0x50] sm:$0xf] %v1142
        %1167 = vst [vmem:[#allocation3 + $0x54] sm:$0x3] %v1143
        %1168 = vst [vmem:[#allocation3 + $0x58] sm:$0xf] %v1144
        %1169 = vst [vmem:[#allocation3 + $0x5c] sm:$0x3] %v1145
        %v1170 = vld [vmem:[#allocation3] sm:$0xf]
        %v1171 = vld [vmem:[#allocation3 + $0x4] sm:$0x3]
        %v1172 = vld [vmem:[#allocation3 + $0x8] sm:$0xf]
        %v1173 = vld [vmem:[#allocation3 + $0xc] sm:$0x3]
        %v1174 = vld [vmem:[#allocation3 + $0x10] sm:$0xf]
        %v1175 = vld [vmem:[#allocation3 + $0x14] sm:$0x3]
        %v1176 = vld [vmem:[#allocation3 + $0x18] sm:$0xf]
        %v1177 = vld [vmem:[#allocation3 + $0x1c] sm:$0x3]
        %v1178 = vld [vmem:[#allocation3 + $0x20] sm:$0xf]
        %v1179 = vld [vmem:[#allocation3 + $0x24] sm:$0x3]
        %v1180 = vld [vmem:[#allocation3 + $0x28] sm:$0xf]
        %v1181 = vld [vmem:[#allocation3 + $0x2c] sm:$0x3]
        %v1182 = vld [vmem:[#allocation3 + $0x30] sm:$0xf]
        %v1183 = vld [vmem:[#allocation3 + $0x34] sm:$0x3]
        %v1184 = vld [vmem:[#allocation3 + $0x38] sm:$0xf]
        %v1185 = vld [vmem:[#allocation3 + $0x3c] sm:$0x3]
        %v1186 = vld [vmem:[#allocation3 + $0x40] sm:$0xf]
        %v1187 = vld [vmem:[#allocation3 + $0x44] sm:$0x3]
        %v1188 = vld [vmem:[#allocation3 + $0x48] sm:$0xf]
        %v1189 = vld [vmem:[#allocation3 + $0x4c] sm:$0x3]
        %v1190 = vld [vmem:[#allocation3 + $0x50] sm:$0xf]
        %v1191 = vld [vmem:[#allocation3 + $0x54] sm:$0x3]
        %v1192 = vld [vmem:[#allocation3 + $0x58] sm:$0xf]
        %v1193 = vld [vmem:[#allocation3 + $0x5c] sm:$0x3]
        %v1194 = vld [vmem:[#allocation9] sm:$0xf]
        %v1195 = vld [vmem:[#allocation9 + $0x4] sm:$0xf]
        %v1196 = vld [vmem:[#allocation9 + $0x8] sm:$0xf]
        %v1197 = vld [vmem:[#allocation9 + $0xc] sm:$0xf]
        %v1198 = vld [vmem:[#allocation9 + $0x10] sm:$0xf]
        %v1199 = vld [vmem:[#allocation9 + $0x14] sm:$0xf]
        %v1200 = vld [vmem:[#allocation9 + $0x18] sm:$0xf]
        %v1201 = vld [vmem:[#allocation9 + $0x1c] sm:$0xf]
        %v1202 = vld [vmem:[#allocation9 + $0x20] sm:$0xf]
        %v1203 = vld [vmem:[#allocation9 + $0x24] sm:$0xf]
        %v1204 = vld [vmem:[#allocation9 + $0x28] sm:$0xf]
        %v1205 = vld [vmem:[#allocation9 + $0x2c] sm:$0xf]
        %v1206 = vld [vmem:[#allocation9 + $0x30] sm:$0xf]
        %v1207 = vld [vmem:[#allocation9 + $0x34] sm:$0xf]
        %v1208 = vld [vmem:[#allocation9 + $0x38] sm:$0xf]
        %v1209 = vld [vmem:[#allocation9 + $0x3c] sm:$0xf]
        %vm1210 = vsmask.f32 3328
        %vm1211 = vsmask.f32 7440
        %vm1212 = vmor %vm1210, %vm1211
        %v1214 = vshrl.u32 %v1170, 16
        %v1216 = vrot.slane %v1214, 4
        %v1217 = vshll.u32 %v1170, 16
        %v1219 = vrot.slane %v1217, 5
        %v1220 = vor.u32 %v1216, %v1219
        %v1221 = vrot.slane %v1220, 4
        %v1223 = vshll.u32 %v1171, 16
        %v1225 = vrot.slane %v1223, 5
        %v1226 = vsel %vm1212, %v1221, %v1225
        %v1228 = vshrl.u32 %v1172, 16
        %v1230 = vrot.slane %v1228, 4
        %v1231 = vshll.u32 %v1172, 16
        %v1233 = vrot.slane %v1231, 5
        %v1234 = vor.u32 %v1230, %v1233
        %v1235 = vrot.slane %v1234, 4
        %v1237 = vshll.u32 %v1173, 16
        %v1239 = vrot.slane %v1237, 5
        %v1240 = vsel %vm1212, %v1235, %v1239
        %v1242 = vshrl.u32 %v1174, 16
        %v1244 = vrot.slane %v1242, 4
        %v1245 = vshll.u32 %v1174, 16
        %v1247 = vrot.slane %v1245, 5
        %v1248 = vor.u32 %v1244, %v1247
        %v1249 = vrot.slane %v1248, 4
        %v1251 = vshll.u32 %v1175, 16
        %v1253 = vrot.slane %v1251, 5
        %v1254 = vsel %vm1212, %v1249, %v1253
        %v1256 = vshrl.u32 %v1176, 16
        %v1258 = vrot.slane %v1256, 4
        %v1259 = vshll.u32 %v1176, 16
        %v1261 = vrot.slane %v1259, 5
        %v1262 = vor.u32 %v1258, %v1261
        %v1263 = vrot.slane %v1262, 4
        %v1265 = vshll.u32 %v1177, 16
        %v1267 = vrot.slane %v1265, 5
        %v1268 = vsel %vm1212, %v1263, %v1267
        %v1270 = vshrl.u32 %v1178, 16
        %v1272 = vrot.slane %v1270, 4
        %v1273 = vshll.u32 %v1178, 16
        %v1275 = vrot.slane %v1273, 5
        %v1276 = vor.u32 %v1272, %v1275
        %v1277 = vrot.slane %v1276, 4
        %v1279 = vshll.u32 %v1179, 16
        %v1281 = vrot.slane %v1279, 5
        %v1282 = vsel %vm1212, %v1277, %v1281
        %v1284 = vshrl.u32 %v1180, 16
        %v1286 = vrot.slane %v1284, 4
        %v1287 = vshll.u32 %v1180, 16
        %v1289 = vrot.slane %v1287, 5
        %v1290 = vor.u32 %v1286, %v1289
        %v1291 = vrot.slane %v1290, 4
        %v1293 = vshll.u32 %v1181, 16
        %v1295 = vrot.slane %v1293, 5
        %v1296 = vsel %vm1212, %v1291, %v1295
        %v1298 = vshrl.u32 %v1182, 16
        %v1300 = vrot.slane %v1298, 4
        %v1301 = vshll.u32 %v1182, 16
        %v1303 = vrot.slane %v1301, 5
        %v1304 = vor.u32 %v1300, %v1303
        %v1305 = vrot.slane %v1304, 4
        %v1307 = vshll.u32 %v1183, 16
        %v1309 = vrot.slane %v1307, 5
        %v1310 = vsel %vm1212, %v1305, %v1309
        %v1312 = vshrl.u32 %v1184, 16
        %v1314 = vrot.slane %v1312, 4
        %v1315 = vshll.u32 %v1184, 16
        %v1317 = vrot.slane %v1315, 5
        %v1318 = vor.u32 %v1314, %v1317
        %v1319 = vrot.slane %v1318, 4
        %v1321 = vshll.u32 %v1185, 16
        %v1323 = vrot.slane %v1321, 5
        %v1324 = vsel %vm1212, %v1319, %v1323
        %v1325 = vld [vmem:[#allocation9 + $0x40] sm:$0xf]
        %v1326 = vld [vmem:[#allocation9 + $0x44] sm:$0xf]
        %v1327 = vld [vmem:[#allocation9 + $0x48] sm:$0xf]
        %v1328 = vld [vmem:[#allocation9 + $0x4c] sm:$0xf]
        %v1329 = vld [vmem:[#allocation9 + $0x50] sm:$0xf]
        %v1330 = vld [vmem:[#allocation9 + $0x54] sm:$0xf]
        %v1331 = vld [vmem:[#allocation9 + $0x58] sm:$0xf]
        %v1332 = vld [vmem:[#allocation9 + $0x5c] sm:$0xf]
        %v1333 = vld [vmem:[#allocation9 + $0x60] sm:$0xf]
        %v1334 = vld [vmem:[#allocation9 + $0x64] sm:$0xf]
        %v1335 = vld [vmem:[#allocation9 + $0x68] sm:$0xf]
        %v1336 = vld [vmem:[#allocation9 + $0x6c] sm:$0xf]
        %v1337 = vld [vmem:[#allocation9 + $0x70] sm:$0xf]
        %v1338 = vld [vmem:[#allocation9 + $0x74] sm:$0xf]
        %v1339 = vld [vmem:[#allocation9 + $0x78] sm:$0xf]
        %v1340 = vld [vmem:[#allocation9 + $0x7c] sm:$0xf]
        %v1341 = vunpack.c.l.b16 %v1226
        %v1342 = vunpack.c.l.b16 %v1240
        %v1343 = vunpack.c.l.b16 %v1254
        %v1344 = vunpack.c.l.b16 %v1268
        %v1345 = vunpack.c.l.b16 %v1282
        %v1346 = vunpack.c.l.b16 %v1296
        %v1347 = vunpack.c.l.b16 %v1310
        %v1348 = vunpack.c.l.b16 %v1324
        %v1349 = vpack.c.b16 %v1342, %v1341
        %v1350 = vpack.c.b16 %v1344, %v1343
        %v1351 = vpack.c.b16 %v1346, %v1345
        %v1352 = vpack.c.b16 %v1348, %v1347
        %v1373 = vunpack.c.l.b16 %v1325
        %v1374 = vunpack.c.l.b16 %v1326
        %v1375 = vunpack.c.l.b16 %v1327
        %v1376 = vunpack.c.l.b16 %v1328
        %v1377 = vunpack.c.l.b16 %v1329
        %v1378 = vunpack.c.l.b16 %v1330
        %v1379 = vunpack.c.l.b16 %v1331
        %v1380 = vunpack.c.l.b16 %v1332
        %v1381 = vunpack.c.l.b16 %v1333
        %v1382 = vunpack.c.l.b16 %v1334
        %v1383 = vunpack.c.l.b16 %v1335
        %v1384 = vunpack.c.l.b16 %v1336
        %v1385 = vunpack.c.l.b16 %v1337
        %v1386 = vunpack.c.l.b16 %v1338
        %v1387 = vunpack.c.l.b16 %v1339
        %v1388 = vunpack.c.l.b16 %v1340
        %v1389 = vpack.c.b16 %v1374, %v1373
        %v1390 = vpack.c.b16 %v1376, %v1375
        %v1391 = vpack.c.b16 %v1378, %v1377
        %v1392 = vpack.c.b16 %v1380, %v1379
        %v1393 = vpack.c.b16 %v1382, %v1381
        %v1394 = vpack.c.b16 %v1384, %v1383
        %v1395 = vpack.c.b16 %v1386, %v1385
        %v1396 = vpack.c.b16 %v1388, %v1387
        %1405 = vmatpush.bf16.msra.mxu0 %v1396
        %1406 = vmatpush.bf16.msra.mxu0 %v1395
        %1407 = vmatpush.bf16.msra.mxu0 %v1394
        %1408 = vmatpush.bf16.msra.mxu0 %v1393
        %1409 = vmatpush.bf16.msra.mxu0 %v1392
        %1410 = vmatpush.bf16.msra.mxu0 %v1391
        %1411 = vmatpush.bf16.msra.mxu0 %v1390
        %1412 = vmatpush.bf16.msra.mxu0 %v1389
        %1413 = vmatmul.bf16.gmra.mxu0 %v1349
        %v1414 = vpop.f32.mrf.mxu0
        %v1415 = vadd.f32 0.0, %v1414
        %v1416 = vpop.f32.mrf.mxu0
        %v1417 = vadd.f32 0.0, %v1416
        %1418 = vmatmul.bf16.gmra.mxu0 %v1350
        %v1419 = vpop.f32.mrf.mxu0
        %v1420 = vadd.f32 0.0, %v1419
        %v1421 = vpop.f32.mrf.mxu0
        %v1422 = vadd.f32 0.0, %v1421
        %1423 = vmatmul.bf16.gmra.mxu0 %v1351
        %v1424 = vpop.f32.mrf.mxu0
        %v1425 = vadd.f32 0.0, %v1424
        %v1426 = vpop.f32.mrf.mxu0
        %v1427 = vadd.f32 0.0, %v1426
        %1428 = vmatmul.bf16.gmra.mxu0 %v1352
        %v1429 = vpop.f32.mrf.mxu0
        %v1430 = vadd.f32 0.0, %v1429
        %v1431 = vpop.f32.mrf.mxu0
        %v1432 = vadd.f32 0.0, %v1431
        %1433 = vdwg.mxu0
        %v1442 = vunpack.c.l.b16 %v1170
        %v1443 = vunpack.c.l.b16 %v1172
        %v1444 = vunpack.c.l.b16 %v1174
        %v1445 = vunpack.c.l.b16 %v1176
        %v1446 = vunpack.c.l.b16 %v1178
        %v1447 = vunpack.c.l.b16 %v1180
        %v1448 = vunpack.c.l.b16 %v1182
        %v1449 = vunpack.c.l.b16 %v1184
        %v1450 = vpack.c.b16 %v1443, %v1442
        %v1451 = vpack.c.b16 %v1445, %v1444
        %v1452 = vpack.c.b16 %v1447, %v1446
        %v1453 = vpack.c.b16 %v1449, %v1448
        %v1474 = vunpack.c.l.b16 %v1194
        %v1475 = vunpack.c.l.b16 %v1195
        %v1476 = vunpack.c.l.b16 %v1196
        %v1477 = vunpack.c.l.b16 %v1197
        %v1478 = vunpack.c.l.b16 %v1198
        %v1479 = vunpack.c.l.b16 %v1199
        %v1480 = vunpack.c.l.b16 %v1200
        %v1481 = vunpack.c.l.b16 %v1201
        %v1482 = vunpack.c.l.b16 %v1202
        %v1483 = vunpack.c.l.b16 %v1203
        %v1484 = vunpack.c.l.b16 %v1204
        %v1485 = vunpack.c.l.b16 %v1205
        %v1486 = vunpack.c.l.b16 %v1206
        %v1487 = vunpack.c.l.b16 %v1207
        %v1488 = vunpack.c.l.b16 %v1208
        %v1489 = vunpack.c.l.b16 %v1209
        %v1490 = vpack.c.b16 %v1475, %v1474
        %v1491 = vpack.c.b16 %v1477, %v1476
        %v1492 = vpack.c.b16 %v1479, %v1478
        %v1493 = vpack.c.b16 %v1481, %v1480
        %v1494 = vpack.c.b16 %v1483, %v1482
        %v1495 = vpack.c.b16 %v1485, %v1484
        %v1496 = vpack.c.b16 %v1487, %v1486
        %v1497 = vpack.c.b16 %v1489, %v1488
        %1506 = vmatpush.bf16.msra.mxu0 %v1497
        %1507 = vmatpush.bf16.msra.mxu0 %v1496
        %1508 = vmatpush.bf16.msra.mxu0 %v1495
        %1509 = vmatpush.bf16.msra.mxu0 %v1494
        %1510 = vmatpush.bf16.msra.mxu0 %v1493
        %1511 = vmatpush.bf16.msra.mxu0 %v1492
        %1512 = vmatpush.bf16.msra.mxu0 %v1491
        %1513 = vmatpush.bf16.msra.mxu0 %v1490
        %1514 = vmatmul.bf16.gmra.mxu0 %v1450
        %v1515 = vpop.f32.mrf.mxu0
        %v1516 = vadd.f32 %v1415, %v1515
        %v1517 = vpop.f32.mrf.mxu0
        %v1518 = vadd.f32 %v1417, %v1517
        %1519 = vmatmul.bf16.gmra.mxu0 %v1451
        %v1520 = vpop.f32.mrf.mxu0
        %v1521 = vadd.f32 %v1420, %v1520
        %v1522 = vpop.f32.mrf.mxu0
        %v1523 = vadd.f32 %v1422, %v1522
        %1524 = vmatmul.bf16.gmra.mxu0 %v1452
        %v1525 = vpop.f32.mrf.mxu0
        %v1526 = vadd.f32 %v1425, %v1525
        %v1527 = vpop.f32.mrf.mxu0
        %v1528 = vadd.f32 %v1427, %v1527
        %1529 = vmatmul.bf16.gmra.mxu0 %v1453
        %v1530 = vpop.f32.mrf.mxu0
        %v1531 = vadd.f32 %v1430, %v1530
        %v1532 = vpop.f32.mrf.mxu0
        %v1533 = vadd.f32 %v1432, %v1532
        %1534 = vdwg.mxu0
        %vm1543 = vcmask 1042432
        %vm1544 = vcmask 1046532
        %vm1545 = vmor %vm1543, %vm1544
        %v1546 = vrot.slane %v1170, 5
        %v1547 = vrot.slane %v1546, 4
        %v1548 = vrot.slane %v1171, 5
        %v1549 = vsel %vm1545, %v1547, %v1548
        %v1550 = vrot.slane %v1172, 5
        %v1551 = vrot.slane %v1550, 4
        %v1552 = vrot.slane %v1173, 5
        %v1553 = vsel %vm1545, %v1551, %v1552
        %v1554 = vrot.slane %v1174, 5
        %v1555 = vrot.slane %v1554, 4
        %v1556 = vrot.slane %v1175, 5
        %v1557 = vsel %vm1545, %v1555, %v1556
        %v1558 = vrot.slane %v1176, 5
        %v1559 = vrot.slane %v1558, 4
        %v1560 = vrot.slane %v1177, 5
        %v1561 = vsel %vm1545, %v1559, %v1560
        %v1562 = vrot.slane %v1178, 5
        %v1563 = vrot.slane %v1562, 4
        %v1564 = vrot.slane %v1179, 5
        %v1565 = vsel %vm1545, %v1563, %v1564
        %v1566 = vrot.slane %v1180, 5
        %v1567 = vrot.slane %v1566, 4
        %v1568 = vrot.slane %v1181, 5
        %v1569 = vsel %vm1545, %v1567, %v1568
        %v1570 = vrot.slane %v1182, 5
        %v1571 = vrot.slane %v1570, 4
        %v1572 = vrot.slane %v1183, 5
        %v1573 = vsel %vm1545, %v1571, %v1572
        %v1574 = vrot.slane %v1184, 5
        %v1575 = vrot.slane %v1574, 4
        %v1576 = vrot.slane %v1185, 5
        %v1577 = vsel %vm1545, %v1575, %v1576
        %v1578 = vld [vmem:[#allocation9 + $0x80] sm:$0xf]
        %v1579 = vld [vmem:[#allocation9 + $0x84] sm:$0xf]
        %v1580 = vld [vmem:[#allocation9 + $0x88] sm:$0xf]
        %v1581 = vld [vmem:[#allocation9 + $0x8c] sm:$0xf]
        %v1582 = vld [vmem:[#allocation9 + $0x90] sm:$0xf]
        %v1583 = vld [vmem:[#allocation9 + $0x94] sm:$0xf]
        %v1584 = vld [vmem:[#allocation9 + $0x98] sm:$0xf]
        %v1585 = vld [vmem:[#allocation9 + $0x9c] sm:$0xf]
        %v1586 = vld [vmem:[#allocation9 + $0xa0] sm:$0xf]
        %v1587 = vld [vmem:[#allocation9 + $0xa4] sm:$0xf]
        %v1588 = vld [vmem:[#allocation9 + $0xa8] sm:$0xf]
        %v1589 = vld [vmem:[#allocation9 + $0xac] sm:$0xf]
        %v1590 = vld [vmem:[#allocation9 + $0xb0] sm:$0xf]
        %v1591 = vld [vmem:[#allocation9 + $0xb4] sm:$0xf]
        %v1592 = vld [vmem:[#allocation9 + $0xb8] sm:$0xf]
        %v1593 = vld [vmem:[#allocation9 + $0xbc] sm:$0xf]
        %v1594 = vunpack.c.l.b16 %v1549
        %v1595 = vunpack.c.l.b16 %v1553
        %v1596 = vunpack.c.l.b16 %v1557
        %v1597 = vunpack.c.l.b16 %v1561
        %v1598 = vunpack.c.l.b16 %v1565
        %v1599 = vunpack.c.l.b16 %v1569
        %v1600 = vunpack.c.l.b16 %v1573
        %v1601 = vunpack.c.l.b16 %v1577
        %v1602 = vpack.c.b16 %v1595, %v1594
        %v1603 = vpack.c.b16 %v1597, %v1596
        %v1604 = vpack.c.b16 %v1599, %v1598
        %v1605 = vpack.c.b16 %v1601, %v1600
        %v1626 = vunpack.c.l.b16 %v1578
        %v1627 = vunpack.c.l.b16 %v1579
        %v1628 = vunpack.c.l.b16 %v1580
        %v1629 = vunpack.c.l.b16 %v1581
        %v1630 = vunpack.c.l.b16 %v1582
        %v1631 = vunpack.c.l.b16 %v1583
        %v1632 = vunpack.c.l.b16 %v1584
        %v1633 = vunpack.c.l.b16 %v1585
        %v1634 = vunpack.c.l.b16 %v1586
        %v1635 = vunpack.c.l.b16 %v1587
        %v1636 = vunpack.c.l.b16 %v1588
        %v1637 = vunpack.c.l.b16 %v1589
        %v1638 = vunpack.c.l.b16 %v1590
        %v1639 = vunpack.c.l.b16 %v1591
        %v1640 = vunpack.c.l.b16 %v1592
        %v1641 = vunpack.c.l.b16 %v1593
        %v1642 = vpack.c.b16 %v1627, %v1626
        %v1643 = vpack.c.b16 %v1629, %v1628
        %v1644 = vpack.c.b16 %v1631, %v1630
        %v1645 = vpack.c.b16 %v1633, %v1632
        %v1646 = vpack.c.b16 %v1635, %v1634
        %v1647 = vpack.c.b16 %v1637, %v1636
        %v1648 = vpack.c.b16 %v1639, %v1638
        %v1649 = vpack.c.b16 %v1641, %v1640
        %1658 = vmatpush.bf16.msra.mxu0 %v1649
        %1659 = vmatpush.bf16.msra.mxu0 %v1648
        %1660 = vmatpush.bf16.msra.mxu0 %v1647
        %1661 = vmatpush.bf16.msra.mxu0 %v1646
        %1662 = vmatpush.bf16.msra.mxu0 %v1645
        %1663 = vmatpush.bf16.msra.mxu0 %v1644
        %1664 = vmatpush.bf16.msra.mxu0 %v1643
        %1665 = vmatpush.bf16.msra.mxu0 %v1642
        %1666 = vmatmul.bf16.gmra.mxu0 %v1602
        %v1667 = vpop.f32.mrf.mxu0
        %v1668 = vadd.f32 0.0, %v1667
        %v1669 = vpop.f32.mrf.mxu0
        %v1670 = vadd.f32 0.0, %v1669
        %1671 = vmatmul.bf16.gmra.mxu0 %v1603
        %v1672 = vpop.f32.mrf.mxu0
        %v1673 = vadd.f32 0.0, %v1672
        %v1674 = vpop.f32.mrf.mxu0
        %v1675 = vadd.f32 0.0, %v1674
        %1676 = vmatmul.bf16.gmra.mxu0 %v1604
        %v1677 = vpop.f32.mrf.mxu0
        %v1678 = vadd.f32 0.0, %v1677
        %v1679 = vpop.f32.mrf.mxu0
        %v1680 = vadd.f32 0.0, %v1679
        %1681 = vmatmul.bf16.gmra.mxu0 %v1605
        %v1682 = vpop.f32.mrf.mxu0
        %v1683 = vadd.f32 0.0, %v1682
        %v1684 = vpop.f32.mrf.mxu0
        %v1685 = vadd.f32 0.0, %v1684
        %1686 = vdwg.mxu0
        %v1687 = vadd.f32 %v1516, %v1668
        %v1688 = vadd.f32 %v1518, %v1670
        %v1689 = vadd.f32 %v1521, %v1673
        %v1690 = vadd.f32 %v1523, %v1675
        %v1691 = vadd.f32 %v1526, %v1678
        %v1692 = vadd.f32 %v1528, %v1680
        %v1693 = vadd.f32 %v1531, %v1683
        %v1694 = vadd.f32 %v1533, %v1685
        %vm1695 = vsmask.f32 2304
        %vm1696 = vsmask.f32 6416
        %vm1697 = vmor %vm1695, %vm1696
        %v1698 = vrot.slane %v1214, 5
        %v1699 = vrot.slane %v1217, 6
        %v1700 = vor.u32 %v1698, %v1699
        %v1701 = vrot.slane %v1700, 4
        %v1702 = vshrl.u32 %v1171, 16
        %v1704 = vrot.slane %v1702, 5
        %v1705 = vrot.slane %v1223, 6
        %v1706 = vor.u32 %v1704, %v1705
        %v1707 = vsel %vm1697, %v1701, %v1706
        %v1708 = vrot.slane %v1228, 5
        %v1709 = vrot.slane %v1231, 6
        %v1710 = vor.u32 %v1708, %v1709
        %v1711 = vrot.slane %v1710, 4
        %v1712 = vshrl.u32 %v1173, 16
        %v1714 = vrot.slane %v1712, 5
        %v1715 = vrot.slane %v1237, 6
        %v1716 = vor.u32 %v1714, %v1715
        %v1717 = vsel %vm1697, %v1711, %v1716
        %v1718 = vrot.slane %v1242, 5
        %v1719 = vrot.slane %v1245, 6
        %v1720 = vor.u32 %v1718, %v1719
        %v1721 = vrot.slane %v1720, 4
        %v1722 = vshrl.u32 %v1175, 16
        %v1724 = vrot.slane %v1722, 5
        %v1725 = vrot.slane %v1251, 6
        %v1726 = vor.u32 %v1724, %v1725
        %v1727 = vsel %vm1697, %v1721, %v1726
        %v1728 = vrot.slane %v1256, 5
        %v1729 = vrot.slane %v1259, 6
        %v1730 = vor.u32 %v1728, %v1729
        %v1731 = vrot.slane %v1730, 4
        %v1732 = vshrl.u32 %v1177, 16
        %v1734 = vrot.slane %v1732, 5
        %v1735 = vrot.slane %v1265, 6
        %v1736 = vor.u32 %v1734, %v1735
        %v1737 = vsel %vm1697, %v1731, %v1736
        %v1738 = vrot.slane %v1270, 5
        %v1739 = vrot.slane %v1273, 6
        %v1740 = vor.u32 %v1738, %v1739
        %v1741 = vrot.slane %v1740, 4
        %v1742 = vshrl.u32 %v1179, 16
        %v1744 = vrot.slane %v1742, 5
        %v1745 = vrot.slane %v1279, 6
        %v1746 = vor.u32 %v1744, %v1745
        %v1747 = vsel %vm1697, %v1741, %v1746
        %v1748 = vrot.slane %v1284, 5
        %v1749 = vrot.slane %v1287, 6
        %v1750 = vor.u32 %v1748, %v1749
        %v1751 = vrot.slane %v1750, 4
        %v1752 = vshrl.u32 %v1181, 16
        %v1754 = vrot.slane %v1752, 5
        %v1755 = vrot.slane %v1293, 6
        %v1756 = vor.u32 %v1754, %v1755
        %v1757 = vsel %vm1697, %v1751, %v1756
        %v1758 = vrot.slane %v1298, 5
        %v1759 = vrot.slane %v1301, 6
        %v1760 = vor.u32 %v1758, %v1759
        %v1761 = vrot.slane %v1760, 4
        %v1762 = vshrl.u32 %v1183, 16
        %v1764 = vrot.slane %v1762, 5
        %v1765 = vrot.slane %v1307, 6
        %v1766 = vor.u32 %v1764, %v1765
        %v1767 = vsel %vm1697, %v1761, %v1766
        %v1768 = vrot.slane %v1312, 5
        %v1769 = vrot.slane %v1315, 6
        %v1770 = vor.u32 %v1768, %v1769
        %v1771 = vrot.slane %v1770, 4
        %v1772 = vshrl.u32 %v1185, 16
        %v1774 = vrot.slane %v1772, 5
        %v1775 = vrot.slane %v1321, 6
        %v1776 = vor.u32 %v1774, %v1775
        %v1777 = vsel %vm1697, %v1771, %v1776
        %v1778 = vld [vmem:[#allocation9 + $0xc0] sm:$0xf]
        %v1779 = vld [vmem:[#allocation9 + $0xc4] sm:$0xf]
        %v1780 = vld [vmem:[#allocation9 + $0xc8] sm:$0xf]
        %v1781 = vld [vmem:[#allocation9 + $0xcc] sm:$0xf]
        %v1782 = vld [vmem:[#allocation9 + $0xd0] sm:$0xf]
        %v1783 = vld [vmem:[#allocation9 + $0xd4] sm:$0xf]
        %v1784 = vld [vmem:[#allocation9 + $0xd8] sm:$0xf]
        %v1785 = vld [vmem:[#allocation9 + $0xdc] sm:$0xf]
        %v1786 = vld [vmem:[#allocation9 + $0xe0] sm:$0xf]
        %v1787 = vld [vmem:[#allocation9 + $0xe4] sm:$0xf]
        %v1788 = vld [vmem:[#allocation9 + $0xe8] sm:$0xf]
        %v1789 = vld [vmem:[#allocation9 + $0xec] sm:$0xf]
        %v1790 = vld [vmem:[#allocation9 + $0xf0] sm:$0xf]
        %v1791 = vld [vmem:[#allocation9 + $0xf4] sm:$0xf]
        %v1792 = vld [vmem:[#allocation9 + $0xf8] sm:$0xf]
        %v1793 = vld [vmem:[#allocation9 + $0xfc] sm:$0xf]
        %v1794 = vunpack.c.l.b16 %v1707
        %v1795 = vunpack.c.l.b16 %v1717
        %v1796 = vunpack.c.l.b16 %v1727
        %v1797 = vunpack.c.l.b16 %v1737
        %v1798 = vunpack.c.l.b16 %v1747
        %v1799 = vunpack.c.l.b16 %v1757
        %v1800 = vunpack.c.l.b16 %v1767
        %v1801 = vunpack.c.l.b16 %v1777
        %v1802 = vpack.c.b16 %v1795, %v1794
        %v1803 = vpack.c.b16 %v1797, %v1796
        %v1804 = vpack.c.b16 %v1799, %v1798
        %v1805 = vpack.c.b16 %v1801, %v1800
        %v1826 = vunpack.c.l.b16 %v1778
        %v1827 = vunpack.c.l.b16 %v1779
        %v1828 = vunpack.c.l.b16 %v1780
        %v1829 = vunpack.c.l.b16 %v1781
        %v1830 = vunpack.c.l.b16 %v1782
        %v1831 = vunpack.c.l.b16 %v1783
        %v1832 = vunpack.c.l.b16 %v1784
        %v1833 = vunpack.c.l.b16 %v1785
        %v1834 = vunpack.c.l.b16 %v1786
        %v1835 = vunpack.c.l.b16 %v1787
        %v1836 = vunpack.c.l.b16 %v1788
        %v1837 = vunpack.c.l.b16 %v1789
        %v1838 = vunpack.c.l.b16 %v1790
        %v1839 = vunpack.c.l.b16 %v1791
        %v1840 = vunpack.c.l.b16 %v1792
        %v1841 = vunpack.c.l.b16 %v1793
        %v1842 = vpack.c.b16 %v1827, %v1826
        %v1843 = vpack.c.b16 %v1829, %v1828
        %v1844 = vpack.c.b16 %v1831, %v1830
        %v1845 = vpack.c.b16 %v1833, %v1832
        %v1846 = vpack.c.b16 %v1835, %v1834
        %v1847 = vpack.c.b16 %v1837, %v1836
        %v1848 = vpack.c.b16 %v1839, %v1838
        %v1849 = vpack.c.b16 %v1841, %v1840
        %1858 = vmatpush.bf16.msra.mxu0 %v1849
        %1859 = vmatpush.bf16.msra.mxu0 %v1848
        %1860 = vmatpush.bf16.msra.mxu0 %v1847
        %1861 = vmatpush.bf16.msra.mxu0 %v1846
        %1862 = vmatpush.bf16.msra.mxu0 %v1845
        %1863 = vmatpush.bf16.msra.mxu0 %v1844
        %1864 = vmatpush.bf16.msra.mxu0 %v1843
        %1865 = vmatpush.bf16.msra.mxu0 %v1842
        %1866 = vmatmul.bf16.gmra.mxu0 %v1802
        %v1867 = vpop.f32.mrf.mxu0
        %v1868 = vadd.f32 0.0, %v1867
        %v1869 = vpop.f32.mrf.mxu0
        %v1870 = vadd.f32 0.0, %v1869
        %1871 = vmatmul.bf16.gmra.mxu0 %v1803
        %v1872 = vpop.f32.mrf.mxu0
        %v1873 = vadd.f32 0.0, %v1872
        %v1874 = vpop.f32.mrf.mxu0
        %v1875 = vadd.f32 0.0, %v1874
        %1876 = vmatmul.bf16.gmra.mxu0 %v1804
        %v1877 = vpop.f32.mrf.mxu0
        %v1878 = vadd.f32 0.0, %v1877
        %v1879 = vpop.f32.mrf.mxu0
        %v1880 = vadd.f32 0.0, %v1879
        %1881 = vmatmul.bf16.gmra.mxu0 %v1805
        %v1882 = vpop.f32.mrf.mxu0
        %v1883 = vadd.f32 0.0, %v1882
        %v1884 = vpop.f32.mrf.mxu0
        %v1885 = vadd.f32 0.0, %v1884
        %1886 = vdwg.mxu0
        %v1887 = vadd.f32 %v1687, %v1868
        %v1888 = vadd.f32 %v1688, %v1870
        %v1889 = vadd.f32 %v1689, %v1873
        %v1890 = vadd.f32 %v1690, %v1875
        %v1891 = vadd.f32 %v1691, %v1878
        %v1892 = vadd.f32 %v1692, %v1880
        %v1893 = vadd.f32 %v1693, %v1883
        %v1894 = vadd.f32 %v1694, %v1885
        %vm1895 = vcmask 1041408
        %vm1896 = vcmask 1045508
        %vm1897 = vmor %vm1895, %vm1896
        %v1898 = vrot.slane %v1170, 6
        %v1899 = vrot.slane %v1898, 4
        %v1900 = vrot.slane %v1171, 6
        %v1901 = vsel %vm1897, %v1899, %v1900
        %v1902 = vrot.slane %v1172, 6
        %v1903 = vrot.slane %v1902, 4
        %v1904 = vrot.slane %v1173, 6
        %v1905 = vsel %vm1897, %v1903, %v1904
        %v1906 = vrot.slane %v1174, 6
        %v1907 = vrot.slane %v1906, 4
        %v1908 = vrot.slane %v1175, 6
        %v1909 = vsel %vm1897, %v1907, %v1908
        %v1910 = vrot.slane %v1176, 6
        %v1911 = vrot.slane %v1910, 4
        %v1912 = vrot.slane %v1177, 6
        %v1913 = vsel %vm1897, %v1911, %v1912
        %v1914 = vrot.slane %v1178, 6
        %v1915 = vrot.slane %v1914, 4
        %v1916 = vrot.slane %v1179, 6
        %v1917 = vsel %vm1897, %v1915, %v1916
        %v1918 = vrot.slane %v1180, 6
        %v1919 = vrot.slane %v1918, 4
        %v1920 = vrot.slane %v1181, 6
        %v1921 = vsel %vm1897, %v1919, %v1920
        %v1922 = vrot.slane %v1182, 6
        %v1923 = vrot.slane %v1922, 4
        %v1924 = vrot.slane %v1183, 6
        %v1925 = vsel %vm1897, %v1923, %v1924
        %v1926 = vrot.slane %v1184, 6
        %v1927 = vrot.slane %v1926, 4
        %v1928 = vrot.slane %v1185, 6
        %v1929 = vsel %vm1897, %v1927, %v1928
        %v1930 = vld [vmem:[#allocation9 + $0x100] sm:$0xf]
        %v1931 = vld [vmem:[#allocation9 + $0x104] sm:$0xf]
        %v1932 = vld [vmem:[#allocation9 + $0x108] sm:$0xf]
        %v1933 = vld [vmem:[#allocation9 + $0x10c] sm:$0xf]
        %v1934 = vld [vmem:[#allocation9 + $0x110] sm:$0xf]
        %v1935 = vld [vmem:[#allocation9 + $0x114] sm:$0xf]
        %v1936 = vld [vmem:[#allocation9 + $0x118] sm:$0xf]
        %v1937 = vld [vmem:[#allocation9 + $0x11c] sm:$0xf]
        %v1938 = vld [vmem:[#allocation9 + $0x120] sm:$0xf]
        %v1939 = vld [vmem:[#allocation9 + $0x124] sm:$0xf]
        %v1940 = vld [vmem:[#allocation9 + $0x128] sm:$0xf]
        %v1941 = vld [vmem:[#allocation9 + $0x12c] sm:$0xf]
        %v1942 = vld [vmem:[#allocation9 + $0x130] sm:$0xf]
        %v1943 = vld [vmem:[#allocation9 + $0x134] sm:$0xf]
        %v1944 = vld [vmem:[#allocation9 + $0x138] sm:$0xf]
        %v1945 = vld [vmem:[#allocation9 + $0x13c] sm:$0xf]
        %v1946 = vunpack.c.l.b16 %v1901
        %v1947 = vunpack.c.l.b16 %v1905
        %v1948 = vunpack.c.l.b16 %v1909
        %v1949 = vunpack.c.l.b16 %v1913
        %v1950 = vunpack.c.l.b16 %v1917
        %v1951 = vunpack.c.l.b16 %v1921
        %v1952 = vunpack.c.l.b16 %v1925
        %v1953 = vunpack.c.l.b16 %v1929
        %v1954 = vpack.c.b16 %v1947, %v1946
        %v1955 = vpack.c.b16 %v1949, %v1948
        %v1956 = vpack.c.b16 %v1951, %v1950
        %v1957 = vpack.c.b16 %v1953, %v1952
        %v1978 = vunpack.c.l.b16 %v1930
        %v1979 = vunpack.c.l.b16 %v1931
        %v1980 = vunpack.c.l.b16 %v1932
        %v1981 = vunpack.c.l.b16 %v1933
        %v1982 = vunpack.c.l.b16 %v1934
        %v1983 = vunpack.c.l.b16 %v1935
        %v1984 = vunpack.c.l.b16 %v1936
        %v1985 = vunpack.c.l.b16 %v1937
        %v1986 = vunpack.c.l.b16 %v1938
        %v1987 = vunpack.c.l.b16 %v1939
        %v1988 = vunpack.c.l.b16 %v1940
        %v1989 = vunpack.c.l.b16 %v1941
        %v1990 = vunpack.c.l.b16 %v1942
        %v1991 = vunpack.c.l.b16 %v1943
        %v1992 = vunpack.c.l.b16 %v1944
        %v1993 = vunpack.c.l.b16 %v1945
        %v1994 = vpack.c.b16 %v1979, %v1978
        %v1995 = vpack.c.b16 %v1981, %v1980
        %v1996 = vpack.c.b16 %v1983, %v1982
        %v1997 = vpack.c.b16 %v1985, %v1984
        %v1998 = vpack.c.b16 %v1987, %v1986
        %v1999 = vpack.c.b16 %v1989, %v1988
        %v2000 = vpack.c.b16 %v1991, %v1990
        %v2001 = vpack.c.b16 %v1993, %v1992
        %2010 = vmatpush.bf16.msra.mxu0 %v2001
        %2011 = vmatpush.bf16.msra.mxu0 %v2000
        %2012 = vmatpush.bf16.msra.mxu0 %v1999
        %2013 = vmatpush.bf16.msra.mxu0 %v1998
        %2014 = vmatpush.bf16.msra.mxu0 %v1997
        %2015 = vmatpush.bf16.msra.mxu0 %v1996
        %2016 = vmatpush.bf16.msra.mxu0 %v1995
        %2017 = vmatpush.bf16.msra.mxu0 %v1994
        %2018 = vmatmul.bf16.gmra.mxu0 %v1954
        %v2019 = vpop.f32.mrf.mxu0
        %v2020 = vadd.f32 0.0, %v2019
        %v2021 = vpop.f32.mrf.mxu0
        %v2022 = vadd.f32 0.0, %v2021
        %2023 = vmatmul.bf16.gmra.mxu0 %v1955
        %v2024 = vpop.f32.mrf.mxu0
        %v2025 = vadd.f32 0.0, %v2024
        %v2026 = vpop.f32.mrf.mxu0
        %v2027 = vadd.f32 0.0, %v2026
        %2028 = vmatmul.bf16.gmra.mxu0 %v1956
        %v2029 = vpop.f32.mrf.mxu0
        %v2030 = vadd.f32 0.0, %v2029
        %v2031 = vpop.f32.mrf.mxu0
        %v2032 = vadd.f32 0.0, %v2031
        %2033 = vmatmul.bf16.gmra.mxu0 %v1957
        %v2034 = vpop.f32.mrf.mxu0
        %v2035 = vadd.f32 0.0, %v2034
        %v2036 = vpop.f32.mrf.mxu0
        %v2037 = vadd.f32 0.0, %v2036
        %2038 = vdwg.mxu0
        %v2039 = vadd.f32 %v1887, %v2020
        %v2040 = vadd.f32 %v1888, %v2022
        %v2041 = vadd.f32 %v1889, %v2025
        %v2042 = vadd.f32 %v1890, %v2027
        %v2043 = vadd.f32 %v1891, %v2030
        %v2044 = vadd.f32 %v1892, %v2032
        %v2045 = vadd.f32 %v1893, %v2035
        %v2046 = vadd.f32 %v1894, %v2037
        %v2047 = vld [vmem:[#allocation9 + $0x140] sm:$0xf]
        %v2048 = vld [vmem:[#allocation9 + $0x144] sm:$0xf]
        %v2049 = vld [vmem:[#allocation9 + $0x148] sm:$0xf]
        %v2050 = vld [vmem:[#allocation9 + $0x14c] sm:$0xf]
        %v2051 = vld [vmem:[#allocation9 + $0x150] sm:$0xf]
        %v2052 = vld [vmem:[#allocation9 + $0x154] sm:$0xf]
        %v2053 = vld [vmem:[#allocation9 + $0x158] sm:$0xf]
        %v2054 = vld [vmem:[#allocation9 + $0x15c] sm:$0xf]
        %v2055 = vld [vmem:[#allocation9 + $0x160] sm:$0xf]
        %v2056 = vld [vmem:[#allocation9 + $0x164] sm:$0xf]
        %v2057 = vld [vmem:[#allocation9 + $0x168] sm:$0xf]
        %v2058 = vld [vmem:[#allocation9 + $0x16c] sm:$0xf]
        %v2059 = vld [vmem:[#allocation9 + $0x170] sm:$0xf]
        %v2060 = vld [vmem:[#allocation9 + $0x174] sm:$0xf]
        %v2061 = vld [vmem:[#allocation9 + $0x178] sm:$0xf]
        %v2062 = vld [vmem:[#allocation9 + $0x17c] sm:$0xf]
        %v2064 = vunpack.c.l.b16 %v1186
        %v2065 = vpack.c.b16 %v1444, %v1443
        %v2066 = vpack.c.b16 %v1446, %v1445
        %v2067 = vpack.c.b16 %v1448, %v1447
        %v2068 = vpack.c.b16 %v2064, %v1449
        %v2089 = vunpack.c.l.b16 %v2047
        %v2090 = vunpack.c.l.b16 %v2048
        %v2091 = vunpack.c.l.b16 %v2049
        %v2092 = vunpack.c.l.b16 %v2050
        %v2093 = vunpack.c.l.b16 %v2051
        %v2094 = vunpack.c.l.b16 %v2052
        %v2095 = vunpack.c.l.b16 %v2053
        %v2096 = vunpack.c.l.b16 %v2054
        %v2097 = vunpack.c.l.b16 %v2055
        %v2098 = vunpack.c.l.b16 %v2056
        %v2099 = vunpack.c.l.b16 %v2057
        %v2100 = vunpack.c.l.b16 %v2058
        %v2101 = vunpack.c.l.b16 %v2059
        %v2102 = vunpack.c.l.b16 %v2060
        %v2103 = vunpack.c.l.b16 %v2061
        %v2104 = vunpack.c.l.b16 %v2062
        %v2105 = vpack.c.b16 %v2090, %v2089
        %v2106 = vpack.c.b16 %v2092, %v2091
        %v2107 = vpack.c.b16 %v2094, %v2093
        %v2108 = vpack.c.b16 %v2096, %v2095
        %v2109 = vpack.c.b16 %v2098, %v2097
        %v2110 = vpack.c.b16 %v2100, %v2099
        %v2111 = vpack.c.b16 %v2102, %v2101
        %v2112 = vpack.c.b16 %v2104, %v2103
        %2121 = vmatpush.bf16.msra.mxu0 %v2112
        %2122 = vmatpush.bf16.msra.mxu0 %v2111
        %2123 = vmatpush.bf16.msra.mxu0 %v2110
        %2124 = vmatpush.bf16.msra.mxu0 %v2109
        %2125 = vmatpush.bf16.msra.mxu0 %v2108
        %2126 = vmatpush.bf16.msra.mxu0 %v2107
        %2127 = vmatpush.bf16.msra.mxu0 %v2106
        %2128 = vmatpush.bf16.msra.mxu0 %v2105
        %2129 = vmatmul.bf16.gmra.mxu0 %v2065
        %v2130 = vpop.f32.mrf.mxu0
        %v2131 = vadd.f32 0.0, %v2130
        %v2132 = vpop.f32.mrf.mxu0
        %v2133 = vadd.f32 0.0, %v2132
        %2134 = vmatmul.bf16.gmra.mxu0 %v2066
        %v2135 = vpop.f32.mrf.mxu0
        %v2136 = vadd.f32 0.0, %v2135
        %v2137 = vpop.f32.mrf.mxu0
        %v2138 = vadd.f32 0.0, %v2137
        %2139 = vmatmul.bf16.gmra.mxu0 %v2067
        %v2140 = vpop.f32.mrf.mxu0
        %v2141 = vadd.f32 0.0, %v2140
        %v2142 = vpop.f32.mrf.mxu0
        %v2143 = vadd.f32 0.0, %v2142
        %2144 = vmatmul.bf16.gmra.mxu0 %v2068
        %v2145 = vpop.f32.mrf.mxu0
        %v2146 = vadd.f32 0.0, %v2145
        %v2147 = vpop.f32.mrf.mxu0
        %v2148 = vadd.f32 0.0, %v2147
        %2149 = vdwg.mxu0
        %v2150 = vadd.f32 %v2039, %v2131
        %v2151 = vadd.f32 %v2040, %v2133
        %v2152 = vadd.f32 %v2041, %v2136
        %v2153 = vadd.f32 %v2042, %v2138
        %v2154 = vadd.f32 %v2043, %v2141
        %v2155 = vadd.f32 %v2044, %v2143
        %v2156 = vadd.f32 %v2045, %v2146
        %v2157 = vadd.f32 %v2046, %v2148
        %v2159 = vshrl.u32 %v1186, 16
        %v2161 = vrot.slane %v2159, 4
        %v2162 = vshll.u32 %v1186, 16
        %v2164 = vrot.slane %v2162, 5
        %v2165 = vor.u32 %v2161, %v2164
        %v2166 = vrot.slane %v2165, 4
        %v2168 = vshll.u32 %v1187, 16
        %v2170 = vrot.slane %v2168, 5
        %v2171 = vsel %vm1212, %v2166, %v2170
        %v2172 = vld [vmem:[#allocation9 + $0x180] sm:$0xf]
        %v2173 = vld [vmem:[#allocation9 + $0x184] sm:$0xf]
        %v2174 = vld [vmem:[#allocation9 + $0x188] sm:$0xf]
        %v2175 = vld [vmem:[#allocation9 + $0x18c] sm:$0xf]
        %v2176 = vld [vmem:[#allocation9 + $0x190] sm:$0xf]
        %v2177 = vld [vmem:[#allocation9 + $0x194] sm:$0xf]
        %v2178 = vld [vmem:[#allocation9 + $0x198] sm:$0xf]
        %v2179 = vld [vmem:[#allocation9 + $0x19c] sm:$0xf]
        %v2180 = vld [vmem:[#allocation9 + $0x1a0] sm:$0xf]
        %v2181 = vld [vmem:[#allocation9 + $0x1a4] sm:$0xf]
        %v2182 = vld [vmem:[#allocation9 + $0x1a8] sm:$0xf]
        %v2183 = vld [vmem:[#allocation9 + $0x1ac] sm:$0xf]
        %v2184 = vld [vmem:[#allocation9 + $0x1b0] sm:$0xf]
        %v2185 = vld [vmem:[#allocation9 + $0x1b4] sm:$0xf]
        %v2186 = vld [vmem:[#allocation9 + $0x1b8] sm:$0xf]
        %v2187 = vld [vmem:[#allocation9 + $0x1bc] sm:$0xf]
        %v2188 = vunpack.c.l.b16 %v2171
        %v2189 = vpack.c.b16 %v1343, %v1342
        %v2190 = vpack.c.b16 %v1345, %v1344
        %v2191 = vpack.c.b16 %v1347, %v1346
        %v2192 = vpack.c.b16 %v2188, %v1348
        %v2213 = vunpack.c.l.b16 %v2172
        %v2214 = vunpack.c.l.b16 %v2173
        %v2215 = vunpack.c.l.b16 %v2174
        %v2216 = vunpack.c.l.b16 %v2175
        %v2217 = vunpack.c.l.b16 %v2176
        %v2218 = vunpack.c.l.b16 %v2177
        %v2219 = vunpack.c.l.b16 %v2178
        %v2220 = vunpack.c.l.b16 %v2179
        %v2221 = vunpack.c.l.b16 %v2180
        %v2222 = vunpack.c.l.b16 %v2181
        %v2223 = vunpack.c.l.b16 %v2182
        %v2224 = vunpack.c.l.b16 %v2183
        %v2225 = vunpack.c.l.b16 %v2184
        %v2226 = vunpack.c.l.b16 %v2185
        %v2227 = vunpack.c.l.b16 %v2186
        %v2228 = vunpack.c.l.b16 %v2187
        %v2229 = vpack.c.b16 %v2214, %v2213
        %v2230 = vpack.c.b16 %v2216, %v2215
        %v2231 = vpack.c.b16 %v2218, %v2217
        %v2232 = vpack.c.b16 %v2220, %v2219
        %v2233 = vpack.c.b16 %v2222, %v2221
        %v2234 = vpack.c.b16 %v2224, %v2223
        %v2235 = vpack.c.b16 %v2226, %v2225
        %v2236 = vpack.c.b16 %v2228, %v2227
        %2245 = vmatpush.bf16.msra.mxu0 %v2236
        %2246 = vmatpush.bf16.msra.mxu0 %v2235
        %2247 = vmatpush.bf16.msra.mxu0 %v2234
        %2248 = vmatpush.bf16.msra.mxu0 %v2233
        %2249 = vmatpush.bf16.msra.mxu0 %v2232
        %2250 = vmatpush.bf16.msra.mxu0 %v2231
        %2251 = vmatpush.bf16.msra.mxu0 %v2230
        %2252 = vmatpush.bf16.msra.mxu0 %v2229
        %2253 = vmatmul.bf16.gmra.mxu0 %v2189
        %v2254 = vpop.f32.mrf.mxu0
        %v2255 = vadd.f32 0.0, %v2254
        %v2256 = vpop.f32.mrf.mxu0
        %v2257 = vadd.f32 0.0, %v2256
        %2258 = vmatmul.bf16.gmra.mxu0 %v2190
        %v2259 = vpop.f32.mrf.mxu0
        %v2260 = vadd.f32 0.0, %v2259
        %v2261 = vpop.f32.mrf.mxu0
        %v2262 = vadd.f32 0.0, %v2261
        %2263 = vmatmul.bf16.gmra.mxu0 %v2191
        %v2264 = vpop.f32.mrf.mxu0
        %v2265 = vadd.f32 0.0, %v2264
        %v2266 = vpop.f32.mrf.mxu0
        %v2267 = vadd.f32 0.0, %v2266
        %2268 = vmatmul.bf16.gmra.mxu0 %v2192
        %v2269 = vpop.f32.mrf.mxu0
        %v2270 = vadd.f32 0.0, %v2269
        %v2271 = vpop.f32.mrf.mxu0
        %v2272 = vadd.f32 0.0, %v2271
        %2273 = vdwg.mxu0
        %v2274 = vadd.f32 %v2150, %v2255
        %v2275 = vadd.f32 %v2151, %v2257
        %v2276 = vadd.f32 %v2152, %v2260
        %v2277 = vadd.f32 %v2153, %v2262
        %v2278 = vadd.f32 %v2154, %v2265
        %v2279 = vadd.f32 %v2155, %v2267
        %v2280 = vadd.f32 %v2156, %v2270
        %v2281 = vadd.f32 %v2157, %v2272
        %v2283 = vrot.slane %v1186, 5
        %v2284 = vrot.slane %v2283, 4
        %v2285 = vrot.slane %v1187, 5
        %v2286 = vsel %vm1545, %v2284, %v2285
        %v2287 = vld [vmem:[#allocation9 + $0x1c0] sm:$0xf]
        %v2288 = vld [vmem:[#allocation9 + $0x1c4] sm:$0xf]
        %v2289 = vld [vmem:[#allocation9 + $0x1c8] sm:$0xf]
        %v2290 = vld [vmem:[#allocation9 + $0x1cc] sm:$0xf]
        %v2291 = vld [vmem:[#allocation9 + $0x1d0] sm:$0xf]
        %v2292 = vld [vmem:[#allocation9 + $0x1d4] sm:$0xf]
        %v2293 = vld [vmem:[#allocation9 + $0x1d8] sm:$0xf]
        %v2294 = vld [vmem:[#allocation9 + $0x1dc] sm:$0xf]
        %v2295 = vld [vmem:[#allocation9 + $0x1e0] sm:$0xf]
        %v2296 = vld [vmem:[#allocation9 + $0x1e4] sm:$0xf]
        %v2297 = vld [vmem:[#allocation9 + $0x1e8] sm:$0xf]
        %v2298 = vld [vmem:[#allocation9 + $0x1ec] sm:$0xf]
        %v2299 = vld [vmem:[#allocation9 + $0x1f0] sm:$0xf]
        %v2300 = vld [vmem:[#allocation9 + $0x1f4] sm:$0xf]
        %v2301 = vld [vmem:[#allocation9 + $0x1f8] sm:$0xf]
        %v2302 = vld [vmem:[#allocation9 + $0x1fc] sm:$0xf]
        %v2303 = vunpack.c.l.b16 %v2286
        %v2304 = vpack.c.b16 %v1596, %v1595
        %v2305 = vpack.c.b16 %v1598, %v1597
        %v2306 = vpack.c.b16 %v1600, %v1599
        %v2307 = vpack.c.b16 %v2303, %v1601
        %v2328 = vunpack.c.l.b16 %v2287
        %v2329 = vunpack.c.l.b16 %v2288
        %v2330 = vunpack.c.l.b16 %v2289
        %v2331 = vunpack.c.l.b16 %v2290
        %v2332 = vunpack.c.l.b16 %v2291
        %v2333 = vunpack.c.l.b16 %v2292
        %v2334 = vunpack.c.l.b16 %v2293
        %v2335 = vunpack.c.l.b16 %v2294
        %v2336 = vunpack.c.l.b16 %v2295
        %v2337 = vunpack.c.l.b16 %v2296
        %v2338 = vunpack.c.l.b16 %v2297
        %v2339 = vunpack.c.l.b16 %v2298
        %v2340 = vunpack.c.l.b16 %v2299
        %v2341 = vunpack.c.l.b16 %v2300
        %v2342 = vunpack.c.l.b16 %v2301
        %v2343 = vunpack.c.l.b16 %v2302
        %v2344 = vpack.c.b16 %v2329, %v2328
        %v2345 = vpack.c.b16 %v2331, %v2330
        %v2346 = vpack.c.b16 %v2333, %v2332
        %v2347 = vpack.c.b16 %v2335, %v2334
        %v2348 = vpack.c.b16 %v2337, %v2336
        %v2349 = vpack.c.b16 %v2339, %v2338
        %v2350 = vpack.c.b16 %v2341, %v2340
        %v2351 = vpack.c.b16 %v2343, %v2342
        %2360 = vmatpush.bf16.msra.mxu0 %v2351
        %2361 = vmatpush.bf16.msra.mxu0 %v2350
        %2362 = vmatpush.bf16.msra.mxu0 %v2349
        %2363 = vmatpush.bf16.msra.mxu0 %v2348
        %2364 = vmatpush.bf16.msra.mxu0 %v2347
        %2365 = vmatpush.bf16.msra.mxu0 %v2346
        %2366 = vmatpush.bf16.msra.mxu0 %v2345
        %2367 = vmatpush.bf16.msra.mxu0 %v2344
        %2368 = vmatmul.bf16.gmra.mxu0 %v2304
        %v2369 = vpop.f32.mrf.mxu0
        %v2370 = vadd.f32 0.0, %v2369
        %v2371 = vpop.f32.mrf.mxu0
        %v2372 = vadd.f32 0.0, %v2371
        %2373 = vmatmul.bf16.gmra.mxu0 %v2305
        %v2374 = vpop.f32.mrf.mxu0
        %v2375 = vadd.f32 0.0, %v2374
        %v2376 = vpop.f32.mrf.mxu0
        %v2377 = vadd.f32 0.0, %v2376
        %2378 = vmatmul.bf16.gmra.mxu0 %v2306
        %v2379 = vpop.f32.mrf.mxu0
        %v2380 = vadd.f32 0.0, %v2379
        %v2381 = vpop.f32.mrf.mxu0
        %v2382 = vadd.f32 0.0, %v2381
        %2383 = vmatmul.bf16.gmra.mxu0 %v2307
        %v2384 = vpop.f32.mrf.mxu0
        %v2385 = vadd.f32 0.0, %v2384
        %v2386 = vpop.f32.mrf.mxu0
        %v2387 = vadd.f32 0.0, %v2386
        %2388 = vdwg.mxu0
        %v2389 = vadd.f32 %v2274, %v2370
        %v2390 = vadd.f32 %v2275, %v2372
        %v2391 = vadd.f32 %v2276, %v2375
        %v2392 = vadd.f32 %v2277, %v2377
        %v2393 = vadd.f32 %v2278, %v2380
        %v2394 = vadd.f32 %v2279, %v2382
        %v2395 = vadd.f32 %v2280, %v2385
        %v2396 = vadd.f32 %v2281, %v2387
        %v2397 = vrot.slane %v2159, 5
        %v2398 = vrot.slane %v2162, 6
        %v2399 = vor.u32 %v2397, %v2398
        %v2400 = vrot.slane %v2399, 4
        %v2401 = vshrl.u32 %v1187, 16
        %v2403 = vrot.slane %v2401, 5
        %v2404 = vrot.slane %v2168, 6
        %v2405 = vor.u32 %v2403, %v2404
        %v2406 = vsel %vm1697, %v2400, %v2405
        %v2407 = vld [vmem:[#allocation9 + $0x200] sm:$0xf]
        %v2408 = vld [vmem:[#allocation9 + $0x204] sm:$0xf]
        %v2409 = vld [vmem:[#allocation9 + $0x208] sm:$0xf]
        %v2410 = vld [vmem:[#allocation9 + $0x20c] sm:$0xf]
        %v2411 = vld [vmem:[#allocation9 + $0x210] sm:$0xf]
        %v2412 = vld [vmem:[#allocation9 + $0x214] sm:$0xf]
        %v2413 = vld [vmem:[#allocation9 + $0x218] sm:$0xf]
        %v2414 = vld [vmem:[#allocation9 + $0x21c] sm:$0xf]
        %v2415 = vld [vmem:[#allocation9 + $0x220] sm:$0xf]
        %v2416 = vld [vmem:[#allocation9 + $0x224] sm:$0xf]
        %v2417 = vld [vmem:[#allocation9 + $0x228] sm:$0xf]
        %v2418 = vld [vmem:[#allocation9 + $0x22c] sm:$0xf]
        %v2419 = vld [vmem:[#allocation9 + $0x230] sm:$0xf]
        %v2420 = vld [vmem:[#allocation9 + $0x234] sm:$0xf]
        %v2421 = vld [vmem:[#allocation9 + $0x238] sm:$0xf]
        %v2422 = vld [vmem:[#allocation9 + $0x23c] sm:$0xf]
        %v2423 = vunpack.c.l.b16 %v2406
        %v2424 = vpack.c.b16 %v1796, %v1795
        %v2425 = vpack.c.b16 %v1798, %v1797
        %v2426 = vpack.c.b16 %v1800, %v1799
        %v2427 = vpack.c.b16 %v2423, %v1801
        %v2448 = vunpack.c.l.b16 %v2407
        %v2449 = vunpack.c.l.b16 %v2408
        %v2450 = vunpack.c.l.b16 %v2409
        %v2451 = vunpack.c.l.b16 %v2410
        %v2452 = vunpack.c.l.b16 %v2411
        %v2453 = vunpack.c.l.b16 %v2412
        %v2454 = vunpack.c.l.b16 %v2413
        %v2455 = vunpack.c.l.b16 %v2414
        %v2456 = vunpack.c.l.b16 %v2415
        %v2457 = vunpack.c.l.b16 %v2416
        %v2458 = vunpack.c.l.b16 %v2417
        %v2459 = vunpack.c.l.b16 %v2418
        %v2460 = vunpack.c.l.b16 %v2419
        %v2461 = vunpack.c.l.b16 %v2420
        %v2462 = vunpack.c.l.b16 %v2421
        %v2463 = vunpack.c.l.b16 %v2422
        %v2464 = vpack.c.b16 %v2449, %v2448
        %v2465 = vpack.c.b16 %v2451, %v2450
        %v2466 = vpack.c.b16 %v2453, %v2452
        %v2467 = vpack.c.b16 %v2455, %v2454
        %v2468 = vpack.c.b16 %v2457, %v2456
        %v2469 = vpack.c.b16 %v2459, %v2458
        %v2470 = vpack.c.b16 %v2461, %v2460
        %v2471 = vpack.c.b16 %v2463, %v2462
        %2480 = vmatpush.bf16.msra.mxu0 %v2471
        %2481 = vmatpush.bf16.msra.mxu0 %v2470
        %2482 = vmatpush.bf16.msra.mxu0 %v2469
        %2483 = vmatpush.bf16.msra.mxu0 %v2468
        %2484 = vmatpush.bf16.msra.mxu0 %v2467
        %2485 = vmatpush.bf16.msra.mxu0 %v2466
        %2486 = vmatpush.bf16.msra.mxu0 %v2465
        %2487 = vmatpush.bf16.msra.mxu0 %v2464
        %2488 = vmatmul.bf16.gmra.mxu0 %v2424
        %v2489 = vpop.f32.mrf.mxu0
        %v2490 = vadd.f32 0.0, %v2489
        %v2491 = vpop.f32.mrf.mxu0
        %v2492 = vadd.f32 0.0, %v2491
        %2493 = vmatmul.bf16.gmra.mxu0 %v2425
        %v2494 = vpop.f32.mrf.mxu0
        %v2495 = vadd.f32 0.0, %v2494
        %v2496 = vpop.f32.mrf.mxu0
        %v2497 = vadd.f32 0.0, %v2496
        %2498 = vmatmul.bf16.gmra.mxu0 %v2426
        %v2499 = vpop.f32.mrf.mxu0
        %v2500 = vadd.f32 0.0, %v2499
        %v2501 = vpop.f32.mrf.mxu0
        %v2502 = vadd.f32 0.0, %v2501
        %2503 = vmatmul.bf16.gmra.mxu0 %v2427
        %v2504 = vpop.f32.mrf.mxu0
        %v2505 = vadd.f32 0.0, %v2504
        %v2506 = vpop.f32.mrf.mxu0
        %v2507 = vadd.f32 0.0, %v2506
        %2508 = vdwg.mxu0
        %v2509 = vadd.f32 %v2389, %v2490
        %v2510 = vadd.f32 %v2390, %v2492
        %v2511 = vadd.f32 %v2391, %v2495
        %v2512 = vadd.f32 %v2392, %v2497
        %v2513 = vadd.f32 %v2393, %v2500
        %v2514 = vadd.f32 %v2394, %v2502
        %v2515 = vadd.f32 %v2395, %v2505
        %v2516 = vadd.f32 %v2396, %v2507
        %v2517 = vrot.slane %v1186, 6
        %v2518 = vrot.slane %v2517, 4
        %v2519 = vrot.slane %v1187, 6
        %v2520 = vsel %vm1897, %v2518, %v2519
        %v2521 = vld [vmem:[#allocation9 + $0x240] sm:$0xf]
        %v2522 = vld [vmem:[#allocation9 + $0x244] sm:$0xf]
        %v2523 = vld [vmem:[#allocation9 + $0x248] sm:$0xf]
        %v2524 = vld [vmem:[#allocation9 + $0x24c] sm:$0xf]
        %v2525 = vld [vmem:[#allocation9 + $0x250] sm:$0xf]
        %v2526 = vld [vmem:[#allocation9 + $0x254] sm:$0xf]
        %v2527 = vld [vmem:[#allocation9 + $0x258] sm:$0xf]
        %v2528 = vld [vmem:[#allocation9 + $0x25c] sm:$0xf]
        %v2529 = vld [vmem:[#allocation9 + $0x260] sm:$0xf]
        %v2530 = vld [vmem:[#allocation9 + $0x264] sm:$0xf]
        %v2531 = vld [vmem:[#allocation9 + $0x268] sm:$0xf]
        %v2532 = vld [vmem:[#allocation9 + $0x26c] sm:$0xf]
        %v2533 = vld [vmem:[#allocation9 + $0x270] sm:$0xf]
        %v2534 = vld [vmem:[#allocation9 + $0x274] sm:$0xf]
        %v2535 = vld [vmem:[#allocation9 + $0x278] sm:$0xf]
        %v2536 = vld [vmem:[#allocation9 + $0x27c] sm:$0xf]
        %v2537 = vunpack.c.l.b16 %v2520
        %v2538 = vpack.c.b16 %v1948, %v1947
        %v2539 = vpack.c.b16 %v1950, %v1949
        %v2540 = vpack.c.b16 %v1952, %v1951
        %v2541 = vpack.c.b16 %v2537, %v1953
        %v2562 = vunpack.c.l.b16 %v2521
        %v2563 = vunpack.c.l.b16 %v2522
        %v2564 = vunpack.c.l.b16 %v2523
        %v2565 = vunpack.c.l.b16 %v2524
        %v2566 = vunpack.c.l.b16 %v2525
        %v2567 = vunpack.c.l.b16 %v2526
        %v2568 = vunpack.c.l.b16 %v2527
        %v2569 = vunpack.c.l.b16 %v2528
        %v2570 = vunpack.c.l.b16 %v2529
        %v2571 = vunpack.c.l.b16 %v2530
        %v2572 = vunpack.c.l.b16 %v2531
        %v2573 = vunpack.c.l.b16 %v2532
        %v2574 = vunpack.c.l.b16 %v2533
        %v2575 = vunpack.c.l.b16 %v2534
        %v2576 = vunpack.c.l.b16 %v2535
        %v2577 = vunpack.c.l.b16 %v2536
        %v2578 = vpack.c.b16 %v2563, %v2562
        %v2579 = vpack.c.b16 %v2565, %v2564
        %v2580 = vpack.c.b16 %v2567, %v2566
        %v2581 = vpack.c.b16 %v2569, %v2568
        %v2582 = vpack.c.b16 %v2571, %v2570
        %v2583 = vpack.c.b16 %v2573, %v2572
        %v2584 = vpack.c.b16 %v2575, %v2574
        %v2585 = vpack.c.b16 %v2577, %v2576
        %2594 = vmatpush.bf16.msra.mxu0 %v2585
        %2595 = vmatpush.bf16.msra.mxu0 %v2584
        %2596 = vmatpush.bf16.msra.mxu0 %v2583
        %2597 = vmatpush.bf16.msra.mxu0 %v2582
        %2598 = vmatpush.bf16.msra.mxu0 %v2581
        %2599 = vmatpush.bf16.msra.mxu0 %v2580
        %2600 = vmatpush.bf16.msra.mxu0 %v2579
        %2601 = vmatpush.bf16.msra.mxu0 %v2578
        %2602 = vmatmul.bf16.gmra.mxu0 %v2538
        %v2603 = vpop.f32.mrf.mxu0
        %v2604 = vadd.f32 0.0, %v2603
        %v2605 = vpop.f32.mrf.mxu0
        %v2606 = vadd.f32 0.0, %v2605
        %2607 = vmatmul.bf16.gmra.mxu0 %v2539
        %v2608 = vpop.f32.mrf.mxu0
        %v2609 = vadd.f32 0.0, %v2608
        %v2610 = vpop.f32.mrf.mxu0
        %v2611 = vadd.f32 0.0, %v2610
        %2612 = vmatmul.bf16.gmra.mxu0 %v2540
        %v2613 = vpop.f32.mrf.mxu0
        %v2614 = vadd.f32 0.0, %v2613
        %v2615 = vpop.f32.mrf.mxu0
        %v2616 = vadd.f32 0.0, %v2615
        %2617 = vmatmul.bf16.gmra.mxu0 %v2541
        %v2618 = vpop.f32.mrf.mxu0
        %v2619 = vadd.f32 0.0, %v2618
        %v2620 = vpop.f32.mrf.mxu0
        %v2621 = vadd.f32 0.0, %v2620
        %2622 = vdwg.mxu0
        %v2623 = vadd.f32 %v2509, %v2604
        %v2624 = vadd.f32 %v2510, %v2606
        %v2625 = vadd.f32 %v2511, %v2609
        %v2626 = vadd.f32 %v2512, %v2611
        %v2627 = vadd.f32 %v2513, %v2614
        %v2628 = vadd.f32 %v2514, %v2616
        %v2629 = vadd.f32 %v2515, %v2619
        %v2630 = vadd.f32 %v2516, %v2621
        %v2631 = vld [vmem:[#allocation9 + $0x280] sm:$0xf]
        %v2632 = vld [vmem:[#allocation9 + $0x284] sm:$0xf]
        %v2633 = vld [vmem:[#allocation9 + $0x288] sm:$0xf]
        %v2634 = vld [vmem:[#allocation9 + $0x28c] sm:$0xf]
        %v2635 = vld [vmem:[#allocation9 + $0x290] sm:$0xf]
        %v2636 = vld [vmem:[#allocation9 + $0x294] sm:$0xf]
        %v2637 = vld [vmem:[#allocation9 + $0x298] sm:$0xf]
        %v2638 = vld [vmem:[#allocation9 + $0x29c] sm:$0xf]
        %v2639 = vld [vmem:[#allocation9 + $0x2a0] sm:$0xf]
        %v2640 = vld [vmem:[#allocation9 + $0x2a4] sm:$0xf]
        %v2641 = vld [vmem:[#allocation9 + $0x2a8] sm:$0xf]
        %v2642 = vld [vmem:[#allocation9 + $0x2ac] sm:$0xf]
        %v2643 = vld [vmem:[#allocation9 + $0x2b0] sm:$0xf]
        %v2644 = vld [vmem:[#allocation9 + $0x2b4] sm:$0xf]
        %v2645 = vld [vmem:[#allocation9 + $0x2b8] sm:$0xf]
        %v2646 = vld [vmem:[#allocation9 + $0x2bc] sm:$0xf]
        %v2648 = vunpack.c.l.b16 %v1188
        %v2649 = vpack.c.b16 %v2648, %v2064
        %v2667 = vunpack.c.l.b16 %v2631
        %v2668 = vunpack.c.l.b16 %v2632
        %v2669 = vunpack.c.l.b16 %v2633
        %v2670 = vunpack.c.l.b16 %v2634
        %v2671 = vunpack.c.l.b16 %v2635
        %v2672 = vunpack.c.l.b16 %v2636
        %v2673 = vunpack.c.l.b16 %v2637
        %v2674 = vunpack.c.l.b16 %v2638
        %v2675 = vunpack.c.l.b16 %v2639
        %v2676 = vunpack.c.l.b16 %v2640
        %v2677 = vunpack.c.l.b16 %v2641
        %v2678 = vunpack.c.l.b16 %v2642
        %v2679 = vunpack.c.l.b16 %v2643
        %v2680 = vunpack.c.l.b16 %v2644
        %v2681 = vunpack.c.l.b16 %v2645
        %v2682 = vunpack.c.l.b16 %v2646
        %v2683 = vpack.c.b16 %v2668, %v2667
        %v2684 = vpack.c.b16 %v2670, %v2669
        %v2685 = vpack.c.b16 %v2672, %v2671
        %v2686 = vpack.c.b16 %v2674, %v2673
        %v2687 = vpack.c.b16 %v2676, %v2675
        %v2688 = vpack.c.b16 %v2678, %v2677
        %v2689 = vpack.c.b16 %v2680, %v2679
        %v2690 = vpack.c.b16 %v2682, %v2681
        %2699 = vmatpush.bf16.msra.mxu0 %v2690
        %2700 = vmatpush.bf16.msra.mxu0 %v2689
        %2701 = vmatpush.bf16.msra.mxu0 %v2688
        %2702 = vmatpush.bf16.msra.mxu0 %v2687
        %2703 = vmatpush.bf16.msra.mxu0 %v2686
        %2704 = vmatpush.bf16.msra.mxu0 %v2685
        %2705 = vmatpush.bf16.msra.mxu0 %v2684
        %2706 = vmatpush.bf16.msra.mxu0 %v2683
        %2707 = vmatmul.bf16.gmra.mxu0 %v1451
        %v2708 = vpop.f32.mrf.mxu0
        %v2709 = vadd.f32 0.0, %v2708
        %v2710 = vpop.f32.mrf.mxu0
        %v2711 = vadd.f32 0.0, %v2710
        %2712 = vmatmul.bf16.gmra.mxu0 %v1452
        %v2713 = vpop.f32.mrf.mxu0
        %v2714 = vadd.f32 0.0, %v2713
        %v2715 = vpop.f32.mrf.mxu0
        %v2716 = vadd.f32 0.0, %v2715
        %2717 = vmatmul.bf16.gmra.mxu0 %v1453
        %v2718 = vpop.f32.mrf.mxu0
        %v2719 = vadd.f32 0.0, %v2718
        %v2720 = vpop.f32.mrf.mxu0
        %v2721 = vadd.f32 0.0, %v2720
        %2722 = vmatmul.bf16.gmra.mxu0 %v2649
        %v2723 = vpop.f32.mrf.mxu0
        %v2724 = vadd.f32 0.0, %v2723
        %v2725 = vpop.f32.mrf.mxu0
        %v2726 = vadd.f32 0.0, %v2725
        %2727 = vdwg.mxu0
        %v2728 = vadd.f32 %v2623, %v2709
        %v2729 = vadd.f32 %v2624, %v2711
        %v2730 = vadd.f32 %v2625, %v2714
        %v2731 = vadd.f32 %v2626, %v2716
        %v2732 = vadd.f32 %v2627, %v2719
        %v2733 = vadd.f32 %v2628, %v2721
        %v2734 = vadd.f32 %v2629, %v2724
        %v2735 = vadd.f32 %v2630, %v2726
        %v2737 = vshrl.u32 %v1188, 16
        %v2739 = vrot.slane %v2737, 4
        %v2740 = vshll.u32 %v1188, 16
        %v2742 = vrot.slane %v2740, 5
        %v2743 = vor.u32 %v2739, %v2742
        %v2744 = vrot.slane %v2743, 4
        %v2746 = vshll.u32 %v1189, 16
        %v2748 = vrot.slane %v2746, 5
        %v2749 = vsel %vm1212, %v2744, %v2748
        %v2750 = vld [vmem:[#allocation9 + $0x2c0] sm:$0xf]
        %v2751 = vld [vmem:[#allocation9 + $0x2c4] sm:$0xf]
        %v2752 = vld [vmem:[#allocation9 + $0x2c8] sm:$0xf]
        %v2753 = vld [vmem:[#allocation9 + $0x2cc] sm:$0xf]
        %v2754 = vld [vmem:[#allocation9 + $0x2d0] sm:$0xf]
        %v2755 = vld [vmem:[#allocation9 + $0x2d4] sm:$0xf]
        %v2756 = vld [vmem:[#allocation9 + $0x2d8] sm:$0xf]
        %v2757 = vld [vmem:[#allocation9 + $0x2dc] sm:$0xf]
        %v2758 = vld [vmem:[#allocation9 + $0x2e0] sm:$0xf]
        %v2759 = vld [vmem:[#allocation9 + $0x2e4] sm:$0xf]
        %v2760 = vld [vmem:[#allocation9 + $0x2e8] sm:$0xf]
        %v2761 = vld [vmem:[#allocation9 + $0x2ec] sm:$0xf]
        %v2762 = vld [vmem:[#allocation9 + $0x2f0] sm:$0xf]
        %v2763 = vld [vmem:[#allocation9 + $0x2f4] sm:$0xf]
        %v2764 = vld [vmem:[#allocation9 + $0x2f8] sm:$0xf]
        %v2765 = vld [vmem:[#allocation9 + $0x2fc] sm:$0xf]
        %v2766 = vunpack.c.l.b16 %v2749
        %v2767 = vpack.c.b16 %v2766, %v2188
        %v2785 = vunpack.c.l.b16 %v2750
        %v2786 = vunpack.c.l.b16 %v2751
        %v2787 = vunpack.c.l.b16 %v2752
        %v2788 = vunpack.c.l.b16 %v2753
        %v2789 = vunpack.c.l.b16 %v2754
        %v2790 = vunpack.c.l.b16 %v2755
        %v2791 = vunpack.c.l.b16 %v2756
        %v2792 = vunpack.c.l.b16 %v2757
        %v2793 = vunpack.c.l.b16 %v2758
        %v2794 = vunpack.c.l.b16 %v2759
        %v2795 = vunpack.c.l.b16 %v2760
        %v2796 = vunpack.c.l.b16 %v2761
        %v2797 = vunpack.c.l.b16 %v2762
        %v2798 = vunpack.c.l.b16 %v2763
        %v2799 = vunpack.c.l.b16 %v2764
        %v2800 = vunpack.c.l.b16 %v2765
        %v2801 = vpack.c.b16 %v2786, %v2785
        %v2802 = vpack.c.b16 %v2788, %v2787
        %v2803 = vpack.c.b16 %v2790, %v2789
        %v2804 = vpack.c.b16 %v2792, %v2791
        %v2805 = vpack.c.b16 %v2794, %v2793
        %v2806 = vpack.c.b16 %v2796, %v2795
        %v2807 = vpack.c.b16 %v2798, %v2797
        %v2808 = vpack.c.b16 %v2800, %v2799
        %2817 = vmatpush.bf16.msra.mxu0 %v2808
        %2818 = vmatpush.bf16.msra.mxu0 %v2807
        %2819 = vmatpush.bf16.msra.mxu0 %v2806
        %2820 = vmatpush.bf16.msra.mxu0 %v2805
        %2821 = vmatpush.bf16.msra.mxu0 %v2804
        %2822 = vmatpush.bf16.msra.mxu0 %v2803
        %2823 = vmatpush.bf16.msra.mxu0 %v2802
        %2824 = vmatpush.bf16.msra.mxu0 %v2801
        %2825 = vmatmul.bf16.gmra.mxu0 %v1350
        %v2826 = vpop.f32.mrf.mxu0
        %v2827 = vadd.f32 0.0, %v2826
        %v2828 = vpop.f32.mrf.mxu0
        %v2829 = vadd.f32 0.0, %v2828
        %2830 = vmatmul.bf16.gmra.mxu0 %v1351
        %v2831 = vpop.f32.mrf.mxu0
        %v2832 = vadd.f32 0.0, %v2831
        %v2833 = vpop.f32.mrf.mxu0
        %v2834 = vadd.f32 0.0, %v2833
        %2835 = vmatmul.bf16.gmra.mxu0 %v1352
        %v2836 = vpop.f32.mrf.mxu0
        %v2837 = vadd.f32 0.0, %v2836
        %v2838 = vpop.f32.mrf.mxu0
        %v2839 = vadd.f32 0.0, %v2838
        %2840 = vmatmul.bf16.gmra.mxu0 %v2767
        %v2841 = vpop.f32.mrf.mxu0
        %v2842 = vadd.f32 0.0, %v2841
        %v2843 = vpop.f32.mrf.mxu0
        %v2844 = vadd.f32 0.0, %v2843
        %2845 = vdwg.mxu0
        %v2846 = vadd.f32 %v2728, %v2827
        %v2847 = vadd.f32 %v2729, %v2829
        %v2848 = vadd.f32 %v2730, %v2832
        %v2849 = vadd.f32 %v2731, %v2834
        %v2850 = vadd.f32 %v2732, %v2837
        %v2851 = vadd.f32 %v2733, %v2839
        %v2852 = vadd.f32 %v2734, %v2842
        %v2853 = vadd.f32 %v2735, %v2844
        %v2855 = vrot.slane %v1188, 5
        %v2856 = vrot.slane %v2855, 4
        %v2857 = vrot.slane %v1189, 5
        %v2858 = vsel %vm1545, %v2856, %v2857
        %v2859 = vld [vmem:[#allocation9 + $0x300] sm:$0xf]
        %v2860 = vld [vmem:[#allocation9 + $0x304] sm:$0xf]
        %v2861 = vld [vmem:[#allocation9 + $0x308] sm:$0xf]
        %v2862 = vld [vmem:[#allocation9 + $0x30c] sm:$0xf]
        %v2863 = vld [vmem:[#allocation9 + $0x310] sm:$0xf]
        %v2864 = vld [vmem:[#allocation9 + $0x314] sm:$0xf]
        %v2865 = vld [vmem:[#allocation9 + $0x318] sm:$0xf]
        %v2866 = vld [vmem:[#allocation9 + $0x31c] sm:$0xf]
        %v2867 = vld [vmem:[#allocation9 + $0x320] sm:$0xf]
        %v2868 = vld [vmem:[#allocation9 + $0x324] sm:$0xf]
        %v2869 = vld [vmem:[#allocation9 + $0x328] sm:$0xf]
        %v2870 = vld [vmem:[#allocation9 + $0x32c] sm:$0xf]
        %v2871 = vld [vmem:[#allocation9 + $0x330] sm:$0xf]
        %v2872 = vld [vmem:[#allocation9 + $0x334] sm:$0xf]
        %v2873 = vld [vmem:[#allocation9 + $0x338] sm:$0xf]
        %v2874 = vld [vmem:[#allocation9 + $0x33c] sm:$0xf]
        %v2875 = vunpack.c.l.b16 %v2858
        %v2876 = vpack.c.b16 %v2875, %v2303
        %v2894 = vunpack.c.l.b16 %v2859
        %v2895 = vunpack.c.l.b16 %v2860
        %v2896 = vunpack.c.l.b16 %v2861
        %v2897 = vunpack.c.l.b16 %v2862
        %v2898 = vunpack.c.l.b16 %v2863
        %v2899 = vunpack.c.l.b16 %v2864
        %v2900 = vunpack.c.l.b16 %v2865
        %v2901 = vunpack.c.l.b16 %v2866
        %v2902 = vunpack.c.l.b16 %v2867
        %v2903 = vunpack.c.l.b16 %v2868
        %v2904 = vunpack.c.l.b16 %v2869
        %v2905 = vunpack.c.l.b16 %v2870
        %v2906 = vunpack.c.l.b16 %v2871
        %v2907 = vunpack.c.l.b16 %v2872
        %v2908 = vunpack.c.l.b16 %v2873
        %v2909 = vunpack.c.l.b16 %v2874
        %v2910 = vpack.c.b16 %v2895, %v2894
        %v2911 = vpack.c.b16 %v2897, %v2896
        %v2912 = vpack.c.b16 %v2899, %v2898
        %v2913 = vpack.c.b16 %v2901, %v2900
        %v2914 = vpack.c.b16 %v2903, %v2902
        %v2915 = vpack.c.b16 %v2905, %v2904
        %v2916 = vpack.c.b16 %v2907, %v2906
        %v2917 = vpack.c.b16 %v2909, %v2908
        %2926 = vmatpush.bf16.msra.mxu0 %v2917
        %2927 = vmatpush.bf16.msra.mxu0 %v2916
        %2928 = vmatpush.bf16.msra.mxu0 %v2915
        %2929 = vmatpush.bf16.msra.mxu0 %v2914
        %2930 = vmatpush.bf16.msra.mxu0 %v2913
        %2931 = vmatpush.bf16.msra.mxu0 %v2912
        %2932 = vmatpush.bf16.msra.mxu0 %v2911
        %2933 = vmatpush.bf16.msra.mxu0 %v2910
        %2934 = vmatmul.bf16.gmra.mxu0 %v1603
        %v2935 = vpop.f32.mrf.mxu0
        %v2936 = vadd.f32 0.0, %v2935
        %v2937 = vpop.f32.mrf.mxu0
        %v2938 = vadd.f32 0.0, %v2937
        %2939 = vmatmul.bf16.gmra.mxu0 %v1604
        %v2940 = vpop.f32.mrf.mxu0
        %v2941 = vadd.f32 0.0, %v2940
        %v2942 = vpop.f32.mrf.mxu0
        %v2943 = vadd.f32 0.0, %v2942
        %2944 = vmatmul.bf16.gmra.mxu0 %v1605
        %v2945 = vpop.f32.mrf.mxu0
        %v2946 = vadd.f32 0.0, %v2945
        %v2947 = vpop.f32.mrf.mxu0
        %v2948 = vadd.f32 0.0, %v2947
        %2949 = vmatmul.bf16.gmra.mxu0 %v2876
        %v2950 = vpop.f32.mrf.mxu0
        %v2951 = vadd.f32 0.0, %v2950
        %v2952 = vpop.f32.mrf.mxu0
        %v2953 = vadd.f32 0.0, %v2952
        %2954 = vdwg.mxu0
        %v2955 = vadd.f32 %v2846, %v2936
        %v2956 = vadd.f32 %v2847, %v2938
        %v2957 = vadd.f32 %v2848, %v2941
        %v2958 = vadd.f32 %v2849, %v2943
        %v2959 = vadd.f32 %v2850, %v2946
        %v2960 = vadd.f32 %v2851, %v2948
        %v2961 = vadd.f32 %v2852, %v2951
        %v2962 = vadd.f32 %v2853, %v2953
        %v2963 = vrot.slane %v2737, 5
        %v2964 = vrot.slane %v2740, 6
        %v2965 = vor.u32 %v2963, %v2964
        %v2966 = vrot.slane %v2965, 4
        %v2967 = vshrl.u32 %v1189, 16
        %v2969 = vrot.slane %v2967, 5
        %v2970 = vrot.slane %v2746, 6
        %v2971 = vor.u32 %v2969, %v2970
        %v2972 = vsel %vm1697, %v2966, %v2971
        %v2973 = vld [vmem:[#allocation9 + $0x340] sm:$0xf]
        %v2974 = vld [vmem:[#allocation9 + $0x344] sm:$0xf]
        %v2975 = vld [vmem:[#allocation9 + $0x348] sm:$0xf]
        %v2976 = vld [vmem:[#allocation9 + $0x34c] sm:$0xf]
        %v2977 = vld [vmem:[#allocation9 + $0x350] sm:$0xf]
        %v2978 = vld [vmem:[#allocation9 + $0x354] sm:$0xf]
        %v2979 = vld [vmem:[#allocation9 + $0x358] sm:$0xf]
        %v2980 = vld [vmem:[#allocation9 + $0x35c] sm:$0xf]
        %v2981 = vld [vmem:[#allocation9 + $0x360] sm:$0xf]
        %v2982 = vld [vmem:[#allocation9 + $0x364] sm:$0xf]
        %v2983 = vld [vmem:[#allocation9 + $0x368] sm:$0xf]
        %v2984 = vld [vmem:[#allocation9 + $0x36c] sm:$0xf]
        %v2985 = vld [vmem:[#allocation9 + $0x370] sm:$0xf]
        %v2986 = vld [vmem:[#allocation9 + $0x374] sm:$0xf]
        %v2987 = vld [vmem:[#allocation9 + $0x378] sm:$0xf]
        %v2988 = vld [vmem:[#allocation9 + $0x37c] sm:$0xf]
        %v2989 = vunpack.c.l.b16 %v2972
        %v2990 = vpack.c.b16 %v2989, %v2423
        %v3008 = vunpack.c.l.b16 %v2973
        %v3009 = vunpack.c.l.b16 %v2974
        %v3010 = vunpack.c.l.b16 %v2975
        %v3011 = vunpack.c.l.b16 %v2976
        %v3012 = vunpack.c.l.b16 %v2977
        %v3013 = vunpack.c.l.b16 %v2978
        %v3014 = vunpack.c.l.b16 %v2979
        %v3015 = vunpack.c.l.b16 %v2980
        %v3016 = vunpack.c.l.b16 %v2981
        %v3017 = vunpack.c.l.b16 %v2982
        %v3018 = vunpack.c.l.b16 %v2983
        %v3019 = vunpack.c.l.b16 %v2984
        %v3020 = vunpack.c.l.b16 %v2985
        %v3021 = vunpack.c.l.b16 %v2986
        %v3022 = vunpack.c.l.b16 %v2987
        %v3023 = vunpack.c.l.b16 %v2988
        %v3024 = vpack.c.b16 %v3009, %v3008
        %v3025 = vpack.c.b16 %v3011, %v3010
        %v3026 = vpack.c.b16 %v3013, %v3012
        %v3027 = vpack.c.b16 %v3015, %v3014
        %v3028 = vpack.c.b16 %v3017, %v3016
        %v3029 = vpack.c.b16 %v3019, %v3018
        %v3030 = vpack.c.b16 %v3021, %v3020
        %v3031 = vpack.c.b16 %v3023, %v3022
        %3040 = vmatpush.bf16.msra.mxu0 %v3031
        %3041 = vmatpush.bf16.msra.mxu0 %v3030
        %3042 = vmatpush.bf16.msra.mxu0 %v3029
        %3043 = vmatpush.bf16.msra.mxu0 %v3028
        %3044 = vmatpush.bf16.msra.mxu0 %v3027
        %3045 = vmatpush.bf16.msra.mxu0 %v3026
        %3046 = vmatpush.bf16.msra.mxu0 %v3025
        %3047 = vmatpush.bf16.msra.mxu0 %v3024
        %3048 = vmatmul.bf16.gmra.mxu0 %v1803
        %v3049 = vpop.f32.mrf.mxu0
        %v3050 = vadd.f32 0.0, %v3049
        %v3051 = vpop.f32.mrf.mxu0
        %v3052 = vadd.f32 0.0, %v3051
        %3053 = vmatmul.bf16.gmra.mxu0 %v1804
        %v3054 = vpop.f32.mrf.mxu0
        %v3055 = vadd.f32 0.0, %v3054
        %v3056 = vpop.f32.mrf.mxu0
        %v3057 = vadd.f32 0.0, %v3056
        %3058 = vmatmul.bf16.gmra.mxu0 %v1805
        %v3059 = vpop.f32.mrf.mxu0
        %v3060 = vadd.f32 0.0, %v3059
        %v3061 = vpop.f32.mrf.mxu0
        %v3062 = vadd.f32 0.0, %v3061
        %3063 = vmatmul.bf16.gmra.mxu0 %v2990
        %v3064 = vpop.f32.mrf.mxu0
        %v3065 = vadd.f32 0.0, %v3064
        %v3066 = vpop.f32.mrf.mxu0
        %v3067 = vadd.f32 0.0, %v3066
        %3068 = vdwg.mxu0
        %v3069 = vadd.f32 %v2955, %v3050
        %v3070 = vadd.f32 %v2956, %v3052
        %v3071 = vadd.f32 %v2957, %v3055
        %v3072 = vadd.f32 %v2958, %v3057
        %v3073 = vadd.f32 %v2959, %v3060
        %v3074 = vadd.f32 %v2960, %v3062
        %v3075 = vadd.f32 %v2961, %v3065
        %v3076 = vadd.f32 %v2962, %v3067
        %v3077 = vrot.slane %v1188, 6
        %v3078 = vrot.slane %v3077, 4
        %v3079 = vrot.slane %v1189, 6
        %v3080 = vsel %vm1897, %v3078, %v3079
        %v3081 = vld [vmem:[#allocation9 + $0x380] sm:$0xf]
        %v3082 = vld [vmem:[#allocation9 + $0x384] sm:$0xf]
        %v3083 = vld [vmem:[#allocation9 + $0x388] sm:$0xf]
        %v3084 = vld [vmem:[#allocation9 + $0x38c] sm:$0xf]
        %v3085 = vld [vmem:[#allocation9 + $0x390] sm:$0xf]
        %v3086 = vld [vmem:[#allocation9 + $0x394] sm:$0xf]
        %v3087 = vld [vmem:[#allocation9 + $0x398] sm:$0xf]
        %v3088 = vld [vmem:[#allocation9 + $0x39c] sm:$0xf]
        %v3089 = vld [vmem:[#allocation9 + $0x3a0] sm:$0xf]
        %v3090 = vld [vmem:[#allocation9 + $0x3a4] sm:$0xf]
        %v3091 = vld [vmem:[#allocation9 + $0x3a8] sm:$0xf]
        %v3092 = vld [vmem:[#allocation9 + $0x3ac] sm:$0xf]
        %v3093 = vld [vmem:[#allocation9 + $0x3b0] sm:$0xf]
        %v3094 = vld [vmem:[#allocation9 + $0x3b4] sm:$0xf]
        %v3095 = vld [vmem:[#allocation9 + $0x3b8] sm:$0xf]
        %v3096 = vld [vmem:[#allocation9 + $0x3bc] sm:$0xf]
        %v3097 = vunpack.c.l.b16 %v3080
        %v3098 = vpack.c.b16 %v3097, %v2537
        %v3116 = vunpack.c.l.b16 %v3081
        %v3117 = vunpack.c.l.b16 %v3082
        %v3118 = vunpack.c.l.b16 %v3083
        %v3119 = vunpack.c.l.b16 %v3084
        %v3120 = vunpack.c.l.b16 %v3085
        %v3121 = vunpack.c.l.b16 %v3086
        %v3122 = vunpack.c.l.b16 %v3087
        %v3123 = vunpack.c.l.b16 %v3088
        %v3124 = vunpack.c.l.b16 %v3089
        %v3125 = vunpack.c.l.b16 %v3090
        %v3126 = vunpack.c.l.b16 %v3091
        %v3127 = vunpack.c.l.b16 %v3092
        %v3128 = vunpack.c.l.b16 %v3093
        %v3129 = vunpack.c.l.b16 %v3094
        %v3130 = vunpack.c.l.b16 %v3095
        %v3131 = vunpack.c.l.b16 %v3096
        %v3132 = vpack.c.b16 %v3117, %v3116
        %v3133 = vpack.c.b16 %v3119, %v3118
        %v3134 = vpack.c.b16 %v3121, %v3120
        %v3135 = vpack.c.b16 %v3123, %v3122
        %v3136 = vpack.c.b16 %v3125, %v3124
        %v3137 = vpack.c.b16 %v3127, %v3126
        %v3138 = vpack.c.b16 %v3129, %v3128
        %v3139 = vpack.c.b16 %v3131, %v3130
        %3148 = vmatpush.bf16.msra.mxu0 %v3139
        %3149 = vmatpush.bf16.msra.mxu0 %v3138
        %3150 = vmatpush.bf16.msra.mxu0 %v3137
        %3151 = vmatpush.bf16.msra.mxu0 %v3136
        %3152 = vmatpush.bf16.msra.mxu0 %v3135
        %3153 = vmatpush.bf16.msra.mxu0 %v3134
        %3154 = vmatpush.bf16.msra.mxu0 %v3133
        %3155 = vmatpush.bf16.msra.mxu0 %v3132
        %3156 = vmatmul.bf16.gmra.mxu0 %v1955
        %v3157 = vpop.f32.mrf.mxu0
        %v3158 = vadd.f32 0.0, %v3157
        %v3159 = vpop.f32.mrf.mxu0
        %v3160 = vadd.f32 0.0, %v3159
        %3161 = vmatmul.bf16.gmra.mxu0 %v1956
        %v3162 = vpop.f32.mrf.mxu0
        %v3163 = vadd.f32 0.0, %v3162
        %v3164 = vpop.f32.mrf.mxu0
        %v3165 = vadd.f32 0.0, %v3164
        %3166 = vmatmul.bf16.gmra.mxu0 %v1957
        %v3167 = vpop.f32.mrf.mxu0
        %v3168 = vadd.f32 0.0, %v3167
        %v3169 = vpop.f32.mrf.mxu0
        %v3170 = vadd.f32 0.0, %v3169
        %3171 = vmatmul.bf16.gmra.mxu0 %v3098
        %v3172 = vpop.f32.mrf.mxu0
        %v3173 = vadd.f32 0.0, %v3172
        %v3174 = vpop.f32.mrf.mxu0
        %v3175 = vadd.f32 0.0, %v3174
        %3176 = vdwg.mxu0
        %v3177 = vadd.f32 %v3069, %v3158
        %v3178 = vadd.f32 %v3070, %v3160
        %v3179 = vadd.f32 %v3071, %v3163
        %v3180 = vadd.f32 %v3072, %v3165
        %v3181 = vadd.f32 %v3073, %v3168
        %v3182 = vadd.f32 %v3074, %v3170
        %v3183 = vadd.f32 %v3075, %v3173
        %v3184 = vadd.f32 %v3076, %v3175
        %v3185 = vld [vmem:[#allocation9 + $0x3c0] sm:$0xf]
        %v3186 = vld [vmem:[#allocation9 + $0x3c4] sm:$0xf]
        %v3187 = vld [vmem:[#allocation9 + $0x3c8] sm:$0xf]
        %v3188 = vld [vmem:[#allocation9 + $0x3cc] sm:$0xf]
        %v3189 = vld [vmem:[#allocation9 + $0x3d0] sm:$0xf]
        %v3190 = vld [vmem:[#allocation9 + $0x3d4] sm:$0xf]
        %v3191 = vld [vmem:[#allocation9 + $0x3d8] sm:$0xf]
        %v3192 = vld [vmem:[#allocation9 + $0x3dc] sm:$0xf]
        %v3193 = vld [vmem:[#allocation9 + $0x3e0] sm:$0xf]
        %v3194 = vld [vmem:[#allocation9 + $0x3e4] sm:$0xf]
        %v3195 = vld [vmem:[#allocation9 + $0x3e8] sm:$0xf]
        %v3196 = vld [vmem:[#allocation9 + $0x3ec] sm:$0xf]
        %v3197 = vld [vmem:[#allocation9 + $0x3f0] sm:$0xf]
        %v3198 = vld [vmem:[#allocation9 + $0x3f4] sm:$0xf]
        %v3199 = vld [vmem:[#allocation9 + $0x3f8] sm:$0xf]
        %v3200 = vld [vmem:[#allocation9 + $0x3fc] sm:$0xf]
        %v3202 = vunpack.c.l.b16 %v1190
        %v3203 = vpack.c.b16 %v3202, %v2648
        %v3221 = vunpack.c.l.b16 %v3185
        %v3222 = vunpack.c.l.b16 %v3186
        %v3223 = vunpack.c.l.b16 %v3187
        %v3224 = vunpack.c.l.b16 %v3188
        %v3225 = vunpack.c.l.b16 %v3189
        %v3226 = vunpack.c.l.b16 %v3190
        %v3227 = vunpack.c.l.b16 %v3191
        %v3228 = vunpack.c.l.b16 %v3192
        %v3229 = vunpack.c.l.b16 %v3193
        %v3230 = vunpack.c.l.b16 %v3194
        %v3231 = vunpack.c.l.b16 %v3195
        %v3232 = vunpack.c.l.b16 %v3196
        %v3233 = vunpack.c.l.b16 %v3197
        %v3234 = vunpack.c.l.b16 %v3198
        %v3235 = vunpack.c.l.b16 %v3199
        %v3236 = vunpack.c.l.b16 %v3200
        %v3237 = vpack.c.b16 %v3222, %v3221
        %v3238 = vpack.c.b16 %v3224, %v3223
        %v3239 = vpack.c.b16 %v3226, %v3225
        %v3240 = vpack.c.b16 %v3228, %v3227
        %v3241 = vpack.c.b16 %v3230, %v3229
        %v3242 = vpack.c.b16 %v3232, %v3231
        %v3243 = vpack.c.b16 %v3234, %v3233
        %v3244 = vpack.c.b16 %v3236, %v3235
        %3253 = vmatpush.bf16.msra.mxu0 %v3244
        %3254 = vmatpush.bf16.msra.mxu0 %v3243
        %3255 = vmatpush.bf16.msra.mxu0 %v3242
        %3256 = vmatpush.bf16.msra.mxu0 %v3241
        %3257 = vmatpush.bf16.msra.mxu0 %v3240
        %3258 = vmatpush.bf16.msra.mxu0 %v3239
        %3259 = vmatpush.bf16.msra.mxu0 %v3238
        %3260 = vmatpush.bf16.msra.mxu0 %v3237
        %3261 = vmatmul.bf16.gmra.mxu0 %v2066
        %v3262 = vpop.f32.mrf.mxu0
        %v3263 = vadd.f32 0.0, %v3262
        %v3264 = vpop.f32.mrf.mxu0
        %v3265 = vadd.f32 0.0, %v3264
        %3266 = vmatmul.bf16.gmra.mxu0 %v2067
        %v3267 = vpop.f32.mrf.mxu0
        %v3268 = vadd.f32 0.0, %v3267
        %v3269 = vpop.f32.mrf.mxu0
        %v3270 = vadd.f32 0.0, %v3269
        %3271 = vmatmul.bf16.gmra.mxu0 %v2068
        %v3272 = vpop.f32.mrf.mxu0
        %v3273 = vadd.f32 0.0, %v3272
        %v3274 = vpop.f32.mrf.mxu0
        %v3275 = vadd.f32 0.0, %v3274
        %3276 = vmatmul.bf16.gmra.mxu0 %v3203
        %v3277 = vpop.f32.mrf.mxu0
        %v3278 = vadd.f32 0.0, %v3277
        %v3279 = vpop.f32.mrf.mxu0
        %v3280 = vadd.f32 0.0, %v3279
        %3281 = vdwg.mxu0
        %v3282 = vadd.f32 %v3177, %v3263
        %v3283 = vadd.f32 %v3178, %v3265
        %v3284 = vadd.f32 %v3179, %v3268
        %v3285 = vadd.f32 %v3180, %v3270
        %v3286 = vadd.f32 %v3181, %v3273
        %v3287 = vadd.f32 %v3182, %v3275
        %v3288 = vadd.f32 %v3183, %v3278
        %v3289 = vadd.f32 %v3184, %v3280
        %v3291 = vshrl.u32 %v1190, 16
        %v3293 = vrot.slane %v3291, 4
        %v3294 = vshll.u32 %v1190, 16
        %v3296 = vrot.slane %v3294, 5
        %v3297 = vor.u32 %v3293, %v3296
        %v3298 = vrot.slane %v3297, 4
        %v3300 = vshll.u32 %v1191, 16
        %v3302 = vrot.slane %v3300, 5
        %v3303 = vsel %vm1212, %v3298, %v3302
        %v3304 = vld [vmem:[#allocation9 + $0x400] sm:$0xf]
        %v3305 = vld [vmem:[#allocation9 + $0x404] sm:$0xf]
        %v3306 = vld [vmem:[#allocation9 + $0x408] sm:$0xf]
        %v3307 = vld [vmem:[#allocation9 + $0x40c] sm:$0xf]
        %v3308 = vld [vmem:[#allocation9 + $0x410] sm:$0xf]
        %v3309 = vld [vmem:[#allocation9 + $0x414] sm:$0xf]
        %v3310 = vld [vmem:[#allocation9 + $0x418] sm:$0xf]
        %v3311 = vld [vmem:[#allocation9 + $0x41c] sm:$0xf]
        %v3312 = vld [vmem:[#allocation9 + $0x420] sm:$0xf]
        %v3313 = vld [vmem:[#allocation9 + $0x424] sm:$0xf]
        %v3314 = vld [vmem:[#allocation9 + $0x428] sm:$0xf]
        %v3315 = vld [vmem:[#allocation9 + $0x42c] sm:$0xf]
        %v3316 = vld [vmem:[#allocation9 + $0x430] sm:$0xf]
        %v3317 = vld [vmem:[#allocation9 + $0x434] sm:$0xf]
        %v3318 = vld [vmem:[#allocation9 + $0x438] sm:$0xf]
        %v3319 = vld [vmem:[#allocation9 + $0x43c] sm:$0xf]
        %v3320 = vunpack.c.l.b16 %v3303
        %v3321 = vpack.c.b16 %v3320, %v2766
        %v3339 = vunpack.c.l.b16 %v3304
        %v3340 = vunpack.c.l.b16 %v3305
        %v3341 = vunpack.c.l.b16 %v3306
        %v3342 = vunpack.c.l.b16 %v3307
        %v3343 = vunpack.c.l.b16 %v3308
        %v3344 = vunpack.c.l.b16 %v3309
        %v3345 = vunpack.c.l.b16 %v3310
        %v3346 = vunpack.c.l.b16 %v3311
        %v3347 = vunpack.c.l.b16 %v3312
        %v3348 = vunpack.c.l.b16 %v3313
        %v3349 = vunpack.c.l.b16 %v3314
        %v3350 = vunpack.c.l.b16 %v3315
        %v3351 = vunpack.c.l.b16 %v3316
        %v3352 = vunpack.c.l.b16 %v3317
        %v3353 = vunpack.c.l.b16 %v3318
        %v3354 = vunpack.c.l.b16 %v3319
        %v3355 = vpack.c.b16 %v3340, %v3339
        %v3356 = vpack.c.b16 %v3342, %v3341
        %v3357 = vpack.c.b16 %v3344, %v3343
        %v3358 = vpack.c.b16 %v3346, %v3345
        %v3359 = vpack.c.b16 %v3348, %v3347
        %v3360 = vpack.c.b16 %v3350, %v3349
        %v3361 = vpack.c.b16 %v3352, %v3351
        %v3362 = vpack.c.b16 %v3354, %v3353
        %3371 = vmatpush.bf16.msra.mxu0 %v3362
        %3372 = vmatpush.bf16.msra.mxu0 %v3361
        %3373 = vmatpush.bf16.msra.mxu0 %v3360
        %3374 = vmatpush.bf16.msra.mxu0 %v3359
        %3375 = vmatpush.bf16.msra.mxu0 %v3358
        %3376 = vmatpush.bf16.msra.mxu0 %v3357
        %3377 = vmatpush.bf16.msra.mxu0 %v3356
        %3378 = vmatpush.bf16.msra.mxu0 %v3355
        %3379 = vmatmul.bf16.gmra.mxu0 %v2190
        %v3380 = vpop.f32.mrf.mxu0
        %v3381 = vadd.f32 0.0, %v3380
        %v3382 = vpop.f32.mrf.mxu0
        %v3383 = vadd.f32 0.0, %v3382
        %3384 = vmatmul.bf16.gmra.mxu0 %v2191
        %v3385 = vpop.f32.mrf.mxu0
        %v3386 = vadd.f32 0.0, %v3385
        %v3387 = vpop.f32.mrf.mxu0
        %v3388 = vadd.f32 0.0, %v3387
        %3389 = vmatmul.bf16.gmra.mxu0 %v2192
        %v3390 = vpop.f32.mrf.mxu0
        %v3391 = vadd.f32 0.0, %v3390
        %v3392 = vpop.f32.mrf.mxu0
        %v3393 = vadd.f32 0.0, %v3392
        %3394 = vmatmul.bf16.gmra.mxu0 %v3321
        %v3395 = vpop.f32.mrf.mxu0
        %v3396 = vadd.f32 0.0, %v3395
        %v3397 = vpop.f32.mrf.mxu0
        %v3398 = vadd.f32 0.0, %v3397
        %3399 = vdwg.mxu0
        %v3400 = vadd.f32 %v3282, %v3381
        %v3401 = vadd.f32 %v3283, %v3383
        %v3402 = vadd.f32 %v3284, %v3386
        %v3403 = vadd.f32 %v3285, %v3388
        %v3404 = vadd.f32 %v3286, %v3391
        %v3405 = vadd.f32 %v3287, %v3393
        %v3406 = vadd.f32 %v3288, %v3396
        %v3407 = vadd.f32 %v3289, %v3398
        %v3409 = vrot.slane %v1190, 5
        %v3410 = vrot.slane %v3409, 4
        %v3411 = vrot.slane %v1191, 5
        %v3412 = vsel %vm1545, %v3410, %v3411
        %v3413 = vld [vmem:[#allocation9 + $0x440] sm:$0xf]
        %v3414 = vld [vmem:[#allocation9 + $0x444] sm:$0xf]
        %v3415 = vld [vmem:[#allocation9 + $0x448] sm:$0xf]
        %v3416 = vld [vmem:[#allocation9 + $0x44c] sm:$0xf]
        %v3417 = vld [vmem:[#allocation9 + $0x450] sm:$0xf]
        %v3418 = vld [vmem:[#allocation9 + $0x454] sm:$0xf]
        %v3419 = vld [vmem:[#allocation9 + $0x458] sm:$0xf]
        %v3420 = vld [vmem:[#allocation9 + $0x45c] sm:$0xf]
        %v3421 = vld [vmem:[#allocation9 + $0x460] sm:$0xf]
        %v3422 = vld [vmem:[#allocation9 + $0x464] sm:$0xf]
        %v3423 = vld [vmem:[#allocation9 + $0x468] sm:$0xf]
        %v3424 = vld [vmem:[#allocation9 + $0x46c] sm:$0xf]
        %v3425 = vld [vmem:[#allocation9 + $0x470] sm:$0xf]
        %v3426 = vld [vmem:[#allocation9 + $0x474] sm:$0xf]
        %v3427 = vld [vmem:[#allocation9 + $0x478] sm:$0xf]
        %v3428 = vld [vmem:[#allocation9 + $0x47c] sm:$0xf]
        %v3429 = vunpack.c.l.b16 %v3412
        %v3430 = vpack.c.b16 %v3429, %v2875
        %v3448 = vunpack.c.l.b16 %v3413
        %v3449 = vunpack.c.l.b16 %v3414
        %v3450 = vunpack.c.l.b16 %v3415
        %v3451 = vunpack.c.l.b16 %v3416
        %v3452 = vunpack.c.l.b16 %v3417
        %v3453 = vunpack.c.l.b16 %v3418
        %v3454 = vunpack.c.l.b16 %v3419
        %v3455 = vunpack.c.l.b16 %v3420
        %v3456 = vunpack.c.l.b16 %v3421
        %v3457 = vunpack.c.l.b16 %v3422
        %v3458 = vunpack.c.l.b16 %v3423
        %v3459 = vunpack.c.l.b16 %v3424
        %v3460 = vunpack.c.l.b16 %v3425
        %v3461 = vunpack.c.l.b16 %v3426
        %v3462 = vunpack.c.l.b16 %v3427
        %v3463 = vunpack.c.l.b16 %v3428
        %v3464 = vpack.c.b16 %v3449, %v3448
        %v3465 = vpack.c.b16 %v3451, %v3450
        %v3466 = vpack.c.b16 %v3453, %v3452
        %v3467 = vpack.c.b16 %v3455, %v3454
        %v3468 = vpack.c.b16 %v3457, %v3456
        %v3469 = vpack.c.b16 %v3459, %v3458
        %v3470 = vpack.c.b16 %v3461, %v3460
        %v3471 = vpack.c.b16 %v3463, %v3462
        %3480 = vmatpush.bf16.msra.mxu0 %v3471
        %3481 = vmatpush.bf16.msra.mxu0 %v3470
        %3482 = vmatpush.bf16.msra.mxu0 %v3469
        %3483 = vmatpush.bf16.msra.mxu0 %v3468
        %3484 = vmatpush.bf16.msra.mxu0 %v3467
        %3485 = vmatpush.bf16.msra.mxu0 %v3466
        %3486 = vmatpush.bf16.msra.mxu0 %v3465
        %3487 = vmatpush.bf16.msra.mxu0 %v3464
        %3488 = vmatmul.bf16.gmra.mxu0 %v2305
        %v3489 = vpop.f32.mrf.mxu0
        %v3490 = vadd.f32 0.0, %v3489
        %v3491 = vpop.f32.mrf.mxu0
        %v3492 = vadd.f32 0.0, %v3491
        %3493 = vmatmul.bf16.gmra.mxu0 %v2306
        %v3494 = vpop.f32.mrf.mxu0
        %v3495 = vadd.f32 0.0, %v3494
        %v3496 = vpop.f32.mrf.mxu0
        %v3497 = vadd.f32 0.0, %v3496
        %3498 = vmatmul.bf16.gmra.mxu0 %v2307
        %v3499 = vpop.f32.mrf.mxu0
        %v3500 = vadd.f32 0.0, %v3499
        %v3501 = vpop.f32.mrf.mxu0
        %v3502 = vadd.f32 0.0, %v3501
        %3503 = vmatmul.bf16.gmra.mxu0 %v3430
        %v3504 = vpop.f32.mrf.mxu0
        %v3505 = vadd.f32 0.0, %v3504
        %v3506 = vpop.f32.mrf.mxu0
        %v3507 = vadd.f32 0.0, %v3506
        %3508 = vdwg.mxu0
        %v3509 = vadd.f32 %v3400, %v3490
        %v3510 = vadd.f32 %v3401, %v3492
        %v3511 = vadd.f32 %v3402, %v3495
        %v3512 = vadd.f32 %v3403, %v3497
        %v3513 = vadd.f32 %v3404, %v3500
        %v3514 = vadd.f32 %v3405, %v3502
        %v3515 = vadd.f32 %v3406, %v3505
        %v3516 = vadd.f32 %v3407, %v3507
        %v3517 = vrot.slane %v3291, 5
        %v3518 = vrot.slane %v3294, 6
        %v3519 = vor.u32 %v3517, %v3518
        %v3520 = vrot.slane %v3519, 4
        %v3521 = vshrl.u32 %v1191, 16
        %v3523 = vrot.slane %v3521, 5
        %v3524 = vrot.slane %v3300, 6
        %v3525 = vor.u32 %v3523, %v3524
        %v3526 = vsel %vm1697, %v3520, %v3525
        %v3527 = vld [vmem:[#allocation9 + $0x480] sm:$0xf]
        %v3528 = vld [vmem:[#allocation9 + $0x484] sm:$0xf]
        %v3529 = vld [vmem:[#allocation9 + $0x488] sm:$0xf]
        %v3530 = vld [vmem:[#allocation9 + $0x48c] sm:$0xf]
        %v3531 = vld [vmem:[#allocation9 + $0x490] sm:$0xf]
        %v3532 = vld [vmem:[#allocation9 + $0x494] sm:$0xf]
        %v3533 = vld [vmem:[#allocation9 + $0x498] sm:$0xf]
        %v3534 = vld [vmem:[#allocation9 + $0x49c] sm:$0xf]
        %v3535 = vld [vmem:[#allocation9 + $0x4a0] sm:$0xf]
        %v3536 = vld [vmem:[#allocation9 + $0x4a4] sm:$0xf]
        %v3537 = vld [vmem:[#allocation9 + $0x4a8] sm:$0xf]
        %v3538 = vld [vmem:[#allocation9 + $0x4ac] sm:$0xf]
        %v3539 = vld [vmem:[#allocation9 + $0x4b0] sm:$0xf]
        %v3540 = vld [vmem:[#allocation9 + $0x4b4] sm:$0xf]
        %v3541 = vld [vmem:[#allocation9 + $0x4b8] sm:$0xf]
        %v3542 = vld [vmem:[#allocation9 + $0x4bc] sm:$0xf]
        %v3543 = vunpack.c.l.b16 %v3526
        %v3544 = vpack.c.b16 %v3543, %v2989
        %v3562 = vunpack.c.l.b16 %v3527
        %v3563 = vunpack.c.l.b16 %v3528
        %v3564 = vunpack.c.l.b16 %v3529
        %v3565 = vunpack.c.l.b16 %v3530
        %v3566 = vunpack.c.l.b16 %v3531
        %v3567 = vunpack.c.l.b16 %v3532
        %v3568 = vunpack.c.l.b16 %v3533
        %v3569 = vunpack.c.l.b16 %v3534
        %v3570 = vunpack.c.l.b16 %v3535
        %v3571 = vunpack.c.l.b16 %v3536
        %v3572 = vunpack.c.l.b16 %v3537
        %v3573 = vunpack.c.l.b16 %v3538
        %v3574 = vunpack.c.l.b16 %v3539
        %v3575 = vunpack.c.l.b16 %v3540
        %v3576 = vunpack.c.l.b16 %v3541
        %v3577 = vunpack.c.l.b16 %v3542
        %v3578 = vpack.c.b16 %v3563, %v3562
        %v3579 = vpack.c.b16 %v3565, %v3564
        %v3580 = vpack.c.b16 %v3567, %v3566
        %v3581 = vpack.c.b16 %v3569, %v3568
        %v3582 = vpack.c.b16 %v3571, %v3570
        %v3583 = vpack.c.b16 %v3573, %v3572
        %v3584 = vpack.c.b16 %v3575, %v3574
        %v3585 = vpack.c.b16 %v3577, %v3576
        %3594 = vmatpush.bf16.msra.mxu0 %v3585
        %3595 = vmatpush.bf16.msra.mxu0 %v3584
        %3596 = vmatpush.bf16.msra.mxu0 %v3583
        %3597 = vmatpush.bf16.msra.mxu0 %v3582
        %3598 = vmatpush.bf16.msra.mxu0 %v3581
        %3599 = vmatpush.bf16.msra.mxu0 %v3580
        %3600 = vmatpush.bf16.msra.mxu0 %v3579
        %3601 = vmatpush.bf16.msra.mxu0 %v3578
        %3602 = vmatmul.bf16.gmra.mxu0 %v2425
        %v3603 = vpop.f32.mrf.mxu0
        %v3604 = vadd.f32 0.0, %v3603
        %v3605 = vpop.f32.mrf.mxu0
        %v3606 = vadd.f32 0.0, %v3605
        %3607 = vmatmul.bf16.gmra.mxu0 %v2426
        %v3608 = vpop.f32.mrf.mxu0
        %v3609 = vadd.f32 0.0, %v3608
        %v3610 = vpop.f32.mrf.mxu0
        %v3611 = vadd.f32 0.0, %v3610
        %3612 = vmatmul.bf16.gmra.mxu0 %v2427
        %v3613 = vpop.f32.mrf.mxu0
        %v3614 = vadd.f32 0.0, %v3613
        %v3615 = vpop.f32.mrf.mxu0
        %v3616 = vadd.f32 0.0, %v3615
        %3617 = vmatmul.bf16.gmra.mxu0 %v3544
        %v3618 = vpop.f32.mrf.mxu0
        %v3619 = vadd.f32 0.0, %v3618
        %v3620 = vpop.f32.mrf.mxu0
        %v3621 = vadd.f32 0.0, %v3620
        %3622 = vdwg.mxu0
        %v3623 = vadd.f32 %v3509, %v3604
        %v3624 = vadd.f32 %v3510, %v3606
        %v3625 = vadd.f32 %v3511, %v3609
        %v3626 = vadd.f32 %v3512, %v3611
        %v3627 = vadd.f32 %v3513, %v3614
        %v3628 = vadd.f32 %v3514, %v3616
        %v3629 = vadd.f32 %v3515, %v3619
        %v3630 = vadd.f32 %v3516, %v3621
        %v3631 = vrot.slane %v1190, 6
        %v3632 = vrot.slane %v3631, 4
        %v3633 = vrot.slane %v1191, 6
        %v3634 = vsel %vm1897, %v3632, %v3633
        %v3635 = vld [vmem:[#allocation9 + $0x4c0] sm:$0xf]
        %v3636 = vld [vmem:[#allocation9 + $0x4c4] sm:$0xf]
        %v3637 = vld [vmem:[#allocation9 + $0x4c8] sm:$0xf]
        %v3638 = vld [vmem:[#allocation9 + $0x4cc] sm:$0xf]
        %v3639 = vld [vmem:[#allocation9 + $0x4d0] sm:$0xf]
        %v3640 = vld [vmem:[#allocation9 + $0x4d4] sm:$0xf]
        %v3641 = vld [vmem:[#allocation9 + $0x4d8] sm:$0xf]
        %v3642 = vld [vmem:[#allocation9 + $0x4dc] sm:$0xf]
        %v3643 = vld [vmem:[#allocation9 + $0x4e0] sm:$0xf]
        %v3644 = vld [vmem:[#allocation9 + $0x4e4] sm:$0xf]
        %v3645 = vld [vmem:[#allocation9 + $0x4e8] sm:$0xf]
        %v3646 = vld [vmem:[#allocation9 + $0x4ec] sm:$0xf]
        %v3647 = vld [vmem:[#allocation9 + $0x4f0] sm:$0xf]
        %v3648 = vld [vmem:[#allocation9 + $0x4f4] sm:$0xf]
        %v3649 = vld [vmem:[#allocation9 + $0x4f8] sm:$0xf]
        %v3650 = vld [vmem:[#allocation9 + $0x4fc] sm:$0xf]
        %v3651 = vunpack.c.l.b16 %v3634
        %v3652 = vpack.c.b16 %v3651, %v3097
        %v3670 = vunpack.c.l.b16 %v3635
        %v3671 = vunpack.c.l.b16 %v3636
        %v3672 = vunpack.c.l.b16 %v3637
        %v3673 = vunpack.c.l.b16 %v3638
        %v3674 = vunpack.c.l.b16 %v3639
        %v3675 = vunpack.c.l.b16 %v3640
        %v3676 = vunpack.c.l.b16 %v3641
        %v3677 = vunpack.c.l.b16 %v3642
        %v3678 = vunpack.c.l.b16 %v3643
        %v3679 = vunpack.c.l.b16 %v3644
        %v3680 = vunpack.c.l.b16 %v3645
        %v3681 = vunpack.c.l.b16 %v3646
        %v3682 = vunpack.c.l.b16 %v3647
        %v3683 = vunpack.c.l.b16 %v3648
        %v3684 = vunpack.c.l.b16 %v3649
        %v3685 = vunpack.c.l.b16 %v3650
        %v3686 = vpack.c.b16 %v3671, %v3670
        %v3687 = vpack.c.b16 %v3673, %v3672
        %v3688 = vpack.c.b16 %v3675, %v3674
        %v3689 = vpack.c.b16 %v3677, %v3676
        %v3690 = vpack.c.b16 %v3679, %v3678
        %v3691 = vpack.c.b16 %v3681, %v3680
        %v3692 = vpack.c.b16 %v3683, %v3682
        %v3693 = vpack.c.b16 %v3685, %v3684
        %3702 = vmatpush.bf16.msra.mxu0 %v3693
        %3703 = vmatpush.bf16.msra.mxu0 %v3692
        %3704 = vmatpush.bf16.msra.mxu0 %v3691
        %3705 = vmatpush.bf16.msra.mxu0 %v3690
        %3706 = vmatpush.bf16.msra.mxu0 %v3689
        %3707 = vmatpush.bf16.msra.mxu0 %v3688
        %3708 = vmatpush.bf16.msra.mxu0 %v3687
        %3709 = vmatpush.bf16.msra.mxu0 %v3686
        %3710 = vmatmul.bf16.gmra.mxu0 %v2539
        %v3711 = vpop.f32.mrf.mxu0
        %v3712 = vadd.f32 0.0, %v3711
        %v3713 = vpop.f32.mrf.mxu0
        %v3714 = vadd.f32 0.0, %v3713
        %3715 = vmatmul.bf16.gmra.mxu0 %v2540
        %v3716 = vpop.f32.mrf.mxu0
        %v3717 = vadd.f32 0.0, %v3716
        %v3718 = vpop.f32.mrf.mxu0
        %v3719 = vadd.f32 0.0, %v3718
        %3720 = vmatmul.bf16.gmra.mxu0 %v2541
        %v3721 = vpop.f32.mrf.mxu0
        %v3722 = vadd.f32 0.0, %v3721
        %v3723 = vpop.f32.mrf.mxu0
        %v3724 = vadd.f32 0.0, %v3723
        %3725 = vmatmul.bf16.gmra.mxu0 %v3652
        %v3726 = vpop.f32.mrf.mxu0
        %v3727 = vadd.f32 0.0, %v3726
        %v3728 = vpop.f32.mrf.mxu0
        %v3729 = vadd.f32 0.0, %v3728
        %3730 = vdwg.mxu0
        %v3731 = vadd.f32 %v3623, %v3712
        %v3732 = vadd.f32 %v3624, %v3714
        %v3733 = vadd.f32 %v3625, %v3717
        %v3734 = vadd.f32 %v3626, %v3719
        %v3735 = vadd.f32 %v3627, %v3722
        %v3736 = vadd.f32 %v3628, %v3724
        %v3737 = vadd.f32 %v3629, %v3727
        %v3738 = vadd.f32 %v3630, %v3729
        %v3739 = vld [vmem:[#allocation9 + $0x500] sm:$0xf]
        %v3740 = vld [vmem:[#allocation9 + $0x504] sm:$0xf]
        %v3741 = vld [vmem:[#allocation9 + $0x508] sm:$0xf]
        %v3742 = vld [vmem:[#allocation9 + $0x50c] sm:$0xf]
        %v3743 = vld [vmem:[#allocation9 + $0x510] sm:$0xf]
        %v3744 = vld [vmem:[#allocation9 + $0x514] sm:$0xf]
        %v3745 = vld [vmem:[#allocation9 + $0x518] sm:$0xf]
        %v3746 = vld [vmem:[#allocation9 + $0x51c] sm:$0xf]
        %v3747 = vld [vmem:[#allocation9 + $0x520] sm:$0xf]
        %v3748 = vld [vmem:[#allocation9 + $0x524] sm:$0xf]
        %v3749 = vld [vmem:[#allocation9 + $0x528] sm:$0xf]
        %v3750 = vld [vmem:[#allocation9 + $0x52c] sm:$0xf]
        %v3751 = vld [vmem:[#allocation9 + $0x530] sm:$0xf]
        %v3752 = vld [vmem:[#allocation9 + $0x534] sm:$0xf]
        %v3753 = vld [vmem:[#allocation9 + $0x538] sm:$0xf]
        %v3754 = vld [vmem:[#allocation9 + $0x53c] sm:$0xf]
        %v3756 = vunpack.c.l.b16 %v1192
        %v3757 = vpack.c.b16 %v3756, %v3202
        %v3775 = vunpack.c.l.b16 %v3739
        %v3776 = vunpack.c.l.b16 %v3740
        %v3777 = vunpack.c.l.b16 %v3741
        %v3778 = vunpack.c.l.b16 %v3742
        %v3779 = vunpack.c.l.b16 %v3743
        %v3780 = vunpack.c.l.b16 %v3744
        %v3781 = vunpack.c.l.b16 %v3745
        %v3782 = vunpack.c.l.b16 %v3746
        %v3783 = vunpack.c.l.b16 %v3747
        %v3784 = vunpack.c.l.b16 %v3748
        %v3785 = vunpack.c.l.b16 %v3749
        %v3786 = vunpack.c.l.b16 %v3750
        %v3787 = vunpack.c.l.b16 %v3751
        %v3788 = vunpack.c.l.b16 %v3752
        %v3789 = vunpack.c.l.b16 %v3753
        %v3790 = vunpack.c.l.b16 %v3754
        %v3791 = vpack.c.b16 %v3776, %v3775
        %v3792 = vpack.c.b16 %v3778, %v3777
        %v3793 = vpack.c.b16 %v3780, %v3779
        %v3794 = vpack.c.b16 %v3782, %v3781
        %v3795 = vpack.c.b16 %v3784, %v3783
        %v3796 = vpack.c.b16 %v3786, %v3785
        %v3797 = vpack.c.b16 %v3788, %v3787
        %v3798 = vpack.c.b16 %v3790, %v3789
        %3807 = vmatpush.bf16.msra.mxu0 %v3798
        %3808 = vmatpush.bf16.msra.mxu0 %v3797
        %3809 = vmatpush.bf16.msra.mxu0 %v3796
        %3810 = vmatpush.bf16.msra.mxu0 %v3795
        %3811 = vmatpush.bf16.msra.mxu0 %v3794
        %3812 = vmatpush.bf16.msra.mxu0 %v3793
        %3813 = vmatpush.bf16.msra.mxu0 %v3792
        %3814 = vmatpush.bf16.msra.mxu0 %v3791
        %3815 = vmatmul.bf16.gmra.mxu0 %v1452
        %v3816 = vpop.f32.mrf.mxu0
        %v3817 = vadd.f32 0.0, %v3816
        %v3818 = vpop.f32.mrf.mxu0
        %v3819 = vadd.f32 0.0, %v3818
        %3820 = vmatmul.bf16.gmra.mxu0 %v1453
        %v3821 = vpop.f32.mrf.mxu0
        %v3822 = vadd.f32 0.0, %v3821
        %v3823 = vpop.f32.mrf.mxu0
        %v3824 = vadd.f32 0.0, %v3823
        %3825 = vmatmul.bf16.gmra.mxu0 %v2649
        %v3826 = vpop.f32.mrf.mxu0
        %v3827 = vadd.f32 0.0, %v3826
        %v3828 = vpop.f32.mrf.mxu0
        %v3829 = vadd.f32 0.0, %v3828
        %3830 = vmatmul.bf16.gmra.mxu0 %v3757
        %v3831 = vpop.f32.mrf.mxu0
        %v3832 = vadd.f32 0.0, %v3831
        %v3833 = vpop.f32.mrf.mxu0
        %v3834 = vadd.f32 0.0, %v3833
        %3835 = vdwg.mxu0
        %v3836 = vadd.f32 %v3731, %v3817
        %v3837 = vadd.f32 %v3732, %v3819
        %v3838 = vadd.f32 %v3733, %v3822
        %v3839 = vadd.f32 %v3734, %v3824
        %v3840 = vadd.f32 %v3735, %v3827
        %v3841 = vadd.f32 %v3736, %v3829
        %v3842 = vadd.f32 %v3737, %v3832
        %v3843 = vadd.f32 %v3738, %v3834
        %v3845 = vshrl.u32 %v1192, 16
        %v3847 = vrot.slane %v3845, 4
        %v3848 = vshll.u32 %v1192, 16
        %v3850 = vrot.slane %v3848, 5
        %v3851 = vor.u32 %v3847, %v3850
        %v3852 = vrot.slane %v3851, 4
        %v3854 = vshll.u32 %v1193, 16
        %v3856 = vrot.slane %v3854, 5
        %v3857 = vsel %vm1212, %v3852, %v3856
        %v3858 = vld [vmem:[#allocation9 + $0x540] sm:$0xf]
        %v3859 = vld [vmem:[#allocation9 + $0x544] sm:$0xf]
        %v3860 = vld [vmem:[#allocation9 + $0x548] sm:$0xf]
        %v3861 = vld [vmem:[#allocation9 + $0x54c] sm:$0xf]
        %v3862 = vld [vmem:[#allocation9 + $0x550] sm:$0xf]
        %v3863 = vld [vmem:[#allocation9 + $0x554] sm:$0xf]
        %v3864 = vld [vmem:[#allocation9 + $0x558] sm:$0xf]
        %v3865 = vld [vmem:[#allocation9 + $0x55c] sm:$0xf]
        %v3866 = vld [vmem:[#allocation9 + $0x560] sm:$0xf]
        %v3867 = vld [vmem:[#allocation9 + $0x564] sm:$0xf]
        %v3868 = vld [vmem:[#allocation9 + $0x568] sm:$0xf]
        %v3869 = vld [vmem:[#allocation9 + $0x56c] sm:$0xf]
        %v3870 = vld [vmem:[#allocation9 + $0x570] sm:$0xf]
        %v3871 = vld [vmem:[#allocation9 + $0x574] sm:$0xf]
        %v3872 = vld [vmem:[#allocation9 + $0x578] sm:$0xf]
        %v3873 = vld [vmem:[#allocation9 + $0x57c] sm:$0xf]
        %v3874 = vunpack.c.l.b16 %v3857
        %v3875 = vpack.c.b16 %v3874, %v3320
        %v3893 = vunpack.c.l.b16 %v3858
        %v3894 = vunpack.c.l.b16 %v3859
        %v3895 = vunpack.c.l.b16 %v3860
        %v3896 = vunpack.c.l.b16 %v3861
        %v3897 = vunpack.c.l.b16 %v3862
        %v3898 = vunpack.c.l.b16 %v3863
        %v3899 = vunpack.c.l.b16 %v3864
        %v3900 = vunpack.c.l.b16 %v3865
        %v3901 = vunpack.c.l.b16 %v3866
        %v3902 = vunpack.c.l.b16 %v3867
        %v3903 = vunpack.c.l.b16 %v3868
        %v3904 = vunpack.c.l.b16 %v3869
        %v3905 = vunpack.c.l.b16 %v3870
        %v3906 = vunpack.c.l.b16 %v3871
        %v3907 = vunpack.c.l.b16 %v3872
        %v3908 = vunpack.c.l.b16 %v3873
        %v3909 = vpack.c.b16 %v3894, %v3893
        %v3910 = vpack.c.b16 %v3896, %v3895
        %v3911 = vpack.c.b16 %v3898, %v3897
        %v3912 = vpack.c.b16 %v3900, %v3899
        %v3913 = vpack.c.b16 %v3902, %v3901
        %v3914 = vpack.c.b16 %v3904, %v3903
        %v3915 = vpack.c.b16 %v3906, %v3905
        %v3916 = vpack.c.b16 %v3908, %v3907
        %3925 = vmatpush.bf16.msra.mxu0 %v3916
        %3926 = vmatpush.bf16.msra.mxu0 %v3915
        %3927 = vmatpush.bf16.msra.mxu0 %v3914
        %3928 = vmatpush.bf16.msra.mxu0 %v3913
        %3929 = vmatpush.bf16.msra.mxu0 %v3912
        %3930 = vmatpush.bf16.msra.mxu0 %v3911
        %3931 = vmatpush.bf16.msra.mxu0 %v3910
        %3932 = vmatpush.bf16.msra.mxu0 %v3909
        %3933 = vmatmul.bf16.gmra.mxu0 %v1351
        %v3934 = vpop.f32.mrf.mxu0
        %v3935 = vadd.f32 0.0, %v3934
        %v3936 = vpop.f32.mrf.mxu0
        %v3937 = vadd.f32 0.0, %v3936
        %3938 = vmatmul.bf16.gmra.mxu0 %v1352
        %v3939 = vpop.f32.mrf.mxu0
        %v3940 = vadd.f32 0.0, %v3939
        %v3941 = vpop.f32.mrf.mxu0
        %v3942 = vadd.f32 0.0, %v3941
        %3943 = vmatmul.bf16.gmra.mxu0 %v2767
        %v3944 = vpop.f32.mrf.mxu0
        %v3945 = vadd.f32 0.0, %v3944
        %v3946 = vpop.f32.mrf.mxu0
        %v3947 = vadd.f32 0.0, %v3946
        %3948 = vmatmul.bf16.gmra.mxu0 %v3875
        %v3949 = vpop.f32.mrf.mxu0
        %v3950 = vadd.f32 0.0, %v3949
        %v3951 = vpop.f32.mrf.mxu0
        %v3952 = vadd.f32 0.0, %v3951
        %3953 = vdwg.mxu0
        %v3954 = vadd.f32 %v3836, %v3935
        %v3955 = vadd.f32 %v3837, %v3937
        %v3956 = vadd.f32 %v3838, %v3940
        %v3957 = vadd.f32 %v3839, %v3942
        %v3958 = vadd.f32 %v3840, %v3945
        %v3959 = vadd.f32 %v3841, %v3947
        %v3960 = vadd.f32 %v3842, %v3950
        %v3961 = vadd.f32 %v3843, %v3952
        %v3963 = vrot.slane %v1192, 5
        %v3964 = vrot.slane %v3963, 4
        %v3965 = vrot.slane %v1193, 5
        %v3966 = vsel %vm1545, %v3964, %v3965
        %v3967 = vld [vmem:[#allocation9 + $0x580] sm:$0xf]
        %v3968 = vld [vmem:[#allocation9 + $0x584] sm:$0xf]
        %v3969 = vld [vmem:[#allocation9 + $0x588] sm:$0xf]
        %v3970 = vld [vmem:[#allocation9 + $0x58c] sm:$0xf]
        %v3971 = vld [vmem:[#allocation9 + $0x590] sm:$0xf]
        %v3972 = vld [vmem:[#allocation9 + $0x594] sm:$0xf]
        %v3973 = vld [vmem:[#allocation9 + $0x598] sm:$0xf]
        %v3974 = vld [vmem:[#allocation9 + $0x59c] sm:$0xf]
        %v3975 = vld [vmem:[#allocation9 + $0x5a0] sm:$0xf]
        %v3976 = vld [vmem:[#allocation9 + $0x5a4] sm:$0xf]
        %v3977 = vld [vmem:[#allocation9 + $0x5a8] sm:$0xf]
        %v3978 = vld [vmem:[#allocation9 + $0x5ac] sm:$0xf]
        %v3979 = vld [vmem:[#allocation9 + $0x5b0] sm:$0xf]
        %v3980 = vld [vmem:[#allocation9 + $0x5b4] sm:$0xf]
        %v3981 = vld [vmem:[#allocation9 + $0x5b8] sm:$0xf]
        %v3982 = vld [vmem:[#allocation9 + $0x5bc] sm:$0xf]
        %v3983 = vunpack.c.l.b16 %v3966
        %v3984 = vpack.c.b16 %v3983, %v3429
        %v4002 = vunpack.c.l.b16 %v3967
        %v4003 = vunpack.c.l.b16 %v3968
        %v4004 = vunpack.c.l.b16 %v3969
        %v4005 = vunpack.c.l.b16 %v3970
        %v4006 = vunpack.c.l.b16 %v3971
        %v4007 = vunpack.c.l.b16 %v3972
        %v4008 = vunpack.c.l.b16 %v3973
        %v4009 = vunpack.c.l.b16 %v3974
        %v4010 = vunpack.c.l.b16 %v3975
        %v4011 = vunpack.c.l.b16 %v3976
        %v4012 = vunpack.c.l.b16 %v3977
        %v4013 = vunpack.c.l.b16 %v3978
        %v4014 = vunpack.c.l.b16 %v3979
        %v4015 = vunpack.c.l.b16 %v3980
        %v4016 = vunpack.c.l.b16 %v3981
        %v4017 = vunpack.c.l.b16 %v3982
        %v4018 = vpack.c.b16 %v4003, %v4002
        %v4019 = vpack.c.b16 %v4005, %v4004
        %v4020 = vpack.c.b16 %v4007, %v4006
        %v4021 = vpack.c.b16 %v4009, %v4008
        %v4022 = vpack.c.b16 %v4011, %v4010
        %v4023 = vpack.c.b16 %v4013, %v4012
        %v4024 = vpack.c.b16 %v4015, %v4014
        %v4025 = vpack.c.b16 %v4017, %v4016
        %4034 = vmatpush.bf16.msra.mxu0 %v4025
        %4035 = vmatpush.bf16.msra.mxu0 %v4024
        %4036 = vmatpush.bf16.msra.mxu0 %v4023
        %4037 = vmatpush.bf16.msra.mxu0 %v4022
        %4038 = vmatpush.bf16.msra.mxu0 %v4021
        %4039 = vmatpush.bf16.msra.mxu0 %v4020
        %4040 = vmatpush.bf16.msra.mxu0 %v4019
        %4041 = vmatpush.bf16.msra.mxu0 %v4018
        %4042 = vmatmul.bf16.gmra.mxu0 %v1604
        %v4043 = vpop.f32.mrf.mxu0
        %v4044 = vadd.f32 0.0, %v4043
        %v4045 = vpop.f32.mrf.mxu0
        %v4046 = vadd.f32 0.0, %v4045
        %4047 = vmatmul.bf16.gmra.mxu0 %v1605
        %v4048 = vpop.f32.mrf.mxu0
        %v4049 = vadd.f32 0.0, %v4048
        %v4050 = vpop.f32.mrf.mxu0
        %v4051 = vadd.f32 0.0, %v4050
        %4052 = vmatmul.bf16.gmra.mxu0 %v2876
        %v4053 = vpop.f32.mrf.mxu0
        %v4054 = vadd.f32 0.0, %v4053
        %v4055 = vpop.f32.mrf.mxu0
        %v4056 = vadd.f32 0.0, %v4055
        %4057 = vmatmul.bf16.gmra.mxu0 %v3984
        %v4058 = vpop.f32.mrf.mxu0
        %v4059 = vadd.f32 0.0, %v4058
        %v4060 = vpop.f32.mrf.mxu0
        %v4061 = vadd.f32 0.0, %v4060
        %4062 = vdwg.mxu0
        %v4063 = vadd.f32 %v3954, %v4044
        %v4064 = vadd.f32 %v3955, %v4046
        %v4065 = vadd.f32 %v3956, %v4049
        %v4066 = vadd.f32 %v3957, %v4051
        %v4067 = vadd.f32 %v3958, %v4054
        %v4068 = vadd.f32 %v3959, %v4056
        %v4069 = vadd.f32 %v3960, %v4059
        %v4070 = vadd.f32 %v3961, %v4061
        %v4071 = vrot.slane %v3845, 5
        %v4072 = vrot.slane %v3848, 6
        %v4073 = vor.u32 %v4071, %v4072
        %v4074 = vrot.slane %v4073, 4
        %v4075 = vshrl.u32 %v1193, 16
        %v4077 = vrot.slane %v4075, 5
        %v4078 = vrot.slane %v3854, 6
        %v4079 = vor.u32 %v4077, %v4078
        %v4080 = vsel %vm1697, %v4074, %v4079
        %v4081 = vld [vmem:[#allocation9 + $0x5c0] sm:$0xf]
        %v4082 = vld [vmem:[#allocation9 + $0x5c4] sm:$0xf]
        %v4083 = vld [vmem:[#allocation9 + $0x5c8] sm:$0xf]
        %v4084 = vld [vmem:[#allocation9 + $0x5cc] sm:$0xf]
        %v4085 = vld [vmem:[#allocation9 + $0x5d0] sm:$0xf]
        %v4086 = vld [vmem:[#allocation9 + $0x5d4] sm:$0xf]
        %v4087 = vld [vmem:[#allocation9 + $0x5d8] sm:$0xf]
        %v4088 = vld [vmem:[#allocation9 + $0x5dc] sm:$0xf]
        %v4089 = vld [vmem:[#allocation9 + $0x5e0] sm:$0xf]
        %v4090 = vld [vmem:[#allocation9 + $0x5e4] sm:$0xf]
        %v4091 = vld [vmem:[#allocation9 + $0x5e8] sm:$0xf]
        %v4092 = vld [vmem:[#allocation9 + $0x5ec] sm:$0xf]
        %v4093 = vld [vmem:[#allocation9 + $0x5f0] sm:$0xf]
        %v4094 = vld [vmem:[#allocation9 + $0x5f4] sm:$0xf]
        %v4095 = vld [vmem:[#allocation9 + $0x5f8] sm:$0xf]
        %v4096 = vld [vmem:[#allocation9 + $0x5fc] sm:$0xf]
        %v4097 = vunpack.c.l.b16 %v4080
        %v4098 = vpack.c.b16 %v4097, %v3543
        %v4116 = vunpack.c.l.b16 %v4081
        %v4117 = vunpack.c.l.b16 %v4082
        %v4118 = vunpack.c.l.b16 %v4083
        %v4119 = vunpack.c.l.b16 %v4084
        %v4120 = vunpack.c.l.b16 %v4085
        %v4121 = vunpack.c.l.b16 %v4086
        %v4122 = vunpack.c.l.b16 %v4087
        %v4123 = vunpack.c.l.b16 %v4088
        %v4124 = vunpack.c.l.b16 %v4089
        %v4125 = vunpack.c.l.b16 %v4090
        %v4126 = vunpack.c.l.b16 %v4091
        %v4127 = vunpack.c.l.b16 %v4092
        %v4128 = vunpack.c.l.b16 %v4093
        %v4129 = vunpack.c.l.b16 %v4094
        %v4130 = vunpack.c.l.b16 %v4095
        %v4131 = vunpack.c.l.b16 %v4096
        %v4132 = vpack.c.b16 %v4117, %v4116
        %v4133 = vpack.c.b16 %v4119, %v4118
        %v4134 = vpack.c.b16 %v4121, %v4120
        %v4135 = vpack.c.b16 %v4123, %v4122
        %v4136 = vpack.c.b16 %v4125, %v4124
        %v4137 = vpack.c.b16 %v4127, %v4126
        %v4138 = vpack.c.b16 %v4129, %v4128
        %v4139 = vpack.c.b16 %v4131, %v4130
        %4148 = vmatpush.bf16.msra.mxu0 %v4139
        %4149 = vmatpush.bf16.msra.mxu0 %v4138
        %4150 = vmatpush.bf16.msra.mxu0 %v4137
        %4151 = vmatpush.bf16.msra.mxu0 %v4136
        %4152 = vmatpush.bf16.msra.mxu0 %v4135
        %4153 = vmatpush.bf16.msra.mxu0 %v4134
        %4154 = vmatpush.bf16.msra.mxu0 %v4133
        %4155 = vmatpush.bf16.msra.mxu0 %v4132
        %4156 = vmatmul.bf16.gmra.mxu0 %v1804
        %v4157 = vpop.f32.mrf.mxu0
        %v4158 = vadd.f32 0.0, %v4157
        %v4159 = vpop.f32.mrf.mxu0
        %v4160 = vadd.f32 0.0, %v4159
        %4161 = vmatmul.bf16.gmra.mxu0 %v1805
        %v4162 = vpop.f32.mrf.mxu0
        %v4163 = vadd.f32 0.0, %v4162
        %v4164 = vpop.f32.mrf.mxu0
        %v4165 = vadd.f32 0.0, %v4164
        %4166 = vmatmul.bf16.gmra.mxu0 %v2990
        %v4167 = vpop.f32.mrf.mxu0
        %v4168 = vadd.f32 0.0, %v4167
        %v4169 = vpop.f32.mrf.mxu0
        %v4170 = vadd.f32 0.0, %v4169
        %4171 = vmatmul.bf16.gmra.mxu0 %v4098
        %v4172 = vpop.f32.mrf.mxu0
        %v4173 = vadd.f32 0.0, %v4172
        %v4174 = vpop.f32.mrf.mxu0
        %v4175 = vadd.f32 0.0, %v4174
        %4176 = vdwg.mxu0
        %v4177 = vadd.f32 %v4063, %v4158
        %v4178 = vadd.f32 %v4064, %v4160
        %v4179 = vadd.f32 %v4065, %v4163
        %v4180 = vadd.f32 %v4066, %v4165
        %v4181 = vadd.f32 %v4067, %v4168
        %v4182 = vadd.f32 %v4068, %v4170
        %v4183 = vadd.f32 %v4069, %v4173
        %v4184 = vadd.f32 %v4070, %v4175
        %v4185 = vrot.slane %v1192, 6
        %v4186 = vrot.slane %v4185, 4
        %v4187 = vrot.slane %v1193, 6
        %v4188 = vsel %vm1897, %v4186, %v4187
        %v4189 = vld [vmem:[#allocation9 + $0x600] sm:$0xf]
        %v4190 = vld [vmem:[#allocation9 + $0x604] sm:$0xf]
        %v4191 = vld [vmem:[#allocation9 + $0x608] sm:$0xf]
        %v4192 = vld [vmem:[#allocation9 + $0x60c] sm:$0xf]
        %v4193 = vld [vmem:[#allocation9 + $0x610] sm:$0xf]
        %v4194 = vld [vmem:[#allocation9 + $0x614] sm:$0xf]
        %v4195 = vld [vmem:[#allocation9 + $0x618] sm:$0xf]
        %v4196 = vld [vmem:[#allocation9 + $0x61c] sm:$0xf]
        %v4197 = vld [vmem:[#allocation9 + $0x620] sm:$0xf]
        %v4198 = vld [vmem:[#allocation9 + $0x624] sm:$0xf]
        %v4199 = vld [vmem:[#allocation9 + $0x628] sm:$0xf]
        %v4200 = vld [vmem:[#allocation9 + $0x62c] sm:$0xf]
        %v4201 = vld [vmem:[#allocation9 + $0x630] sm:$0xf]
        %v4202 = vld [vmem:[#allocation9 + $0x634] sm:$0xf]
        %v4203 = vld [vmem:[#allocation9 + $0x638] sm:$0xf]
        %v4204 = vld [vmem:[#allocation9 + $0x63c] sm:$0xf]
        %v4205 = vunpack.c.l.b16 %v4188
        %v4206 = vpack.c.b16 %v4205, %v3651
        %v4224 = vunpack.c.l.b16 %v4189
        %v4225 = vunpack.c.l.b16 %v4190
        %v4226 = vunpack.c.l.b16 %v4191
        %v4227 = vunpack.c.l.b16 %v4192
        %v4228 = vunpack.c.l.b16 %v4193
        %v4229 = vunpack.c.l.b16 %v4194
        %v4230 = vunpack.c.l.b16 %v4195
        %v4231 = vunpack.c.l.b16 %v4196
        %v4232 = vunpack.c.l.b16 %v4197
        %v4233 = vunpack.c.l.b16 %v4198
        %v4234 = vunpack.c.l.b16 %v4199
        %v4235 = vunpack.c.l.b16 %v4200
        %v4236 = vunpack.c.l.b16 %v4201
        %v4237 = vunpack.c.l.b16 %v4202
        %v4238 = vunpack.c.l.b16 %v4203
        %v4239 = vunpack.c.l.b16 %v4204
        %v4240 = vpack.c.b16 %v4225, %v4224
        %v4241 = vpack.c.b16 %v4227, %v4226
        %v4242 = vpack.c.b16 %v4229, %v4228
        %v4243 = vpack.c.b16 %v4231, %v4230
        %v4244 = vpack.c.b16 %v4233, %v4232
        %v4245 = vpack.c.b16 %v4235, %v4234
        %v4246 = vpack.c.b16 %v4237, %v4236
        %v4247 = vpack.c.b16 %v4239, %v4238
        %4256 = vmatpush.bf16.msra.mxu0 %v4247
        %4257 = vmatpush.bf16.msra.mxu0 %v4246
        %4258 = vmatpush.bf16.msra.mxu0 %v4245
        %4259 = vmatpush.bf16.msra.mxu0 %v4244
        %4260 = vmatpush.bf16.msra.mxu0 %v4243
        %4261 = vmatpush.bf16.msra.mxu0 %v4242
        %4262 = vmatpush.bf16.msra.mxu0 %v4241
        %4263 = vmatpush.bf16.msra.mxu0 %v4240
        %4264 = vmatmul.bf16.gmra.mxu0 %v1956
        %v4265 = vpop.f32.mrf.mxu0
        %v4266 = vadd.f32 0.0, %v4265
        %v4267 = vpop.f32.mrf.mxu0
        %v4268 = vadd.f32 0.0, %v4267
        %4269 = vmatmul.bf16.gmra.mxu0 %v1957
        %v4270 = vpop.f32.mrf.mxu0
        %v4271 = vadd.f32 0.0, %v4270
        %v4272 = vpop.f32.mrf.mxu0
        %v4273 = vadd.f32 0.0, %v4272
        %4274 = vmatmul.bf16.gmra.mxu0 %v3098
        %v4275 = vpop.f32.mrf.mxu0
        %v4276 = vadd.f32 0.0, %v4275
        %v4277 = vpop.f32.mrf.mxu0
        %v4278 = vadd.f32 0.0, %v4277
        %4279 = vmatmul.bf16.gmra.mxu0 %v4206
        %v4280 = vpop.f32.mrf.mxu0
        %v4281 = vadd.f32 0.0, %v4280
        %v4282 = vpop.f32.mrf.mxu0
        %v4283 = vadd.f32 0.0, %v4282
        %4284 = vdwg.mxu0
        %v4285 = vadd.f32 %v4177, %v4266
        %v4286 = vadd.f32 %v4178, %v4268
        %v4287 = vadd.f32 %v4179, %v4271
        %v4288 = vadd.f32 %v4180, %v4273
        %v4289 = vadd.f32 %v4181, %v4276
        %v4290 = vadd.f32 %v4182, %v4278
        %v4291 = vadd.f32 %v4183, %v4281
        %v4292 = vadd.f32 %v4184, %v4283
        %v4293 = vld [vmem:[#allocation10] sm:$0x1]
        %v4295 = vperm.slane %v4293, 0
        %v4297 = vadd.f32 %v4285, %v4295
        %v4298 = vadd.f32 %v4286, %v4295
        %v4299 = vadd.f32 %v4287, %v4295
        %v4300 = vadd.f32 %v4288, %v4295
        %v4301 = vadd.f32 %v4289, %v4295
        %v4302 = vadd.f32 %v4290, %v4295
        %v4303 = vadd.f32 %v4291, %v4295
        %v4304 = vadd.f32 %v4292, %v4295
        %v4305 = vmax.f32 %v4297, 0.0
        %v4306 = vmax.f32 %v4298, 0.0
        %v4307 = vmax.f32 %v4299, 0.0
        %v4308 = vmax.f32 %v4300, 0.0
        %v4309 = vmax.f32 %v4301, 0.0
        %v4310 = vmax.f32 %v4302, 0.0
        %v4311 = vmax.f32 %v4303, 0.0
        %v4312 = vmax.f32 %v4304, 0.0
        %v4313 = vmax.f32 %v4305, %v4306
        %v4314 = vmax.f32 %v4307, %v4308
        %v4315 = vmax.f32 %v4309, %v4310
        %v4316 = vmax.f32 %v4311, %v4312
        %4317 = vst [vmem:[#allocation4] sm:$0xff] %v4313
        %4318 = vst [vmem:[#allocation4 + $0x8] sm:$0xff] %v4314
        %4319 = vst [vmem:[#allocation4 + $0x10] sm:$0xff] %v4315
        %4320 = vst [vmem:[#allocation4 + $0x18] sm:$0xff] %v4316
        %v4321 = vld [vmem:[#allocation4] ss:$2 sm:$0xf]
        %s4322 = scalar_lea.vmem [#allocation4], 8
        %v4323 = vld [vmem:[%s4322] ss:$2 sm:$0xf]
        %s4324 = scalar_lea.vmem [#allocation4], 16
        %v4325 = vld [vmem:[%s4324] ss:$2 sm:$0xf]
        %s4326 = scalar_lea.vmem [#allocation4], 24
        %v4327 = vld [vmem:[%s4326] ss:$2 sm:$0xf]
        %s4328 = scalar_lea.vmem [#allocation4], 1
        %v4329 = vld [vmem:[%s4328] ss:$2 sm:$0xf]
        %s4330 = scalar_lea.vmem [#allocation4], 9
        %v4331 = vld [vmem:[%s4330] ss:$2 sm:$0xf]
        %s4332 = scalar_lea.vmem [#allocation4], 17
        %v4333 = vld [vmem:[%s4332] ss:$2 sm:$0xf]
        %s4334 = scalar_lea.vmem [#allocation4], 25
        %v4335 = vld [vmem:[%s4334] ss:$2 sm:$0xf]
        %v4336 = vmax.f32 %v4321, %v4329
        %v4337 = vmax.f32 %v4323, %v4331
        %v4338 = vmax.f32 %v4325, %v4333
        %v4339 = vmax.f32 %v4327, %v4335
        %v4340 = vpack.c.bf16 %v4336, %v4336
        %v4341 = vpack.c.bf16 %v4337, %v4337
        %v4342 = vpack.c.bf16 %v4338, %v4338
        %v4343 = vpack.c.bf16 %v4339, %v4339
        %4344 = vst [vmem:[%s287] sm:$0x3] %v4340
        %4345 = vst [vmem:[%s287 + $0x2] sm:$0x3] %v4341
        %4346 = vst [vmem:[%s287 + $0x4] sm:$0x3] %v4342
        %4347 = vst [vmem:[%s287 + $0x6] sm:$0x3] %v4343
        %p4348 = scmp.lt.s32.totalorder %s19, 1
        %s4349 = scalar_select %p4348, %s19, 1
        %s4350 = smul.addr %s4349, 4
        %s4351 = smul.addr %s4350, 2
        %s4352 = scalar_lea.vmem %s5, %s4351
        // Predicated region
        $region57: #{cnn_forward.2} parent=39 // pred_check
          %p4353 = pneg %p147
        $region58: #{cnn_forward.2} parent=39 // pred_check_branch
          %4355 = sbr.rel (%p4353) target = $region60
        $region59: #{cnn_forward.2} parent=39 // pred_region
          _
        $region60: #{cnn_forward.2} parent=39 // pred_fallthru
          _
      $region40: #{cnn_forward.2} parent=5 // pred_fallthru
        _
      %p4356 = scmp.le.s32.totalorder 2, %s14
      // Predicated region
      $region61: #{cnn_forward.2} parent=5 // pred_check
        %p4357 = pneg %p4356
      $region62: #{cnn_forward.2} parent=5 // pred_check_branch
        %4359 = sbr.rel (%p4357) target = $region64
      $region63: #{cnn_forward.2} parent=5 // pred_region
        %s4360 = ssub.s32 %s14, 2
        // Predicated region
        $region65: #{cnn_forward.2} parent=63 // pred_check
          %p4361 = pneg %p153
        $region66: #{cnn_forward.2} parent=63 // pred_check_branch
          %4363 = sbr.rel (%p4361) target = $region68
        $region67: #{cnn_forward.2} parent=63 // pred_region
          %p4364 = scmp.lt.s32.totalorder %s20, 1
          %s4365 = scalar_select %p4364, %s20, 1
          %s4366 = smul.addr %s4365, 4
          %s4367 = smul.addr %s4366, 2
          %s4368 = scalar_lea.vmem %s5, %s4367
        $region68: #{cnn_forward.2} parent=63 // pred_fallthru
          _
      $region64: #{cnn_forward.2} parent=5 // pred_fallthru
        _
    $region6: #{cnn_forward.2} parent=1 // loop_footer
      %s18 = sadd.s32 1, %s14
    $region7: #{cnn_forward.2} parent=1 // loop_footer_branch
      %13 = sbr.rel target = $region3
    $region8: #{cnn_forward.2} parent=1 // loop_exit
      _
    %4369 = vsyncpa [#allocation6], 1
    %s4370 = scalar_lea.sflag [#allocation6], 1
    %4371 = vsyncpa %s4370, 1
    %4372 = vsyncpa [#allocation8], 1
    %4373 = vsyncpa [#allocation11], 1

// kernel: cnn_forward.3
$region0: #{cnn_forward.3}
  #allocation0 [shape = 'u32[]', space=smem, size = 0x4, offset = 0x4, fixed_abs, tag = 'smem constant byte address 0x4 - core index']
  #allocation1 [shape = 'u32[72,128]{1,0:T(1,128)}', space=vmem, size = 0x9000, scoped, tag = 'internal scratch']
  %s0 = inlined_call_operand.vmem [shape: bf16[8,2048], index: 0, kind: input, shape index: {}]
  %s1 = inlined_call_operand.hbm [shape: bf16[2048,1024], index: 1, kind: input, shape index: {}]
  %s2 = inlined_call_operand.hbm [shape: f32[1,1024], index: 2, kind: input, shape index: {}]
  %s3 = inlined_call_operand.hbm [shape: bf16[1024,128], index: 3, kind: input, shape index: {}]
  %s4 = inlined_call_operand.hbm [shape: f32[1,128], index: 4, kind: input, shape index: {}]
  %s5 = inlined_call_operand.vmem [shape: f32[8,128], index: 5, kind: output, shape index: {}]
  %s6 = sld [smem:[#allocation0]]
  $region46: #{cnn_forward.3} parent=0
    _
  %s8 = ssub.s32 1, %s6
  %s9 = scalar_select 0, %s8, %s6
  $region1: #{cnn_forward.3} parent=0
    #allocation2 [shape = 'u8[4194304]{0}', space=vmem, size = 0x400000, scoped, tag = 'input window, operand 1, single buffered']
    #allocation3 [shape = 's32[1]{0}', space=sflag, size = 0x4, scoped, tag = 'scoped memory for cnn_forward.3']
    #allocation4 [shape = 'u8[4096]{0}', space=vmem, size = 0x1000, scoped, tag = 'input window, operand 2, single buffered']
    #allocation5 [shape = 's32[1]{0}', space=sflag, size = 0x4, scoped, tag = 'scoped memory for cnn_forward.3']
    #allocation6 [shape = 'u8[262144]{0}', space=vmem, size = 0x40000, scoped, tag = 'input window, operand 3, single buffered']
    #allocation7 [shape = 'u8[512]{0}', space=vmem, size = 0x400, scoped, tag = 'input window, operand 4, single buffered']
    #allocation8 [shape = 's32[1]{0}', space=sflag, size = 0x4, scoped, tag = 'scoped memory for cnn_forward.3']
    %10 = vsyncpa [#allocation3], 0
    %11 = vsyncpa [#allocation5], 0
    %12 = vsyncpa [#allocation8], 0
    // Predicated region
    $region2: #{cnn_forward.3} parent=1 // pred_check
      _
    $region3: #{cnn_forward.3} parent=1 // pred_check_branch
      %14 = sbr.rel (0) target = $region5
    $region4: #{cnn_forward.3} parent=1 // pred_region
      _
    $region5: #{cnn_forward.3} parent=1 // pred_fallthru
      _
    // Predicated region
    $region6: #{cnn_forward.3} parent=1 // pred_check
      _
    $region7: #{cnn_forward.3} parent=1 // pred_check_branch
      %16 = sbr.rel (0) target = $region9
    $region8: #{cnn_forward.3} parent=1 // pred_region
      %18 = vsyncadd [#allocation3], 0
      %s19 = sshll.u32 %s1, 4
      %s20 = int_to_ptr.hbm [resolvable:$true] %s19
      %s21 = sshll.u32 [#allocation2], 4
      %s22 = int_to_ptr.vmem [resolvable:$true] %s21
      %27 = dma.hbm_to_vmem [thread:$0]  %s20, 131072, %s22, [#allocation3], 512, 512, 32
    $region9: #{cnn_forward.3} parent=1 // pred_fallthru
      _
    // Predicated region
    $region10: #{cnn_forward.3} parent=1 // pred_check
      _
    $region11: #{cnn_forward.3} parent=1 // pred_check_branch
      %29 = sbr.rel (0) target = $region13
    $region12: #{cnn_forward.3} parent=1 // pred_region
      %31 = vsyncadd [#allocation5], 0
      %s33 = sshll.u32 %s2, 4
      %s34 = int_to_ptr.hbm [resolvable:$true] %s33
      %s35 = sshll.u32 [#allocation4], 4
      %s36 = int_to_ptr.vmem [resolvable:$true] %s35
      %38 = dma.hbm_to_vmem [thread:$0]  %s34, 128, %s36, [#allocation5]
    $region13: #{cnn_forward.3} parent=1 // pred_fallthru
      _
    // Predicated region
    $region14: #{cnn_forward.3} parent=1 // pred_check
      _
    $region15: #{cnn_forward.3} parent=1 // pred_check_branch
      %40 = sbr.rel (0) target = $region17
    $region16: #{cnn_forward.3} parent=1 // pred_region
      %42 = vsyncadd [#allocation5], 0
      %s43 = sshll.u32 %s3, 4
      %s44 = int_to_ptr.hbm [resolvable:$true] %s43
      %s45 = sshll.u32 [#allocation6], 4
      %s46 = int_to_ptr.vmem [resolvable:$true] %s45
      %51 = dma.hbm_to_vmem [thread:$0]  %s44, 8192, %s46, [#allocation5], 64, 64, 4
    $region17: #{cnn_forward.3} parent=1 // pred_fallthru
      _
    // Predicated region
    $region18: #{cnn_forward.3} parent=1 // pred_check
      _
    $region19: #{cnn_forward.3} parent=1 // pred_check_branch
      %53 = sbr.rel (0) target = $region21
    $region20: #{cnn_forward.3} parent=1 // pred_region
      %55 = vsyncadd [#allocation8], 0
      %s57 = sshll.u32 %s4, 4
      %s58 = int_to_ptr.hbm [resolvable:$true] %s57
      %s59 = sshll.u32 [#allocation7], 4
      %s60 = int_to_ptr.vmem [resolvable:$true] %s59
      %62 = dma.hbm_to_vmem [thread:$0]  %s58, 16, %s60, [#allocation8]
    $region21: #{cnn_forward.3} parent=1 // pred_fallthru
      _
    // Predicated region
    $region22: #{cnn_forward.3} parent=1 // pred_check
      _
    $region23: #{cnn_forward.3} parent=1 // pred_check_branch
      %64 = sbr.rel (0) target = $region25
    $region24: #{cnn_forward.3} parent=1 // pred_region
      %66 = dma.done [#allocation3], 131072
    $region25: #{cnn_forward.3} parent=1 // pred_fallthru
      _
    // Predicated region
    $region26: #{cnn_forward.3} parent=1 // pred_check
      _
    $region27: #{cnn_forward.3} parent=1 // pred_check_branch
      %68 = sbr.rel (0) target = $region29
    $region28: #{cnn_forward.3} parent=1 // pred_region
      %70 = dma.done [#allocation5], 128
    $region29: #{cnn_forward.3} parent=1 // pred_fallthru
      _
    // Predicated region
    $region30: #{cnn_forward.3} parent=1 // pred_check
      _
    $region31: #{cnn_forward.3} parent=1 // pred_check_branch
      %72 = sbr.rel (0) target = $region33
    $region32: #{cnn_forward.3} parent=1 // pred_region
      %74 = dma.done [#allocation5], 8192
    $region33: #{cnn_forward.3} parent=1 // pred_fallthru
      _
    // Predicated region
    $region34: #{cnn_forward.3} parent=1 // pred_check
      _
    $region35: #{cnn_forward.3} parent=1 // pred_check_branch
      %76 = sbr.rel (0) target = $region37
    $region36: #{cnn_forward.3} parent=1 // pred_region
      %78 = dma.done [#allocation8], 16
    $region37: #{cnn_forward.3} parent=1 // pred_fallthru
      _
    %v79 = vld [vmem:[%s0] sm:$0xff]
    %v80 = vld [vmem:[%s0 + $0x8] sm:$0xff]
    %v81 = vld [vmem:[%s0 + $0x10] sm:$0xff]
    %v82 = vld [vmem:[%s0 + $0x18] sm:$0xff]
    %v83 = vld [vmem:[%s0 + $0x20] sm:$0xff]
    %v84 = vld [vmem:[%s0 + $0x28] sm:$0xff]
    %v85 = vld [vmem:[%s0 + $0x30] sm:$0xff]
    %v86 = vld [vmem:[%s0 + $0x38] sm:$0xff]
    %v87 = vld [vmem:[#allocation2] sm:$0xff]
    %v88 = vld [vmem:[#allocation2 + $0x8] sm:$0xff]
    %v89 = vld [vmem:[#allocation2 + $0x10] sm:$0xff]
    %v90 = vld [vmem:[#allocation2 + $0x18] sm:$0xff]
    %v91 = vld [vmem:[#allocation2 + $0x20] sm:$0xff]
    %v92 = vld [vmem:[#allocation2 + $0x28] sm:$0xff]
    %v93 = vld [vmem:[#allocation2 + $0x30] sm:$0xff]
    %v94 = vld [vmem:[#allocation2 + $0x38] sm:$0xff]
    %v95 = vld [vmem:[#allocation2 + $0x40] sm:$0xff]
    %v96 = vld [vmem:[#allocation2 + $0x48] sm:$0xff]
    %v97 = vld [vmem:[#allocation2 + $0x50] sm:$0xff]
    %v98 = vld [vmem:[#allocation2 + $0x58] sm:$0xff]
    %v99 = vld [vmem:[#allocation2 + $0x60] sm:$0xff]
    %v100 = vld [vmem:[#allocation2 + $0x68] sm:$0xff]
    %v101 = vld [vmem:[#allocation2 + $0x70] sm:$0xff]
    %v102 = vld [vmem:[#allocation2 + $0x78] sm:$0xff]
    %v103 = vld [vmem:[#allocation2 + $0x80] sm:$0xff]
    %v104 = vld [vmem:[#allocation2 + $0x88] sm:$0xff]
    %v105 = vld [vmem:[#allocation2 + $0x90] sm:$0xff]
    %v106 = vld [vmem:[#allocation2 + $0x98] sm:$0xff]
    %v107 = vld [vmem:[#allocation2 + $0xa0] sm:$0xff]
    %v108 = vld [vmem:[#allocation2 + $0xa8] sm:$0xff]
    %v109 = vld [vmem:[#allocation2 + $0xb0] sm:$0xff]
    %v110 = vld [vmem:[#allocation2 + $0xb8] sm:$0xff]
    %v111 = vld [vmem:[#allocation2 + $0xc0] sm:$0xff]
    %v112 = vld [vmem:[#allocation2 + $0xc8] sm:$0xff]
    %v113 = vld [vmem:[#allocation2 + $0xd0] sm:$0xff]
    %v114 = vld [vmem:[#allocation2 + $0xd8] sm:$0xff]
    %v115 = vld [vmem:[#allocation2 + $0xe0] sm:$0xff]
    %v116 = vld [vmem:[#allocation2 + $0xe8] sm:$0xff]
    %v117 = vld [vmem:[#allocation2 + $0xf0] sm:$0xff]
    %v118 = vld [vmem:[#allocation2 + $0xf8] sm:$0xff]
    %v119 = vld [vmem:[#allocation2 + $0x100] sm:$0xff]
    %v120 = vld [vmem:[#allocation2 + $0x108] sm:$0xff]
    %v121 = vld [vmem:[#allocation2 + $0x110] sm:$0xff]
    %v122 = vld [vmem:[#allocation2 + $0x118] sm:$0xff]
    %v123 = vld [vmem:[#allocation2 + $0x120] sm:$0xff]
    %v124 = vld [vmem:[#allocation2 + $0x128] sm:$0xff]
    %v125 = vld [vmem:[#allocation2 + $0x130] sm:$0xff]
    %v126 = vld [vmem:[#allocation2 + $0x138] sm:$0xff]
    %v127 = vld [vmem:[#allocation2 + $0x140] sm:$0xff]
    %v128 = vld [vmem:[#allocation2 + $0x148] sm:$0xff]
    %v129 = vld [vmem:[#allocation2 + $0x150] sm:$0xff]
    %v130 = vld [vmem:[#allocation2 + $0x158] sm:$0xff]
    %v131 = vld [vmem:[#allocation2 + $0x160] sm:$0xff]
    %v132 = vld [vmem:[#allocation2 + $0x168] sm:$0xff]
    %v133 = vld [vmem:[#allocation2 + $0x170] sm:$0xff]
    %v134 = vld [vmem:[#allocation2 + $0x178] sm:$0xff]
    %v135 = vld [vmem:[#allocation2 + $0x180] sm:$0xff]
    %v136 = vld [vmem:[#allocation2 + $0x188] sm:$0xff]
    %v137 = vld [vmem:[#allocation2 + $0x190] sm:$0xff]
    %v138 = vld [vmem:[#allocation2 + $0x198] sm:$0xff]
    %v139 = vld [vmem:[#allocation2 + $0x1a0] sm:$0xff]
    %v140 = vld [vmem:[#allocation2 + $0x1a8] sm:$0xff]
    %v141 = vld [vmem:[#allocation2 + $0x1b0] sm:$0xff]
    %v142 = vld [vmem:[#allocation2 + $0x1b8] sm:$0xff]
    %v143 = vld [vmem:[#allocation2 + $0x1c0] sm:$0xff]
    %v144 = vld [vmem:[#allocation2 + $0x1c8] sm:$0xff]
    %v145 = vld [vmem:[#allocation2 + $0x1d0] sm:$0xff]
    %v146 = vld [vmem:[#allocation2 + $0x1d8] sm:$0xff]
    %v147 = vld [vmem:[#allocation2 + $0x1e0] sm:$0xff]
    %v148 = vld [vmem:[#allocation2 + $0x1e8] sm:$0xff]
    %v149 = vld [vmem:[#allocation2 + $0x1f0] sm:$0xff]
    %v150 = vld [vmem:[#allocation2 + $0x1f8] sm:$0xff]
    %v151 = vld [vmem:[#allocation2 + $0x200] sm:$0xff]
    %v152 = vld [vmem:[#allocation2 + $0x208] sm:$0xff]
    %v153 = vld [vmem:[#allocation2 + $0x210] sm:$0xff]
    %v154 = vld [vmem:[#allocation2 + $0x218] sm:$0xff]
    %v155 = vld [vmem:[#allocation2 + $0x220] sm:$0xff]
    %v156 = vld [vmem:[#allocation2 + $0x228] sm:$0xff]
    %v157 = vld [vmem:[#allocation2 + $0x230] sm:$0xff]
    %v158 = vld [vmem:[#allocation2 + $0x238] sm:$0xff]
    %v159 = vld [vmem:[#allocation2 + $0x240] sm:$0xff]
    %v160 = vld [vmem:[#allocation2 + $0x248] sm:$0xff]
    %v161 = vld [vmem:[#allocation2 + $0x250] sm:$0xff]
    %v162 = vld [vmem:[#allocation2 + $0x258] sm:$0xff]
    %v163 = vld [vmem:[#allocation2 + $0x260] sm:$0xff]
    %v164 = vld [vmem:[#allocation2 + $0x268] sm:$0xff]
    %v165 = vld [vmem:[#allocation2 + $0x270] sm:$0xff]
    %v166 = vld [vmem:[#allocation2 + $0x278] sm:$0xff]
    %v167 = vld [vmem:[#allocation2 + $0x280] sm:$0xff]
    %v168 = vld [vmem:[#allocation2 + $0x288] sm:$0xff]
    %v169 = vld [vmem:[#allocation2 + $0x290] sm:$0xff]
    %v170 = vld [vmem:[#allocation2 + $0x298] sm:$0xff]
    %v171 = vld [vmem:[#allocation2 + $0x2a0] sm:$0xff]
    %v172 = vld [vmem:[#allocation2 + $0x2a8] sm:$0xff]
    %v173 = vld [vmem:[#allocation2 + $0x2b0] sm:$0xff]
    %v174 = vld [vmem:[#allocation2 + $0x2b8] sm:$0xff]
    %v175 = vld [vmem:[#allocation2 + $0x2c0] sm:$0xff]
    %v176 = vld [vmem:[#allocation2 + $0x2c8] sm:$0xff]
    %v177 = vld [vmem:[#allocation2 + $0x2d0] sm:$0xff]
    %v178 = vld [vmem:[#allocation2 + $0x2d8] sm:$0xff]
    %v179 = vld [vmem:[#allocation2 + $0x2e0] sm:$0xff]
    %v180 = vld [vmem:[#allocation2 + $0x2e8] sm:$0xff]
    %v181 = vld [vmem:[#allocation2 + $0x2f0] sm:$0xff]
    %v182 = vld [vmem:[#allocation2 + $0x2f8] sm:$0xff]
    %v183 = vld [vmem:[#allocation2 + $0x300] sm:$0xff]
    %v184 = vld [vmem:[#allocation2 + $0x308] sm:$0xff]
    %v185 = vld [vmem:[#allocation2 + $0x310] sm:$0xff]
    %v186 = vld [vmem:[#allocation2 + $0x318] sm:$0xff]
    %v187 = vld [vmem:[#allocation2 + $0x320] sm:$0xff]
    %v188 = vld [vmem:[#allocation2 + $0x328] sm:$0xff]
    %v189 = vld [vmem:[#allocation2 + $0x330] sm:$0xff]
    %v190 = vld [vmem:[#allocation2 + $0x338] sm:$0xff]
    %v191 = vld [vmem:[#allocation2 + $0x340] sm:$0xff]
    %v192 = vld [vmem:[#allocation2 + $0x348] sm:$0xff]
    %v193 = vld [vmem:[#allocation2 + $0x350] sm:$0xff]
    %v194 = vld [vmem:[#allocation2 + $0x358] sm:$0xff]
    %v195 = vld [vmem:[#allocation2 + $0x360] sm:$0xff]
    %v196 = vld [vmem:[#allocation2 + $0x368] sm:$0xff]
    %v197 = vld [vmem:[#allocation2 + $0x370] sm:$0xff]
    %v198 = vld [vmem:[#allocation2 + $0x378] sm:$0xff]
    %v199 = vld [vmem:[#allocation2 + $0x380] sm:$0xff]
    %v200 = vld [vmem:[#allocation2 + $0x388] sm:$0xff]
    %v201 = vld [vmem:[#allocation2 + $0x390] sm:$0xff]
    %v202 = vld [vmem:[#allocation2 + $0x398] sm:$0xff]
    %v203 = vld [vmem:[#allocation2 + $0x3a0] sm:$0xff]
    %v204 = vld [vmem:[#allocation2 + $0x3a8] sm:$0xff]
    %v205 = vld [vmem:[#allocation2 + $0x3b0] sm:$0xff]
    %v206 = vld [vmem:[#allocation2 + $0x3b8] sm:$0xff]
    %v207 = vld [vmem:[#allocation2 + $0x3c0] sm:$0xff]
    %v208 = vld [vmem:[#allocation2 + $0x3c8] sm:$0xff]
    %v209 = vld [vmem:[#allocation2 + $0x3d0] sm:$0xff]
    %v210 = vld [vmem:[#allocation2 + $0x3d8] sm:$0xff]
    %v211 = vld [vmem:[#allocation2 + $0x3e0] sm:$0xff]
    %v212 = vld [vmem:[#allocation2 + $0x3e8] sm:$0xff]
    %v213 = vld [vmem:[#allocation2 + $0x3f0] sm:$0xff]
    %v214 = vld [vmem:[#allocation2 + $0x3f8] sm:$0xff]
    %v215 = vld [vmem:[#allocation2 + $0x400] sm:$0xff]
    %v216 = vld [vmem:[#allocation2 + $0x408] sm:$0xff]
    %v217 = vld [vmem:[#allocation2 + $0x410] sm:$0xff]
    %v218 = vld [vmem:[#allocation2 + $0x418] sm:$0xff]
    %v219 = vld [vmem:[#allocation2 + $0x420] sm:$0xff]
    %v220 = vld [vmem:[#allocation2 + $0x428] sm:$0xff]
    %v221 = vld [vmem:[#allocation2 + $0x430] sm:$0xff]
    %v222 = vld [vmem:[#allocation2 + $0x438] sm:$0xff]
    %v223 = vld [vmem:[#allocation2 + $0x440] sm:$0xff]
    %v224 = vld [vmem:[#allocation2 + $0x448] sm:$0xff]
    %v225 = vld [vmem:[#allocation2 + $0x450] sm:$0xff]
    %v226 = vld [vmem:[#allocation2 + $0x458] sm:$0xff]
    %v227 = vld [vmem:[#allocation2 + $0x460] sm:$0xff]
    %v228 = vld [vmem:[#allocation2 + $0x468] sm:$0xff]
    %v229 = vld [vmem:[#allocation2 + $0x470] sm:$0xff]
    %v230 = vld [vmem:[#allocation2 + $0x478] sm:$0xff]
    %v231 = vld [vmem:[#allocation2 + $0x480] sm:$0xff]
    %v232 = vld [vmem:[#allocation2 + $0x488] sm:$0xff]
    %v233 = vld [vmem:[#allocation2 + $0x490] sm:$0xff]
    %v234 = vld [vmem:[#allocation2 + $0x498] sm:$0xff]
    %v235 = vld [vmem:[#allocation2 + $0x4a0] sm:$0xff]
    %v236 = vld [vmem:[#allocation2 + $0x4a8] sm:$0xff]
    %v237 = vld [vmem:[#allocation2 + $0x4b0] sm:$0xff]
    %v238 = vld [vmem:[#allocation2 + $0x4b8] sm:$0xff]
    %v239 = vld [vmem:[#allocation2 + $0x4c0] sm:$0xff]
    %v240 = vld [vmem:[#allocation2 + $0x4c8] sm:$0xff]
    %v241 = vld [vmem:[#allocation2 + $0x4d0] sm:$0xff]
    %v242 = vld [vmem:[#allocation2 + $0x4d8] sm:$0xff]
    %v243 = vld [vmem:[#allocation2 + $0x4e0] sm:$0xff]
    %v244 = vld [vmem:[#allocation2 + $0x4e8] sm:$0xff]
    %v245 = vld [vmem:[#allocation2 + $0x4f0] sm:$0xff]
    %v246 = vld [vmem:[#allocation2 + $0x4f8] sm:$0xff]
    %v247 = vld [vmem:[#allocation2 + $0x500] sm:$0xff]
    %v248 = vld [vmem:[#allocation2 + $0x508] sm:$0xff]
    %v249 = vld [vmem:[#allocation2 + $0x510] sm:$0xff]
    %v250 = vld [vmem:[#allocation2 + $0x518] sm:$0xff]
    %v251 = vld [vmem:[#allocation2 + $0x520] sm:$0xff]
    %v252 = vld [vmem:[#allocation2 + $0x528] sm:$0xff]
    %v253 = vld [vmem:[#allocation2 + $0x530] sm:$0xff]
    %v254 = vld [vmem:[#allocation2 + $0x538] sm:$0xff]
    %v255 = vld [vmem:[#allocation2 + $0x540] sm:$0xff]
    %v256 = vld [vmem:[#allocation2 + $0x548] sm:$0xff]
    %v257 = vld [vmem:[#allocation2 + $0x550] sm:$0xff]
    %v258 = vld [vmem:[#allocation2 + $0x558] sm:$0xff]
    %v259 = vld [vmem:[#allocation2 + $0x560] sm:$0xff]
    %v260 = vld [vmem:[#allocation2 + $0x568] sm:$0xff]
    %v261 = vld [vmem:[#allocation2 + $0x570] sm:$0xff]
    %v262 = vld [vmem:[#allocation2 + $0x578] sm:$0xff]
    %v263 = vld [vmem:[#allocation2 + $0x580] sm:$0xff]
    %v264 = vld [vmem:[#allocation2 + $0x588] sm:$0xff]
    %v265 = vld [vmem:[#allocation2 + $0x590] sm:$0xff]
    %v266 = vld [vmem:[#allocation2 + $0x598] sm:$0xff]
    %v267 = vld [vmem:[#allocation2 + $0x5a0] sm:$0xff]
    %v268 = vld [vmem:[#allocation2 + $0x5a8] sm:$0xff]
    %v269 = vld [vmem:[#allocation2 + $0x5b0] sm:$0xff]
    %v270 = vld [vmem:[#allocation2 + $0x5b8] sm:$0xff]
    %v271 = vld [vmem:[#allocation2 + $0x5c0] sm:$0xff]
    %v272 = vld [vmem:[#allocation2 + $0x5c8] sm:$0xff]
    %v273 = vld [vmem:[#allocation2 + $0x5d0] sm:$0xff]
    %v274 = vld [vmem:[#allocation2 + $0x5d8] sm:$0xff]
    %v275 = vld [vmem:[#allocation2 + $0x5e0] sm:$0xff]
    %v276 = vld [vmem:[#allocation2 + $0x5e8] sm:$0xff]
    %v277 = vld [vmem:[#allocation2 + $0x5f0] sm:$0xff]
    %v278 = vld [vmem:[#allocation2 + $0x5f8] sm:$0xff]
    %v279 = vld [vmem:[#allocation2 + $0x600] sm:$0xff]
    %v280 = vld [vmem:[#allocation2 + $0x608] sm:$0xff]
    %v281 = vld [vmem:[#allocation2 + $0x610] sm:$0xff]
    %v282 = vld [vmem:[#allocation2 + $0x618] sm:$0xff]
    %v283 = vld [vmem:[#allocation2 + $0x620] sm:$0xff]
    %v284 = vld [vmem:[#allocation2 + $0x628] sm:$0xff]
    %v285 = vld [vmem:[#allocation2 + $0x630] sm:$0xff]
    %v286 = vld [vmem:[#allocation2 + $0x638] sm:$0xff]
    %v287 = vld [vmem:[#allocation2 + $0x640] sm:$0xff]
    %v288 = vld [vmem:[#allocation2 + $0x648] sm:$0xff]
    %v289 = vld [vmem:[#allocation2 + $0x650] sm:$0xff]
    %v290 = vld [vmem:[#allocation2 + $0x658] sm:$0xff]
    %v291 = vld [vmem:[#allocation2 + $0x660] sm:$0xff]
    %v292 = vld [vmem:[#allocation2 + $0x668] sm:$0xff]
    %v293 = vld [vmem:[#allocation2 + $0x670] sm:$0xff]
    %v294 = vld [vmem:[#allocation2 + $0x678] sm:$0xff]
    %v295 = vld [vmem:[#allocation2 + $0x680] sm:$0xff]
    %v296 = vld [vmem:[#allocation2 + $0x688] sm:$0xff]
    %v297 = vld [vmem:[#allocation2 + $0x690] sm:$0xff]
    %v298 = vld [vmem:[#allocation2 + $0x698] sm:$0xff]
    %v299 = vld [vmem:[#allocation2 + $0x6a0] sm:$0xff]
    %v300 = vld [vmem:[#allocation2 + $0x6a8] sm:$0xff]
    %v301 = vld [vmem:[#allocation2 + $0x6b0] sm:$0xff]
    %v302 = vld [vmem:[#allocation2 + $0x6b8] sm:$0xff]
    %v303 = vld [vmem:[#allocation2 + $0x6c0] sm:$0xff]
    %v304 = vld [vmem:[#allocation2 + $0x6c8] sm:$0xff]
    %v305 = vld [vmem:[#allocation2 + $0x6d0] sm:$0xff]
    %v306 = vld [vmem:[#allocation2 + $0x6d8] sm:$0xff]
    %v307 = vld [vmem:[#allocation2 + $0x6e0] sm:$0xff]
    %v308 = vld [vmem:[#allocation2 + $0x6e8] sm:$0xff]
    %v309 = vld [vmem:[#allocation2 + $0x6f0] sm:$0xff]
    %v310 = vld [vmem:[#allocation2 + $0x6f8] sm:$0xff]
    %v311 = vld [vmem:[#allocation2 + $0x700] sm:$0xff]
    %v312 = vld [vmem:[#allocation2 + $0x708] sm:$0xff]
    %v313 = vld [vmem:[#allocation2 + $0x710] sm:$0xff]
    %v314 = vld [vmem:[#allocation2 + $0x718] sm:$0xff]
    %v315 = vld [vmem:[#allocation2 + $0x720] sm:$0xff]
    %v316 = vld [vmem:[#allocation2 + $0x728] sm:$0xff]
    %v317 = vld [vmem:[#allocation2 + $0x730] sm:$0xff]
    %v318 = vld [vmem:[#allocation2 + $0x738] sm:$0xff]
    %v319 = vld [vmem:[#allocation2 + $0x740] sm:$0xff]
    %v320 = vld [vmem:[#allocation2 + $0x748] sm:$0xff]
    %v321 = vld [vmem:[#allocation2 + $0x750] sm:$0xff]
    %v322 = vld [vmem:[#allocation2 + $0x758] sm:$0xff]
    %v323 = vld [vmem:[#allocation2 + $0x760] sm:$0xff]
    %v324 = vld [vmem:[#allocation2 + $0x768] sm:$0xff]
    %v325 = vld [vmem:[#allocation2 + $0x770] sm:$0xff]
    %v326 = vld [vmem:[#allocation2 + $0x778] sm:$0xff]
    %v327 = vld [vmem:[#allocation2 + $0x780] sm:$0xff]
    %v328 = vld [vmem:[#allocation2 + $0x788] sm:$0xff]
    %v329 = vld [vmem:[#allocation2 + $0x790] sm:$0xff]
    %v330 = vld [vmem:[#allocation2 + $0x798] sm:$0xff]
    %v331 = vld [vmem:[#allocation2 + $0x7a0] sm:$0xff]
    %v332 = vld [vmem:[#allocation2 + $0x7a8] sm:$0xff]
    %v333 = vld [vmem:[#allocation2 + $0x7b0] sm:$0xff]
    %v334 = vld [vmem:[#allocation2 + $0x7b8] sm:$0xff]
    %v335 = vld [vmem:[#allocation2 + $0x7c0] sm:$0xff]
    %v336 = vld [vmem:[#allocation2 + $0x7c8] sm:$0xff]
    %v337 = vld [vmem:[#allocation2 + $0x7d0] sm:$0xff]
    %v338 = vld [vmem:[#allocation2 + $0x7d8] sm:$0xff]
    %v339 = vld [vmem:[#allocation2 + $0x7e0] sm:$0xff]
    %v340 = vld [vmem:[#allocation2 + $0x7e8] sm:$0xff]
    %v341 = vld [vmem:[#allocation2 + $0x7f0] sm:$0xff]
    %v342 = vld [vmem:[#allocation2 + $0x7f8] sm:$0xff]
    %v343 = vld [vmem:[#allocation2 + $0x800] sm:$0xff]
    %v344 = vld [vmem:[#allocation2 + $0x808] sm:$0xff]
    %v345 = vld [vmem:[#allocation2 + $0x810] sm:$0xff]
    %v346 = vld [vmem:[#allocation2 + $0x818] sm:$0xff]
    %v347 = vld [vmem:[#allocation2 + $0x820] sm:$0xff]
    %v348 = vld [vmem:[#allocation2 + $0x828] sm:$0xff]
    %v349 = vld [vmem:[#allocation2 + $0x830] sm:$0xff]
    %v350 = vld [vmem:[#allocation2 + $0x838] sm:$0xff]
    %v351 = vld [vmem:[#allocation2 + $0x840] sm:$0xff]
    %v352 = vld [vmem:[#allocation2 + $0x848] sm:$0xff]
    %v353 = vld [vmem:[#allocation2 + $0x850] sm:$0xff]
    %v354 = vld [vmem:[#allocation2 + $0x858] sm:$0xff]
    %v355 = vld [vmem:[#allocation2 + $0x860] sm:$0xff]
    %v356 = vld [vmem:[#allocation2 + $0x868] sm:$0xff]
    %v357 = vld [vmem:[#allocation2 + $0x870] sm:$0xff]
    %v358 = vld [vmem:[#allocation2 + $0x878] sm:$0xff]
    %v359 = vld [vmem:[#allocation2 + $0x880] sm:$0xff]
    %v360 = vld [vmem:[#allocation2 + $0x888] sm:$0xff]
    %v361 = vld [vmem:[#allocation2 + $0x890] sm:$0xff]
    %v362 = vld [vmem:[#allocation2 + $0x898] sm:$0xff]
    %v363 = vld [vmem:[#allocation2 + $0x8a0] sm:$0xff]
    %v364 = vld [vmem:[#allocation2 + $0x8a8] sm:$0xff]
    %v365 = vld [vmem:[#allocation2 + $0x8b0] sm:$0xff]
    %v366 = vld [vmem:[#allocation2 + $0x8b8] sm:$0xff]
    %v367 = vld [vmem:[#allocation2 + $0x8c0] sm:$0xff]
    %v368 = vld [vmem:[#allocation2 + $0x8c8] sm:$0xff]
    %v369 = vld [vmem:[#allocation2 + $0x8d0] sm:$0xff]
    %v370 = vld [vmem:[#allocation2 + $0x8d8] sm:$0xff]
    %v371 = vld [vmem:[#allocation2 + $0x8e0] sm:$0xff]
    %v372 = vld [vmem:[#allocation2 + $0x8e8] sm:$0xff]
    %v373 = vld [vmem:[#allocation2 + $0x8f0] sm:$0xff]
    %v374 = vld [vmem:[#allocation2 + $0x8f8] sm:$0xff]
    %v375 = vld [vmem:[#allocation2 + $0x900] sm:$0xff]
    %v376 = vld [vmem:[#allocation2 + $0x908] sm:$0xff]
    %v377 = vld [vmem:[#allocation2 + $0x910] sm:$0xff]
    %v378 = vld [vmem:[#allocation2 + $0x918] sm:$0xff]
    %v379 = vld [vmem:[#allocation2 + $0x920] sm:$0xff]
    %v380 = vld [vmem:[#allocation2 + $0x928] sm:$0xff]
    %v381 = vld [vmem:[#allocation2 + $0x930] sm:$0xff]
    %v382 = vld [vmem:[#allocation2 + $0x938] sm:$0xff]
    %v383 = vld [vmem:[#allocation2 + $0x940] sm:$0xff]
    %v384 = vld [vmem:[#allocation2 + $0x948] sm:$0xff]
    %v385 = vld [vmem:[#allocation2 + $0x950] sm:$0xff]
    %v386 = vld [vmem:[#allocation2 + $0x958] sm:$0xff]
    %v387 = vld [vmem:[#allocation2 + $0x960] sm:$0xff]
    %v388 = vld [vmem:[#allocation2 + $0x968] sm:$0xff]
    %v389 = vld [vmem:[#allocation2 + $0x970] sm:$0xff]
    %v390 = vld [vmem:[#allocation2 + $0x978] sm:$0xff]
    %v391 = vld [vmem:[#allocation2 + $0x980] sm:$0xff]
    %v392 = vld [vmem:[#allocation2 + $0x988] sm:$0xff]
    %v393 = vld [vmem:[#allocation2 + $0x990] sm:$0xff]
    %v394 = vld [vmem:[#allocation2 + $0x998] sm:$0xff]
    %v395 = vld [vmem:[#allocation2 + $0x9a0] sm:$0xff]
    %v396 = vld [vmem:[#allocation2 + $0x9a8] sm:$0xff]
    %v397 = vld [vmem:[#allocation2 + $0x9b0] sm:$0xff]
    %v398 = vld [vmem:[#allocation2 + $0x9b8] sm:$0xff]
    %v399 = vld [vmem:[#allocation2 + $0x9c0] sm:$0xff]
    %v400 = vld [vmem:[#allocation2 + $0x9c8] sm:$0xff]
    %v401 = vld [vmem:[#allocation2 + $0x9d0] sm:$0xff]
    %v402 = vld [vmem:[#allocation2 + $0x9d8] sm:$0xff]
    %v403 = vld [vmem:[#allocation2 + $0x9e0] sm:$0xff]
    %v404 = vld [vmem:[#allocation2 + $0x9e8] sm:$0xff]
    %v405 = vld [vmem:[#allocation2 + $0x9f0] sm:$0xff]
    %v406 = vld [vmem:[#allocation2 + $0x9f8] sm:$0xff]
    %v407 = vld [vmem:[#allocation2 + $0xa00] sm:$0xff]
    %v408 = vld [vmem:[#allocation2 + $0xa08] sm:$0xff]
    %v409 = vld [vmem:[#allocation2 + $0xa10] sm:$0xff]
    %v410 = vld [vmem:[#allocation2 + $0xa18] sm:$0xff]
    %v411 = vld [vmem:[#allocation2 + $0xa20] sm:$0xff]
    %v412 = vld [vmem:[#allocation2 + $0xa28] sm:$0xff]
    %v413 = vld [vmem:[#allocation2 + $0xa30] sm:$0xff]
    %v414 = vld [vmem:[#allocation2 + $0xa38] sm:$0xff]
    %v415 = vld [vmem:[#allocation2 + $0xa40] sm:$0xff]
    %v416 = vld [vmem:[#allocation2 + $0xa48] sm:$0xff]
    %v417 = vld [vmem:[#allocation2 + $0xa50] sm:$0xff]
    %v418 = vld [vmem:[#allocation2 + $0xa58] sm:$0xff]
    %v419 = vld [vmem:[#allocation2 + $0xa60] sm:$0xff]
    %v420 = vld [vmem:[#allocation2 + $0xa68] sm:$0xff]
    %v421 = vld [vmem:[#allocation2 + $0xa70] sm:$0xff]
    %v422 = vld [vmem:[#allocation2 + $0xa78] sm:$0xff]
    %v423 = vld [vmem:[#allocation2 + $0xa80] sm:$0xff]
    %v424 = vld [vmem:[#allocation2 + $0xa88] sm:$0xff]
    %v425 = vld [vmem:[#allocation2 + $0xa90] sm:$0xff]
    %v426 = vld [vmem:[#allocation2 + $0xa98] sm:$0xff]
    %v427 = vld [vmem:[#allocation2 + $0xaa0] sm:$0xff]
    %v428 = vld [vmem:[#allocation2 + $0xaa8] sm:$0xff]
    %v429 = vld [vmem:[#allocation2 + $0xab0] sm:$0xff]
    %v430 = vld [vmem:[#allocation2 + $0xab8] sm:$0xff]
    %v431 = vld [vmem:[#allocation2 + $0xac0] sm:$0xff]
    %v432 = vld [vmem:[#allocation2 + $0xac8] sm:$0xff]
    %v433 = vld [vmem:[#allocation2 + $0xad0] sm:$0xff]
    %v434 = vld [vmem:[#allocation2 + $0xad8] sm:$0xff]
    %v435 = vld [vmem:[#allocation2 + $0xae0] sm:$0xff]
    %v436 = vld [vmem:[#allocation2 + $0xae8] sm:$0xff]
    %v437 = vld [vmem:[#allocation2 + $0xaf0] sm:$0xff]
    %v438 = vld [vmem:[#allocation2 + $0xaf8] sm:$0xff]
    %v439 = vld [vmem:[#allocation2 + $0xb00] sm:$0xff]
    %v440 = vld [vmem:[#allocation2 + $0xb08] sm:$0xff]
    %v441 = vld [vmem:[#allocation2 + $0xb10] sm:$0xff]
    %v442 = vld [vmem:[#allocation2 + $0xb18] sm:$0xff]
    %v443 = vld [vmem:[#allocation2 + $0xb20] sm:$0xff]
    %v444 = vld [vmem:[#allocation2 + $0xb28] sm:$0xff]
    %v445 = vld [vmem:[#allocation2 + $0xb30] sm:$0xff]
    %v446 = vld [vmem:[#allocation2 + $0xb38] sm:$0xff]
    %v447 = vld [vmem:[#allocation2 + $0xb40] sm:$0xff]
    %v448 = vld [vmem:[#allocation2 + $0xb48] sm:$0xff]
    %v449 = vld [vmem:[#allocation2 + $0xb50] sm:$0xff]
    %v450 = vld [vmem:[#allocation2 + $0xb58] sm:$0xff]
    %v451 = vld [vmem:[#allocation2 + $0xb60] sm:$0xff]
    %v452 = vld [vmem:[#allocation2 + $0xb68] sm:$0xff]
    %v453 = vld [vmem:[#allocation2 + $0xb70] sm:$0xff]
    %v454 = vld [vmem:[#allocation2 + $0xb78] sm:$0xff]
    %v455 = vld [vmem:[#allocation2 + $0xb80] sm:$0xff]
    %v456 = vld [vmem:[#allocation2 + $0xb88] sm:$0xff]
    %v457 = vld [vmem:[#allocation2 + $0xb90] sm:$0xff]
    %v458 = vld [vmem:[#allocation2 + $0xb98] sm:$0xff]
    %v459 = vld [vmem:[#allocation2 + $0xba0] sm:$0xff]
    %v460 = vld [vmem:[#allocation2 + $0xba8] sm:$0xff]
    %v461 = vld [vmem:[#allocation2 + $0xbb0] sm:$0xff]
    %v462 = vld [vmem:[#allocation2 + $0xbb8] sm:$0xff]
    %v463 = vld [vmem:[#allocation2 + $0xbc0] sm:$0xff]
    %v464 = vld [vmem:[#allocation2 + $0xbc8] sm:$0xff]
    %v465 = vld [vmem:[#allocation2 + $0xbd0] sm:$0xff]
    %v466 = vld [vmem:[#allocation2 + $0xbd8] sm:$0xff]
    %v467 = vld [vmem:[#allocation2 + $0xbe0] sm:$0xff]
    %v468 = vld [vmem:[#allocation2 + $0xbe8] sm:$0xff]
    %v469 = vld [vmem:[#allocation2 + $0xbf0] sm:$0xff]
    %v470 = vld [vmem:[#allocation2 + $0xbf8] sm:$0xff]
    %v471 = vld [vmem:[#allocation2 + $0xc00] sm:$0xff]
    %v472 = vld [vmem:[#allocation2 + $0xc08] sm:$0xff]
    %v473 = vld [vmem:[#allocation2 + $0xc10] sm:$0xff]
    %v474 = vld [vmem:[#allocation2 + $0xc18] sm:$0xff]
    %v475 = vld [vmem:[#allocation2 + $0xc20] sm:$0xff]
    %v476 = vld [vmem:[#allocation2 + $0xc28] sm:$0xff]
    %v477 = vld [vmem:[#allocation2 + $0xc30] sm:$0xff]
    %v478 = vld [vmem:[#allocation2 + $0xc38] sm:$0xff]
    %v479 = vld [vmem:[#allocation2 + $0xc40] sm:$0xff]
    %v480 = vld [vmem:[#allocation2 + $0xc48] sm:$0xff]
    %v481 = vld [vmem:[#allocation2 + $0xc50] sm:$0xff]
    %v482 = vld [vmem:[#allocation2 + $0xc58] sm:$0xff]
    %v483 = vld [vmem:[#allocation2 + $0xc60] sm:$0xff]
    %v484 = vld [vmem:[#allocation2 + $0xc68] sm:$0xff]
    %v485 = vld [vmem:[#allocation2 + $0xc70] sm:$0xff]
    %v486 = vld [vmem:[#allocation2 + $0xc78] sm:$0xff]
    %v487 = vld [vmem:[#allocation2 + $0xc80] sm:$0xff]
    %v488 = vld [vmem:[#allocation2 + $0xc88] sm:$0xff]
    %v489 = vld [vmem:[#allocation2 + $0xc90] sm:$0xff]
    %v490 = vld [vmem:[#allocation2 + $0xc98] sm:$0xff]
    %v491 = vld [vmem:[#allocation2 + $0xca0] sm:$0xff]
    %v492 = vld [vmem:[#allocation2 + $0xca8] sm:$0xff]
    %v493 = vld [vmem:[#allocation2 + $0xcb0] sm:$0xff]
    %v494 = vld [vmem:[#allocation2 + $0xcb8] sm:$0xff]
    %v495 = vld [vmem:[#allocation2 + $0xcc0] sm:$0xff]
    %v496 = vld [vmem:[#allocation2 + $0xcc8] sm:$0xff]
    %v497 = vld [vmem:[#allocation2 + $0xcd0] sm:$0xff]
    %v498 = vld [vmem:[#allocation2 + $0xcd8] sm:$0xff]
    %v499 = vld [vmem:[#allocation2 + $0xce0] sm:$0xff]
    %v500 = vld [vmem:[#allocation2 + $0xce8] sm:$0xff]
    %v501 = vld [vmem:[#allocation2 + $0xcf0] sm:$0xff]
    %v502 = vld [vmem:[#allocation2 + $0xcf8] sm:$0xff]
    %v503 = vld [vmem:[#allocation2 + $0xd00] sm:$0xff]
    %v504 = vld [vmem:[#allocation2 + $0xd08] sm:$0xff]
    %v505 = vld [vmem:[#allocation2 + $0xd10] sm:$0xff]
    %v506 = vld [vmem:[#allocation2 + $0xd18] sm:$0xff]
    %v507 = vld [vmem:[#allocation2 + $0xd20] sm:$0xff]
    %v508 = vld [vmem:[#allocation2 + $0xd28] sm:$0xff]
    %v509 = vld [vmem:[#allocation2 + $0xd30] sm:$0xff]
    %v510 = vld [vmem:[#allocation2 + $0xd38] sm:$0xff]
    %v511 = vld [vmem:[#allocation2 + $0xd40] sm:$0xff]
    %v512 = vld [vmem:[#allocation2 + $0xd48] sm:$0xff]
    %v513 = vld [vmem:[#allocation2 + $0xd50] sm:$0xff]
    %v514 = vld [vmem:[#allocation2 + $0xd58] sm:$0xff]
    %v515 = vld [vmem:[#allocation2 + $0xd60] sm:$0xff]
    %v516 = vld [vmem:[#allocation2 + $0xd68] sm:$0xff]
    %v517 = vld [vmem:[#allocation2 + $0xd70] sm:$0xff]
    %v518 = vld [vmem:[#allocation2 + $0xd78] sm:$0xff]
    %v519 = vld [vmem:[#allocation2 + $0xd80] sm:$0xff]
    %v520 = vld [vmem:[#allocation2 + $0xd88] sm:$0xff]
    %v521 = vld [vmem:[#allocation2 + $0xd90] sm:$0xff]
    %v522 = vld [vmem:[#allocation2 + $0xd98] sm:$0xff]
    %v523 = vld [vmem:[#allocation2 + $0xda0] sm:$0xff]
    %v524 = vld [vmem:[#allocation2 + $0xda8] sm:$0xff]
    %v525 = vld [vmem:[#allocation2 + $0xdb0] sm:$0xff]
    %v526 = vld [vmem:[#allocation2 + $0xdb8] sm:$0xff]
    %v527 = vld [vmem:[#allocation2 + $0xdc0] sm:$0xff]
    %v528 = vld [vmem:[#allocation2 + $0xdc8] sm:$0xff]
    %v529 = vld [vmem:[#allocation2 + $0xdd0] sm:$0xff]
    %v530 = vld [vmem:[#allocation2 + $0xdd8] sm:$0xff]
    %v531 = vld [vmem:[#allocation2 + $0xde0] sm:$0xff]
    %v532 = vld [vmem:[#allocation2 + $0xde8] sm:$0xff]
    %v533 = vld [vmem:[#allocation2 + $0xdf0] sm:$0xff]
    %v534 = vld [vmem:[#allocation2 + $0xdf8] sm:$0xff]
    %v535 = vld [vmem:[#allocation2 + $0xe00] sm:$0xff]
    %v536 = vld [vmem:[#allocation2 + $0xe08] sm:$0xff]
    %v537 = vld [vmem:[#allocation2 + $0xe10] sm:$0xff]
    %v538 = vld [vmem:[#allocation2 + $0xe18] sm:$0xff]
    %v539 = vld [vmem:[#allocation2 + $0xe20] sm:$0xff]
    %v540 = vld [vmem:[#allocation2 + $0xe28] sm:$0xff]
    %v541 = vld [vmem:[#allocation2 + $0xe30] sm:$0xff]
    %v542 = vld [vmem:[#allocation2 + $0xe38] sm:$0xff]
    %v543 = vld [vmem:[#allocation2 + $0xe40] sm:$0xff]
    %v544 = vld [vmem:[#allocation2 + $0xe48] sm:$0xff]
    %v545 = vld [vmem:[#allocation2 + $0xe50] sm:$0xff]
    %v546 = vld [vmem:[#allocation2 + $0xe58] sm:$0xff]
    %v547 = vld [vmem:[#allocation2 + $0xe60] sm:$0xff]
    %v548 = vld [vmem:[#allocation2 + $0xe68] sm:$0xff]
    %v549 = vld [vmem:[#allocation2 + $0xe70] sm:$0xff]
    %v550 = vld [vmem:[#allocation2 + $0xe78] sm:$0xff]
    %v551 = vld [vmem:[#allocation2 + $0xe80] sm:$0xff]
    %v552 = vld [vmem:[#allocation2 + $0xe88] sm:$0xff]
    %v553 = vld [vmem:[#allocation2 + $0xe90] sm:$0xff]
    %v554 = vld [vmem:[#allocation2 + $0xe98] sm:$0xff]
    %v555 = vld [vmem:[#allocation2 + $0xea0] sm:$0xff]
    %v556 = vld [vmem:[#allocation2 + $0xea8] sm:$0xff]
    %v557 = vld [vmem:[#allocation2 + $0xeb0] sm:$0xff]
    %v558 = vld [vmem:[#allocation2 + $0xeb8] sm:$0xff]
    %v559 = vld [vmem:[#allocation2 + $0xec0] sm:$0xff]
    %v560 = vld [vmem:[#allocation2 + $0xec8] sm:$0xff]
    %v561 = vld [vmem:[#allocation2 + $0xed0] sm:$0xff]
    %v562 = vld [vmem:[#allocation2 + $0xed8] sm:$0xff]
    %v563 = vld [vmem:[#allocation2 + $0xee0] sm:$0xff]
    %v564 = vld [vmem:[#allocation2 + $0xee8] sm:$0xff]
    %v565 = vld [vmem:[#allocation2 + $0xef0] sm:$0xff]
    %v566 = vld [vmem:[#allocation2 + $0xef8] sm:$0xff]
    %v567 = vld [vmem:[#allocation2 + $0xf00] sm:$0xff]
    %v568 = vld [vmem:[#allocation2 + $0xf08] sm:$0xff]
    %v569 = vld [vmem:[#allocation2 + $0xf10] sm:$0xff]
    %v570 = vld [vmem:[#allocation2 + $0xf18] sm:$0xff]
    %v571 = vld [vmem:[#allocation2 + $0xf20] sm:$0xff]
    %v572 = vld [vmem:[#allocation2 + $0xf28] sm:$0xff]
    %v573 = vld [vmem:[#allocation2 + $0xf30] sm:$0xff]
    %v574 = vld [vmem:[#allocation2 + $0xf38] sm:$0xff]
    %v575 = vld [vmem:[#allocation2 + $0xf40] sm:$0xff]
    %v576 = vld [vmem:[#allocation2 + $0xf48] sm:$0xff]
    %v577 = vld [vmem:[#allocation2 + $0xf50] sm:$0xff]
    %v578 = vld [vmem:[#allocation2 + $0xf58] sm:$0xff]
    %v579 = vld [vmem:[#allocation2 + $0xf60] sm:$0xff]
    %v580 = vld [vmem:[#allocation2 + $0xf68] sm:$0xff]
    %v581 = vld [vmem:[#allocation2 + $0xf70] sm:$0xff]
    %v582 = vld [vmem:[#allocation2 + $0xf78] sm:$0xff]
    %v583 = vld [vmem:[#allocation2 + $0xf80] sm:$0xff]
    %v584 = vld [vmem:[#allocation2 + $0xf88] sm:$0xff]
    %v585 = vld [vmem:[#allocation2 + $0xf90] sm:$0xff]
    %v586 = vld [vmem:[#allocation2 + $0xf98] sm:$0xff]
    %v587 = vld [vmem:[#allocation2 + $0xfa0] sm:$0xff]
    %v588 = vld [vmem:[#allocation2 + $0xfa8] sm:$0xff]
    %v589 = vld [vmem:[#allocation2 + $0xfb0] sm:$0xff]
    %v590 = vld [vmem:[#allocation2 + $0xfb8] sm:$0xff]
    %v591 = vld [vmem:[#allocation2 + $0xfc0] sm:$0xff]
    %v592 = vld [vmem:[#allocation2 + $0xfc8] sm:$0xff]
    %v593 = vld [vmem:[#allocation2 + $0xfd0] sm:$0xff]
    %v594 = vld [vmem:[#allocation2 + $0xfd8] sm:$0xff]
    %v595 = vld [vmem:[#allocation2 + $0xfe0] sm:$0xff]
    %v596 = vld [vmem:[#allocation2 + $0xfe8] sm:$0xff]
    %v597 = vld [vmem:[#allocation2 + $0xff0] sm:$0xff]
    %v598 = vld [vmem:[#allocation2 + $0xff8] sm:$0xff]
    %v599 = vld [vmem:[#allocation2 + $0x1000] sm:$0xff]
    %v600 = vld [vmem:[#allocation2 + $0x1008] sm:$0xff]
    %v601 = vld [vmem:[#allocation2 + $0x1010] sm:$0xff]
    %v602 = vld [vmem:[#allocation2 + $0x1018] sm:$0xff]
    %v603 = vld [vmem:[#allocation2 + $0x1020] sm:$0xff]
    %v604 = vld [vmem:[#allocation2 + $0x1028] sm:$0xff]
    %v605 = vld [vmem:[#allocation2 + $0x1030] sm:$0xff]
    %v606 = vld [vmem:[#allocation2 + $0x1038] sm:$0xff]
    %v607 = vld [vmem:[#allocation2 + $0x1040] sm:$0xff]
    %v608 = vld [vmem:[#allocation2 + $0x1048] sm:$0xff]
    %v609 = vld [vmem:[#allocation2 + $0x1050] sm:$0xff]
    %v610 = vld [vmem:[#allocation2 + $0x1058] sm:$0xff]
    %v611 = vld [vmem:[#allocation2 + $0x1060] sm:$0xff]
    %v612 = vld [vmem:[#allocation2 + $0x1068] sm:$0xff]
    %v613 = vld [vmem:[#allocation2 + $0x1070] sm:$0xff]
    %v614 = vld [vmem:[#allocation2 + $0x1078] sm:$0xff]
    %v615 = vld [vmem:[#allocation2 + $0x1080] sm:$0xff]
    %v616 = vld [vmem:[#allocation2 + $0x1088] sm:$0xff]
    %v617 = vld [vmem:[#allocation2 + $0x1090] sm:$0xff]
    %v618 = vld [vmem:[#allocation2 + $0x1098] sm:$0xff]
    %v619 = vld [vmem:[#allocation2 + $0x10a0] sm:$0xff]
    %v620 = vld [vmem:[#allocation2 + $0x10a8] sm:$0xff]
    %v621 = vld [vmem:[#allocation2 + $0x10b0] sm:$0xff]
    %v622 = vld [vmem:[#allocation2 + $0x10b8] sm:$0xff]
    %v623 = vld [vmem:[#allocation2 + $0x10c0] sm:$0xff]
    %v624 = vld [vmem:[#allocation2 + $0x10c8] sm:$0xff]
    %v625 = vld [vmem:[#allocation2 + $0x10d0] sm:$0xff]
    %v626 = vld [vmem:[#allocation2 + $0x10d8] sm:$0xff]
    %v627 = vld [vmem:[#allocation2 + $0x10e0] sm:$0xff]
    %v628 = vld [vmem:[#allocation2 + $0x10e8] sm:$0xff]
    %v629 = vld [vmem:[#allocation2 + $0x10f0] sm:$0xff]
    %v630 = vld [vmem:[#allocation2 + $0x10f8] sm:$0xff]
    %v631 = vld [vmem:[#allocation2 + $0x1100] sm:$0xff]
    %v632 = vld [vmem:[#allocation2 + $0x1108] sm:$0xff]
    %v633 = vld [vmem:[#allocation2 + $0x1110] sm:$0xff]
    %v634 = vld [vmem:[#allocation2 + $0x1118] sm:$0xff]
    %v635 = vld [vmem:[#allocation2 + $0x1120] sm:$0xff]
    %v636 = vld [vmem:[#allocation2 + $0x1128] sm:$0xff]
    %v637 = vld [vmem:[#allocation2 + $0x1130] sm:$0xff]
    %v638 = vld [vmem:[#allocation2 + $0x1138] sm:$0xff]
    %v639 = vld [vmem:[#allocation2 + $0x1140] sm:$0xff]
    %v640 = vld [vmem:[#allocation2 + $0x1148] sm:$0xff]
    %v641 = vld [vmem:[#allocation2 + $0x1150] sm:$0xff]
    %v642 = vld [vmem:[#allocation2 + $0x1158] sm:$0xff]
    %v643 = vld [vmem:[#allocation2 + $0x1160] sm:$0xff]
    %v644 = vld [vmem:[#allocation2 + $0x1168] sm:$0xff]
    %v645 = vld [vmem:[#allocation2 + $0x1170] sm:$0xff]
    %v646 = vld [vmem:[#allocation2 + $0x1178] sm:$0xff]
    %v647 = vld [vmem:[#allocation2 + $0x1180] sm:$0xff]
    %v648 = vld [vmem:[#allocation2 + $0x1188] sm:$0xff]
    %v649 = vld [vmem:[#allocation2 + $0x1190] sm:$0xff]
    %v650 = vld [vmem:[#allocation2 + $0x1198] sm:$0xff]
    %v651 = vld [vmem:[#allocation2 + $0x11a0] sm:$0xff]
    %v652 = vld [vmem:[#allocation2 + $0x11a8] sm:$0xff]
    %v653 = vld [vmem:[#allocation2 + $0x11b0] sm:$0xff]
    %v654 = vld [vmem:[#allocation2 + $0x11b8] sm:$0xff]
    %v655 = vld [vmem:[#allocation2 + $0x11c0] sm:$0xff]
    %v656 = vld [vmem:[#allocation2 + $0x11c8] sm:$0xff]
    %v657 = vld [vmem:[#allocation2 + $0x11d0] sm:$0xff]
    %v658 = vld [vmem:[#allocation2 + $0x11d8] sm:$0xff]
    %v659 = vld [vmem:[#allocation2 + $0x11e0] sm:$0xff]
    %v660 = vld [vmem:[#allocation2 + $0x11e8] sm:$0xff]
    %v661 = vld [vmem:[#allocation2 + $0x11f0] sm:$0xff]
    %v662 = vld [vmem:[#allocation2 + $0x11f8] sm:$0xff]
    %v663 = vld [vmem:[#allocation2 + $0x1200] sm:$0xff]
    %v664 = vld [vmem:[#allocation2 + $0x1208] sm:$0xff]
    %v665 = vld [vmem:[#allocation2 + $0x1210] sm:$0xff]
    %v666 = vld [vmem:[#allocation2 + $0x1218] sm:$0xff]
    %v667 = vld [vmem:[#allocation2 + $0x1220] sm:$0xff]
    %v668 = vld [vmem:[#allocation2 + $0x1228] sm:$0xff]
    %v669 = vld [vmem:[#allocation2 + $0x1230] sm:$0xff]
    %v670 = vld [vmem:[#allocation2 + $0x1238] sm:$0xff]
    %v671 = vld [vmem:[#allocation2 + $0x1240] sm:$0xff]
    %v672 = vld [vmem:[#allocation2 + $0x1248] sm:$0xff]
    %v673 = vld [vmem:[#allocation2 + $0x1250] sm:$0xff]
    %v674 = vld [vmem:[#allocation2 + $0x1258] sm:$0xff]
    %v675 = vld [vmem:[#allocation2 + $0x1260] sm:$0xff]
    %v676 = vld [vmem:[#allocation2 + $0x1268] sm:$0xff]
    %v677 = vld [vmem:[#allocation2 + $0x1270] sm:$0xff]
    %v678 = vld [vmem:[#allocation2 + $0x1278] sm:$0xff]
    %v679 = vld [vmem:[#allocation2 + $0x1280] sm:$0xff]
    %v680 = vld [vmem:[#allocation2 + $0x1288] sm:$0xff]
    %v681 = vld [vmem:[#allocation2 + $0x1290] sm:$0xff]
    %v682 = vld [vmem:[#allocation2 + $0x1298] sm:$0xff]
    %v683 = vld [vmem:[#allocation2 + $0x12a0] sm:$0xff]
    %v684 = vld [vmem:[#allocation2 + $0x12a8] sm:$0xff]
    %v685 = vld [vmem:[#allocation2 + $0x12b0] sm:$0xff]
    %v686 = vld [vmem:[#allocation2 + $0x12b8] sm:$0xff]
    %v687 = vld [vmem:[#allocation2 + $0x12c0] sm:$0xff]
    %v688 = vld [vmem:[#allocation2 + $0x12c8] sm:$0xff]
    %v689 = vld [vmem:[#allocation2 + $0x12d0] sm:$0xff]
    %v690 = vld [vmem:[#allocation2 + $0x12d8] sm:$0xff]
    %v691 = vld [vmem:[#allocation2 + $0x12e0] sm:$0xff]
    %v692 = vld [vmem:[#allocation2 + $0x12e8] sm:$0xff]
    %v693 = vld [vmem:[#allocation2 + $0x12f0] sm:$0xff]
    %v694 = vld [vmem:[#allocation2 + $0x12f8] sm:$0xff]
    %v695 = vld [vmem:[#allocation2 + $0x1300] sm:$0xff]
    %v696 = vld [vmem:[#allocation2 + $0x1308] sm:$0xff]
    %v697 = vld [vmem:[#allocation2 + $0x1310] sm:$0xff]
    %v698 = vld [vmem:[#allocation2 + $0x1318] sm:$0xff]
    %v699 = vld [vmem:[#allocation2 + $0x1320] sm:$0xff]
    %v700 = vld [vmem:[#allocation2 + $0x1328] sm:$0xff]
    %v701 = vld [vmem:[#allocation2 + $0x1330] sm:$0xff]
    %v702 = vld [vmem:[#allocation2 + $0x1338] sm:$0xff]
    %v703 = vld [vmem:[#allocation2 + $0x1340] sm:$0xff]
    %v704 = vld [vmem:[#allocation2 + $0x1348] sm:$0xff]
    %v705 = vld [vmem:[#allocation2 + $0x1350] sm:$0xff]
    %v706 = vld [vmem:[#allocation2 + $0x1358] sm:$0xff]
    %v707 = vld [vmem:[#allocation2 + $0x1360] sm:$0xff]
    %v708 = vld [vmem:[#allocation2 + $0x1368] sm:$0xff]
    %v709 = vld [vmem:[#allocation2 + $0x1370] sm:$0xff]
    %v710 = vld [vmem:[#allocation2 + $0x1378] sm:$0xff]
    %v711 = vld [vmem:[#allocation2 + $0x1380] sm:$0xff]
    %v712 = vld [vmem:[#allocation2 + $0x1388] sm:$0xff]
    %v713 = vld [vmem:[#allocation2 + $0x1390] sm:$0xff]
    %v714 = vld [vmem:[#allocation2 + $0x1398] sm:$0xff]
    %v715 = vld [vmem:[#allocation2 + $0x13a0] sm:$0xff]
    %v716 = vld [vmem:[#allocation2 + $0x13a8] sm:$0xff]
    %v717 = vld [vmem:[#allocation2 + $0x13b0] sm:$0xff]
    %v718 = vld [vmem:[#allocation2 + $0x13b8] sm:$0xff]
    %v719 = vld [vmem:[#allocation2 + $0x13c0] sm:$0xff]
    %v720 = vld [vmem:[#allocation2 + $0x13c8] sm:$0xff]
    %v721 = vld [vmem:[#allocation2 + $0x13d0] sm:$0xff]
    %v722 = vld [vmem:[#allocation2 + $0x13d8] sm:$0xff]
    %v723 = vld [vmem:[#allocation2 + $0x13e0] sm:$0xff]
    %v724 = vld [vmem:[#allocation2 + $0x13e8] sm:$0xff]
    %v725 = vld [vmem:[#allocation2 + $0x13f0] sm:$0xff]
    %v726 = vld [vmem:[#allocation2 + $0x13f8] sm:$0xff]
    %v727 = vld [vmem:[#allocation2 + $0x1400] sm:$0xff]
    %v728 = vld [vmem:[#allocation2 + $0x1408] sm:$0xff]
    %v729 = vld [vmem:[#allocation2 + $0x1410] sm:$0xff]
    %v730 = vld [vmem:[#allocation2 + $0x1418] sm:$0xff]
    %v731 = vld [vmem:[#allocation2 + $0x1420] sm:$0xff]
    %v732 = vld [vmem:[#allocation2 + $0x1428] sm:$0xff]
    %v733 = vld [vmem:[#allocation2 + $0x1430] sm:$0xff]
    %v734 = vld [vmem:[#allocation2 + $0x1438] sm:$0xff]
    %v735 = vld [vmem:[#allocation2 + $0x1440] sm:$0xff]
    %v736 = vld [vmem:[#allocation2 + $0x1448] sm:$0xff]
    %v737 = vld [vmem:[#allocation2 + $0x1450] sm:$0xff]
    %v738 = vld [vmem:[#allocation2 + $0x1458] sm:$0xff]
    %v739 = vld [vmem:[#allocation2 + $0x1460] sm:$0xff]
    %v740 = vld [vmem:[#allocation2 + $0x1468] sm:$0xff]
    %v741 = vld [vmem:[#allocation2 + $0x1470] sm:$0xff]
    %v742 = vld [vmem:[#allocation2 + $0x1478] sm:$0xff]
    %v743 = vld [vmem:[#allocation2 + $0x1480] sm:$0xff]
    %v744 = vld [vmem:[#allocation2 + $0x1488] sm:$0xff]
    %v745 = vld [vmem:[#allocation2 + $0x1490] sm:$0xff]
    %v746 = vld [vmem:[#allocation2 + $0x1498] sm:$0xff]
    %v747 = vld [vmem:[#allocation2 + $0x14a0] sm:$0xff]
    %v748 = vld [vmem:[#allocation2 + $0x14a8] sm:$0xff]
    %v749 = vld [vmem:[#allocation2 + $0x14b0] sm:$0xff]
    %v750 = vld [vmem:[#allocation2 + $0x14b8] sm:$0xff]
    %v751 = vld [vmem:[#allocation2 + $0x14c0] sm:$0xff]
    %v752 = vld [vmem:[#allocation2 + $0x14c8] sm:$0xff]
    %v753 = vld [vmem:[#allocation2 + $0x14d0] sm:$0xff]
    %v754 = vld [vmem:[#allocation2 + $0x14d8] sm:$0xff]
    %v755 = vld [vmem:[#allocation2 + $0x14e0] sm:$0xff]
    %v756 = vld [vmem:[#allocation2 + $0x14e8] sm:$0xff]
    %v757 = vld [vmem:[#allocation2 + $0x14f0] sm:$0xff]
    %v758 = vld [vmem:[#allocation2 + $0x14f8] sm:$0xff]
    %v759 = vld [vmem:[#allocation2 + $0x1500] sm:$0xff]
    %v760 = vld [vmem:[#allocation2 + $0x1508] sm:$0xff]
    %v761 = vld [vmem:[#allocation2 + $0x1510] sm:$0xff]
    %v762 = vld [vmem:[#allocation2 + $0x1518] sm:$0xff]
    %v763 = vld [vmem:[#allocation2 + $0x1520] sm:$0xff]
    %v764 = vld [vmem:[#allocation2 + $0x1528] sm:$0xff]
    %v765 = vld [vmem:[#allocation2 + $0x1530] sm:$0xff]
    %v766 = vld [vmem:[#allocation2 + $0x1538] sm:$0xff]
    %v767 = vld [vmem:[#allocation2 + $0x1540] sm:$0xff]
    %v768 = vld [vmem:[#allocation2 + $0x1548] sm:$0xff]
    %v769 = vld [vmem:[#allocation2 + $0x1550] sm:$0xff]
    %v770 = vld [vmem:[#allocation2 + $0x1558] sm:$0xff]
    %v771 = vld [vmem:[#allocation2 + $0x1560] sm:$0xff]
    %v772 = vld [vmem:[#allocation2 + $0x1568] sm:$0xff]
    %v773 = vld [vmem:[#allocation2 + $0x1570] sm:$0xff]
    %v774 = vld [vmem:[#allocation2 + $0x1578] sm:$0xff]
    %v775 = vld [vmem:[#allocation2 + $0x1580] sm:$0xff]
    %v776 = vld [vmem:[#allocation2 + $0x1588] sm:$0xff]
    %v777 = vld [vmem:[#allocation2 + $0x1590] sm:$0xff]
    %v778 = vld [vmem:[#allocation2 + $0x1598] sm:$0xff]
    %v779 = vld [vmem:[#allocation2 + $0x15a0] sm:$0xff]
    %v780 = vld [vmem:[#allocation2 + $0x15a8] sm:$0xff]
    %v781 = vld [vmem:[#allocation2 + $0x15b0] sm:$0xff]
    %v782 = vld [vmem:[#allocation2 + $0x15b8] sm:$0xff]
    %v783 = vld [vmem:[#allocation2 + $0x15c0] sm:$0xff]
    %v784 = vld [vmem:[#allocation2 + $0x15c8] sm:$0xff]
    %v785 = vld [vmem:[#allocation2 + $0x15d0] sm:$0xff]
    %v786 = vld [vmem:[#allocation2 + $0x15d8] sm:$0xff]
    %v787 = vld [vmem:[#allocation2 + $0x15e0] sm:$0xff]
    %v788 = vld [vmem:[#allocation2 + $0x15e8] sm:$0xff]
    %v789 = vld [vmem:[#allocation2 + $0x15f0] sm:$0xff]
    %v790 = vld [vmem:[#allocation2 + $0x15f8] sm:$0xff]
    %v791 = vld [vmem:[#allocation2 + $0x1600] sm:$0xff]
    %v792 = vld [vmem:[#allocation2 + $0x1608] sm:$0xff]
    %v793 = vld [vmem:[#allocation2 + $0x1610] sm:$0xff]
    %v794 = vld [vmem:[#allocation2 + $0x1618] sm:$0xff]
    %v795 = vld [vmem:[#allocation2 + $0x1620] sm:$0xff]
    %v796 = vld [vmem:[#allocation2 + $0x1628] sm:$0xff]
    %v797 = vld [vmem:[#allocation2 + $0x1630] sm:$0xff]
    %v798 = vld [vmem:[#allocation2 + $0x1638] sm:$0xff]
    %v799 = vld [vmem:[#allocation2 + $0x1640] sm:$0xff]
    %v800 = vld [vmem:[#allocation2 + $0x1648] sm:$0xff]
    %v801 = vld [vmem:[#allocation2 + $0x1650] sm:$0xff]
    %v802 = vld [vmem:[#allocation2 + $0x1658] sm:$0xff]
    %v803 = vld [vmem:[#allocation2 + $0x1660] sm:$0xff]
    %v804 = vld [vmem:[#allocation2 + $0x1668] sm:$0xff]
    %v805 = vld [vmem:[#allocation2 + $0x1670] sm:$0xff]
    %v806 = vld [vmem:[#allocation2 + $0x1678] sm:$0xff]
    %v807 = vld [vmem:[#allocation2 + $0x1680] sm:$0xff]
    %v808 = vld [vmem:[#allocation2 + $0x1688] sm:$0xff]
    %v809 = vld [vmem:[#allocation2 + $0x1690] sm:$0xff]
    %v810 = vld [vmem:[#allocation2 + $0x1698] sm:$0xff]
    %v811 = vld [vmem:[#allocation2 + $0x16a0] sm:$0xff]
    %v812 = vld [vmem:[#allocation2 + $0x16a8] sm:$0xff]
    %v813 = vld [vmem:[#allocation2 + $0x16b0] sm:$0xff]
    %v814 = vld [vmem:[#allocation2 + $0x16b8] sm:$0xff]
    %v815 = vld [vmem:[#allocation2 + $0x16c0] sm:$0xff]
    %v816 = vld [vmem:[#allocation2 + $0x16c8] sm:$0xff]
    %v817 = vld [vmem:[#allocation2 + $0x16d0] sm:$0xff]
    %v818 = vld [vmem:[#allocation2 + $0x16d8] sm:$0xff]
    %v819 = vld [vmem:[#allocation2 + $0x16e0] sm:$0xff]
    %v820 = vld [vmem:[#allocation2 + $0x16e8] sm:$0xff]
    %v821 = vld [vmem:[#allocation2 + $0x16f0] sm:$0xff]
    %v822 = vld [vmem:[#allocation2 + $0x16f8] sm:$0xff]
    %v823 = vld [vmem:[#allocation2 + $0x1700] sm:$0xff]
    %v824 = vld [vmem:[#allocation2 + $0x1708] sm:$0xff]
    %v825 = vld [vmem:[#allocation2 + $0x1710] sm:$0xff]
    %v826 = vld [vmem:[#allocation2 + $0x1718] sm:$0xff]
    %v827 = vld [vmem:[#allocation2 + $0x1720] sm:$0xff]
    %v828 = vld [vmem:[#allocation2 + $0x1728] sm:$0xff]
    %v829 = vld [vmem:[#allocation2 + $0x1730] sm:$0xff]
    %v830 = vld [vmem:[#allocation2 + $0x1738] sm:$0xff]
    %v831 = vld [vmem:[#allocation2 + $0x1740] sm:$0xff]
    %v832 = vld [vmem:[#allocation2 + $0x1748] sm:$0xff]
    %v833 = vld [vmem:[#allocation2 + $0x1750] sm:$0xff]
    %v834 = vld [vmem:[#allocation2 + $0x1758] sm:$0xff]
    %v835 = vld [vmem:[#allocation2 + $0x1760] sm:$0xff]
    %v836 = vld [vmem:[#allocation2 + $0x1768] sm:$0xff]
    %v837 = vld [vmem:[#allocation2 + $0x1770] sm:$0xff]
    %v838 = vld [vmem:[#allocation2 + $0x1778] sm:$0xff]
    %v839 = vld [vmem:[#allocation2 + $0x1780] sm:$0xff]
    %v840 = vld [vmem:[#allocation2 + $0x1788] sm:$0xff]
    %v841 = vld [vmem:[#allocation2 + $0x1790] sm:$0xff]
    %v842 = vld [vmem:[#allocation2 + $0x1798] sm:$0xff]
    %v843 = vld [vmem:[#allocation2 + $0x17a0] sm:$0xff]
    %v844 = vld [vmem:[#allocation2 + $0x17a8] sm:$0xff]
    %v845 = vld [vmem:[#allocation2 + $0x17b0] sm:$0xff]
    %v846 = vld [vmem:[#allocation2 + $0x17b8] sm:$0xff]
    %v847 = vld [vmem:[#allocation2 + $0x17c0] sm:$0xff]
    %v848 = vld [vmem:[#allocation2 + $0x17c8] sm:$0xff]
    %v849 = vld [vmem:[#allocation2 + $0x17d0] sm:$0xff]
    %v850 = vld [vmem:[#allocation2 + $0x17d8] sm:$0xff]
    %v851 = vld [vmem:[#allocation2 + $0x17e0] sm:$0xff]
    %v852 = vld [vmem:[#allocation2 + $0x17e8] sm:$0xff]
    %v853 = vld [vmem:[#allocation2 + $0x17f0] sm:$0xff]
    %v854 = vld [vmem:[#allocation2 + $0x17f8] sm:$0xff]
    %v855 = vld [vmem:[#allocation2 + $0x1800] sm:$0xff]
    %v856 = vld [vmem:[#allocation2 + $0x1808] sm:$0xff]
    %v857 = vld [vmem:[#allocation2 + $0x1810] sm:$0xff]
    %v858 = vld [vmem:[#allocation2 + $0x1818] sm:$0xff]
    %v859 = vld [vmem:[#allocation2 + $0x1820] sm:$0xff]
    %v860 = vld [vmem:[#allocation2 + $0x1828] sm:$0xff]
    %v861 = vld [vmem:[#allocation2 + $0x1830] sm:$0xff]
    %v862 = vld [vmem:[#allocation2 + $0x1838] sm:$0xff]
    %v863 = vld [vmem:[#allocation2 + $0x1840] sm:$0xff]
    %v864 = vld [vmem:[#allocation2 + $0x1848] sm:$0xff]
    %v865 = vld [vmem:[#allocation2 + $0x1850] sm:$0xff]
    %v866 = vld [vmem:[#allocation2 + $0x1858] sm:$0xff]
    %v867 = vld [vmem:[#allocation2 + $0x1860] sm:$0xff]
    %v868 = vld [vmem:[#allocation2 + $0x1868] sm:$0xff]
    %v869 = vld [vmem:[#allocation2 + $0x1870] sm:$0xff]
    %v870 = vld [vmem:[#allocation2 + $0x1878] sm:$0xff]
    %v871 = vld [vmem:[#allocation2 + $0x1880] sm:$0xff]
    %v872 = vld [vmem:[#allocation2 + $0x1888] sm:$0xff]
    %v873 = vld [vmem:[#allocation2 + $0x1890] sm:$0xff]
    %v874 = vld [vmem:[#allocation2 + $0x1898] sm:$0xff]
    %v875 = vld [vmem:[#allocation2 + $0x18a0] sm:$0xff]
    %v876 = vld [vmem:[#allocation2 + $0x18a8] sm:$0xff]
    %v877 = vld [vmem:[#allocation2 + $0x18b0] sm:$0xff]
    %v878 = vld [vmem:[#allocation2 + $0x18b8] sm:$0xff]
    %v879 = vld [vmem:[#allocation2 + $0x18c0] sm:$0xff]
    %v880 = vld [vmem:[#allocation2 + $0x18c8] sm:$0xff]
    %v881 = vld [vmem:[#allocation2 + $0x18d0] sm:$0xff]
    %v882 = vld [vmem:[#allocation2 + $0x18d8] sm:$0xff]
    %v883 = vld [vmem:[#allocation2 + $0x18e0] sm:$0xff]
    %v884 = vld [vmem:[#allocation2 + $0x18e8] sm:$0xff]
    %v885 = vld [vmem:[#allocation2 + $0x18f0] sm:$0xff]
    %v886 = vld [vmem:[#allocation2 + $0x18f8] sm:$0xff]
    %v887 = vld [vmem:[#allocation2 + $0x1900] sm:$0xff]
    %v888 = vld [vmem:[#allocation2 + $0x1908] sm:$0xff]
    %v889 = vld [vmem:[#allocation2 + $0x1910] sm:$0xff]
    %v890 = vld [vmem:[#allocation2 + $0x1918] sm:$0xff]
    %v891 = vld [vmem:[#allocation2 + $0x1920] sm:$0xff]
    %v892 = vld [vmem:[#allocation2 + $0x1928] sm:$0xff]
    %v893 = vld [vmem:[#allocation2 + $0x1930] sm:$0xff]
    %v894 = vld [vmem:[#allocation2 + $0x1938] sm:$0xff]
    %v895 = vld [vmem:[#allocation2 + $0x1940] sm:$0xff]
    %v896 = vld [vmem:[#allocation2 + $0x1948] sm:$0xff]
    %v897 = vld [vmem:[#allocation2 + $0x1950] sm:$0xff]
    %v898 = vld [vmem:[#allocation2 + $0x1958] sm:$0xff]
    %v899 = vld [vmem:[#allocation2 + $0x1960] sm:$0xff]
    %v900 = vld [vmem:[#allocation2 + $0x1968] sm:$0xff]
    %v901 = vld [vmem:[#allocation2 + $0x1970] sm:$0xff]
    %v902 = vld [vmem:[#allocation2 + $0x1978] sm:$0xff]
    %v903 = vld [vmem:[#allocation2 + $0x1980] sm:$0xff]
    %v904 = vld [vmem:[#allocation2 + $0x1988] sm:$0xff]
    %v905 = vld [vmem:[#allocation2 + $0x1990] sm:$0xff]
    %v906 = vld [vmem:[#allocation2 + $0x1998] sm:$0xff]
    %v907 = vld [vmem:[#allocation2 + $0x19a0] sm:$0xff]
    %v908 = vld [vmem:[#allocation2 + $0x19a8] sm:$0xff]
    %v909 = vld [vmem:[#allocation2 + $0x19b0] sm:$0xff]
    %v910 = vld [vmem:[#allocation2 + $0x19b8] sm:$0xff]
    %v911 = vld [vmem:[#allocation2 + $0x19c0] sm:$0xff]
    %v912 = vld [vmem:[#allocation2 + $0x19c8] sm:$0xff]
    %v913 = vld [vmem:[#allocation2 + $0x19d0] sm:$0xff]
    %v914 = vld [vmem:[#allocation2 + $0x19d8] sm:$0xff]
    %v915 = vld [vmem:[#allocation2 + $0x19e0] sm:$0xff]
    %v916 = vld [vmem:[#allocation2 + $0x19e8] sm:$0xff]
    %v917 = vld [vmem:[#allocation2 + $0x19f0] sm:$0xff]
    %v918 = vld [vmem:[#allocation2 + $0x19f8] sm:$0xff]
    %v919 = vld [vmem:[#allocation2 + $0x1a00] sm:$0xff]
    %v920 = vld [vmem:[#allocation2 + $0x1a08] sm:$0xff]
    %v921 = vld [vmem:[#allocation2 + $0x1a10] sm:$0xff]
    %v922 = vld [vmem:[#allocation2 + $0x1a18] sm:$0xff]
    %v923 = vld [vmem:[#allocation2 + $0x1a20] sm:$0xff]
    %v924 = vld [vmem:[#allocation2 + $0x1a28] sm:$0xff]
    %v925 = vld [vmem:[#allocation2 + $0x1a30] sm:$0xff]
    %v926 = vld [vmem:[#allocation2 + $0x1a38] sm:$0xff]
    %v927 = vld [vmem:[#allocation2 + $0x1a40] sm:$0xff]
    %v928 = vld [vmem:[#allocation2 + $0x1a48] sm:$0xff]
    %v929 = vld [vmem:[#allocation2 + $0x1a50] sm:$0xff]
    %v930 = vld [vmem:[#allocation2 + $0x1a58] sm:$0xff]
    %v931 = vld [vmem:[#allocation2 + $0x1a60] sm:$0xff]
    %v932 = vld [vmem:[#allocation2 + $0x1a68] sm:$0xff]
    %v933 = vld [vmem:[#allocation2 + $0x1a70] sm:$0xff]
    %v934 = vld [vmem:[#allocation2 + $0x1a78] sm:$0xff]
    %v935 = vld [vmem:[#allocation2 + $0x1a80] sm:$0xff]
    %v936 = vld [vmem:[#allocation2 + $0x1a88] sm:$0xff]
    %v937 = vld [vmem:[#allocation2 + $0x1a90] sm:$0xff]
    %v938 = vld [vmem:[#allocation2 + $0x1a98] sm:$0xff]
    %v939 = vld [vmem:[#allocation2 + $0x1aa0] sm:$0xff]
    %v940 = vld [vmem:[#allocation2 + $0x1aa8] sm:$0xff]
    %v941 = vld [vmem:[#allocation2 + $0x1ab0] sm:$0xff]
    %v942 = vld [vmem:[#allocation2 + $0x1ab8] sm:$0xff]
    %v943 = vld [vmem:[#allocation2 + $0x1ac0] sm:$0xff]
    %v944 = vld [vmem:[#allocation2 + $0x1ac8] sm:$0xff]
    %v945 = vld [vmem:[#allocation2 + $0x1ad0] sm:$0xff]
    %v946 = vld [vmem:[#allocation2 + $0x1ad8] sm:$0xff]
    %v947 = vld [vmem:[#allocation2 + $0x1ae0] sm:$0xff]
    %v948 = vld [vmem:[#allocation2 + $0x1ae8] sm:$0xff]
    %v949 = vld [vmem:[#allocation2 + $0x1af0] sm:$0xff]
    %v950 = vld [vmem:[#allocation2 + $0x1af8] sm:$0xff]
    %v951 = vld [vmem:[#allocation2 + $0x1b00] sm:$0xff]
    %v952 = vld [vmem:[#allocation2 + $0x1b08] sm:$0xff]
    %v953 = vld [vmem:[#allocation2 + $0x1b10] sm:$0xff]
    %v954 = vld [vmem:[#allocation2 + $0x1b18] sm:$0xff]
    %v955 = vld [vmem:[#allocation2 + $0x1b20] sm:$0xff]
    %v956 = vld [vmem:[#allocation2 + $0x1b28] sm:$0xff]
    %v957 = vld [vmem:[#allocation2 + $0x1b30] sm:$0xff]
    %v958 = vld [vmem:[#allocation2 + $0x1b38] sm:$0xff]
    %v959 = vld [vmem:[#allocation2 + $0x1b40] sm:$0xff]
    %v960 = vld [vmem:[#allocation2 + $0x1b48] sm:$0xff]
    %v961 = vld [vmem:[#allocation2 + $0x1b50] sm:$0xff]
    %v962 = vld [vmem:[#allocation2 + $0x1b58] sm:$0xff]
    %v963 = vld [vmem:[#allocation2 + $0x1b60] sm:$0xff]
    %v964 = vld [vmem:[#allocation2 + $0x1b68] sm:$0xff]
    %v965 = vld [vmem:[#allocation2 + $0x1b70] sm:$0xff]
    %v966 = vld [vmem:[#allocation2 + $0x1b78] sm:$0xff]
    %v967 = vld [vmem:[#allocation2 + $0x1b80] sm:$0xff]
    %v968 = vld [vmem:[#allocation2 + $0x1b88] sm:$0xff]
    %v969 = vld [vmem:[#allocation2 + $0x1b90] sm:$0xff]
    %v970 = vld [vmem:[#allocation2 + $0x1b98] sm:$0xff]
    %v971 = vld [vmem:[#allocation2 + $0x1ba0] sm:$0xff]
    %v972 = vld [vmem:[#allocation2 + $0x1ba8] sm:$0xff]
    %v973 = vld [vmem:[#allocation2 + $0x1bb0] sm:$0xff]
    %v974 = vld [vmem:[#allocation2 + $0x1bb8] sm:$0xff]
    %v975 = vld [vmem:[#allocation2 + $0x1bc0] sm:$0xff]
    %v976 = vld [vmem:[#allocation2 + $0x1bc8] sm:$0xff]
    %v977 = vld [vmem:[#allocation2 + $0x1bd0] sm:$0xff]
    %v978 = vld [vmem:[#allocation2 + $0x1bd8] sm:$0xff]
    %v979 = vld [vmem:[#allocation2 + $0x1be0] sm:$0xff]
    %v980 = vld [vmem:[#allocation2 + $0x1be8] sm:$0xff]
    %v981 = vld [vmem:[#allocation2 + $0x1bf0] sm:$0xff]
    %v982 = vld [vmem:[#allocation2 + $0x1bf8] sm:$0xff]
    %v983 = vld [vmem:[#allocation2 + $0x1c00] sm:$0xff]
    %v984 = vld [vmem:[#allocation2 + $0x1c08] sm:$0xff]
    %v985 = vld [vmem:[#allocation2 + $0x1c10] sm:$0xff]
    %v986 = vld [vmem:[#allocation2 + $0x1c18] sm:$0xff]
    %v987 = vld [vmem:[#allocation2 + $0x1c20] sm:$0xff]
    %v988 = vld [vmem:[#allocation2 + $0x1c28] sm:$0xff]
    %v989 = vld [vmem:[#allocation2 + $0x1c30] sm:$0xff]
    %v990 = vld [vmem:[#allocation2 + $0x1c38] sm:$0xff]
    %v991 = vld [vmem:[#allocation2 + $0x1c40] sm:$0xff]
    %v992 = vld [vmem:[#allocation2 + $0x1c48] sm:$0xff]
    %v993 = vld [vmem:[#allocation2 + $0x1c50] sm:$0xff]
    %v994 = vld [vmem:[#allocation2 + $0x1c58] sm:$0xff]
    %v995 = vld [vmem:[#allocation2 + $0x1c60] sm:$0xff]
    %v996 = vld [vmem:[#allocation2 + $0x1c68] sm:$0xff]
    %v997 = vld [vmem:[#allocation2 + $0x1c70] sm:$0xff]
    %v998 = vld [vmem:[#allocation2 + $0x1c78] sm:$0xff]
    %v999 = vld [vmem:[#allocation2 + $0x1c80] sm:$0xff]
    %v1000 = vld [vmem:[#allocation2 + $0x1c88] sm:$0xff]
    %v1001 = vld [vmem:[#allocation2 + $0x1c90] sm:$0xff]
    %v1002 = vld [vmem:[#allocation2 + $0x1c98] sm:$0xff]
    %v1003 = vld [vmem:[#allocation2 + $0x1ca0] sm:$0xff]
    %v1004 = vld [vmem:[#allocation2 + $0x1ca8] sm:$0xff]
    %v1005 = vld [vmem:[#allocation2 + $0x1cb0] sm:$0xff]
    %v1006 = vld [vmem:[#allocation2 + $0x1cb8] sm:$0xff]
    %v1007 = vld [vmem:[#allocation2 + $0x1cc0] sm:$0xff]
    %v1008 = vld [vmem:[#allocation2 + $0x1cc8] sm:$0xff]
    %v1009 = vld [vmem:[#allocation2 + $0x1cd0] sm:$0xff]
    %v1010 = vld [vmem:[#allocation2 + $0x1cd8] sm:$0xff]
    %v1011 = vld [vmem:[#allocation2 + $0x1ce0] sm:$0xff]
    %v1012 = vld [vmem:[#allocation2 + $0x1ce8] sm:$0xff]
    %v1013 = vld [vmem:[#allocation2 + $0x1cf0] sm:$0xff]
    %v1014 = vld [vmem:[#allocation2 + $0x1cf8] sm:$0xff]
    %v1015 = vld [vmem:[#allocation2 + $0x1d00] sm:$0xff]
    %v1016 = vld [vmem:[#allocation2 + $0x1d08] sm:$0xff]
    %v1017 = vld [vmem:[#allocation2 + $0x1d10] sm:$0xff]
    %v1018 = vld [vmem:[#allocation2 + $0x1d18] sm:$0xff]
    %v1019 = vld [vmem:[#allocation2 + $0x1d20] sm:$0xff]
    %v1020 = vld [vmem:[#allocation2 + $0x1d28] sm:$0xff]
    %v1021 = vld [vmem:[#allocation2 + $0x1d30] sm:$0xff]
    %v1022 = vld [vmem:[#allocation2 + $0x1d38] sm:$0xff]
    %v1023 = vld [vmem:[#allocation2 + $0x1d40] sm:$0xff]
    %v1024 = vld [vmem:[#allocation2 + $0x1d48] sm:$0xff]
    %v1025 = vld [vmem:[#allocation2 + $0x1d50] sm:$0xff]
    %v1026 = vld [vmem:[#allocation2 + $0x1d58] sm:$0xff]
    %v1027 = vld [vmem:[#allocation2 + $0x1d60] sm:$0xff]
    %v1028 = vld [vmem:[#allocation2 + $0x1d68] sm:$0xff]
    %v1029 = vld [vmem:[#allocation2 + $0x1d70] sm:$0xff]
    %v1030 = vld [vmem:[#allocation2 + $0x1d78] sm:$0xff]
    %v1031 = vld [vmem:[#allocation2 + $0x1d80] sm:$0xff]
    %v1032 = vld [vmem:[#allocation2 + $0x1d88] sm:$0xff]
    %v1033 = vld [vmem:[#allocation2 + $0x1d90] sm:$0xff]
    %v1034 = vld [vmem:[#allocation2 + $0x1d98] sm:$0xff]
    %v1035 = vld [vmem:[#allocation2 + $0x1da0] sm:$0xff]
    %v1036 = vld [vmem:[#allocation2 + $0x1da8] sm:$0xff]
    %v1037 = vld [vmem:[#allocation2 + $0x1db0] sm:$0xff]
    %v1038 = vld [vmem:[#allocation2 + $0x1db8] sm:$0xff]
    %v1039 = vld [vmem:[#allocation2 + $0x1dc0] sm:$0xff]
    %v1040 = vld [vmem:[#allocation2 + $0x1dc8] sm:$0xff]
    %v1041 = vld [vmem:[#allocation2 + $0x1dd0] sm:$0xff]
    %v1042 = vld [vmem:[#allocation2 + $0x1dd8] sm:$0xff]
    %v1043 = vld [vmem:[#allocation2 + $0x1de0] sm:$0xff]
    %v1044 = vld [vmem:[#allocation2 + $0x1de8] sm:$0xff]
    %v1045 = vld [vmem:[#allocation2 + $0x1df0] sm:$0xff]
    %v1046 = vld [vmem:[#allocation2 + $0x1df8] sm:$0xff]
    %v1047 = vld [vmem:[#allocation2 + $0x1e00] sm:$0xff]
    %v1048 = vld [vmem:[#allocation2 + $0x1e08] sm:$0xff]
    %v1049 = vld [vmem:[#allocation2 + $0x1e10] sm:$0xff]
    %v1050 = vld [vmem:[#allocation2 + $0x1e18] sm:$0xff]
    %v1051 = vld [vmem:[#allocation2 + $0x1e20] sm:$0xff]
    %v1052 = vld [vmem:[#allocation2 + $0x1e28] sm:$0xff]
    %v1053 = vld [vmem:[#allocation2 + $0x1e30] sm:$0xff]
    %v1054 = vld [vmem:[#allocation2 + $0x1e38] sm:$0xff]
    %v1055 = vld [vmem:[#allocation2 + $0x1e40] sm:$0xff]
    %v1056 = vld [vmem:[#allocation2 + $0x1e48] sm:$0xff]
    %v1057 = vld [vmem:[#allocation2 + $0x1e50] sm:$0xff]
    %v1058 = vld [vmem:[#allocation2 + $0x1e58] sm:$0xff]
    %v1059 = vld [vmem:[#allocation2 + $0x1e60] sm:$0xff]
    %v1060 = vld [vmem:[#allocation2 + $0x1e68] sm:$0xff]
    %v1061 = vld [vmem:[#allocation2 + $0x1e70] sm:$0xff]
    %v1062 = vld [vmem:[#allocation2 + $0x1e78] sm:$0xff]
    %v1063 = vld [vmem:[#allocation2 + $0x1e80] sm:$0xff]
    %v1064 = vld [vmem:[#allocation2 + $0x1e88] sm:$0xff]
    %v1065 = vld [vmem:[#allocation2 + $0x1e90] sm:$0xff]
    %v1066 = vld [vmem:[#allocation2 + $0x1e98] sm:$0xff]
    %v1067 = vld [vmem:[#allocation2 + $0x1ea0] sm:$0xff]
    %v1068 = vld [vmem:[#allocation2 + $0x1ea8] sm:$0xff]
    %v1069 = vld [vmem:[#allocation2 + $0x1eb0] sm:$0xff]
    %v1070 = vld [vmem:[#allocation2 + $0x1eb8] sm:$0xff]
    %v1071 = vld [vmem:[#allocation2 + $0x1ec0] sm:$0xff]
    %v1072 = vld [vmem:[#allocation2 + $0x1ec8] sm:$0xff]
    %v1073 = vld [vmem:[#allocation2 + $0x1ed0] sm:$0xff]
    %v1074 = vld [vmem:[#allocation2 + $0x1ed8] sm:$0xff]
    %v1075 = vld [vmem:[#allocation2 + $0x1ee0] sm:$0xff]
    %v1076 = vld [vmem:[#allocation2 + $0x1ee8] sm:$0xff]
    %v1077 = vld [vmem:[#allocation2 + $0x1ef0] sm:$0xff]
    %v1078 = vld [vmem:[#allocation2 + $0x1ef8] sm:$0xff]
    %v1079 = vld [vmem:[#allocation2 + $0x1f00] sm:$0xff]
    %v1080 = vld [vmem:[#allocation2 + $0x1f08] sm:$0xff]
    %v1081 = vld [vmem:[#allocation2 + $0x1f10] sm:$0xff]
    %v1082 = vld [vmem:[#allocation2 + $0x1f18] sm:$0xff]
    %v1083 = vld [vmem:[#allocation2 + $0x1f20] sm:$0xff]
    %v1084 = vld [vmem:[#allocation2 + $0x1f28] sm:$0xff]
    %v1085 = vld [vmem:[#allocation2 + $0x1f30] sm:$0xff]
    %v1086 = vld [vmem:[#allocation2 + $0x1f38] sm:$0xff]
    %v1087 = vld [vmem:[#allocation2 + $0x1f40] sm:$0xff]
    %v1088 = vld [vmem:[#allocation2 + $0x1f48] sm:$0xff]
    %v1089 = vld [vmem:[#allocation2 + $0x1f50] sm:$0xff]
    %v1090 = vld [vmem:[#allocation2 + $0x1f58] sm:$0xff]
    %v1091 = vld [vmem:[#allocation2 + $0x1f60] sm:$0xff]
    %v1092 = vld [vmem:[#allocation2 + $0x1f68] sm:$0xff]
    %v1093 = vld [vmem:[#allocation2 + $0x1f70] sm:$0xff]
    %v1094 = vld [vmem:[#allocation2 + $0x1f78] sm:$0xff]
    %v1095 = vld [vmem:[#allocation2 + $0x1f80] sm:$0xff]
    %v1096 = vld [vmem:[#allocation2 + $0x1f88] sm:$0xff]
    %v1097 = vld [vmem:[#allocation2 + $0x1f90] sm:$0xff]
    %v1098 = vld [vmem:[#allocation2 + $0x1f98] sm:$0xff]
    %v1099 = vld [vmem:[#allocation2 + $0x1fa0] sm:$0xff]
    %v1100 = vld [vmem:[#allocation2 + $0x1fa8] sm:$0xff]
    %v1101 = vld [vmem:[#allocation2 + $0x1fb0] sm:$0xff]
    %v1102 = vld [vmem:[#allocation2 + $0x1fb8] sm:$0xff]
    %v1103 = vld [vmem:[#allocation2 + $0x1fc0] sm:$0xff]
    %v1104 = vld [vmem:[#allocation2 + $0x1fc8] sm:$0xff]
    %v1105 = vld [vmem:[#allocation2 + $0x1fd0] sm:$0xff]
    %v1106 = vld [vmem:[#allocation2 + $0x1fd8] sm:$0xff]
    %v1107 = vld [vmem:[#allocation2 + $0x1fe0] sm:$0xff]
    %v1108 = vld [vmem:[#allocation2 + $0x1fe8] sm:$0xff]
    %v1109 = vld [vmem:[#allocation2 + $0x1ff0] sm:$0xff]
    %v1110 = vld [vmem:[#allocation2 + $0x1ff8] sm:$0xff]
    %v1111 = vld [vmem:[#allocation4] sm:$0xff]
    %v1113 = vperm.slane %v1111, 0
    %v1114 = vperm.slane %v1111, 1
    %v1115 = vperm.slane %v1111, 2
    %v1116 = vperm.slane %v1111, 3
    %v1117 = vperm.slane %v1111, 4
    %v1118 = vperm.slane %v1111, 5
    %v1119 = vperm.slane %v1111, 6
    %v1120 = vperm.slane %v1111, 7
    %v1137 = vunpack.c.l.b16 %v79
    %v1138 = vunpack.c.h.b16 %v79
    %v1139 = vunpack.c.l.b16 %v80
    %v1140 = vunpack.c.h.b16 %v80
    %v1141 = vunpack.c.l.b16 %v81
    %v1142 = vunpack.c.h.b16 %v81
    %v1143 = vunpack.c.l.b16 %v82
    %v1144 = vunpack.c.h.b16 %v82
    %v1145 = vunpack.c.l.b16 %v83
    %v1146 = vunpack.c.h.b16 %v83
    %v1147 = vunpack.c.l.b16 %v84
    %v1148 = vunpack.c.h.b16 %v84
    %v1149 = vunpack.c.l.b16 %v85
    %v1150 = vunpack.c.h.b16 %v85
    %v1151 = vunpack.c.l.b16 %v86
    %v1152 = vunpack.c.h.b16 %v86
    %v1153 = vpack.c.b16 %v1137, %v1137
    %v1154 = vpack.c.b16 %v1138, %v1138
    %v1155 = vpack.c.b16 %v1139, %v1139
    %v1156 = vpack.c.b16 %v1140, %v1140
    %v1157 = vpack.c.b16 %v1141, %v1141
    %v1158 = vpack.c.b16 %v1142, %v1142
    %v1159 = vpack.c.b16 %v1143, %v1143
    %v1160 = vpack.c.b16 %v1144, %v1144
    %v1161 = vpack.c.b16 %v1145, %v1145
    %v1162 = vpack.c.b16 %v1146, %v1146
    %v1163 = vpack.c.b16 %v1147, %v1147
    %v1164 = vpack.c.b16 %v1148, %v1148
    %v1165 = vpack.c.b16 %v1149, %v1149
    %v1166 = vpack.c.b16 %v1150, %v1150
    %v1167 = vpack.c.b16 %v1151, %v1151
    %v1168 = vpack.c.b16 %v1152, %v1152
    %v2209 = vunpack.c.l.b16 %v87
    %v2210 = vunpack.c.h.b16 %v87
    %v2211 = vunpack.c.l.b16 %v88
    %v2212 = vunpack.c.h.b16 %v88
    %v2213 = vunpack.c.l.b16 %v89
    %v2214 = vunpack.c.h.b16 %v89
    %v2215 = vunpack.c.l.b16 %v90
    %v2216 = vunpack.c.h.b16 %v90
    %v2217 = vunpack.c.l.b16 %v91
    %v2218 = vunpack.c.h.b16 %v91
    %v2219 = vunpack.c.l.b16 %v92
    %v2220 = vunpack.c.h.b16 %v92
    %v2221 = vunpack.c.l.b16 %v93
    %v2222 = vunpack.c.h.b16 %v93
    %v2223 = vunpack.c.l.b16 %v94
    %v2224 = vunpack.c.h.b16 %v94
    %v2225 = vunpack.c.l.b16 %v95
    %v2226 = vunpack.c.h.b16 %v95
    %v2227 = vunpack.c.l.b16 %v96
    %v2228 = vunpack.c.h.b16 %v96
    %v2229 = vunpack.c.l.b16 %v97
    %v2230 = vunpack.c.h.b16 %v97
    %v2231 = vunpack.c.l.b16 %v98
    %v2232 = vunpack.c.h.b16 %v98
    %v2233 = vunpack.c.l.b16 %v99
    %v2234 = vunpack.c.h.b16 %v99
    %v2235 = vunpack.c.l.b16 %v100
    %v2236 = vunpack.c.h.b16 %v100
    %v2237 = vunpack.c.l.b16 %v101
    %v2238 = vunpack.c.h.b16 %v101
    %v2239 = vunpack.c.l.b16 %v102
    %v2240 = vunpack.c.h.b16 %v102
    %v2241 = vunpack.c.l.b16 %v103
    %v2242 = vunpack.c.h.b16 %v103
    %v2243 = vunpack.c.l.b16 %v104
    %v2244 = vunpack.c.h.b16 %v104
    %v2245 = vunpack.c.l.b16 %v105
    %v2246 = vunpack.c.h.b16 %v105
    %v2247 = vunpack.c.l.b16 %v106
    %v2248 = vunpack.c.h.b16 %v106
    %v2249 = vunpack.c.l.b16 %v107
    %v2250 = vunpack.c.h.b16 %v107
    %v2251 = vunpack.c.l.b16 %v108
    %v2252 = vunpack.c.h.b16 %v108
    %v2253 = vunpack.c.l.b16 %v109
    %v2254 = vunpack.c.h.b16 %v109
    %v2255 = vunpack.c.l.b16 %v110
    %v2256 = vunpack.c.h.b16 %v110
    %v2257 = vunpack.c.l.b16 %v111
    %v2258 = vunpack.c.h.b16 %v111
    %v2259 = vunpack.c.l.b16 %v112
    %v2260 = vunpack.c.h.b16 %v112
    %v2261 = vunpack.c.l.b16 %v113
    %v2262 = vunpack.c.h.b16 %v113
    %v2263 = vunpack.c.l.b16 %v114
    %v2264 = vunpack.c.h.b16 %v114
    %v2265 = vunpack.c.l.b16 %v115
    %v2266 = vunpack.c.h.b16 %v115
    %v2267 = vunpack.c.l.b16 %v116
    %v2268 = vunpack.c.h.b16 %v116
    %v2269 = vunpack.c.l.b16 %v117
    %v2270 = vunpack.c.h.b16 %v117
    %v2271 = vunpack.c.l.b16 %v118
    %v2272 = vunpack.c.h.b16 %v118
    %v2273 = vunpack.c.l.b16 %v119
    %v2274 = vunpack.c.h.b16 %v119
    %v2275 = vunpack.c.l.b16 %v120
    %v2276 = vunpack.c.h.b16 %v120
    %v2277 = vunpack.c.l.b16 %v121
    %v2278 = vunpack.c.h.b16 %v121
    %v2279 = vunpack.c.l.b16 %v122
    %v2280 = vunpack.c.h.b16 %v122
    %v2281 = vunpack.c.l.b16 %v123
    %v2282 = vunpack.c.h.b16 %v123
    %v2283 = vunpack.c.l.b16 %v124
    %v2284 = vunpack.c.h.b16 %v124
    %v2285 = vunpack.c.l.b16 %v125
    %v2286 = vunpack.c.h.b16 %v125
    %v2287 = vunpack.c.l.b16 %v126
    %v2288 = vunpack.c.h.b16 %v126
    %v2289 = vunpack.c.l.b16 %v127
    %v2290 = vunpack.c.h.b16 %v127
    %v2291 = vunpack.c.l.b16 %v128
    %v2292 = vunpack.c.h.b16 %v128
    %v2293 = vunpack.c.l.b16 %v129
    %v2294 = vunpack.c.h.b16 %v129
    %v2295 = vunpack.c.l.b16 %v130
    %v2296 = vunpack.c.h.b16 %v130
    %v2297 = vunpack.c.l.b16 %v131
    %v2298 = vunpack.c.h.b16 %v131
    %v2299 = vunpack.c.l.b16 %v132
    %v2300 = vunpack.c.h.b16 %v132
    %v2301 = vunpack.c.l.b16 %v133
    %v2302 = vunpack.c.h.b16 %v133
    %v2303 = vunpack.c.l.b16 %v134
    %v2304 = vunpack.c.h.b16 %v134
    %v2305 = vunpack.c.l.b16 %v135
    %v2306 = vunpack.c.h.b16 %v135
    %v2307 = vunpack.c.l.b16 %v136
    %v2308 = vunpack.c.h.b16 %v136
    %v2309 = vunpack.c.l.b16 %v137
    %v2310 = vunpack.c.h.b16 %v137
    %v2311 = vunpack.c.l.b16 %v138
    %v2312 = vunpack.c.h.b16 %v138
    %v2313 = vunpack.c.l.b16 %v139
    %v2314 = vunpack.c.h.b16 %v139
    %v2315 = vunpack.c.l.b16 %v140
    %v2316 = vunpack.c.h.b16 %v140
    %v2317 = vunpack.c.l.b16 %v141
    %v2318 = vunpack.c.h.b16 %v141
    %v2319 = vunpack.c.l.b16 %v142
    %v2320 = vunpack.c.h.b16 %v142
    %v2321 = vunpack.c.l.b16 %v143
    %v2322 = vunpack.c.h.b16 %v143
    %v2323 = vunpack.c.l.b16 %v144
    %v2324 = vunpack.c.h.b16 %v144
    %v2325 = vunpack.c.l.b16 %v145
    %v2326 = vunpack.c.h.b16 %v145
    %v2327 = vunpack.c.l.b16 %v146
    %v2328 = vunpack.c.h.b16 %v146
    %v2329 = vunpack.c.l.b16 %v147
    %v2330 = vunpack.c.h.b16 %v147
    %v2331 = vunpack.c.l.b16 %v148
    %v2332 = vunpack.c.h.b16 %v148
    %v2333 = vunpack.c.l.b16 %v149
    %v2334 = vunpack.c.h.b16 %v149
    %v2335 = vunpack.c.l.b16 %v150
    %v2336 = vunpack.c.h.b16 %v150
    %v2337 = vunpack.c.l.b16 %v151
    %v2338 = vunpack.c.h.b16 %v151
    %v2339 = vunpack.c.l.b16 %v152
    %v2340 = vunpack.c.h.b16 %v152
    %v2341 = vunpack.c.l.b16 %v153
    %v2342 = vunpack.c.h.b16 %v153
    %v2343 = vunpack.c.l.b16 %v154
    %v2344 = vunpack.c.h.b16 %v154
    %v2345 = vunpack.c.l.b16 %v155
    %v2346 = vunpack.c.h.b16 %v155
    %v2347 = vunpack.c.l.b16 %v156
    %v2348 = vunpack.c.h.b16 %v156
    %v2349 = vunpack.c.l.b16 %v157
    %v2350 = vunpack.c.h.b16 %v157
    %v2351 = vunpack.c.l.b16 %v158
    %v2352 = vunpack.c.h.b16 %v158
    %v2353 = vunpack.c.l.b16 %v159
    %v2354 = vunpack.c.h.b16 %v159
    %v2355 = vunpack.c.l.b16 %v160
    %v2356 = vunpack.c.h.b16 %v160
    %v2357 = vunpack.c.l.b16 %v161
    %v2358 = vunpack.c.h.b16 %v161
    %v2359 = vunpack.c.l.b16 %v162
    %v2360 = vunpack.c.h.b16 %v162
    %v2361 = vunpack.c.l.b16 %v163
    %v2362 = vunpack.c.h.b16 %v163
    %v2363 = vunpack.c.l.b16 %v164
    %v2364 = vunpack.c.h.b16 %v164
    %v2365 = vunpack.c.l.b16 %v165
    %v2366 = vunpack.c.h.b16 %v165
    %v2367 = vunpack.c.l.b16 %v166
    %v2368 = vunpack.c.h.b16 %v166
    %v2369 = vunpack.c.l.b16 %v167
    %v2370 = vunpack.c.h.b16 %v167
    %v2371 = vunpack.c.l.b16 %v168
    %v2372 = vunpack.c.h.b16 %v168
    %v2373 = vunpack.c.l.b16 %v169
    %v2374 = vunpack.c.h.b16 %v169
    %v2375 = vunpack.c.l.b16 %v170
    %v2376 = vunpack.c.h.b16 %v170
    %v2377 = vunpack.c.l.b16 %v171
    %v2378 = vunpack.c.h.b16 %v171
    %v2379 = vunpack.c.l.b16 %v172
    %v2380 = vunpack.c.h.b16 %v172
    %v2381 = vunpack.c.l.b16 %v173
    %v2382 = vunpack.c.h.b16 %v173
    %v2383 = vunpack.c.l.b16 %v174
    %v2384 = vunpack.c.h.b16 %v174
    %v2385 = vunpack.c.l.b16 %v175
    %v2386 = vunpack.c.h.b16 %v175
    %v2387 = vunpack.c.l.b16 %v176
    %v2388 = vunpack.c.h.b16 %v176
    %v2389 = vunpack.c.l.b16 %v177
    %v2390 = vunpack.c.h.b16 %v177
    %v2391 = vunpack.c.l.b16 %v178
    %v2392 = vunpack.c.h.b16 %v178
    %v2393 = vunpack.c.l.b16 %v179
    %v2394 = vunpack.c.h.b16 %v179
    %v2395 = vunpack.c.l.b16 %v180
    %v2396 = vunpack.c.h.b16 %v180
    %v2397 = vunpack.c.l.b16 %v181
    %v2398 = vunpack.c.h.b16 %v181
    %v2399 = vunpack.c.l.b16 %v182
    %v2400 = vunpack.c.h.b16 %v182
    %v2401 = vunpack.c.l.b16 %v183
    %v2402 = vunpack.c.h.b16 %v183
    %v2403 = vunpack.c.l.b16 %v184
    %v2404 = vunpack.c.h.b16 %v184
    %v2405 = vunpack.c.l.b16 %v185
    %v2406 = vunpack.c.h.b16 %v185
    %v2407 = vunpack.c.l.b16 %v186
    %v2408 = vunpack.c.h.b16 %v186
    %v2409 = vunpack.c.l.b16 %v187
    %v2410 = vunpack.c.h.b16 %v187
    %v2411 = vunpack.c.l.b16 %v188
    %v2412 = vunpack.c.h.b16 %v188
    %v2413 = vunpack.c.l.b16 %v189
    %v2414 = vunpack.c.h.b16 %v189
    %v2415 = vunpack.c.l.b16 %v190
    %v2416 = vunpack.c.h.b16 %v190
    %v2417 = vunpack.c.l.b16 %v191
    %v2418 = vunpack.c.h.b16 %v191
    %v2419 = vunpack.c.l.b16 %v192
    %v2420 = vunpack.c.h.b16 %v192
    %v2421 = vunpack.c.l.b16 %v193
    %v2422 = vunpack.c.h.b16 %v193
    %v2423 = vunpack.c.l.b16 %v194
    %v2424 = vunpack.c.h.b16 %v194
    %v2425 = vunpack.c.l.b16 %v195
    %v2426 = vunpack.c.h.b16 %v195
    %v2427 = vunpack.c.l.b16 %v196
    %v2428 = vunpack.c.h.b16 %v196
    %v2429 = vunpack.c.l.b16 %v197
    %v2430 = vunpack.c.h.b16 %v197
    %v2431 = vunpack.c.l.b16 %v198
    %v2432 = vunpack.c.h.b16 %v198
    %v2433 = vunpack.c.l.b16 %v199
    %v2434 = vunpack.c.h.b16 %v199
    %v2435 = vunpack.c.l.b16 %v200
    %v2436 = vunpack.c.h.b16 %v200
    %v2437 = vunpack.c.l.b16 %v201
    %v2438 = vunpack.c.h.b16 %v201
    %v2439 = vunpack.c.l.b16 %v202
    %v2440 = vunpack.c.h.b16 %v202
    %v2441 = vunpack.c.l.b16 %v203
    %v2442 = vunpack.c.h.b16 %v203
    %v2443 = vunpack.c.l.b16 %v204
    %v2444 = vunpack.c.h.b16 %v204
    %v2445 = vunpack.c.l.b16 %v205
    %v2446 = vunpack.c.h.b16 %v205
    %v2447 = vunpack.c.l.b16 %v206
    %v2448 = vunpack.c.h.b16 %v206
    %v2449 = vunpack.c.l.b16 %v207
    %v2450 = vunpack.c.h.b16 %v207
    %v2451 = vunpack.c.l.b16 %v208
    %v2452 = vunpack.c.h.b16 %v208
    %v2453 = vunpack.c.l.b16 %v209
    %v2454 = vunpack.c.h.b16 %v209
    %v2455 = vunpack.c.l.b16 %v210
    %v2456 = vunpack.c.h.b16 %v210
    %v2457 = vunpack.c.l.b16 %v211
    %v2458 = vunpack.c.h.b16 %v211
    %v2459 = vunpack.c.l.b16 %v212
    %v2460 = vunpack.c.h.b16 %v212
    %v2461 = vunpack.c.l.b16 %v213
    %v2462 = vunpack.c.h.b16 %v213
    %v2463 = vunpack.c.l.b16 %v214
    %v2464 = vunpack.c.h.b16 %v214
    %v2465 = vunpack.c.l.b16 %v215
    %v2466 = vunpack.c.h.b16 %v215
    %v2467 = vunpack.c.l.b16 %v216
    %v2468 = vunpack.c.h.b16 %v216
    %v2469 = vunpack.c.l.b16 %v217
    %v2470 = vunpack.c.h.b16 %v217
    %v2471 = vunpack.c.l.b16 %v218
    %v2472 = vunpack.c.h.b16 %v218
    %v2473 = vunpack.c.l.b16 %v219
    %v2474 = vunpack.c.h.b16 %v219
    %v2475 = vunpack.c.l.b16 %v220
    %v2476 = vunpack.c.h.b16 %v220
    %v2477 = vunpack.c.l.b16 %v221
    %v2478 = vunpack.c.h.b16 %v221
    %v2479 = vunpack.c.l.b16 %v222
    %v2480 = vunpack.c.h.b16 %v222
    %v2481 = vunpack.c.l.b16 %v223
    %v2482 = vunpack.c.h.b16 %v223
    %v2483 = vunpack.c.l.b16 %v224
    %v2484 = vunpack.c.h.b16 %v224
    %v2485 = vunpack.c.l.b16 %v225
    %v2486 = vunpack.c.h.b16 %v225
    %v2487 = vunpack.c.l.b16 %v226
    %v2488 = vunpack.c.h.b16 %v226
    %v2489 = vunpack.c.l.b16 %v227
    %v2490 = vunpack.c.h.b16 %v227
    %v2491 = vunpack.c.l.b16 %v228
    %v2492 = vunpack.c.h.b16 %v228
    %v2493 = vunpack.c.l.b16 %v229
    %v2494 = vunpack.c.h.b16 %v229
    %v2495 = vunpack.c.l.b16 %v230
    %v2496 = vunpack.c.h.b16 %v230
    %v2497 = vunpack.c.l.b16 %v231
    %v2498 = vunpack.c.h.b16 %v231
    %v2499 = vunpack.c.l.b16 %v232
    %v2500 = vunpack.c.h.b16 %v232
    %v2501 = vunpack.c.l.b16 %v233
    %v2502 = vunpack.c.h.b16 %v233
    %v2503 = vunpack.c.l.b16 %v234
    %v2504 = vunpack.c.h.b16 %v234
    %v2505 = vunpack.c.l.b16 %v235
    %v2506 = vunpack.c.h.b16 %v235
    %v2507 = vunpack.c.l.b16 %v236
    %v2508 = vunpack.c.h.b16 %v236
    %v2509 = vunpack.c.l.b16 %v237
    %v2510 = vunpack.c.h.b16 %v237
    %v2511 = vunpack.c.l.b16 %v238
    %v2512 = vunpack.c.h.b16 %v238
    %v2513 = vunpack.c.l.b16 %v239
    %v2514 = vunpack.c.h.b16 %v239
    %v2515 = vunpack.c.l.b16 %v240
    %v2516 = vunpack.c.h.b16 %v240
    %v2517 = vunpack.c.l.b16 %v241
    %v2518 = vunpack.c.h.b16 %v241
    %v2519 = vunpack.c.l.b16 %v242
    %v2520 = vunpack.c.h.b16 %v242
    %v2521 = vunpack.c.l.b16 %v243
    %v2522 = vunpack.c.h.b16 %v243
    %v2523 = vunpack.c.l.b16 %v244
    %v2524 = vunpack.c.h.b16 %v244
    %v2525 = vunpack.c.l.b16 %v245
    %v2526 = vunpack.c.h.b16 %v245
    %v2527 = vunpack.c.l.b16 %v246
    %v2528 = vunpack.c.h.b16 %v246
    %v2529 = vunpack.c.l.b16 %v247
    %v2530 = vunpack.c.h.b16 %v247
    %v2531 = vunpack.c.l.b16 %v248
    %v2532 = vunpack.c.h.b16 %v248
    %v2533 = vunpack.c.l.b16 %v249
    %v2534 = vunpack.c.h.b16 %v249
    %v2535 = vunpack.c.l.b16 %v250
    %v2536 = vunpack.c.h.b16 %v250
    %v2537 = vunpack.c.l.b16 %v251
    %v2538 = vunpack.c.h.b16 %v251
    %v2539 = vunpack.c.l.b16 %v252
    %v2540 = vunpack.c.h.b16 %v252
    %v2541 = vunpack.c.l.b16 %v253
    %v2542 = vunpack.c.h.b16 %v253
    %v2543 = vunpack.c.l.b16 %v254
    %v2544 = vunpack.c.h.b16 %v254
    %v2545 = vunpack.c.l.b16 %v255
    %v2546 = vunpack.c.h.b16 %v255
    %v2547 = vunpack.c.l.b16 %v256
    %v2548 = vunpack.c.h.b16 %v256
    %v2549 = vunpack.c.l.b16 %v257
    %v2550 = vunpack.c.h.b16 %v257
    %v2551 = vunpack.c.l.b16 %v258
    %v2552 = vunpack.c.h.b16 %v258
    %v2553 = vunpack.c.l.b16 %v259
    %v2554 = vunpack.c.h.b16 %v259
    %v2555 = vunpack.c.l.b16 %v260
    %v2556 = vunpack.c.h.b16 %v260
    %v2557 = vunpack.c.l.b16 %v261
    %v2558 = vunpack.c.h.b16 %v261
    %v2559 = vunpack.c.l.b16 %v262
    %v2560 = vunpack.c.h.b16 %v262
    %v2561 = vunpack.c.l.b16 %v263
    %v2562 = vunpack.c.h.b16 %v263
    %v2563 = vunpack.c.l.b16 %v264
    %v2564 = vunpack.c.h.b16 %v264
    %v2565 = vunpack.c.l.b16 %v265
    %v2566 = vunpack.c.h.b16 %v265
    %v2567 = vunpack.c.l.b16 %v266
    %v2568 = vunpack.c.h.b16 %v266
    %v2569 = vunpack.c.l.b16 %v267
    %v2570 = vunpack.c.h.b16 %v267
    %v2571 = vunpack.c.l.b16 %v268
    %v2572 = vunpack.c.h.b16 %v268
    %v2573 = vunpack.c.l.b16 %v269
    %v2574 = vunpack.c.h.b16 %v269
    %v2575 = vunpack.c.l.b16 %v270
    %v2576 = vunpack.c.h.b16 %v270
    %v2577 = vunpack.c.l.b16 %v271
    %v2578 = vunpack.c.h.b16 %v271
    %v2579 = vunpack.c.l.b16 %v272
    %v2580 = vunpack.c.h.b16 %v272
    %v2581 = vunpack.c.l.b16 %v273
    %v2582 = vunpack.c.h.b16 %v273
    %v2583 = vunpack.c.l.b16 %v274
    %v2584 = vunpack.c.h.b16 %v274
    %v2585 = vunpack.c.l.b16 %v275
    %v2586 = vunpack.c.h.b16 %v275
    %v2587 = vunpack.c.l.b16 %v276
    %v2588 = vunpack.c.h.b16 %v276
    %v2589 = vunpack.c.l.b16 %v277
    %v2590 = vunpack.c.h.b16 %v277
    %v2591 = vunpack.c.l.b16 %v278
    %v2592 = vunpack.c.h.b16 %v278
    %v2593 = vunpack.c.l.b16 %v279
    %v2594 = vunpack.c.h.b16 %v279
    %v2595 = vunpack.c.l.b16 %v280
    %v2596 = vunpack.c.h.b16 %v280
    %v2597 = vunpack.c.l.b16 %v281
    %v2598 = vunpack.c.h.b16 %v281
    %v2599 = vunpack.c.l.b16 %v282
    %v2600 = vunpack.c.h.b16 %v282
    %v2601 = vunpack.c.l.b16 %v283
    %v2602 = vunpack.c.h.b16 %v283
    %v2603 = vunpack.c.l.b16 %v284
    %v2604 = vunpack.c.h.b16 %v284
    %v2605 = vunpack.c.l.b16 %v285
    %v2606 = vunpack.c.h.b16 %v285
    %v2607 = vunpack.c.l.b16 %v286
    %v2608 = vunpack.c.h.b16 %v286
    %v2609 = vunpack.c.l.b16 %v287
    %v2610 = vunpack.c.h.b16 %v287
    %v2611 = vunpack.c.l.b16 %v288
    %v2612 = vunpack.c.h.b16 %v288
    %v2613 = vunpack.c.l.b16 %v289
    %v2614 = vunpack.c.h.b16 %v289
    %v2615 = vunpack.c.l.b16 %v290
    %v2616 = vunpack.c.h.b16 %v290
    %v2617 = vunpack.c.l.b16 %v291
    %v2618 = vunpack.c.h.b16 %v291
    %v2619 = vunpack.c.l.b16 %v292
    %v2620 = vunpack.c.h.b16 %v292
    %v2621 = vunpack.c.l.b16 %v293
    %v2622 = vunpack.c.h.b16 %v293
    %v2623 = vunpack.c.l.b16 %v294
    %v2624 = vunpack.c.h.b16 %v294
    %v2625 = vunpack.c.l.b16 %v295
    %v2626 = vunpack.c.h.b16 %v295
    %v2627 = vunpack.c.l.b16 %v296
    %v2628 = vunpack.c.h.b16 %v296
    %v2629 = vunpack.c.l.b16 %v297
    %v2630 = vunpack.c.h.b16 %v297
    %v2631 = vunpack.c.l.b16 %v298
    %v2632 = vunpack.c.h.b16 %v298
    %v2633 = vunpack.c.l.b16 %v299
    %v2634 = vunpack.c.h.b16 %v299
    %v2635 = vunpack.c.l.b16 %v300
    %v2636 = vunpack.c.h.b16 %v300
    %v2637 = vunpack.c.l.b16 %v301
    %v2638 = vunpack.c.h.b16 %v301
    %v2639 = vunpack.c.l.b16 %v302
    %v2640 = vunpack.c.h.b16 %v302
    %v2641 = vunpack.c.l.b16 %v303
    %v2642 = vunpack.c.h.b16 %v303
    %v2643 = vunpack.c.l.b16 %v304
    %v2644 = vunpack.c.h.b16 %v304
    %v2645 = vunpack.c.l.b16 %v305
    %v2646 = vunpack.c.h.b16 %v305
    %v2647 = vunpack.c.l.b16 %v306
    %v2648 = vunpack.c.h.b16 %v306
    %v2649 = vunpack.c.l.b16 %v307
    %v2650 = vunpack.c.h.b16 %v307
    %v2651 = vunpack.c.l.b16 %v308
    %v2652 = vunpack.c.h.b16 %v308
    %v2653 = vunpack.c.l.b16 %v309
    %v2654 = vunpack.c.h.b16 %v309
    %v2655 = vunpack.c.l.b16 %v310
    %v2656 = vunpack.c.h.b16 %v310
    %v2657 = vunpack.c.l.b16 %v311
    %v2658 = vunpack.c.h.b16 %v311
    %v2659 = vunpack.c.l.b16 %v312
    %v2660 = vunpack.c.h.b16 %v312
    %v2661 = vunpack.c.l.b16 %v313
    %v2662 = vunpack.c.h.b16 %v313
    %v2663 = vunpack.c.l.b16 %v314
    %v2664 = vunpack.c.h.b16 %v314
    %v2665 = vunpack.c.l.b16 %v315
    %v2666 = vunpack.c.h.b16 %v315
    %v2667 = vunpack.c.l.b16 %v316
    %v2668 = vunpack.c.h.b16 %v316
    %v2669 = vunpack.c.l.b16 %v317
    %v2670 = vunpack.c.h.b16 %v317
    %v2671 = vunpack.c.l.b16 %v318
    %v2672 = vunpack.c.h.b16 %v318
    %v2673 = vunpack.c.l.b16 %v319
    %v2674 = vunpack.c.h.b16 %v319
    %v2675 = vunpack.c.l.b16 %v320
    %v2676 = vunpack.c.h.b16 %v320
    %v2677 = vunpack.c.l.b16 %v321
    %v2678 = vunpack.c.h.b16 %v321
    %v2679 = vunpack.c.l.b16 %v322
    %v2680 = vunpack.c.h.b16 %v322
    %v2681 = vunpack.c.l.b16 %v323
    %v2682 = vunpack.c.h.b16 %v323
    %v2683 = vunpack.c.l.b16 %v324
    %v2684 = vunpack.c.h.b16 %v324
    %v2685 = vunpack.c.l.b16 %v325
    %v2686 = vunpack.c.h.b16 %v325
    %v2687 = vunpack.c.l.b16 %v326
    %v2688 = vunpack.c.h.b16 %v326
    %v2689 = vunpack.c.l.b16 %v327
    %v2690 = vunpack.c.h.b16 %v327
    %v2691 = vunpack.c.l.b16 %v328
    %v2692 = vunpack.c.h.b16 %v328
    %v2693 = vunpack.c.l.b16 %v329
    %v2694 = vunpack.c.h.b16 %v329
    %v2695 = vunpack.c.l.b16 %v330
    %v2696 = vunpack.c.h.b16 %v330
    %v2697 = vunpack.c.l.b16 %v331
    %v2698 = vunpack.c.h.b16 %v331
    %v2699 = vunpack.c.l.b16 %v332
    %v2700 = vunpack.c.h.b16 %v332
    %v2701 = vunpack.c.l.b16 %v333
    %v2702 = vunpack.c.h.b16 %v333
    %v2703 = vunpack.c.l.b16 %v334
    %v2704 = vunpack.c.h.b16 %v334
    %v2705 = vunpack.c.l.b16 %v335
    %v2706 = vunpack.c.h.b16 %v335
    %v2707 = vunpack.c.l.b16 %v336
    %v2708 = vunpack.c.h.b16 %v336
    %v2709 = vunpack.c.l.b16 %v337
    %v2710 = vunpack.c.h.b16 %v337
    %v2711 = vunpack.c.l.b16 %v338
    %v2712 = vunpack.c.h.b16 %v338
    %v2713 = vunpack.c.l.b16 %v339
    %v2714 = vunpack.c.h.b16 %v339
    %v2715 = vunpack.c.l.b16 %v340
    %v2716 = vunpack.c.h.b16 %v340
    %v2717 = vunpack.c.l.b16 %v341
    %v2718 = vunpack.c.h.b16 %v341
    %v2719 = vunpack.c.l.b16 %v342
    %v2720 = vunpack.c.h.b16 %v342
    %v2721 = vunpack.c.l.b16 %v343
    %v2722 = vunpack.c.h.b16 %v343
    %v2723 = vunpack.c.l.b16 %v344
    %v2724 = vunpack.c.h.b16 %v344
    %v2725 = vunpack.c.l.b16 %v345
    %v2726 = vunpack.c.h.b16 %v345
    %v2727 = vunpack.c.l.b16 %v346
    %v2728 = vunpack.c.h.b16 %v346
    %v2729 = vunpack.c.l.b16 %v347
    %v2730 = vunpack.c.h.b16 %v347
    %v2731 = vunpack.c.l.b16 %v348
    %v2732 = vunpack.c.h.b16 %v348
    %v2733 = vunpack.c.l.b16 %v349
    %v2734 = vunpack.c.h.b16 %v349
    %v2735 = vunpack.c.l.b16 %v350
    %v2736 = vunpack.c.h.b16 %v350
    %v2737 = vunpack.c.l.b16 %v351
    %v2738 = vunpack.c.h.b16 %v351
    %v2739 = vunpack.c.l.b16 %v352
    %v2740 = vunpack.c.h.b16 %v352
    %v2741 = vunpack.c.l.b16 %v353
    %v2742 = vunpack.c.h.b16 %v353
    %v2743 = vunpack.c.l.b16 %v354
    %v2744 = vunpack.c.h.b16 %v354
    %v2745 = vunpack.c.l.b16 %v355
    %v2746 = vunpack.c.h.b16 %v355
    %v2747 = vunpack.c.l.b16 %v356
    %v2748 = vunpack.c.h.b16 %v356
    %v2749 = vunpack.c.l.b16 %v357
    %v2750 = vunpack.c.h.b16 %v357
    %v2751 = vunpack.c.l.b16 %v358
    %v2752 = vunpack.c.h.b16 %v358
    %v2753 = vunpack.c.l.b16 %v359
    %v2754 = vunpack.c.h.b16 %v359
    %v2755 = vunpack.c.l.b16 %v360
    %v2756 = vunpack.c.h.b16 %v360
    %v2757 = vunpack.c.l.b16 %v361
    %v2758 = vunpack.c.h.b16 %v361
    %v2759 = vunpack.c.l.b16 %v362
    %v2760 = vunpack.c.h.b16 %v362
    %v2761 = vunpack.c.l.b16 %v363
    %v2762 = vunpack.c.h.b16 %v363
    %v2763 = vunpack.c.l.b16 %v364
    %v2764 = vunpack.c.h.b16 %v364
    %v2765 = vunpack.c.l.b16 %v365
    %v2766 = vunpack.c.h.b16 %v365
    %v2767 = vunpack.c.l.b16 %v366
    %v2768 = vunpack.c.h.b16 %v366
    %v2769 = vunpack.c.l.b16 %v367
    %v2770 = vunpack.c.h.b16 %v367
    %v2771 = vunpack.c.l.b16 %v368
    %v2772 = vunpack.c.h.b16 %v368
    %v2773 = vunpack.c.l.b16 %v369
    %v2774 = vunpack.c.h.b16 %v369
    %v2775 = vunpack.c.l.b16 %v370
    %v2776 = vunpack.c.h.b16 %v370
    %v2777 = vunpack.c.l.b16 %v371
    %v2778 = vunpack.c.h.b16 %v371
    %v2779 = vunpack.c.l.b16 %v372
    %v2780 = vunpack.c.h.b16 %v372
    %v2781 = vunpack.c.l.b16 %v373
    %v2782 = vunpack.c.h.b16 %v373
    %v2783 = vunpack.c.l.b16 %v374
    %v2784 = vunpack.c.h.b16 %v374
    %v2785 = vunpack.c.l.b16 %v375
    %v2786 = vunpack.c.h.b16 %v375
    %v2787 = vunpack.c.l.b16 %v376
    %v2788 = vunpack.c.h.b16 %v376
    %v2789 = vunpack.c.l.b16 %v377
    %v2790 = vunpack.c.h.b16 %v377
    %v2791 = vunpack.c.l.b16 %v378
    %v2792 = vunpack.c.h.b16 %v378
    %v2793 = vunpack.c.l.b16 %v379
    %v2794 = vunpack.c.h.b16 %v379
    %v2795 = vunpack.c.l.b16 %v380
    %v2796 = vunpack.c.h.b16 %v380
    %v2797 = vunpack.c.l.b16 %v381
    %v2798 = vunpack.c.h.b16 %v381
    %v2799 = vunpack.c.l.b16 %v382
    %v2800 = vunpack.c.h.b16 %v382
    %v2801 = vunpack.c.l.b16 %v383
    %v2802 = vunpack.c.h.b16 %v383
    %v2803 = vunpack.c.l.b16 %v384
    %v2804 = vunpack.c.h.b16 %v384
    %v2805 = vunpack.c.l.b16 %v385
    %v2806 = vunpack.c.h.b16 %v385
    %v2807 = vunpack.c.l.b16 %v386
    %v2808 = vunpack.c.h.b16 %v386
    %v2809 = vunpack.c.l.b16 %v387
    %v2810 = vunpack.c.h.b16 %v387
    %v2811 = vunpack.c.l.b16 %v388
    %v2812 = vunpack.c.h.b16 %v388
    %v2813 = vunpack.c.l.b16 %v389
    %v2814 = vunpack.c.h.b16 %v389
    %v2815 = vunpack.c.l.b16 %v390
    %v2816 = vunpack.c.h.b16 %v390
    %v2817 = vunpack.c.l.b16 %v391
    %v2818 = vunpack.c.h.b16 %v391
    %v2819 = vunpack.c.l.b16 %v392
    %v2820 = vunpack.c.h.b16 %v392
    %v2821 = vunpack.c.l.b16 %v393
    %v2822 = vunpack.c.h.b16 %v393
    %v2823 = vunpack.c.l.b16 %v394
    %v2824 = vunpack.c.h.b16 %v394
    %v2825 = vunpack.c.l.b16 %v395
    %v2826 = vunpack.c.h.b16 %v395
    %v2827 = vunpack.c.l.b16 %v396
    %v2828 = vunpack.c.h.b16 %v396
    %v2829 = vunpack.c.l.b16 %v397
    %v2830 = vunpack.c.h.b16 %v397
    %v2831 = vunpack.c.l.b16 %v398
    %v2832 = vunpack.c.h.b16 %v398
    %v2833 = vunpack.c.l.b16 %v399
    %v2834 = vunpack.c.h.b16 %v399
    %v2835 = vunpack.c.l.b16 %v400
    %v2836 = vunpack.c.h.b16 %v400
    %v2837 = vunpack.c.l.b16 %v401
    %v2838 = vunpack.c.h.b16 %v401
    %v2839 = vunpack.c.l.b16 %v402
    %v2840 = vunpack.c.h.b16 %v402
    %v2841 = vunpack.c.l.b16 %v403
    %v2842 = vunpack.c.h.b16 %v403
    %v2843 = vunpack.c.l.b16 %v404
    %v2844 = vunpack.c.h.b16 %v404
    %v2845 = vunpack.c.l.b16 %v405
    %v2846 = vunpack.c.h.b16 %v405
    %v2847 = vunpack.c.l.b16 %v406
    %v2848 = vunpack.c.h.b16 %v406
    %v2849 = vunpack.c.l.b16 %v407
    %v2850 = vunpack.c.h.b16 %v407
    %v2851 = vunpack.c.l.b16 %v408
    %v2852 = vunpack.c.h.b16 %v408
    %v2853 = vunpack.c.l.b16 %v409
    %v2854 = vunpack.c.h.b16 %v409
    %v2855 = vunpack.c.l.b16 %v410
    %v2856 = vunpack.c.h.b16 %v410
    %v2857 = vunpack.c.l.b16 %v411
    %v2858 = vunpack.c.h.b16 %v411
    %v2859 = vunpack.c.l.b16 %v412
    %v2860 = vunpack.c.h.b16 %v412
    %v2861 = vunpack.c.l.b16 %v413
    %v2862 = vunpack.c.h.b16 %v413
    %v2863 = vunpack.c.l.b16 %v414
    %v2864 = vunpack.c.h.b16 %v414
    %v2865 = vunpack.c.l.b16 %v415
    %v2866 = vunpack.c.h.b16 %v415
    %v2867 = vunpack.c.l.b16 %v416
    %v2868 = vunpack.c.h.b16 %v416
    %v2869 = vunpack.c.l.b16 %v417
    %v2870 = vunpack.c.h.b16 %v417
    %v2871 = vunpack.c.l.b16 %v418
    %v2872 = vunpack.c.h.b16 %v418
    %v2873 = vunpack.c.l.b16 %v419
    %v2874 = vunpack.c.h.b16 %v419
    %v2875 = vunpack.c.l.b16 %v420
    %v2876 = vunpack.c.h.b16 %v420
    %v2877 = vunpack.c.l.b16 %v421
    %v2878 = vunpack.c.h.b16 %v421
    %v2879 = vunpack.c.l.b16 %v422
    %v2880 = vunpack.c.h.b16 %v422
    %v2881 = vunpack.c.l.b16 %v423
    %v2882 = vunpack.c.h.b16 %v423
    %v2883 = vunpack.c.l.b16 %v424
    %v2884 = vunpack.c.h.b16 %v424
    %v2885 = vunpack.c.l.b16 %v425
    %v2886 = vunpack.c.h.b16 %v425
    %v2887 = vunpack.c.l.b16 %v426
    %v2888 = vunpack.c.h.b16 %v426
    %v2889 = vunpack.c.l.b16 %v427
    %v2890 = vunpack.c.h.b16 %v427
    %v2891 = vunpack.c.l.b16 %v428
    %v2892 = vunpack.c.h.b16 %v428
    %v2893 = vunpack.c.l.b16 %v429
    %v2894 = vunpack.c.h.b16 %v429
    %v2895 = vunpack.c.l.b16 %v430
    %v2896 = vunpack.c.h.b16 %v430
    %v2897 = vunpack.c.l.b16 %v431
    %v2898 = vunpack.c.h.b16 %v431
    %v2899 = vunpack.c.l.b16 %v432
    %v2900 = vunpack.c.h.b16 %v432
    %v2901 = vunpack.c.l.b16 %v433
    %v2902 = vunpack.c.h.b16 %v433
    %v2903 = vunpack.c.l.b16 %v434
    %v2904 = vunpack.c.h.b16 %v434
    %v2905 = vunpack.c.l.b16 %v435
    %v2906 = vunpack.c.h.b16 %v435
    %v2907 = vunpack.c.l.b16 %v436
    %v2908 = vunpack.c.h.b16 %v436
    %v2909 = vunpack.c.l.b16 %v437
    %v2910 = vunpack.c.h.b16 %v437
    %v2911 = vunpack.c.l.b16 %v438
    %v2912 = vunpack.c.h.b16 %v438
    %v2913 = vunpack.c.l.b16 %v439
    %v2914 = vunpack.c.h.b16 %v439
    %v2915 = vunpack.c.l.b16 %v440
    %v2916 = vunpack.c.h.b16 %v440
    %v2917 = vunpack.c.l.b16 %v441
    %v2918 = vunpack.c.h.b16 %v441
    %v2919 = vunpack.c.l.b16 %v442
    %v2920 = vunpack.c.h.b16 %v442
    %v2921 = vunpack.c.l.b16 %v443
    %v2922 = vunpack.c.h.b16 %v443
    %v2923 = vunpack.c.l.b16 %v444
    %v2924 = vunpack.c.h.b16 %v444
    %v2925 = vunpack.c.l.b16 %v445
    %v2926 = vunpack.c.h.b16 %v445
    %v2927 = vunpack.c.l.b16 %v446
    %v2928 = vunpack.c.h.b16 %v446
    %v2929 = vunpack.c.l.b16 %v447
    %v2930 = vunpack.c.h.b16 %v447
    %v2931 = vunpack.c.l.b16 %v448
    %v2932 = vunpack.c.h.b16 %v448
    %v2933 = vunpack.c.l.b16 %v449
    %v2934 = vunpack.c.h.b16 %v449
    %v2935 = vunpack.c.l.b16 %v450
    %v2936 = vunpack.c.h.b16 %v450
    %v2937 = vunpack.c.l.b16 %v451
    %v2938 = vunpack.c.h.b16 %v451
    %v2939 = vunpack.c.l.b16 %v452
    %v2940 = vunpack.c.h.b16 %v452
    %v2941 = vunpack.c.l.b16 %v453
    %v2942 = vunpack.c.h.b16 %v453
    %v2943 = vunpack.c.l.b16 %v454
    %v2944 = vunpack.c.h.b16 %v454
    %v2945 = vunpack.c.l.b16 %v455
    %v2946 = vunpack.c.h.b16 %v455
    %v2947 = vunpack.c.l.b16 %v456
    %v2948 = vunpack.c.h.b16 %v456
    %v2949 = vunpack.c.l.b16 %v457
    %v2950 = vunpack.c.h.b16 %v457
    %v2951 = vunpack.c.l.b16 %v458
    %v2952 = vunpack.c.h.b16 %v458
    %v2953 = vunpack.c.l.b16 %v459
    %v2954 = vunpack.c.h.b16 %v459
    %v2955 = vunpack.c.l.b16 %v460
    %v2956 = vunpack.c.h.b16 %v460
    %v2957 = vunpack.c.l.b16 %v461
    %v2958 = vunpack.c.h.b16 %v461
    %v2959 = vunpack.c.l.b16 %v462
    %v2960 = vunpack.c.h.b16 %v462
    %v2961 = vunpack.c.l.b16 %v463
    %v2962 = vunpack.c.h.b16 %v463
    %v2963 = vunpack.c.l.b16 %v464
    %v2964 = vunpack.c.h.b16 %v464
    %v2965 = vunpack.c.l.b16 %v465
    %v2966 = vunpack.c.h.b16 %v465
    %v2967 = vunpack.c.l.b16 %v466
    %v2968 = vunpack.c.h.b16 %v466
    %v2969 = vunpack.c.l.b16 %v467
    %v2970 = vunpack.c.h.b16 %v467
    %v2971 = vunpack.c.l.b16 %v468
    %v2972 = vunpack.c.h.b16 %v468
    %v2973 = vunpack.c.l.b16 %v469
    %v2974 = vunpack.c.h.b16 %v469
    %v2975 = vunpack.c.l.b16 %v470
    %v2976 = vunpack.c.h.b16 %v470
    %v2977 = vunpack.c.l.b16 %v471
    %v2978 = vunpack.c.h.b16 %v471
    %v2979 = vunpack.c.l.b16 %v472
    %v2980 = vunpack.c.h.b16 %v472
    %v2981 = vunpack.c.l.b16 %v473
    %v2982 = vunpack.c.h.b16 %v473
    %v2983 = vunpack.c.l.b16 %v474
    %v2984 = vunpack.c.h.b16 %v474
    %v2985 = vunpack.c.l.b16 %v475
    %v2986 = vunpack.c.h.b16 %v475
    %v2987 = vunpack.c.l.b16 %v476
    %v2988 = vunpack.c.h.b16 %v476
    %v2989 = vunpack.c.l.b16 %v477
    %v2990 = vunpack.c.h.b16 %v477
    %v2991 = vunpack.c.l.b16 %v478
    %v2992 = vunpack.c.h.b16 %v478
    %v2993 = vunpack.c.l.b16 %v479
    %v2994 = vunpack.c.h.b16 %v479
    %v2995 = vunpack.c.l.b16 %v480
    %v2996 = vunpack.c.h.b16 %v480
    %v2997 = vunpack.c.l.b16 %v481
    %v2998 = vunpack.c.h.b16 %v481
    %v2999 = vunpack.c.l.b16 %v482
    %v3000 = vunpack.c.h.b16 %v482
    %v3001 = vunpack.c.l.b16 %v483
    %v3002 = vunpack.c.h.b16 %v483
    %v3003 = vunpack.c.l.b16 %v484
    %v3004 = vunpack.c.h.b16 %v484
    %v3005 = vunpack.c.l.b16 %v485
    %v3006 = vunpack.c.h.b16 %v485
    %v3007 = vunpack.c.l.b16 %v486
    %v3008 = vunpack.c.h.b16 %v486
    %v3009 = vunpack.c.l.b16 %v487
    %v3010 = vunpack.c.h.b16 %v487
    %v3011 = vunpack.c.l.b16 %v488
    %v3012 = vunpack.c.h.b16 %v488
    %v3013 = vunpack.c.l.b16 %v489
    %v3014 = vunpack.c.h.b16 %v489
    %v3015 = vunpack.c.l.b16 %v490
    %v3016 = vunpack.c.h.b16 %v490
    %v3017 = vunpack.c.l.b16 %v491
    %v3018 = vunpack.c.h.b16 %v491
    %v3019 = vunpack.c.l.b16 %v492
    %v3020 = vunpack.c.h.b16 %v492
    %v3021 = vunpack.c.l.b16 %v493
    %v3022 = vunpack.c.h.b16 %v493
    %v3023 = vunpack.c.l.b16 %v494
    %v3024 = vunpack.c.h.b16 %v494
    %v3025 = vunpack.c.l.b16 %v495
    %v3026 = vunpack.c.h.b16 %v495
    %v3027 = vunpack.c.l.b16 %v496
    %v3028 = vunpack.c.h.b16 %v496
    %v3029 = vunpack.c.l.b16 %v497
    %v3030 = vunpack.c.h.b16 %v497
    %v3031 = vunpack.c.l.b16 %v498
    %v3032 = vunpack.c.h.b16 %v498
    %v3033 = vunpack.c.l.b16 %v499
    %v3034 = vunpack.c.h.b16 %v499
    %v3035 = vunpack.c.l.b16 %v500
    %v3036 = vunpack.c.h.b16 %v500
    %v3037 = vunpack.c.l.b16 %v501
    %v3038 = vunpack.c.h.b16 %v501
    %v3039 = vunpack.c.l.b16 %v502
    %v3040 = vunpack.c.h.b16 %v502
    %v3041 = vunpack.c.l.b16 %v503
    %v3042 = vunpack.c.h.b16 %v503
    %v3043 = vunpack.c.l.b16 %v504
    %v3044 = vunpack.c.h.b16 %v504
    %v3045 = vunpack.c.l.b16 %v505
    %v3046 = vunpack.c.h.b16 %v505
    %v3047 = vunpack.c.l.b16 %v506
    %v3048 = vunpack.c.h.b16 %v506
    %v3049 = vunpack.c.l.b16 %v507
    %v3050 = vunpack.c.h.b16 %v507
    %v3051 = vunpack.c.l.b16 %v508
    %v3052 = vunpack.c.h.b16 %v508
    %v3053 = vunpack.c.l.b16 %v509
    %v3054 = vunpack.c.h.b16 %v509
    %v3055 = vunpack.c.l.b16 %v510
    %v3056 = vunpack.c.h.b16 %v510
    %v3057 = vunpack.c.l.b16 %v511
    %v3058 = vunpack.c.h.b16 %v511
    %v3059 = vunpack.c.l.b16 %v512
    %v3060 = vunpack.c.h.b16 %v512
    %v3061 = vunpack.c.l.b16 %v513
    %v3062 = vunpack.c.h.b16 %v513
    %v3063 = vunpack.c.l.b16 %v514
    %v3064 = vunpack.c.h.b16 %v514
    %v3065 = vunpack.c.l.b16 %v515
    %v3066 = vunpack.c.h.b16 %v515
    %v3067 = vunpack.c.l.b16 %v516
    %v3068 = vunpack.c.h.b16 %v516
    %v3069 = vunpack.c.l.b16 %v517
    %v3070 = vunpack.c.h.b16 %v517
    %v3071 = vunpack.c.l.b16 %v518
    %v3072 = vunpack.c.h.b16 %v518
    %v3073 = vunpack.c.l.b16 %v519
    %v3074 = vunpack.c.h.b16 %v519
    %v3075 = vunpack.c.l.b16 %v520
    %v3076 = vunpack.c.h.b16 %v520
    %v3077 = vunpack.c.l.b16 %v521
    %v3078 = vunpack.c.h.b16 %v521
    %v3079 = vunpack.c.l.b16 %v522
    %v3080 = vunpack.c.h.b16 %v522
    %v3081 = vunpack.c.l.b16 %v523
    %v3082 = vunpack.c.h.b16 %v523
    %v3083 = vunpack.c.l.b16 %v524
    %v3084 = vunpack.c.h.b16 %v524
    %v3085 = vunpack.c.l.b16 %v525
    %v3086 = vunpack.c.h.b16 %v525
    %v3087 = vunpack.c.l.b16 %v526
    %v3088 = vunpack.c.h.b16 %v526
    %v3089 = vunpack.c.l.b16 %v527
    %v3090 = vunpack.c.h.b16 %v527
    %v3091 = vunpack.c.l.b16 %v528
    %v3092 = vunpack.c.h.b16 %v528
    %v3093 = vunpack.c.l.b16 %v529
    %v3094 = vunpack.c.h.b16 %v529
    %v3095 = vunpack.c.l.b16 %v530
    %v3096 = vunpack.c.h.b16 %v530
    %v3097 = vunpack.c.l.b16 %v531
    %v3098 = vunpack.c.h.b16 %v531
    %v3099 = vunpack.c.l.b16 %v532
    %v3100 = vunpack.c.h.b16 %v532
    %v3101 = vunpack.c.l.b16 %v533
    %v3102 = vunpack.c.h.b16 %v533
    %v3103 = vunpack.c.l.b16 %v534
    %v3104 = vunpack.c.h.b16 %v534
    %v3105 = vunpack.c.l.b16 %v535
    %v3106 = vunpack.c.h.b16 %v535
    %v3107 = vunpack.c.l.b16 %v536
    %v3108 = vunpack.c.h.b16 %v536
    %v3109 = vunpack.c.l.b16 %v537
    %v3110 = vunpack.c.h.b16 %v537
    %v3111 = vunpack.c.l.b16 %v538
    %v3112 = vunpack.c.h.b16 %v538
    %v3113 = vunpack.c.l.b16 %v539
    %v3114 = vunpack.c.h.b16 %v539
    %v3115 = vunpack.c.l.b16 %v540
    %v3116 = vunpack.c.h.b16 %v540
    %v3117 = vunpack.c.l.b16 %v541
    %v3118 = vunpack.c.h.b16 %v541
    %v3119 = vunpack.c.l.b16 %v542
    %v3120 = vunpack.c.h.b16 %v542
    %v3121 = vunpack.c.l.b16 %v543
    %v3122 = vunpack.c.h.b16 %v543
    %v3123 = vunpack.c.l.b16 %v544
    %v3124 = vunpack.c.h.b16 %v544
    %v3125 = vunpack.c.l.b16 %v545
    %v3126 = vunpack.c.h.b16 %v545
    %v3127 = vunpack.c.l.b16 %v546
    %v3128 = vunpack.c.h.b16 %v546
    %v3129 = vunpack.c.l.b16 %v547
    %v3130 = vunpack.c.h.b16 %v547
    %v3131 = vunpack.c.l.b16 %v548
    %v3132 = vunpack.c.h.b16 %v548
    %v3133 = vunpack.c.l.b16 %v549
    %v3134 = vunpack.c.h.b16 %v549
    %v3135 = vunpack.c.l.b16 %v550
    %v3136 = vunpack.c.h.b16 %v550
    %v3137 = vunpack.c.l.b16 %v551
    %v3138 = vunpack.c.h.b16 %v551
    %v3139 = vunpack.c.l.b16 %v552
    %v3140 = vunpack.c.h.b16 %v552
    %v3141 = vunpack.c.l.b16 %v553
    %v3142 = vunpack.c.h.b16 %v553
    %v3143 = vunpack.c.l.b16 %v554
    %v3144 = vunpack.c.h.b16 %v554
    %v3145 = vunpack.c.l.b16 %v555
    %v3146 = vunpack.c.h.b16 %v555
    %v3147 = vunpack.c.l.b16 %v556
    %v3148 = vunpack.c.h.b16 %v556
    %v3149 = vunpack.c.l.b16 %v557
    %v3150 = vunpack.c.h.b16 %v557
    %v3151 = vunpack.c.l.b16 %v558
    %v3152 = vunpack.c.h.b16 %v558
    %v3153 = vunpack.c.l.b16 %v559
    %v3154 = vunpack.c.h.b16 %v559
    %v3155 = vunpack.c.l.b16 %v560
    %v3156 = vunpack.c.h.b16 %v560
    %v3157 = vunpack.c.l.b16 %v561
    %v3158 = vunpack.c.h.b16 %v561
    %v3159 = vunpack.c.l.b16 %v562
    %v3160 = vunpack.c.h.b16 %v562
    %v3161 = vunpack.c.l.b16 %v563
    %v3162 = vunpack.c.h.b16 %v563
    %v3163 = vunpack.c.l.b16 %v564
    %v3164 = vunpack.c.h.b16 %v564
    %v3165 = vunpack.c.l.b16 %v565
    %v3166 = vunpack.c.h.b16 %v565
    %v3167 = vunpack.c.l.b16 %v566
    %v3168 = vunpack.c.h.b16 %v566
    %v3169 = vunpack.c.l.b16 %v567
    %v3170 = vunpack.c.h.b16 %v567
    %v3171 = vunpack.c.l.b16 %v568
    %v3172 = vunpack.c.h.b16 %v568
    %v3173 = vunpack.c.l.b16 %v569
    %v3174 = vunpack.c.h.b16 %v569
    %v3175 = vunpack.c.l.b16 %v570
    %v3176 = vunpack.c.h.b16 %v570
    %v3177 = vunpack.c.l.b16 %v571
    %v3178 = vunpack.c.h.b16 %v571
    %v3179 = vunpack.c.l.b16 %v572
    %v3180 = vunpack.c.h.b16 %v572
    %v3181 = vunpack.c.l.b16 %v573
    %v3182 = vunpack.c.h.b16 %v573
    %v3183 = vunpack.c.l.b16 %v574
    %v3184 = vunpack.c.h.b16 %v574
    %v3185 = vunpack.c.l.b16 %v575
    %v3186 = vunpack.c.h.b16 %v575
    %v3187 = vunpack.c.l.b16 %v576
    %v3188 = vunpack.c.h.b16 %v576
    %v3189 = vunpack.c.l.b16 %v577
    %v3190 = vunpack.c.h.b16 %v577
    %v3191 = vunpack.c.l.b16 %v578
    %v3192 = vunpack.c.h.b16 %v578
    %v3193 = vunpack.c.l.b16 %v579
    %v3194 = vunpack.c.h.b16 %v579
    %v3195 = vunpack.c.l.b16 %v580
    %v3196 = vunpack.c.h.b16 %v580
    %v3197 = vunpack.c.l.b16 %v581
    %v3198 = vunpack.c.h.b16 %v581
    %v3199 = vunpack.c.l.b16 %v582
    %v3200 = vunpack.c.h.b16 %v582
    %v3201 = vunpack.c.l.b16 %v583
    %v3202 = vunpack.c.h.b16 %v583
    %v3203 = vunpack.c.l.b16 %v584
    %v3204 = vunpack.c.h.b16 %v584
    %v3205 = vunpack.c.l.b16 %v585
    %v3206 = vunpack.c.h.b16 %v585
    %v3207 = vunpack.c.l.b16 %v586
    %v3208 = vunpack.c.h.b16 %v586
    %v3209 = vunpack.c.l.b16 %v587
    %v3210 = vunpack.c.h.b16 %v587
    %v3211 = vunpack.c.l.b16 %v588
    %v3212 = vunpack.c.h.b16 %v588
    %v3213 = vunpack.c.l.b16 %v589
    %v3214 = vunpack.c.h.b16 %v589
    %v3215 = vunpack.c.l.b16 %v590
    %v3216 = vunpack.c.h.b16 %v590
    %v3217 = vunpack.c.l.b16 %v591
    %v3218 = vunpack.c.h.b16 %v591
    %v3219 = vunpack.c.l.b16 %v592
    %v3220 = vunpack.c.h.b16 %v592
    %v3221 = vunpack.c.l.b16 %v593
    %v3222 = vunpack.c.h.b16 %v593
    %v3223 = vunpack.c.l.b16 %v594
    %v3224 = vunpack.c.h.b16 %v594
    %v3225 = vunpack.c.l.b16 %v595
    %v3226 = vunpack.c.h.b16 %v595
    %v3227 = vunpack.c.l.b16 %v596
    %v3228 = vunpack.c.h.b16 %v596
    %v3229 = vunpack.c.l.b16 %v597
    %v3230 = vunpack.c.h.b16 %v597
    %v3231 = vunpack.c.l.b16 %v598
    %v3232 = vunpack.c.h.b16 %v598
    %v3233 = vunpack.c.l.b16 %v599
    %v3234 = vunpack.c.h.b16 %v599
    %v3235 = vunpack.c.l.b16 %v600
    %v3236 = vunpack.c.h.b16 %v600
    %v3237 = vunpack.c.l.b16 %v601
    %v3238 = vunpack.c.h.b16 %v601
    %v3239 = vunpack.c.l.b16 %v602
    %v3240 = vunpack.c.h.b16 %v602
    %v3241 = vunpack.c.l.b16 %v603
    %v3242 = vunpack.c.h.b16 %v603
    %v3243 = vunpack.c.l.b16 %v604
    %v3244 = vunpack.c.h.b16 %v604
    %v3245 = vunpack.c.l.b16 %v605
    %v3246 = vunpack.c.h.b16 %v605
    %v3247 = vunpack.c.l.b16 %v606
    %v3248 = vunpack.c.h.b16 %v606
    %v3249 = vunpack.c.l.b16 %v607
    %v3250 = vunpack.c.h.b16 %v607
    %v3251 = vunpack.c.l.b16 %v608
    %v3252 = vunpack.c.h.b16 %v608
    %v3253 = vunpack.c.l.b16 %v609
    %v3254 = vunpack.c.h.b16 %v609
    %v3255 = vunpack.c.l.b16 %v610
    %v3256 = vunpack.c.h.b16 %v610
    %v3257 = vunpack.c.l.b16 %v611
    %v3258 = vunpack.c.h.b16 %v611
    %v3259 = vunpack.c.l.b16 %v612
    %v3260 = vunpack.c.h.b16 %v612
    %v3261 = vunpack.c.l.b16 %v613
    %v3262 = vunpack.c.h.b16 %v613
    %v3263 = vunpack.c.l.b16 %v614
    %v3264 = vunpack.c.h.b16 %v614
    %v3265 = vunpack.c.l.b16 %v615
    %v3266 = vunpack.c.h.b16 %v615
    %v3267 = vunpack.c.l.b16 %v616
    %v3268 = vunpack.c.h.b16 %v616
    %v3269 = vunpack.c.l.b16 %v617
    %v3270 = vunpack.c.h.b16 %v617
    %v3271 = vunpack.c.l.b16 %v618
    %v3272 = vunpack.c.h.b16 %v618
    %v3273 = vunpack.c.l.b16 %v619
    %v3274 = vunpack.c.h.b16 %v619
    %v3275 = vunpack.c.l.b16 %v620
    %v3276 = vunpack.c.h.b16 %v620
    %v3277 = vunpack.c.l.b16 %v621
    %v3278 = vunpack.c.h.b16 %v621
    %v3279 = vunpack.c.l.b16 %v622
    %v3280 = vunpack.c.h.b16 %v622
    %v3281 = vunpack.c.l.b16 %v623
    %v3282 = vunpack.c.h.b16 %v623
    %v3283 = vunpack.c.l.b16 %v624
    %v3284 = vunpack.c.h.b16 %v624
    %v3285 = vunpack.c.l.b16 %v625
    %v3286 = vunpack.c.h.b16 %v625
    %v3287 = vunpack.c.l.b16 %v626
    %v3288 = vunpack.c.h.b16 %v626
    %v3289 = vunpack.c.l.b16 %v627
    %v3290 = vunpack.c.h.b16 %v627
    %v3291 = vunpack.c.l.b16 %v628
    %v3292 = vunpack.c.h.b16 %v628
    %v3293 = vunpack.c.l.b16 %v629
    %v3294 = vunpack.c.h.b16 %v629
    %v3295 = vunpack.c.l.b16 %v630
    %v3296 = vunpack.c.h.b16 %v630
    %v3297 = vunpack.c.l.b16 %v631
    %v3298 = vunpack.c.h.b16 %v631
    %v3299 = vunpack.c.l.b16 %v632
    %v3300 = vunpack.c.h.b16 %v632
    %v3301 = vunpack.c.l.b16 %v633
    %v3302 = vunpack.c.h.b16 %v633
    %v3303 = vunpack.c.l.b16 %v634
    %v3304 = vunpack.c.h.b16 %v634
    %v3305 = vunpack.c.l.b16 %v635
    %v3306 = vunpack.c.h.b16 %v635
    %v3307 = vunpack.c.l.b16 %v636
    %v3308 = vunpack.c.h.b16 %v636
    %v3309 = vunpack.c.l.b16 %v637
    %v3310 = vunpack.c.h.b16 %v637
    %v3311 = vunpack.c.l.b16 %v638
    %v3312 = vunpack.c.h.b16 %v638
    %v3313 = vunpack.c.l.b16 %v639
    %v3314 = vunpack.c.h.b16 %v639
    %v3315 = vunpack.c.l.b16 %v640
    %v3316 = vunpack.c.h.b16 %v640
    %v3317 = vunpack.c.l.b16 %v641
    %v3318 = vunpack.c.h.b16 %v641
    %v3319 = vunpack.c.l.b16 %v642
    %v3320 = vunpack.c.h.b16 %v642
    %v3321 = vunpack.c.l.b16 %v643
    %v3322 = vunpack.c.h.b16 %v643
    %v3323 = vunpack.c.l.b16 %v644
    %v3324 = vunpack.c.h.b16 %v644
    %v3325 = vunpack.c.l.b16 %v645
    %v3326 = vunpack.c.h.b16 %v645
    %v3327 = vunpack.c.l.b16 %v646
    %v3328 = vunpack.c.h.b16 %v646
    %v3329 = vunpack.c.l.b16 %v647
    %v3330 = vunpack.c.h.b16 %v647
    %v3331 = vunpack.c.l.b16 %v648
    %v3332 = vunpack.c.h.b16 %v648
    %v3333 = vunpack.c.l.b16 %v649
    %v3334 = vunpack.c.h.b16 %v649
    %v3335 = vunpack.c.l.b16 %v650
    %v3336 = vunpack.c.h.b16 %v650
    %v3337 = vunpack.c.l.b16 %v651
    %v3338 = vunpack.c.h.b16 %v651
    %v3339 = vunpack.c.l.b16 %v652
    %v3340 = vunpack.c.h.b16 %v652
    %v3341 = vunpack.c.l.b16 %v653
    %v3342 = vunpack.c.h.b16 %v653
    %v3343 = vunpack.c.l.b16 %v654
    %v3344 = vunpack.c.h.b16 %v654
    %v3345 = vunpack.c.l.b16 %v655
    %v3346 = vunpack.c.h.b16 %v655
    %v3347 = vunpack.c.l.b16 %v656
    %v3348 = vunpack.c.h.b16 %v656
    %v3349 = vunpack.c.l.b16 %v657
    %v3350 = vunpack.c.h.b16 %v657
    %v3351 = vunpack.c.l.b16 %v658
    %v3352 = vunpack.c.h.b16 %v658
    %v3353 = vunpack.c.l.b16 %v659
    %v3354 = vunpack.c.h.b16 %v659
    %v3355 = vunpack.c.l.b16 %v660
    %v3356 = vunpack.c.h.b16 %v660
    %v3357 = vunpack.c.l.b16 %v661
    %v3358 = vunpack.c.h.b16 %v661
    %v3359 = vunpack.c.l.b16 %v662
    %v3360 = vunpack.c.h.b16 %v662
    %v3361 = vunpack.c.l.b16 %v663
    %v3362 = vunpack.c.h.b16 %v663
    %v3363 = vunpack.c.l.b16 %v664
    %v3364 = vunpack.c.h.b16 %v664
    %v3365 = vunpack.c.l.b16 %v665
    %v3366 = vunpack.c.h.b16 %v665
    %v3367 = vunpack.c.l.b16 %v666
    %v3368 = vunpack.c.h.b16 %v666
    %v3369 = vunpack.c.l.b16 %v667
    %v3370 = vunpack.c.h.b16 %v667
    %v3371 = vunpack.c.l.b16 %v668
    %v3372 = vunpack.c.h.b16 %v668
    %v3373 = vunpack.c.l.b16 %v669
    %v3374 = vunpack.c.h.b16 %v669
    %v3375 = vunpack.c.l.b16 %v670
    %v3376 = vunpack.c.h.b16 %v670
    %v3377 = vunpack.c.l.b16 %v671
    %v3378 = vunpack.c.h.b16 %v671
    %v3379 = vunpack.c.l.b16 %v672
    %v3380 = vunpack.c.h.b16 %v672
    %v3381 = vunpack.c.l.b16 %v673
    %v3382 = vunpack.c.h.b16 %v673
    %v3383 = vunpack.c.l.b16 %v674
    %v3384 = vunpack.c.h.b16 %v674
    %v3385 = vunpack.c.l.b16 %v675
    %v3386 = vunpack.c.h.b16 %v675
    %v3387 = vunpack.c.l.b16 %v676
    %v3388 = vunpack.c.h.b16 %v676
    %v3389 = vunpack.c.l.b16 %v677
    %v3390 = vunpack.c.h.b16 %v677
    %v3391 = vunpack.c.l.b16 %v678
    %v3392 = vunpack.c.h.b16 %v678
    %v3393 = vunpack.c.l.b16 %v679
    %v3394 = vunpack.c.h.b16 %v679
    %v3395 = vunpack.c.l.b16 %v680
    %v3396 = vunpack.c.h.b16 %v680
    %v3397 = vunpack.c.l.b16 %v681
    %v3398 = vunpack.c.h.b16 %v681
    %v3399 = vunpack.c.l.b16 %v682
    %v3400 = vunpack.c.h.b16 %v682
    %v3401 = vunpack.c.l.b16 %v683
    %v3402 = vunpack.c.h.b16 %v683
    %v3403 = vunpack.c.l.b16 %v684
    %v3404 = vunpack.c.h.b16 %v684
    %v3405 = vunpack.c.l.b16 %v685
    %v3406 = vunpack.c.h.b16 %v685
    %v3407 = vunpack.c.l.b16 %v686
    %v3408 = vunpack.c.h.b16 %v686
    %v3409 = vunpack.c.l.b16 %v687
    %v3410 = vunpack.c.h.b16 %v687
    %v3411 = vunpack.c.l.b16 %v688
    %v3412 = vunpack.c.h.b16 %v688
    %v3413 = vunpack.c.l.b16 %v689
    %v3414 = vunpack.c.h.b16 %v689
    %v3415 = vunpack.c.l.b16 %v690
    %v3416 = vunpack.c.h.b16 %v690
    %v3417 = vunpack.c.l.b16 %v691
    %v3418 = vunpack.c.h.b16 %v691
    %v3419 = vunpack.c.l.b16 %v692
    %v3420 = vunpack.c.h.b16 %v692
    %v3421 = vunpack.c.l.b16 %v693
    %v3422 = vunpack.c.h.b16 %v693
    %v3423 = vunpack.c.l.b16 %v694
    %v3424 = vunpack.c.h.b16 %v694
    %v3425 = vunpack.c.l.b16 %v695
    %v3426 = vunpack.c.h.b16 %v695
    %v3427 = vunpack.c.l.b16 %v696
    %v3428 = vunpack.c.h.b16 %v696
    %v3429 = vunpack.c.l.b16 %v697
    %v3430 = vunpack.c.h.b16 %v697
    %v3431 = vunpack.c.l.b16 %v698
    %v3432 = vunpack.c.h.b16 %v698
    %v3433 = vunpack.c.l.b16 %v699
    %v3434 = vunpack.c.h.b16 %v699
    %v3435 = vunpack.c.l.b16 %v700
    %v3436 = vunpack.c.h.b16 %v700
    %v3437 = vunpack.c.l.b16 %v701
    %v3438 = vunpack.c.h.b16 %v701
    %v3439 = vunpack.c.l.b16 %v702
    %v3440 = vunpack.c.h.b16 %v702
    %v3441 = vunpack.c.l.b16 %v703
    %v3442 = vunpack.c.h.b16 %v703
    %v3443 = vunpack.c.l.b16 %v704
    %v3444 = vunpack.c.h.b16 %v704
    %v3445 = vunpack.c.l.b16 %v705
    %v3446 = vunpack.c.h.b16 %v705
    %v3447 = vunpack.c.l.b16 %v706
    %v3448 = vunpack.c.h.b16 %v706
    %v3449 = vunpack.c.l.b16 %v707
    %v3450 = vunpack.c.h.b16 %v707
    %v3451 = vunpack.c.l.b16 %v708
    %v3452 = vunpack.c.h.b16 %v708
    %v3453 = vunpack.c.l.b16 %v709
    %v3454 = vunpack.c.h.b16 %v709
    %v3455 = vunpack.c.l.b16 %v710
    %v3456 = vunpack.c.h.b16 %v710
    %v3457 = vunpack.c.l.b16 %v711
    %v3458 = vunpack.c.h.b16 %v711
    %v3459 = vunpack.c.l.b16 %v712
    %v3460 = vunpack.c.h.b16 %v712
    %v3461 = vunpack.c.l.b16 %v713
    %v3462 = vunpack.c.h.b16 %v713
    %v3463 = vunpack.c.l.b16 %v714
    %v3464 = vunpack.c.h.b16 %v714
    %v3465 = vunpack.c.l.b16 %v715
    %v3466 = vunpack.c.h.b16 %v715
    %v3467 = vunpack.c.l.b16 %v716
    %v3468 = vunpack.c.h.b16 %v716
    %v3469 = vunpack.c.l.b16 %v717
    %v3470 = vunpack.c.h.b16 %v717
    %v3471 = vunpack.c.l.b16 %v718
    %v3472 = vunpack.c.h.b16 %v718
    %v3473 = vunpack.c.l.b16 %v719
    %v3474 = vunpack.c.h.b16 %v719
    %v3475 = vunpack.c.l.b16 %v720
    %v3476 = vunpack.c.h.b16 %v720
    %v3477 = vunpack.c.l.b16 %v721
    %v3478 = vunpack.c.h.b16 %v721
    %v3479 = vunpack.c.l.b16 %v722
    %v3480 = vunpack.c.h.b16 %v722
    %v3481 = vunpack.c.l.b16 %v723
    %v3482 = vunpack.c.h.b16 %v723
    %v3483 = vunpack.c.l.b16 %v724
    %v3484 = vunpack.c.h.b16 %v724
    %v3485 = vunpack.c.l.b16 %v725
    %v3486 = vunpack.c.h.b16 %v725
    %v3487 = vunpack.c.l.b16 %v726
    %v3488 = vunpack.c.h.b16 %v726
    %v3489 = vunpack.c.l.b16 %v727
    %v3490 = vunpack.c.h.b16 %v727
    %v3491 = vunpack.c.l.b16 %v728
    %v3492 = vunpack.c.h.b16 %v728
    %v3493 = vunpack.c.l.b16 %v729
    %v3494 = vunpack.c.h.b16 %v729
    %v3495 = vunpack.c.l.b16 %v730
    %v3496 = vunpack.c.h.b16 %v730
    %v3497 = vunpack.c.l.b16 %v731
    %v3498 = vunpack.c.h.b16 %v731
    %v3499 = vunpack.c.l.b16 %v732
    %v3500 = vunpack.c.h.b16 %v732
    %v3501 = vunpack.c.l.b16 %v733
    %v3502 = vunpack.c.h.b16 %v733
    %v3503 = vunpack.c.l.b16 %v734
    %v3504 = vunpack.c.h.b16 %v734
    %v3505 = vunpack.c.l.b16 %v735
    %v3506 = vunpack.c.h.b16 %v735
    %v3507 = vunpack.c.l.b16 %v736
    %v3508 = vunpack.c.h.b16 %v736
    %v3509 = vunpack.c.l.b16 %v737
    %v3510 = vunpack.c.h.b16 %v737
    %v3511 = vunpack.c.l.b16 %v738
    %v3512 = vunpack.c.h.b16 %v738
    %v3513 = vunpack.c.l.b16 %v739
    %v3514 = vunpack.c.h.b16 %v739
    %v3515 = vunpack.c.l.b16 %v740
    %v3516 = vunpack.c.h.b16 %v740
    %v3517 = vunpack.c.l.b16 %v741
    %v3518 = vunpack.c.h.b16 %v741
    %v3519 = vunpack.c.l.b16 %v742
    %v3520 = vunpack.c.h.b16 %v742
    %v3521 = vunpack.c.l.b16 %v743
    %v3522 = vunpack.c.h.b16 %v743
    %v3523 = vunpack.c.l.b16 %v744
    %v3524 = vunpack.c.h.b16 %v744
    %v3525 = vunpack.c.l.b16 %v745
    %v3526 = vunpack.c.h.b16 %v745
    %v3527 = vunpack.c.l.b16 %v746
    %v3528 = vunpack.c.h.b16 %v746
    %v3529 = vunpack.c.l.b16 %v747
    %v3530 = vunpack.c.h.b16 %v747
    %v3531 = vunpack.c.l.b16 %v748
    %v3532 = vunpack.c.h.b16 %v748
    %v3533 = vunpack.c.l.b16 %v749
    %v3534 = vunpack.c.h.b16 %v749
    %v3535 = vunpack.c.l.b16 %v750
    %v3536 = vunpack.c.h.b16 %v750
    %v3537 = vunpack.c.l.b16 %v751
    %v3538 = vunpack.c.h.b16 %v751
    %v3539 = vunpack.c.l.b16 %v752
    %v3540 = vunpack.c.h.b16 %v752
    %v3541 = vunpack.c.l.b16 %v753
    %v3542 = vunpack.c.h.b16 %v753
    %v3543 = vunpack.c.l.b16 %v754
    %v3544 = vunpack.c.h.b16 %v754
    %v3545 = vunpack.c.l.b16 %v755
    %v3546 = vunpack.c.h.b16 %v755
    %v3547 = vunpack.c.l.b16 %v756
    %v3548 = vunpack.c.h.b16 %v756
    %v3549 = vunpack.c.l.b16 %v757
    %v3550 = vunpack.c.h.b16 %v757
    %v3551 = vunpack.c.l.b16 %v758
    %v3552 = vunpack.c.h.b16 %v758
    %v3553 = vunpack.c.l.b16 %v759
    %v3554 = vunpack.c.h.b16 %v759
    %v3555 = vunpack.c.l.b16 %v760
    %v3556 = vunpack.c.h.b16 %v760
    %v3557 = vunpack.c.l.b16 %v761
    %v3558 = vunpack.c.h.b16 %v761
    %v3559 = vunpack.c.l.b16 %v762
    %v3560 = vunpack.c.h.b16 %v762
    %v3561 = vunpack.c.l.b16 %v763
    %v3562 = vunpack.c.h.b16 %v763
    %v3563 = vunpack.c.l.b16 %v764
    %v3564 = vunpack.c.h.b16 %v764
    %v3565 = vunpack.c.l.b16 %v765
    %v3566 = vunpack.c.h.b16 %v765
    %v3567 = vunpack.c.l.b16 %v766
    %v3568 = vunpack.c.h.b16 %v766
    %v3569 = vunpack.c.l.b16 %v767
    %v3570 = vunpack.c.h.b16 %v767
    %v3571 = vunpack.c.l.b16 %v768
    %v3572 = vunpack.c.h.b16 %v768
    %v3573 = vunpack.c.l.b16 %v769
    %v3574 = vunpack.c.h.b16 %v769
    %v3575 = vunpack.c.l.b16 %v770
    %v3576 = vunpack.c.h.b16 %v770
    %v3577 = vunpack.c.l.b16 %v771
    %v3578 = vunpack.c.h.b16 %v771
    %v3579 = vunpack.c.l.b16 %v772
    %v3580 = vunpack.c.h.b16 %v772
    %v3581 = vunpack.c.l.b16 %v773
    %v3582 = vunpack.c.h.b16 %v773
    %v3583 = vunpack.c.l.b16 %v774
    %v3584 = vunpack.c.h.b16 %v774
    %v3585 = vunpack.c.l.b16 %v775
    %v3586 = vunpack.c.h.b16 %v775
    %v3587 = vunpack.c.l.b16 %v776
    %v3588 = vunpack.c.h.b16 %v776
    %v3589 = vunpack.c.l.b16 %v777
    %v3590 = vunpack.c.h.b16 %v777
    %v3591 = vunpack.c.l.b16 %v778
    %v3592 = vunpack.c.h.b16 %v778
    %v3593 = vunpack.c.l.b16 %v779
    %v3594 = vunpack.c.h.b16 %v779
    %v3595 = vunpack.c.l.b16 %v780
    %v3596 = vunpack.c.h.b16 %v780
    %v3597 = vunpack.c.l.b16 %v781
    %v3598 = vunpack.c.h.b16 %v781
    %v3599 = vunpack.c.l.b16 %v782
    %v3600 = vunpack.c.h.b16 %v782
    %v3601 = vunpack.c.l.b16 %v783
    %v3602 = vunpack.c.h.b16 %v783
    %v3603 = vunpack.c.l.b16 %v784
    %v3604 = vunpack.c.h.b16 %v784
    %v3605 = vunpack.c.l.b16 %v785
    %v3606 = vunpack.c.h.b16 %v785
    %v3607 = vunpack.c.l.b16 %v786
    %v3608 = vunpack.c.h.b16 %v786
    %v3609 = vunpack.c.l.b16 %v787
    %v3610 = vunpack.c.h.b16 %v787
    %v3611 = vunpack.c.l.b16 %v788
    %v3612 = vunpack.c.h.b16 %v788
    %v3613 = vunpack.c.l.b16 %v789
    %v3614 = vunpack.c.h.b16 %v789
    %v3615 = vunpack.c.l.b16 %v790
    %v3616 = vunpack.c.h.b16 %v790
    %v3617 = vunpack.c.l.b16 %v791
    %v3618 = vunpack.c.h.b16 %v791
    %v3619 = vunpack.c.l.b16 %v792
    %v3620 = vunpack.c.h.b16 %v792
    %v3621 = vunpack.c.l.b16 %v793
    %v3622 = vunpack.c.h.b16 %v793
    %v3623 = vunpack.c.l.b16 %v794
    %v3624 = vunpack.c.h.b16 %v794
    %v3625 = vunpack.c.l.b16 %v795
    %v3626 = vunpack.c.h.b16 %v795
    %v3627 = vunpack.c.l.b16 %v796
    %v3628 = vunpack.c.h.b16 %v796
    %v3629 = vunpack.c.l.b16 %v797
    %v3630 = vunpack.c.h.b16 %v797
    %v3631 = vunpack.c.l.b16 %v798
    %v3632 = vunpack.c.h.b16 %v798
    %v3633 = vunpack.c.l.b16 %v799
    %v3634 = vunpack.c.h.b16 %v799
    %v3635 = vunpack.c.l.b16 %v800
    %v3636 = vunpack.c.h.b16 %v800
    %v3637 = vunpack.c.l.b16 %v801
    %v3638 = vunpack.c.h.b16 %v801
    %v3639 = vunpack.c.l.b16 %v802
    %v3640 = vunpack.c.h.b16 %v802
    %v3641 = vunpack.c.l.b16 %v803
    %v3642 = vunpack.c.h.b16 %v803
    %v3643 = vunpack.c.l.b16 %v804
    %v3644 = vunpack.c.h.b16 %v804
    %v3645 = vunpack.c.l.b16 %v805
    %v3646 = vunpack.c.h.b16 %v805
    %v3647 = vunpack.c.l.b16 %v806
    %v3648 = vunpack.c.h.b16 %v806
    %v3649 = vunpack.c.l.b16 %v807
    %v3650 = vunpack.c.h.b16 %v807
    %v3651 = vunpack.c.l.b16 %v808
    %v3652 = vunpack.c.h.b16 %v808
    %v3653 = vunpack.c.l.b16 %v809
    %v3654 = vunpack.c.h.b16 %v809
    %v3655 = vunpack.c.l.b16 %v810
    %v3656 = vunpack.c.h.b16 %v810
    %v3657 = vunpack.c.l.b16 %v811
    %v3658 = vunpack.c.h.b16 %v811
    %v3659 = vunpack.c.l.b16 %v812
    %v3660 = vunpack.c.h.b16 %v812
    %v3661 = vunpack.c.l.b16 %v813
    %v3662 = vunpack.c.h.b16 %v813
    %v3663 = vunpack.c.l.b16 %v814
    %v3664 = vunpack.c.h.b16 %v814
    %v3665 = vunpack.c.l.b16 %v815
    %v3666 = vunpack.c.h.b16 %v815
    %v3667 = vunpack.c.l.b16 %v816
    %v3668 = vunpack.c.h.b16 %v816
    %v3669 = vunpack.c.l.b16 %v817
    %v3670 = vunpack.c.h.b16 %v817
    %v3671 = vunpack.c.l.b16 %v818
    %v3672 = vunpack.c.h.b16 %v818
    %v3673 = vunpack.c.l.b16 %v819
    %v3674 = vunpack.c.h.b16 %v819
    %v3675 = vunpack.c.l.b16 %v820
    %v3676 = vunpack.c.h.b16 %v820
    %v3677 = vunpack.c.l.b16 %v821
    %v3678 = vunpack.c.h.b16 %v821
    %v3679 = vunpack.c.l.b16 %v822
    %v3680 = vunpack.c.h.b16 %v822
    %v3681 = vunpack.c.l.b16 %v823
    %v3682 = vunpack.c.h.b16 %v823
    %v3683 = vunpack.c.l.b16 %v824
    %v3684 = vunpack.c.h.b16 %v824
    %v3685 = vunpack.c.l.b16 %v825
    %v3686 = vunpack.c.h.b16 %v825
    %v3687 = vunpack.c.l.b16 %v826
    %v3688 = vunpack.c.h.b16 %v826
    %v3689 = vunpack.c.l.b16 %v827
    %v3690 = vunpack.c.h.b16 %v827
    %v3691 = vunpack.c.l.b16 %v828
    %v3692 = vunpack.c.h.b16 %v828
    %v3693 = vunpack.c.l.b16 %v829
    %v3694 = vunpack.c.h.b16 %v829
    %v3695 = vunpack.c.l.b16 %v830
    %v3696 = vunpack.c.h.b16 %v830
    %v3697 = vunpack.c.l.b16 %v831
    %v3698 = vunpack.c.h.b16 %v831
    %v3699 = vunpack.c.l.b16 %v832
    %v3700 = vunpack.c.h.b16 %v832
    %v3701 = vunpack.c.l.b16 %v833
    %v3702 = vunpack.c.h.b16 %v833
    %v3703 = vunpack.c.l.b16 %v834
    %v3704 = vunpack.c.h.b16 %v834
    %v3705 = vunpack.c.l.b16 %v835
    %v3706 = vunpack.c.h.b16 %v835
    %v3707 = vunpack.c.l.b16 %v836
    %v3708 = vunpack.c.h.b16 %v836
    %v3709 = vunpack.c.l.b16 %v837
    %v3710 = vunpack.c.h.b16 %v837
    %v3711 = vunpack.c.l.b16 %v838
    %v3712 = vunpack.c.h.b16 %v838
    %v3713 = vunpack.c.l.b16 %v839
    %v3714 = vunpack.c.h.b16 %v839
    %v3715 = vunpack.c.l.b16 %v840
    %v3716 = vunpack.c.h.b16 %v840
    %v3717 = vunpack.c.l.b16 %v841
    %v3718 = vunpack.c.h.b16 %v841
    %v3719 = vunpack.c.l.b16 %v842
    %v3720 = vunpack.c.h.b16 %v842
    %v3721 = vunpack.c.l.b16 %v843
    %v3722 = vunpack.c.h.b16 %v843
    %v3723 = vunpack.c.l.b16 %v844
    %v3724 = vunpack.c.h.b16 %v844
    %v3725 = vunpack.c.l.b16 %v845
    %v3726 = vunpack.c.h.b16 %v845
    %v3727 = vunpack.c.l.b16 %v846
    %v3728 = vunpack.c.h.b16 %v846
    %v3729 = vunpack.c.l.b16 %v847
    %v3730 = vunpack.c.h.b16 %v847
    %v3731 = vunpack.c.l.b16 %v848
    %v3732 = vunpack.c.h.b16 %v848
    %v3733 = vunpack.c.l.b16 %v849
    %v3734 = vunpack.c.h.b16 %v849
    %v3735 = vunpack.c.l.b16 %v850
    %v3736 = vunpack.c.h.b16 %v850
    %v3737 = vunpack.c.l.b16 %v851
    %v3738 = vunpack.c.h.b16 %v851
    %v3739 = vunpack.c.l.b16 %v852
    %v3740 = vunpack.c.h.b16 %v852
    %v3741 = vunpack.c.l.b16 %v853
    %v3742 = vunpack.c.h.b16 %v853
    %v3743 = vunpack.c.l.b16 %v854
    %v3744 = vunpack.c.h.b16 %v854
    %v3745 = vunpack.c.l.b16 %v855
    %v3746 = vunpack.c.h.b16 %v855
    %v3747 = vunpack.c.l.b16 %v856
    %v3748 = vunpack.c.h.b16 %v856
    %v3749 = vunpack.c.l.b16 %v857
    %v3750 = vunpack.c.h.b16 %v857
    %v3751 = vunpack.c.l.b16 %v858
    %v3752 = vunpack.c.h.b16 %v858
    %v3753 = vunpack.c.l.b16 %v859
    %v3754 = vunpack.c.h.b16 %v859
    %v3755 = vunpack.c.l.b16 %v860
    %v3756 = vunpack.c.h.b16 %v860
    %v3757 = vunpack.c.l.b16 %v861
    %v3758 = vunpack.c.h.b16 %v861
    %v3759 = vunpack.c.l.b16 %v862
    %v3760 = vunpack.c.h.b16 %v862
    %v3761 = vunpack.c.l.b16 %v863
    %v3762 = vunpack.c.h.b16 %v863
    %v3763 = vunpack.c.l.b16 %v864
    %v3764 = vunpack.c.h.b16 %v864
    %v3765 = vunpack.c.l.b16 %v865
    %v3766 = vunpack.c.h.b16 %v865
    %v3767 = vunpack.c.l.b16 %v866
    %v3768 = vunpack.c.h.b16 %v866
    %v3769 = vunpack.c.l.b16 %v867
    %v3770 = vunpack.c.h.b16 %v867
    %v3771 = vunpack.c.l.b16 %v868
    %v3772 = vunpack.c.h.b16 %v868
    %v3773 = vunpack.c.l.b16 %v869
    %v3774 = vunpack.c.h.b16 %v869
    %v3775 = vunpack.c.l.b16 %v870
    %v3776 = vunpack.c.h.b16 %v870
    %v3777 = vunpack.c.l.b16 %v871
    %v3778 = vunpack.c.h.b16 %v871
    %v3779 = vunpack.c.l.b16 %v872
    %v3780 = vunpack.c.h.b16 %v872
    %v3781 = vunpack.c.l.b16 %v873
    %v3782 = vunpack.c.h.b16 %v873
    %v3783 = vunpack.c.l.b16 %v874
    %v3784 = vunpack.c.h.b16 %v874
    %v3785 = vunpack.c.l.b16 %v875
    %v3786 = vunpack.c.h.b16 %v875
    %v3787 = vunpack.c.l.b16 %v876
    %v3788 = vunpack.c.h.b16 %v876
    %v3789 = vunpack.c.l.b16 %v877
    %v3790 = vunpack.c.h.b16 %v877
    %v3791 = vunpack.c.l.b16 %v878
    %v3792 = vunpack.c.h.b16 %v878
    %v3793 = vunpack.c.l.b16 %v879
    %v3794 = vunpack.c.h.b16 %v879
    %v3795 = vunpack.c.l.b16 %v880
    %v3796 = vunpack.c.h.b16 %v880
    %v3797 = vunpack.c.l.b16 %v881
    %v3798 = vunpack.c.h.b16 %v881
    %v3799 = vunpack.c.l.b16 %v882
    %v3800 = vunpack.c.h.b16 %v882
    %v3801 = vunpack.c.l.b16 %v883
    %v3802 = vunpack.c.h.b16 %v883
    %v3803 = vunpack.c.l.b16 %v884
    %v3804 = vunpack.c.h.b16 %v884
    %v3805 = vunpack.c.l.b16 %v885
    %v3806 = vunpack.c.h.b16 %v885
    %v3807 = vunpack.c.l.b16 %v886
    %v3808 = vunpack.c.h.b16 %v886
    %v3809 = vunpack.c.l.b16 %v887
    %v3810 = vunpack.c.h.b16 %v887
    %v3811 = vunpack.c.l.b16 %v888
    %v3812 = vunpack.c.h.b16 %v888
    %v3813 = vunpack.c.l.b16 %v889
    %v3814 = vunpack.c.h.b16 %v889
    %v3815 = vunpack.c.l.b16 %v890
    %v3816 = vunpack.c.h.b16 %v890
    %v3817 = vunpack.c.l.b16 %v891
    %v3818 = vunpack.c.h.b16 %v891
    %v3819 = vunpack.c.l.b16 %v892
    %v3820 = vunpack.c.h.b16 %v892
    %v3821 = vunpack.c.l.b16 %v893
    %v3822 = vunpack.c.h.b16 %v893
    %v3823 = vunpack.c.l.b16 %v894
    %v3824 = vunpack.c.h.b16 %v894
    %v3825 = vunpack.c.l.b16 %v895
    %v3826 = vunpack.c.h.b16 %v895
    %v3827 = vunpack.c.l.b16 %v896
    %v3828 = vunpack.c.h.b16 %v896
    %v3829 = vunpack.c.l.b16 %v897
    %v3830 = vunpack.c.h.b16 %v897
    %v3831 = vunpack.c.l.b16 %v898
    %v3832 = vunpack.c.h.b16 %v898
    %v3833 = vunpack.c.l.b16 %v899
    %v3834 = vunpack.c.h.b16 %v899
    %v3835 = vunpack.c.l.b16 %v900
    %v3836 = vunpack.c.h.b16 %v900
    %v3837 = vunpack.c.l.b16 %v901
    %v3838 = vunpack.c.h.b16 %v901
    %v3839 = vunpack.c.l.b16 %v902
    %v3840 = vunpack.c.h.b16 %v902
    %v3841 = vunpack.c.l.b16 %v903
    %v3842 = vunpack.c.h.b16 %v903
    %v3843 = vunpack.c.l.b16 %v904
    %v3844 = vunpack.c.h.b16 %v904
    %v3845 = vunpack.c.l.b16 %v905
    %v3846 = vunpack.c.h.b16 %v905
    %v3847 = vunpack.c.l.b16 %v906
    %v3848 = vunpack.c.h.b16 %v906
    %v3849 = vunpack.c.l.b16 %v907
    %v3850 = vunpack.c.h.b16 %v907
    %v3851 = vunpack.c.l.b16 %v908
    %v3852 = vunpack.c.h.b16 %v908
    %v3853 = vunpack.c.l.b16 %v909
    %v3854 = vunpack.c.h.b16 %v909
    %v3855 = vunpack.c.l.b16 %v910
    %v3856 = vunpack.c.h.b16 %v910
    %v3857 = vunpack.c.l.b16 %v911
    %v3858 = vunpack.c.h.b16 %v911
    %v3859 = vunpack.c.l.b16 %v912
    %v3860 = vunpack.c.h.b16 %v912
    %v3861 = vunpack.c.l.b16 %v913
    %v3862 = vunpack.c.h.b16 %v913
    %v3863 = vunpack.c.l.b16 %v914
    %v3864 = vunpack.c.h.b16 %v914
    %v3865 = vunpack.c.l.b16 %v915
    %v3866 = vunpack.c.h.b16 %v915
    %v3867 = vunpack.c.l.b16 %v916
    %v3868 = vunpack.c.h.b16 %v916
    %v3869 = vunpack.c.l.b16 %v917
    %v3870 = vunpack.c.h.b16 %v917
    %v3871 = vunpack.c.l.b16 %v918
    %v3872 = vunpack.c.h.b16 %v918
    %v3873 = vunpack.c.l.b16 %v919
    %v3874 = vunpack.c.h.b16 %v919
    %v3875 = vunpack.c.l.b16 %v920
    %v3876 = vunpack.c.h.b16 %v920
    %v3877 = vunpack.c.l.b16 %v921
    %v3878 = vunpack.c.h.b16 %v921
    %v3879 = vunpack.c.l.b16 %v922
    %v3880 = vunpack.c.h.b16 %v922
    %v3881 = vunpack.c.l.b16 %v923
    %v3882 = vunpack.c.h.b16 %v923
    %v3883 = vunpack.c.l.b16 %v924
    %v3884 = vunpack.c.h.b16 %v924
    %v3885 = vunpack.c.l.b16 %v925
    %v3886 = vunpack.c.h.b16 %v925
    %v3887 = vunpack.c.l.b16 %v926
    %v3888 = vunpack.c.h.b16 %v926
    %v3889 = vunpack.c.l.b16 %v927
    %v3890 = vunpack.c.h.b16 %v927
    %v3891 = vunpack.c.l.b16 %v928
    %v3892 = vunpack.c.h.b16 %v928
    %v3893 = vunpack.c.l.b16 %v929
    %v3894 = vunpack.c.h.b16 %v929
    %v3895 = vunpack.c.l.b16 %v930
    %v3896 = vunpack.c.h.b16 %v930
    %v3897 = vunpack.c.l.b16 %v931
    %v3898 = vunpack.c.h.b16 %v931
    %v3899 = vunpack.c.l.b16 %v932
    %v3900 = vunpack.c.h.b16 %v932
    %v3901 = vunpack.c.l.b16 %v933
    %v3902 = vunpack.c.h.b16 %v933
    %v3903 = vunpack.c.l.b16 %v934
    %v3904 = vunpack.c.h.b16 %v934
    %v3905 = vunpack.c.l.b16 %v935
    %v3906 = vunpack.c.h.b16 %v935
    %v3907 = vunpack.c.l.b16 %v936
    %v3908 = vunpack.c.h.b16 %v936
    %v3909 = vunpack.c.l.b16 %v937
    %v3910 = vunpack.c.h.b16 %v937
    %v3911 = vunpack.c.l.b16 %v938
    %v3912 = vunpack.c.h.b16 %v938
    %v3913 = vunpack.c.l.b16 %v939
    %v3914 = vunpack.c.h.b16 %v939
    %v3915 = vunpack.c.l.b16 %v940
    %v3916 = vunpack.c.h.b16 %v940
    %v3917 = vunpack.c.l.b16 %v941
    %v3918 = vunpack.c.h.b16 %v941
    %v3919 = vunpack.c.l.b16 %v942
    %v3920 = vunpack.c.h.b16 %v942
    %v3921 = vunpack.c.l.b16 %v943
    %v3922 = vunpack.c.h.b16 %v943
    %v3923 = vunpack.c.l.b16 %v944
    %v3924 = vunpack.c.h.b16 %v944
    %v3925 = vunpack.c.l.b16 %v945
    %v3926 = vunpack.c.h.b16 %v945
    %v3927 = vunpack.c.l.b16 %v946
    %v3928 = vunpack.c.h.b16 %v946
    %v3929 = vunpack.c.l.b16 %v947
    %v3930 = vunpack.c.h.b16 %v947
    %v3931 = vunpack.c.l.b16 %v948
    %v3932 = vunpack.c.h.b16 %v948
    %v3933 = vunpack.c.l.b16 %v949
    %v3934 = vunpack.c.h.b16 %v949
    %v3935 = vunpack.c.l.b16 %v950
    %v3936 = vunpack.c.h.b16 %v950
    %v3937 = vunpack.c.l.b16 %v951
    %v3938 = vunpack.c.h.b16 %v951
    %v3939 = vunpack.c.l.b16 %v952
    %v3940 = vunpack.c.h.b16 %v952
    %v3941 = vunpack.c.l.b16 %v953
    %v3942 = vunpack.c.h.b16 %v953
    %v3943 = vunpack.c.l.b16 %v954
    %v3944 = vunpack.c.h.b16 %v954
    %v3945 = vunpack.c.l.b16 %v955
    %v3946 = vunpack.c.h.b16 %v955
    %v3947 = vunpack.c.l.b16 %v956
    %v3948 = vunpack.c.h.b16 %v956
    %v3949 = vunpack.c.l.b16 %v957
    %v3950 = vunpack.c.h.b16 %v957
    %v3951 = vunpack.c.l.b16 %v958
    %v3952 = vunpack.c.h.b16 %v958
    %v3953 = vunpack.c.l.b16 %v959
    %v3954 = vunpack.c.h.b16 %v959
    %v3955 = vunpack.c.l.b16 %v960
    %v3956 = vunpack.c.h.b16 %v960
    %v3957 = vunpack.c.l.b16 %v961
    %v3958 = vunpack.c.h.b16 %v961
    %v3959 = vunpack.c.l.b16 %v962
    %v3960 = vunpack.c.h.b16 %v962
    %v3961 = vunpack.c.l.b16 %v963
    %v3962 = vunpack.c.h.b16 %v963
    %v3963 = vunpack.c.l.b16 %v964
    %v3964 = vunpack.c.h.b16 %v964
    %v3965 = vunpack.c.l.b16 %v965
    %v3966 = vunpack.c.h.b16 %v965
    %v3967 = vunpack.c.l.b16 %v966
    %v3968 = vunpack.c.h.b16 %v966
    %v3969 = vunpack.c.l.b16 %v967
    %v3970 = vunpack.c.h.b16 %v967
    %v3971 = vunpack.c.l.b16 %v968
    %v3972 = vunpack.c.h.b16 %v968
    %v3973 = vunpack.c.l.b16 %v969
    %v3974 = vunpack.c.h.b16 %v969
    %v3975 = vunpack.c.l.b16 %v970
    %v3976 = vunpack.c.h.b16 %v970
    %v3977 = vunpack.c.l.b16 %v971
    %v3978 = vunpack.c.h.b16 %v971
    %v3979 = vunpack.c.l.b16 %v972
    %v3980 = vunpack.c.h.b16 %v972
    %v3981 = vunpack.c.l.b16 %v973
    %v3982 = vunpack.c.h.b16 %v973
    %v3983 = vunpack.c.l.b16 %v974
    %v3984 = vunpack.c.h.b16 %v974
    %v3985 = vunpack.c.l.b16 %v975
    %v3986 = vunpack.c.h.b16 %v975
    %v3987 = vunpack.c.l.b16 %v976
    %v3988 = vunpack.c.h.b16 %v976
    %v3989 = vunpack.c.l.b16 %v977
    %v3990 = vunpack.c.h.b16 %v977
    %v3991 = vunpack.c.l.b16 %v978
    %v3992 = vunpack.c.h.b16 %v978
    %v3993 = vunpack.c.l.b16 %v979
    %v3994 = vunpack.c.h.b16 %v979
    %v3995 = vunpack.c.l.b16 %v980
    %v3996 = vunpack.c.h.b16 %v980
    %v3997 = vunpack.c.l.b16 %v981
    %v3998 = vunpack.c.h.b16 %v981
    %v3999 = vunpack.c.l.b16 %v982
    %v4000 = vunpack.c.h.b16 %v982
    %v4001 = vunpack.c.l.b16 %v983
    %v4002 = vunpack.c.h.b16 %v983
    %v4003 = vunpack.c.l.b16 %v984
    %v4004 = vunpack.c.h.b16 %v984
    %v4005 = vunpack.c.l.b16 %v985
    %v4006 = vunpack.c.h.b16 %v985
    %v4007 = vunpack.c.l.b16 %v986
    %v4008 = vunpack.c.h.b16 %v986
    %v4009 = vunpack.c.l.b16 %v987
    %v4010 = vunpack.c.h.b16 %v987
    %v4011 = vunpack.c.l.b16 %v988
    %v4012 = vunpack.c.h.b16 %v988
    %v4013 = vunpack.c.l.b16 %v989
    %v4014 = vunpack.c.h.b16 %v989
    %v4015 = vunpack.c.l.b16 %v990
    %v4016 = vunpack.c.h.b16 %v990
    %v4017 = vunpack.c.l.b16 %v991
    %v4018 = vunpack.c.h.b16 %v991
    %v4019 = vunpack.c.l.b16 %v992
    %v4020 = vunpack.c.h.b16 %v992
    %v4021 = vunpack.c.l.b16 %v993
    %v4022 = vunpack.c.h.b16 %v993
    %v4023 = vunpack.c.l.b16 %v994
    %v4024 = vunpack.c.h.b16 %v994
    %v4025 = vunpack.c.l.b16 %v995
    %v4026 = vunpack.c.h.b16 %v995
    %v4027 = vunpack.c.l.b16 %v996
    %v4028 = vunpack.c.h.b16 %v996
    %v4029 = vunpack.c.l.b16 %v997
    %v4030 = vunpack.c.h.b16 %v997
    %v4031 = vunpack.c.l.b16 %v998
    %v4032 = vunpack.c.h.b16 %v998
    %v4033 = vunpack.c.l.b16 %v999
    %v4034 = vunpack.c.h.b16 %v999
    %v4035 = vunpack.c.l.b16 %v1000
    %v4036 = vunpack.c.h.b16 %v1000
    %v4037 = vunpack.c.l.b16 %v1001
    %v4038 = vunpack.c.h.b16 %v1001
    %v4039 = vunpack.c.l.b16 %v1002
    %v4040 = vunpack.c.h.b16 %v1002
    %v4041 = vunpack.c.l.b16 %v1003
    %v4042 = vunpack.c.h.b16 %v1003
    %v4043 = vunpack.c.l.b16 %v1004
    %v4044 = vunpack.c.h.b16 %v1004
    %v4045 = vunpack.c.l.b16 %v1005
    %v4046 = vunpack.c.h.b16 %v1005
    %v4047 = vunpack.c.l.b16 %v1006
    %v4048 = vunpack.c.h.b16 %v1006
    %v4049 = vunpack.c.l.b16 %v1007
    %v4050 = vunpack.c.h.b16 %v1007
    %v4051 = vunpack.c.l.b16 %v1008
    %v4052 = vunpack.c.h.b16 %v1008
    %v4053 = vunpack.c.l.b16 %v1009
    %v4054 = vunpack.c.h.b16 %v1009
    %v4055 = vunpack.c.l.b16 %v1010
    %v4056 = vunpack.c.h.b16 %v1010
    %v4057 = vunpack.c.l.b16 %v1011
    %v4058 = vunpack.c.h.b16 %v1011
    %v4059 = vunpack.c.l.b16 %v1012
    %v4060 = vunpack.c.h.b16 %v1012
    %v4061 = vunpack.c.l.b16 %v1013
    %v4062 = vunpack.c.h.b16 %v1013
    %v4063 = vunpack.c.l.b16 %v1014
    %v4064 = vunpack.c.h.b16 %v1014
    %v4065 = vunpack.c.l.b16 %v1015
    %v4066 = vunpack.c.h.b16 %v1015
    %v4067 = vunpack.c.l.b16 %v1016
    %v4068 = vunpack.c.h.b16 %v1016
    %v4069 = vunpack.c.l.b16 %v1017
    %v4070 = vunpack.c.h.b16 %v1017
    %v4071 = vunpack.c.l.b16 %v1018
    %v4072 = vunpack.c.h.b16 %v1018
    %v4073 = vunpack.c.l.b16 %v1019
    %v4074 = vunpack.c.h.b16 %v1019
    %v4075 = vunpack.c.l.b16 %v1020
    %v4076 = vunpack.c.h.b16 %v1020
    %v4077 = vunpack.c.l.b16 %v1021
    %v4078 = vunpack.c.h.b16 %v1021
    %v4079 = vunpack.c.l.b16 %v1022
    %v4080 = vunpack.c.h.b16 %v1022
    %v4081 = vunpack.c.l.b16 %v1023
    %v4082 = vunpack.c.h.b16 %v1023
    %v4083 = vunpack.c.l.b16 %v1024
    %v4084 = vunpack.c.h.b16 %v1024
    %v4085 = vunpack.c.l.b16 %v1025
    %v4086 = vunpack.c.h.b16 %v1025
    %v4087 = vunpack.c.l.b16 %v1026
    %v4088 = vunpack.c.h.b16 %v1026
    %v4089 = vunpack.c.l.b16 %v1027
    %v4090 = vunpack.c.h.b16 %v1027
    %v4091 = vunpack.c.l.b16 %v1028
    %v4092 = vunpack.c.h.b16 %v1028
    %v4093 = vunpack.c.l.b16 %v1029
    %v4094 = vunpack.c.h.b16 %v1029
    %v4095 = vunpack.c.l.b16 %v1030
    %v4096 = vunpack.c.h.b16 %v1030
    %v4097 = vunpack.c.l.b16 %v1031
    %v4098 = vunpack.c.h.b16 %v1031
    %v4099 = vunpack.c.l.b16 %v1032
    %v4100 = vunpack.c.h.b16 %v1032
    %v4101 = vunpack.c.l.b16 %v1033
    %v4102 = vunpack.c.h.b16 %v1033
    %v4103 = vunpack.c.l.b16 %v1034
    %v4104 = vunpack.c.h.b16 %v1034
    %v4105 = vunpack.c.l.b16 %v1035
    %v4106 = vunpack.c.h.b16 %v1035
    %v4107 = vunpack.c.l.b16 %v1036
    %v4108 = vunpack.c.h.b16 %v1036
    %v4109 = vunpack.c.l.b16 %v1037
    %v4110 = vunpack.c.h.b16 %v1037
    %v4111 = vunpack.c.l.b16 %v1038
    %v4112 = vunpack.c.h.b16 %v1038
    %v4113 = vunpack.c.l.b16 %v1039
    %v4114 = vunpack.c.h.b16 %v1039
    %v4115 = vunpack.c.l.b16 %v1040
    %v4116 = vunpack.c.h.b16 %v1040
    %v4117 = vunpack.c.l.b16 %v1041
    %v4118 = vunpack.c.h.b16 %v1041
    %v4119 = vunpack.c.l.b16 %v1042
    %v4120 = vunpack.c.h.b16 %v1042
    %v4121 = vunpack.c.l.b16 %v1043
    %v4122 = vunpack.c.h.b16 %v1043
    %v4123 = vunpack.c.l.b16 %v1044
    %v4124 = vunpack.c.h.b16 %v1044
    %v4125 = vunpack.c.l.b16 %v1045
    %v4126 = vunpack.c.h.b16 %v1045
    %v4127 = vunpack.c.l.b16 %v1046
    %v4128 = vunpack.c.h.b16 %v1046
    %v4129 = vunpack.c.l.b16 %v1047
    %v4130 = vunpack.c.h.b16 %v1047
    %v4131 = vunpack.c.l.b16 %v1048
    %v4132 = vunpack.c.h.b16 %v1048
    %v4133 = vunpack.c.l.b16 %v1049
    %v4134 = vunpack.c.h.b16 %v1049
    %v4135 = vunpack.c.l.b16 %v1050
    %v4136 = vunpack.c.h.b16 %v1050
    %v4137 = vunpack.c.l.b16 %v1051
    %v4138 = vunpack.c.h.b16 %v1051
    %v4139 = vunpack.c.l.b16 %v1052
    %v4140 = vunpack.c.h.b16 %v1052
    %v4141 = vunpack.c.l.b16 %v1053
    %v4142 = vunpack.c.h.b16 %v1053
    %v4143 = vunpack.c.l.b16 %v1054
    %v4144 = vunpack.c.h.b16 %v1054
    %v4145 = vunpack.c.l.b16 %v1055
    %v4146 = vunpack.c.h.b16 %v1055
    %v4147 = vunpack.c.l.b16 %v1056
    %v4148 = vunpack.c.h.b16 %v1056
    %v4149 = vunpack.c.l.b16 %v1057
    %v4150 = vunpack.c.h.b16 %v1057
    %v4151 = vunpack.c.l.b16 %v1058
    %v4152 = vunpack.c.h.b16 %v1058
    %v4153 = vunpack.c.l.b16 %v1059
    %v4154 = vunpack.c.h.b16 %v1059
    %v4155 = vunpack.c.l.b16 %v1060
    %v4156 = vunpack.c.h.b16 %v1060
    %v4157 = vunpack.c.l.b16 %v1061
    %v4158 = vunpack.c.h.b16 %v1061
    %v4159 = vunpack.c.l.b16 %v1062
    %v4160 = vunpack.c.h.b16 %v1062
    %v4161 = vunpack.c.l.b16 %v1063
    %v4162 = vunpack.c.h.b16 %v1063
    %v4163 = vunpack.c.l.b16 %v1064
    %v4164 = vunpack.c.h.b16 %v1064
    %v4165 = vunpack.c.l.b16 %v1065
    %v4166 = vunpack.c.h.b16 %v1065
    %v4167 = vunpack.c.l.b16 %v1066
    %v4168 = vunpack.c.h.b16 %v1066
    %v4169 = vunpack.c.l.b16 %v1067
    %v4170 = vunpack.c.h.b16 %v1067
    %v4171 = vunpack.c.l.b16 %v1068
    %v4172 = vunpack.c.h.b16 %v1068
    %v4173 = vunpack.c.l.b16 %v1069
    %v4174 = vunpack.c.h.b16 %v1069
    %v4175 = vunpack.c.l.b16 %v1070
    %v4176 = vunpack.c.h.b16 %v1070
    %v4177 = vunpack.c.l.b16 %v1071
    %v4178 = vunpack.c.h.b16 %v1071
    %v4179 = vunpack.c.l.b16 %v1072
    %v4180 = vunpack.c.h.b16 %v1072
    %v4181 = vunpack.c.l.b16 %v1073
    %v4182 = vunpack.c.h.b16 %v1073
    %v4183 = vunpack.c.l.b16 %v1074
    %v4184 = vunpack.c.h.b16 %v1074
    %v4185 = vunpack.c.l.b16 %v1075
    %v4186 = vunpack.c.h.b16 %v1075
    %v4187 = vunpack.c.l.b16 %v1076
    %v4188 = vunpack.c.h.b16 %v1076
    %v4189 = vunpack.c.l.b16 %v1077
    %v4190 = vunpack.c.h.b16 %v1077
    %v4191 = vunpack.c.l.b16 %v1078
    %v4192 = vunpack.c.h.b16 %v1078
    %v4193 = vunpack.c.l.b16 %v1079
    %v4194 = vunpack.c.h.b16 %v1079
    %v4195 = vunpack.c.l.b16 %v1080
    %v4196 = vunpack.c.h.b16 %v1080
    %v4197 = vunpack.c.l.b16 %v1081
    %v4198 = vunpack.c.h.b16 %v1081
    %v4199 = vunpack.c.l.b16 %v1082
    %v4200 = vunpack.c.h.b16 %v1082
    %v4201 = vunpack.c.l.b16 %v1083
    %v4202 = vunpack.c.h.b16 %v1083
    %v4203 = vunpack.c.l.b16 %v1084
    %v4204 = vunpack.c.h.b16 %v1084
    %v4205 = vunpack.c.l.b16 %v1085
    %v4206 = vunpack.c.h.b16 %v1085
    %v4207 = vunpack.c.l.b16 %v1086
    %v4208 = vunpack.c.h.b16 %v1086
    %v4209 = vunpack.c.l.b16 %v1087
    %v4210 = vunpack.c.h.b16 %v1087
    %v4211 = vunpack.c.l.b16 %v1088
    %v4212 = vunpack.c.h.b16 %v1088
    %v4213 = vunpack.c.l.b16 %v1089
    %v4214 = vunpack.c.h.b16 %v1089
    %v4215 = vunpack.c.l.b16 %v1090
    %v4216 = vunpack.c.h.b16 %v1090
    %v4217 = vunpack.c.l.b16 %v1091
    %v4218 = vunpack.c.h.b16 %v1091
    %v4219 = vunpack.c.l.b16 %v1092
    %v4220 = vunpack.c.h.b16 %v1092
    %v4221 = vunpack.c.l.b16 %v1093
    %v4222 = vunpack.c.h.b16 %v1093
    %v4223 = vunpack.c.l.b16 %v1094
    %v4224 = vunpack.c.h.b16 %v1094
    %v4225 = vunpack.c.l.b16 %v1095
    %v4226 = vunpack.c.h.b16 %v1095
    %v4227 = vunpack.c.l.b16 %v1096
    %v4228 = vunpack.c.h.b16 %v1096
    %v4229 = vunpack.c.l.b16 %v1097
    %v4230 = vunpack.c.h.b16 %v1097
    %v4231 = vunpack.c.l.b16 %v1098
    %v4232 = vunpack.c.h.b16 %v1098
    %v4233 = vunpack.c.l.b16 %v1099
    %v4234 = vunpack.c.h.b16 %v1099
    %v4235 = vunpack.c.l.b16 %v1100
    %v4236 = vunpack.c.h.b16 %v1100
    %v4237 = vunpack.c.l.b16 %v1101
    %v4238 = vunpack.c.h.b16 %v1101
    %v4239 = vunpack.c.l.b16 %v1102
    %v4240 = vunpack.c.h.b16 %v1102
    %v4241 = vunpack.c.l.b16 %v1103
    %v4242 = vunpack.c.h.b16 %v1103
    %v4243 = vunpack.c.l.b16 %v1104
    %v4244 = vunpack.c.h.b16 %v1104
    %v4245 = vunpack.c.l.b16 %v1105
    %v4246 = vunpack.c.h.b16 %v1105
    %v4247 = vunpack.c.l.b16 %v1106
    %v4248 = vunpack.c.h.b16 %v1106
    %v4249 = vunpack.c.l.b16 %v1107
    %v4250 = vunpack.c.h.b16 %v1107
    %v4251 = vunpack.c.l.b16 %v1108
    %v4252 = vunpack.c.h.b16 %v1108
    %v4253 = vunpack.c.l.b16 %v1109
    %v4254 = vunpack.c.h.b16 %v1109
    %v4255 = vunpack.c.l.b16 %v1110
    %v4256 = vunpack.c.h.b16 %v1110
    %v4257 = vpack.c.b16 %v2217, %v2209
    %v4258 = vpack.c.b16 %v2218, %v2210
    %v4259 = vpack.c.b16 %v2219, %v2211
    %v4260 = vpack.c.b16 %v2220, %v2212
    %v4261 = vpack.c.b16 %v2221, %v2213
    %v4262 = vpack.c.b16 %v2222, %v2214
    %v4263 = vpack.c.b16 %v2223, %v2215
    %v4264 = vpack.c.b16 %v2224, %v2216
    %v4265 = vpack.c.b16 %v2233, %v2225
    %v4266 = vpack.c.b16 %v2234, %v2226
    %v4267 = vpack.c.b16 %v2235, %v2227
    %v4268 = vpack.c.b16 %v2236, %v2228
    %v4269 = vpack.c.b16 %v2237, %v2229
    %v4270 = vpack.c.b16 %v2238, %v2230
    %v4271 = vpack.c.b16 %v2239, %v2231
    %v4272 = vpack.c.b16 %v2240, %v2232
    %v4273 = vpack.c.b16 %v2249, %v2241
    %v4274 = vpack.c.b16 %v2250, %v2242
    %v4275 = vpack.c.b16 %v2251, %v2243
    %v4276 = vpack.c.b16 %v2252, %v2244
    %v4277 = vpack.c.b16 %v2253, %v2245
    %v4278 = vpack.c.b16 %v2254, %v2246
    %v4279 = vpack.c.b16 %v2255, %v2247
    %v4280 = vpack.c.b16 %v2256, %v2248
    %v4281 = vpack.c.b16 %v2265, %v2257
    %v4282 = vpack.c.b16 %v2266, %v2258
    %v4283 = vpack.c.b16 %v2267, %v2259
    %v4284 = vpack.c.b16 %v2268, %v2260
    %v4285 = vpack.c.b16 %v2269, %v2261
    %v4286 = vpack.c.b16 %v2270, %v2262
    %v4287 = vpack.c.b16 %v2271, %v2263
    %v4288 = vpack.c.b16 %v2272, %v2264
    %v4289 = vpack.c.b16 %v2281, %v2273
    %v4290 = vpack.c.b16 %v2282, %v2274
    %v4291 = vpack.c.b16 %v2283, %v2275
    %v4292 = vpack.c.b16 %v2284, %v2276
    %v4293 = vpack.c.b16 %v2285, %v2277
    %v4294 = vpack.c.b16 %v2286, %v2278
    %v4295 = vpack.c.b16 %v2287, %v2279
    %v4296 = vpack.c.b16 %v2288, %v2280
    %v4297 = vpack.c.b16 %v2297, %v2289
    %v4298 = vpack.c.b16 %v2298, %v2290
    %v4299 = vpack.c.b16 %v2299, %v2291
    %v4300 = vpack.c.b16 %v2300, %v2292
    %v4301 = vpack.c.b16 %v2301, %v2293
    %v4302 = vpack.c.b16 %v2302, %v2294
    %v4303 = vpack.c.b16 %v2303, %v2295
    %v4304 = vpack.c.b16 %v2304, %v2296
    %v4305 = vpack.c.b16 %v2313, %v2305
    %v4306 = vpack.c.b16 %v2314, %v2306
    %v4307 = vpack.c.b16 %v2315, %v2307
    %v4308 = vpack.c.b16 %v2316, %v2308
    %v4309 = vpack.c.b16 %v2317, %v2309
    %v4310 = vpack.c.b16 %v2318, %v2310
    %v4311 = vpack.c.b16 %v2319, %v2311
    %v4312 = vpack.c.b16 %v2320, %v2312
    %v4313 = vpack.c.b16 %v2329, %v2321
    %v4314 = vpack.c.b16 %v2330, %v2322
    %v4315 = vpack.c.b16 %v2331, %v2323
    %v4316 = vpack.c.b16 %v2332, %v2324
    %v4317 = vpack.c.b16 %v2333, %v2325
    %v4318 = vpack.c.b16 %v2334, %v2326
    %v4319 = vpack.c.b16 %v2335, %v2327
    %v4320 = vpack.c.b16 %v2336, %v2328
    %v4321 = vpack.c.b16 %v2345, %v2337
    %v4322 = vpack.c.b16 %v2346, %v2338
    %v4323 = vpack.c.b16 %v2347, %v2339
    %v4324 = vpack.c.b16 %v2348, %v2340
    %v4325 = vpack.c.b16 %v2349, %v2341
    %v4326 = vpack.c.b16 %v2350, %v2342
    %v4327 = vpack.c.b16 %v2351, %v2343
    %v4328 = vpack.c.b16 %v2352, %v2344
    %v4329 = vpack.c.b16 %v2361, %v2353
    %v4330 = vpack.c.b16 %v2362, %v2354
    %v4331 = vpack.c.b16 %v2363, %v2355
    %v4332 = vpack.c.b16 %v2364, %v2356
    %v4333 = vpack.c.b16 %v2365, %v2357
    %v4334 = vpack.c.b16 %v2366, %v2358
    %v4335 = vpack.c.b16 %v2367, %v2359
    %v4336 = vpack.c.b16 %v2368, %v2360
    %v4337 = vpack.c.b16 %v2377, %v2369
    %v4338 = vpack.c.b16 %v2378, %v2370
    %v4339 = vpack.c.b16 %v2379, %v2371
    %v4340 = vpack.c.b16 %v2380, %v2372
    %v4341 = vpack.c.b16 %v2381, %v2373
    %v4342 = vpack.c.b16 %v2382, %v2374
    %v4343 = vpack.c.b16 %v2383, %v2375
    %v4344 = vpack.c.b16 %v2384, %v2376
    %v4345 = vpack.c.b16 %v2393, %v2385
    %v4346 = vpack.c.b16 %v2394, %v2386
    %v4347 = vpack.c.b16 %v2395, %v2387
    %v4348 = vpack.c.b16 %v2396, %v2388
    %v4349 = vpack.c.b16 %v2397, %v2389
    %v4350 = vpack.c.b16 %v2398, %v2390
    %v4351 = vpack.c.b16 %v2399, %v2391
    %v4352 = vpack.c.b16 %v2400, %v2392
    %v4353 = vpack.c.b16 %v2409, %v2401
    %v4354 = vpack.c.b16 %v2410, %v2402
    %v4355 = vpack.c.b16 %v2411, %v2403
    %v4356 = vpack.c.b16 %v2412, %v2404
    %v4357 = vpack.c.b16 %v2413, %v2405
    %v4358 = vpack.c.b16 %v2414, %v2406
    %v4359 = vpack.c.b16 %v2415, %v2407
    %v4360 = vpack.c.b16 %v2416, %v2408
    %v4361 = vpack.c.b16 %v2425, %v2417
    %v4362 = vpack.c.b16 %v2426, %v2418
    %v4363 = vpack.c.b16 %v2427, %v2419
    %v4364 = vpack.c.b16 %v2428, %v2420
    %v4365 = vpack.c.b16 %v2429, %v2421
    %v4366 = vpack.c.b16 %v2430, %v2422
    %v4367 = vpack.c.b16 %v2431, %v2423
    %v4368 = vpack.c.b16 %v2432, %v2424
    %v4369 = vpack.c.b16 %v2441, %v2433
    %v4370 = vpack.c.b16 %v2442, %v2434
    %v4371 = vpack.c.b16 %v2443, %v2435
    %v4372 = vpack.c.b16 %v2444, %v2436
    %v4373 = vpack.c.b16 %v2445, %v2437
    %v4374 = vpack.c.b16 %v2446, %v2438
    %v4375 = vpack.c.b16 %v2447, %v2439
    %v4376 = vpack.c.b16 %v2448, %v2440
    %v4377 = vpack.c.b16 %v2457, %v2449
    %v4378 = vpack.c.b16 %v2458, %v2450
    %v4379 = vpack.c.b16 %v2459, %v2451
    %v4380 = vpack.c.b16 %v2460, %v2452
    %v4381 = vpack.c.b16 %v2461, %v2453
    %v4382 = vpack.c.b16 %v2462, %v2454
    %v4383 = vpack.c.b16 %v2463, %v2455
    %v4384 = vpack.c.b16 %v2464, %v2456
    %v4385 = vpack.c.b16 %v2473, %v2465
    %v4386 = vpack.c.b16 %v2474, %v2466
    %v4387 = vpack.c.b16 %v2475, %v2467
    %v4388 = vpack.c.b16 %v2476, %v2468
    %v4389 = vpack.c.b16 %v2477, %v2469
    %v4390 = vpack.c.b16 %v2478, %v2470
    %v4391 = vpack.c.b16 %v2479, %v2471
    %v4392 = vpack.c.b16 %v2480, %v2472
    %v4393 = vpack.c.b16 %v2489, %v2481
    %v4394 = vpack.c.b16 %v2490, %v2482
    %v4395 = vpack.c.b16 %v2491, %v2483
    %v4396 = vpack.c.b16 %v2492, %v2484
    %v4397 = vpack.c.b16 %v2493, %v2485
    %v4398 = vpack.c.b16 %v2494, %v2486
    %v4399 = vpack.c.b16 %v2495, %v2487
    %v4400 = vpack.c.b16 %v2496, %v2488
    %v4401 = vpack.c.b16 %v2505, %v2497
    %v4402 = vpack.c.b16 %v2506, %v2498
    %v4403 = vpack.c.b16 %v2507, %v2499
    %v4404 = vpack.c.b16 %v2508, %v2500
    %v4405 = vpack.c.b16 %v2509, %v2501
    %v4406 = vpack.c.b16 %v2510, %v2502
    %v4407 = vpack.c.b16 %v2511, %v2503
    %v4408 = vpack.c.b16 %v2512, %v2504
    %v4409 = vpack.c.b16 %v2521, %v2513
    %v4410 = vpack.c.b16 %v2522, %v2514
    %v4411 = vpack.c.b16 %v2523, %v2515
    %v4412 = vpack.c.b16 %v2524, %v2516
    %v4413 = vpack.c.b16 %v2525, %v2517
    %v4414 = vpack.c.b16 %v2526, %v2518
    %v4415 = vpack.c.b16 %v2527, %v2519
    %v4416 = vpack.c.b16 %v2528, %v2520
    %v4417 = vpack.c.b16 %v2537, %v2529
    %v4418 = vpack.c.b16 %v2538, %v2530
    %v4419 = vpack.c.b16 %v2539, %v2531
    %v4420 = vpack.c.b16 %v2540, %v2532
    %v4421 = vpack.c.b16 %v2541, %v2533
    %v4422 = vpack.c.b16 %v2542, %v2534
    %v4423 = vpack.c.b16 %v2543, %v2535
    %v4424 = vpack.c.b16 %v2544, %v2536
    %v4425 = vpack.c.b16 %v2553, %v2545
    %v4426 = vpack.c.b16 %v2554, %v2546
    %v4427 = vpack.c.b16 %v2555, %v2547
    %v4428 = vpack.c.b16 %v2556, %v2548
    %v4429 = vpack.c.b16 %v2557, %v2549
    %v4430 = vpack.c.b16 %v2558, %v2550
    %v4431 = vpack.c.b16 %v2559, %v2551
    %v4432 = vpack.c.b16 %v2560, %v2552
    %v4433 = vpack.c.b16 %v2569, %v2561
    %v4434 = vpack.c.b16 %v2570, %v2562
    %v4435 = vpack.c.b16 %v2571, %v2563
    %v4436 = vpack.c.b16 %v2572, %v2564
    %v4437 = vpack.c.b16 %v2573, %v2565
    %v4438 = vpack.c.b16 %v2574, %v2566
    %v4439 = vpack.c.b16 %v2575, %v2567
    %v4440 = vpack.c.b16 %v2576, %v2568
    %v4441 = vpack.c.b16 %v2585, %v2577
    %v4442 = vpack.c.b16 %v2586, %v2578
    %v4443 = vpack.c.b16 %v2587, %v2579
    %v4444 = vpack.c.b16 %v2588, %v2580
    %v4445 = vpack.c.b16 %v2589, %v2581
    %v4446 = vpack.c.b16 %v2590, %v2582
    %v4447 = vpack.c.b16 %v2591, %v2583
    %v4448 = vpack.c.b16 %v2592, %v2584
    %v4449 = vpack.c.b16 %v2601, %v2593
    %v4450 = vpack.c.b16 %v2602, %v2594
    %v4451 = vpack.c.b16 %v2603, %v2595
    %v4452 = vpack.c.b16 %v2604, %v2596
    %v4453 = vpack.c.b16 %v2605, %v2597
    %v4454 = vpack.c.b16 %v2606, %v2598
    %v4455 = vpack.c.b16 %v2607, %v2599
    %v4456 = vpack.c.b16 %v2608, %v2600
    %v4457 = vpack.c.b16 %v2617, %v2609
    %v4458 = vpack.c.b16 %v2618, %v2610
    %v4459 = vpack.c.b16 %v2619, %v2611
    %v4460 = vpack.c.b16 %v2620, %v2612
    %v4461 = vpack.c.b16 %v2621, %v2613
    %v4462 = vpack.c.b16 %v2622, %v2614
    %v4463 = vpack.c.b16 %v2623, %v2615
    %v4464 = vpack.c.b16 %v2624, %v2616
    %v4465 = vpack.c.b16 %v2633, %v2625
    %v4466 = vpack.c.b16 %v2634, %v2626
    %v4467 = vpack.c.b16 %v2635, %v2627
    %v4468 = vpack.c.b16 %v2636, %v2628
    %v4469 = vpack.c.b16 %v2637, %v2629
    %v4470 = vpack.c.b16 %v2638, %v2630
    %v4471 = vpack.c.b16 %v2639, %v2631
    %v4472 = vpack.c.b16 %v2640, %v2632
    %v4473 = vpack.c.b16 %v2649, %v2641
    %v4474 = vpack.c.b16 %v2650, %v2642
    %v4475 = vpack.c.b16 %v2651, %v2643
    %v4476 = vpack.c.b16 %v2652, %v2644
    %v4477 = vpack.c.b16 %v2653, %v2645
    %v4478 = vpack.c.b16 %v2654, %v2646
    %v4479 = vpack.c.b16 %v2655, %v2647
    %v4480 = vpack.c.b16 %v2656, %v2648
    %v4481 = vpack.c.b16 %v2665, %v2657
    %v4482 = vpack.c.b16 %v2666, %v2658
    %v4483 = vpack.c.b16 %v2667, %v2659
    %v4484 = vpack.c.b16 %v2668, %v2660
    %v4485 = vpack.c.b16 %v2669, %v2661
    %v4486 = vpack.c.b16 %v2670, %v2662
    %v4487 = vpack.c.b16 %v2671, %v2663
    %v4488 = vpack.c.b16 %v2672, %v2664
    %v4489 = vpack.c.b16 %v2681, %v2673
    %v4490 = vpack.c.b16 %v2682, %v2674
    %v4491 = vpack.c.b16 %v2683, %v2675
    %v4492 = vpack.c.b16 %v2684, %v2676
    %v4493 = vpack.c.b16 %v2685, %v2677
    %v4494 = vpack.c.b16 %v2686, %v2678
    %v4495 = vpack.c.b16 %v2687, %v2679
    %v4496 = vpack.c.b16 %v2688, %v2680
    %v4497 = vpack.c.b16 %v2697, %v2689
    %v4498 = vpack.c.b16 %v2698, %v2690
    %v4499 = vpack.c.b16 %v2699, %v2691
    %v4500 = vpack.c.b16 %v2700, %v2692
    %v4501 = vpack.c.b16 %v2701, %v2693
    %v4502 = vpack.c.b16 %v2702, %v2694
    %v4503 = vpack.c.b16 %v2703, %v2695
    %v4504 = vpack.c.b16 %v2704, %v2696
    %v4505 = vpack.c.b16 %v2713, %v2705
    %v4506 = vpack.c.b16 %v2714, %v2706
    %v4507 = vpack.c.b16 %v2715, %v2707
    %v4508 = vpack.c.b16 %v2716, %v2708
    %v4509 = vpack.c.b16 %v2717, %v2709
    %v4510 = vpack.c.b16 %v2718, %v2710
    %v4511 = vpack.c.b16 %v2719, %v2711
    %v4512 = vpack.c.b16 %v2720, %v2712
    %v4513 = vpack.c.b16 %v2729, %v2721
    %v4514 = vpack.c.b16 %v2730, %v2722
    %v4515 = vpack.c.b16 %v2731, %v2723
    %v4516 = vpack.c.b16 %v2732, %v2724
    %v4517 = vpack.c.b16 %v2733, %v2725
    %v4518 = vpack.c.b16 %v2734, %v2726
    %v4519 = vpack.c.b16 %v2735, %v2727
    %v4520 = vpack.c.b16 %v2736, %v2728
    %v4521 = vpack.c.b16 %v2745, %v2737
    %v4522 = vpack.c.b16 %v2746, %v2738
    %v4523 = vpack.c.b16 %v2747, %v2739
    %v4524 = vpack.c.b16 %v2748, %v2740
    %v4525 = vpack.c.b16 %v2749, %v2741
    %v4526 = vpack.c.b16 %v2750, %v2742
    %v4527 = vpack.c.b16 %v2751, %v2743
    %v4528 = vpack.c.b16 %v2752, %v2744
    %v4529 = vpack.c.b16 %v2761, %v2753
    %v4530 = vpack.c.b16 %v2762, %v2754
    %v4531 = vpack.c.b16 %v2763, %v2755
    %v4532 = vpack.c.b16 %v2764, %v2756
    %v4533 = vpack.c.b16 %v2765, %v2757
    %v4534 = vpack.c.b16 %v2766, %v2758
    %v4535 = vpack.c.b16 %v2767, %v2759
    %v4536 = vpack.c.b16 %v2768, %v2760
    %v4537 = vpack.c.b16 %v2777, %v2769
    %v4538 = vpack.c.b16 %v2778, %v2770
    %v4539 = vpack.c.b16 %v2779, %v2771
    %v4540 = vpack.c.b16 %v2780, %v2772
    %v4541 = vpack.c.b16 %v2781, %v2773
    %v4542 = vpack.c.b16 %v2782, %v2774
    %v4543 = vpack.c.b16 %v2783, %v2775
    %v4544 = vpack.c.b16 %v2784, %v2776
    %v4545 = vpack.c.b16 %v2793, %v2785
    %v4546 = vpack.c.b16 %v2794, %v2786
    %v4547 = vpack.c.b16 %v2795, %v2787
    %v4548 = vpack.c.b16 %v2796, %v2788
    %v4549 = vpack.c.b16 %v2797, %v2789
    %v4550 = vpack.c.b16 %v2798, %v2790
    %v4551 = vpack.c.b16 %v2799, %v2791
    %v4552 = vpack.c.b16 %v2800, %v2792
    %v4553 = vpack.c.b16 %v2809, %v2801
    %v4554 = vpack.c.b16 %v2810, %v2802
    %v4555 = vpack.c.b16 %v2811, %v2803
    %v4556 = vpack.c.b16 %v2812, %v2804
    %v4557 = vpack.c.b16 %v2813, %v2805
    %v4558 = vpack.c.b16 %v2814, %v2806
    %v4559 = vpack.c.b16 %v2815, %v2807
    %v4560 = vpack.c.b16 %v2816, %v2808
    %v4561 = vpack.c.b16 %v2825, %v2817
    %v4562 = vpack.c.b16 %v2826, %v2818
    %v4563 = vpack.c.b16 %v2827, %v2819
    %v4564 = vpack.c.b16 %v2828, %v2820
    %v4565 = vpack.c.b16 %v2829, %v2821
    %v4566 = vpack.c.b16 %v2830, %v2822
    %v4567 = vpack.c.b16 %v2831, %v2823
    %v4568 = vpack.c.b16 %v2832, %v2824
    %v4569 = vpack.c.b16 %v2841, %v2833
    %v4570 = vpack.c.b16 %v2842, %v2834
    %v4571 = vpack.c.b16 %v2843, %v2835
    %v4572 = vpack.c.b16 %v2844, %v2836
    %v4573 = vpack.c.b16 %v2845, %v2837
    %v4574 = vpack.c.b16 %v2846, %v2838
    %v4575 = vpack.c.b16 %v2847, %v2839
    %v4576 = vpack.c.b16 %v2848, %v2840
    %v4577 = vpack.c.b16 %v2857, %v2849
    %v4578 = vpack.c.b16 %v2858, %v2850
    %v4579 = vpack.c.b16 %v2859, %v2851
    %v4580 = vpack.c.b16 %v2860, %v2852
    %v4581 = vpack.c.b16 %v2861, %v2853
    %v4582 = vpack.c.b16 %v2862, %v2854
    %v4583 = vpack.c.b16 %v2863, %v2855
    %v4584 = vpack.c.b16 %v2864, %v2856
    %v4585 = vpack.c.b16 %v2873, %v2865
    %v4586 = vpack.c.b16 %v2874, %v2866
    %v4587 = vpack.c.b16 %v2875, %v2867
    %v4588 = vpack.c.b16 %v2876, %v2868
    %v4589 = vpack.c.b16 %v2877, %v2869
    %v4590 = vpack.c.b16 %v2878, %v2870
    %v4591 = vpack.c.b16 %v2879, %v2871
    %v4592 = vpack.c.b16 %v2880, %v2872
    %v4593 = vpack.c.b16 %v2889, %v2881
    %v4594 = vpack.c.b16 %v2890, %v2882
    %v4595 = vpack.c.b16 %v2891, %v2883
    %v4596 = vpack.c.b16 %v2892, %v2884
    %v4597 = vpack.c.b16 %v2893, %v2885
    %v4598 = vpack.c.b16 %v2894, %v2886
    %v4599 = vpack.c.b16 %v2895, %v2887
    %v4600 = vpack.c.b16 %v2896, %v2888
    %v4601 = vpack.c.b16 %v2905, %v2897
    %v4602 = vpack.c.b16 %v2906, %v2898
    %v4603 = vpack.c.b16 %v2907, %v2899
    %v4604 = vpack.c.b16 %v2908, %v2900
    %v4605 = vpack.c.b16 %v2909, %v2901
    %v4606 = vpack.c.b16 %v2910, %v2902
    %v4607 = vpack.c.b16 %v2911, %v2903
    %v4608 = vpack.c.b16 %v2912, %v2904
    %v4609 = vpack.c.b16 %v2921, %v2913
    %v4610 = vpack.c.b16 %v2922, %v2914
    %v4611 = vpack.c.b16 %v2923, %v2915
    %v4612 = vpack.c.b16 %v2924, %v2916
    %v4613 = vpack.c.b16 %v2925, %v2917
    %v4614 = vpack.c.b16 %v2926, %v2918
    %v4615 = vpack.c.b16 %v2927, %v2919
    %v4616 = vpack.c.b16 %v2928, %v2920
    %v4617 = vpack.c.b16 %v2937, %v2929
    %v4618 = vpack.c.b16 %v2938, %v2930
    %v4619 = vpack.c.b16 %v2939, %v2931
    %v4620 = vpack.c.b16 %v2940, %v2932
    %v4621 = vpack.c.b16 %v2941, %v2933
    %v4622 = vpack.c.b16 %v2942, %v2934
    %v4623 = vpack.c.b16 %v2943, %v2935
    %v4624 = vpack.c.b16 %v2944, %v2936
    %v4625 = vpack.c.b16 %v2953, %v2945
    %v4626 = vpack.c.b16 %v2954, %v2946
    %v4627 = vpack.c.b16 %v2955, %v2947
    %v4628 = vpack.c.b16 %v2956, %v2948
    %v4629 = vpack.c.b16 %v2957, %v2949
    %v4630 = vpack.c.b16 %v2958, %v2950
    %v4631 = vpack.c.b16 %v2959, %v2951
    %v4632 = vpack.c.b16 %v2960, %v2952
    %v4633 = vpack.c.b16 %v2969, %v2961
    %v4634 = vpack.c.b16 %v2970, %v2962
    %v4635 = vpack.c.b16 %v2971, %v2963
    %v4636 = vpack.c.b16 %v2972, %v2964
    %v4637 = vpack.c.b16 %v2973, %v2965
    %v4638 = vpack.c.b16 %v2974, %v2966
    %v4639 = vpack.c.b16 %v2975, %v2967
    %v4640 = vpack.c.b16 %v2976, %v2968
    %v4641 = vpack.c.b16 %v2985, %v2977
    %v4642 = vpack.c.b16 %v2986, %v2978
    %v4643 = vpack.c.b16 %v2987, %v2979
    %v4644 = vpack.c.b16 %v2988, %v2980
    %v4645 = vpack.c.b16 %v2989, %v2981
    %v4646 = vpack.c.b16 %v2990, %v2982
    %v4647 = vpack.c.b16 %v2991, %v2983
    %v4648 = vpack.c.b16 %v2992, %v2984
    %v4649 = vpack.c.b16 %v3001, %v2993
    %v4650 = vpack.c.b16 %v3002, %v2994
    %v4651 = vpack.c.b16 %v3003, %v2995
    %v4652 = vpack.c.b16 %v3004, %v2996
    %v4653 = vpack.c.b16 %v3005, %v2997
    %v4654 = vpack.c.b16 %v3006, %v2998
    %v4655 = vpack.c.b16 %v3007, %v2999
    %v4656 = vpack.c.b16 %v3008, %v3000
    %v4657 = vpack.c.b16 %v3017, %v3009
    %v4658 = vpack.c.b16 %v3018, %v3010
    %v4659 = vpack.c.b16 %v3019, %v3011
    %v4660 = vpack.c.b16 %v3020, %v3012
    %v4661 = vpack.c.b16 %v3021, %v3013
    %v4662 = vpack.c.b16 %v3022, %v3014
    %v4663 = vpack.c.b16 %v3023, %v3015
    %v4664 = vpack.c.b16 %v3024, %v3016
    %v4665 = vpack.c.b16 %v3033, %v3025
    %v4666 = vpack.c.b16 %v3034, %v3026
    %v4667 = vpack.c.b16 %v3035, %v3027
    %v4668 = vpack.c.b16 %v3036, %v3028
    %v4669 = vpack.c.b16 %v3037, %v3029
    %v4670 = vpack.c.b16 %v3038, %v3030
    %v4671 = vpack.c.b16 %v3039, %v3031
    %v4672 = vpack.c.b16 %v3040, %v3032
    %v4673 = vpack.c.b16 %v3049, %v3041
    %v4674 = vpack.c.b16 %v3050, %v3042
    %v4675 = vpack.c.b16 %v3051, %v3043
    %v4676 = vpack.c.b16 %v3052, %v3044
    %v4677 = vpack.c.b16 %v3053, %v3045
    %v4678 = vpack.c.b16 %v3054, %v3046
    %v4679 = vpack.c.b16 %v3055, %v3047
    %v4680 = vpack.c.b16 %v3056, %v3048
    %v4681 = vpack.c.b16 %v3065, %v3057
    %v4682 = vpack.c.b16 %v3066, %v3058
    %v4683 = vpack.c.b16 %v3067, %v3059
    %v4684 = vpack.c.b16 %v3068, %v3060
    %v4685 = vpack.c.b16 %v3069, %v3061
    %v4686 = vpack.c.b16 %v3070, %v3062
    %v4687 = vpack.c.b16 %v3071, %v3063
    %v4688 = vpack.c.b16 %v3072, %v3064
    %v4689 = vpack.c.b16 %v3081, %v3073
    %v4690 = vpack.c.b16 %v3082, %v3074
    %v4691 = vpack.c.b16 %v3083, %v3075
    %v4692 = vpack.c.b16 %v3084, %v3076
    %v4693 = vpack.c.b16 %v3085, %v3077
    %v4694 = vpack.c.b16 %v3086, %v3078
    %v4695 = vpack.c.b16 %v3087, %v3079
    %v4696 = vpack.c.b16 %v3088, %v3080
    %v4697 = vpack.c.b16 %v3097, %v3089
    %v4698 = vpack.c.b16 %v3098, %v3090
    %v4699 = vpack.c.b16 %v3099, %v3091
    %v4700 = vpack.c.b16 %v3100, %v3092
    %v4701 = vpack.c.b16 %v3101, %v3093
    %v4702 = vpack.c.b16 %v3102, %v3094
    %v4703 = vpack.c.b16 %v3103, %v3095
    %v4704 = vpack.c.b16 %v3104, %v3096
    %v4705 = vpack.c.b16 %v3113, %v3105
    %v4706 = vpack.c.b16 %v3114, %v3106
    %v4707 = vpack.c.b16 %v3115, %v3107
    %v4708 = vpack.c.b16 %v3116, %v3108
    %v4709 = vpack.c.b16 %v3117, %v3109
    %v4710 = vpack.c.b16 %v3118, %v3110
    %v4711 = vpack.c.b16 %v3119, %v3111
    %v4712 = vpack.c.b16 %v3120, %v3112
    %v4713 = vpack.c.b16 %v3129, %v3121
    %v4714 = vpack.c.b16 %v3130, %v3122
    %v4715 = vpack.c.b16 %v3131, %v3123
    %v4716 = vpack.c.b16 %v3132, %v3124
    %v4717 = vpack.c.b16 %v3133, %v3125
    %v4718 = vpack.c.b16 %v3134, %v3126
    %v4719 = vpack.c.b16 %v3135, %v3127
    %v4720 = vpack.c.b16 %v3136, %v3128
    %v4721 = vpack.c.b16 %v3145, %v3137
    %v4722 = vpack.c.b16 %v3146, %v3138
    %v4723 = vpack.c.b16 %v3147, %v3139
    %v4724 = vpack.c.b16 %v3148, %v3140
    %v4725 = vpack.c.b16 %v3149, %v3141
    %v4726 = vpack.c.b16 %v3150, %v3142
    %v4727 = vpack.c.b16 %v3151, %v3143
    %v4728 = vpack.c.b16 %v3152, %v3144
    %v4729 = vpack.c.b16 %v3161, %v3153
    %v4730 = vpack.c.b16 %v3162, %v3154
    %v4731 = vpack.c.b16 %v3163, %v3155
    %v4732 = vpack.c.b16 %v3164, %v3156
    %v4733 = vpack.c.b16 %v3165, %v3157
    %v4734 = vpack.c.b16 %v3166, %v3158
    %v4735 = vpack.c.b16 %v3167, %v3159
    %v4736 = vpack.c.b16 %v3168, %v3160
    %v4737 = vpack.c.b16 %v3177, %v3169
    %v4738 = vpack.c.b16 %v3178, %v3170
    %v4739 = vpack.c.b16 %v3179, %v3171
    %v4740 = vpack.c.b16 %v3180, %v3172
    %v4741 = vpack.c.b16 %v3181, %v3173
    %v4742 = vpack.c.b16 %v3182, %v3174
    %v4743 = vpack.c.b16 %v3183, %v3175
    %v4744 = vpack.c.b16 %v3184, %v3176
    %v4745 = vpack.c.b16 %v3193, %v3185
    %v4746 = vpack.c.b16 %v3194, %v3186
    %v4747 = vpack.c.b16 %v3195, %v3187
    %v4748 = vpack.c.b16 %v3196, %v3188
    %v4749 = vpack.c.b16 %v3197, %v3189
    %v4750 = vpack.c.b16 %v3198, %v3190
    %v4751 = vpack.c.b16 %v3199, %v3191
    %v4752 = vpack.c.b16 %v3200, %v3192
    %v4753 = vpack.c.b16 %v3209, %v3201
    %v4754 = vpack.c.b16 %v3210, %v3202
    %v4755 = vpack.c.b16 %v3211, %v3203
    %v4756 = vpack.c.b16 %v3212, %v3204
    %v4757 = vpack.c.b16 %v3213, %v3205
    %v4758 = vpack.c.b16 %v3214, %v3206
    %v4759 = vpack.c.b16 %v3215, %v3207
    %v4760 = vpack.c.b16 %v3216, %v3208
    %v4761 = vpack.c.b16 %v3225, %v3217
    %v4762 = vpack.c.b16 %v3226, %v3218
    %v4763 = vpack.c.b16 %v3227, %v3219
    %v4764 = vpack.c.b16 %v3228, %v3220
    %v4765 = vpack.c.b16 %v3229, %v3221
    %v4766 = vpack.c.b16 %v3230, %v3222
    %v4767 = vpack.c.b16 %v3231, %v3223
    %v4768 = vpack.c.b16 %v3232, %v3224
    %v4769 = vpack.c.b16 %v3241, %v3233
    %v4770 = vpack.c.b16 %v3242, %v3234
    %v4771 = vpack.c.b16 %v3243, %v3235
    %v4772 = vpack.c.b16 %v3244, %v3236
    %v4773 = vpack.c.b16 %v3245, %v3237
    %v4774 = vpack.c.b16 %v3246, %v3238
    %v4775 = vpack.c.b16 %v3247, %v3239
    %v4776 = vpack.c.b16 %v3248, %v3240
    %v4777 = vpack.c.b16 %v3257, %v3249
    %v4778 = vpack.c.b16 %v3258, %v3250
    %v4779 = vpack.c.b16 %v3259, %v3251
    %v4780 = vpack.c.b16 %v3260, %v3252
    %v4781 = vpack.c.b16 %v3261, %v3253
    %v4782 = vpack.c.b16 %v3262, %v3254
    %v4783 = vpack.c.b16 %v3263, %v3255
    %v4784 = vpack.c.b16 %v3264, %v3256
    %v4785 = vpack.c.b16 %v3273, %v3265
    %v4786 = vpack.c.b16 %v3274, %v3266
    %v4787 = vpack.c.b16 %v3275, %v3267
    %v4788 = vpack.c.b16 %v3276, %v3268
    %v4789 = vpack.c.b16 %v3277, %v3269
    %v4790 = vpack.c.b16 %v3278, %v3270
    %v4791 = vpack.c.b16 %v3279, %v3271
    %v4792 = vpack.c.b16 %v3280, %v3272
    %v4793 = vpack.c.b16 %v3289, %v3281
    %v4794 = vpack.c.b16 %v3290, %v3282
    %v4795 = vpack.c.b16 %v3291, %v3283
    %v4796 = vpack.c.b16 %v3292, %v3284
    %v4797 = vpack.c.b16 %v3293, %v3285
    %v4798 = vpack.c.b16 %v3294, %v3286
    %v4799 = vpack.c.b16 %v3295, %v3287
    %v4800 = vpack.c.b16 %v3296, %v3288
    %v4801 = vpack.c.b16 %v3305, %v3297
    %v4802 = vpack.c.b16 %v3306, %v3298
    %v4803 = vpack.c.b16 %v3307, %v3299
    %v4804 = vpack.c.b16 %v3308, %v3300
    %v4805 = vpack.c.b16 %v3309, %v3301
    %v4806 = vpack.c.b16 %v3310, %v3302
    %v4807 = vpack.c.b16 %v3311, %v3303
    %v4808 = vpack.c.b16 %v3312, %v3304
    %v4809 = vpack.c.b16 %v3321, %v3313
    %v4810 = vpack.c.b16 %v3322, %v3314
    %v4811 = vpack.c.b16 %v3323, %v3315
    %v4812 = vpack.c.b16 %v3324, %v3316
    %v4813 = vpack.c.b16 %v3325, %v3317
    %v4814 = vpack.c.b16 %v3326, %v3318
    %v4815 = vpack.c.b16 %v3327, %v3319
    %v4816 = vpack.c.b16 %v3328, %v3320
    %v4817 = vpack.c.b16 %v3337, %v3329
    %v4818 = vpack.c.b16 %v3338, %v3330
    %v4819 = vpack.c.b16 %v3339, %v3331
    %v4820 = vpack.c.b16 %v3340, %v3332
    %v4821 = vpack.c.b16 %v3341, %v3333
    %v4822 = vpack.c.b16 %v3342, %v3334
    %v4823 = vpack.c.b16 %v3343, %v3335
    %v4824 = vpack.c.b16 %v3344, %v3336
    %v4825 = vpack.c.b16 %v3353, %v3345
    %v4826 = vpack.c.b16 %v3354, %v3346
    %v4827 = vpack.c.b16 %v3355, %v3347
    %v4828 = vpack.c.b16 %v3356, %v3348
    %v4829 = vpack.c.b16 %v3357, %v3349
    %v4830 = vpack.c.b16 %v3358, %v3350
    %v4831 = vpack.c.b16 %v3359, %v3351
    %v4832 = vpack.c.b16 %v3360, %v3352
    %v4833 = vpack.c.b16 %v3369, %v3361
    %v4834 = vpack.c.b16 %v3370, %v3362
    %v4835 = vpack.c.b16 %v3371, %v3363
    %v4836 = vpack.c.b16 %v3372, %v3364
    %v4837 = vpack.c.b16 %v3373, %v3365
    %v4838 = vpack.c.b16 %v3374, %v3366
    %v4839 = vpack.c.b16 %v3375, %v3367
    %v4840 = vpack.c.b16 %v3376, %v3368
    %v4841 = vpack.c.b16 %v3385, %v3377
    %v4842 = vpack.c.b16 %v3386, %v3378
    %v4843 = vpack.c.b16 %v3387, %v3379
    %v4844 = vpack.c.b16 %v3388, %v3380
    %v4845 = vpack.c.b16 %v3389, %v3381
    %v4846 = vpack.c.b16 %v3390, %v3382
    %v4847 = vpack.c.b16 %v3391, %v3383
    %v4848 = vpack.c.b16 %v3392, %v3384
    %v4849 = vpack.c.b16 %v3401, %v3393
    %v4850 = vpack.c.b16 %v3402, %v3394
    %v4851 = vpack.c.b16 %v3403, %v3395
    %v4852 = vpack.c.b16 %v3404, %v3396
    %v4853 = vpack.c.b16 %v3405, %v3397
    %v4854 = vpack.c.b16 %v3406, %v3398
    %v4855 = vpack.c.b16 %v3407, %v3399
    %v4856 = vpack.c.b16 %v3408, %v3400
    %v4857 = vpack.c.b16 %v3417, %v3409
    %v4858 = vpack.c.b16 %v3418, %v3410
    %v4859 = vpack.c.b16 %v3419, %v3411
    %v4860 = vpack.c.b16 %v3420, %v3412
    %v4861 = vpack.c.b16 %v3421, %v3413
    %v4862 = vpack.c.b16 %v3422, %v3414
    %v4863 = vpack.c.b16 %v3423, %v3415
    %v4864 = vpack.c.b16 %v3424, %v3416
    %v4865 = vpack.c.b16 %v3433, %v3425
    %v4866 = vpack.c.b16 %v3434, %v3426
    %v4867 = vpack.c.b16 %v3435, %v3427
    %v4868 = vpack.c.b16 %v3436, %v3428
    %v4869 = vpack.c.b16 %v3437, %v3429
    %v4870 = vpack.c.b16 %v3438, %v3430
    %v4871 = vpack.c.b16 %v3439, %v3431
    %v4872 = vpack.c.b16 %v3440, %v3432
    %v4873 = vpack.c.b16 %v3449, %v3441
    %v4874 = vpack.c.b16 %v3450, %v3442
    %v4875 = vpack.c.b16 %v3451, %v3443
    %v4876 = vpack.c.b16 %v3452, %v3444
    %v4877 = vpack.c.b16 %v3453, %v3445
    %v4878 = vpack.c.b16 %v3454, %v3446
    %v4879 = vpack.c.b16 %v3455, %v3447
    %v4880 = vpack.c.b16 %v3456, %v3448
    %v4881 = vpack.c.b16 %v3465, %v3457
    %v4882 = vpack.c.b16 %v3466, %v3458
    %v4883 = vpack.c.b16 %v3467, %v3459
    %v4884 = vpack.c.b16 %v3468, %v3460
    %v4885 = vpack.c.b16 %v3469, %v3461
    %v4886 = vpack.c.b16 %v3470, %v3462
    %v4887 = vpack.c.b16 %v3471, %v3463
    %v4888 = vpack.c.b16 %v3472, %v3464
    %v4889 = vpack.c.b16 %v3481, %v3473
    %v4890 = vpack.c.b16 %v3482, %v3474
    %v4891 = vpack.c.b16 %v3483, %v3475
    %v4892 = vpack.c.b16 %v3484, %v3476
    %v4893 = vpack.c.b16 %v3485, %v3477
    %v4894 = vpack.c.b16 %v3486, %v3478
    %v4895 = vpack.c.b16 %v3487, %v3479
    %v4896 = vpack.c.b16 %v3488, %v3480
    %v4897 = vpack.c.b16 %v3497, %v3489
    %v4898 = vpack.c.b16 %v3498, %v3490
    %v4899 = vpack.c.b16 %v3499, %v3491
    %v4900 = vpack.c.b16 %v3500, %v3492
    %v4901 = vpack.c.b16 %v3501, %v3493
    %v4902 = vpack.c.b16 %v3502, %v3494
    %v4903 = vpack.c.b16 %v3503, %v3495
    %v4904 = vpack.c.b16 %v3504, %v3496
    %v4905 = vpack.c.b16 %v3513, %v3505
    %v4906 = vpack.c.b16 %v3514, %v3506
    %v4907 = vpack.c.b16 %v3515, %v3507
    %v4908 = vpack.c.b16 %v3516, %v3508
    %v4909 = vpack.c.b16 %v3517, %v3509
    %v4910 = vpack.c.b16 %v3518, %v3510
    %v4911 = vpack.c.b16 %v3519, %v3511
    %v4912 = vpack.c.b16 %v3520, %v3512
    %v4913 = vpack.c.b16 %v3529, %v3521
    %v4914 = vpack.c.b16 %v3530, %v3522
    %v4915 = vpack.c.b16 %v3531, %v3523
    %v4916 = vpack.c.b16 %v3532, %v3524
    %v4917 = vpack.c.b16 %v3533, %v3525
    %v4918 = vpack.c.b16 %v3534, %v3526
    %v4919 = vpack.c.b16 %v3535, %v3527
    %v4920 = vpack.c.b16 %v3536, %v3528
    %v4921 = vpack.c.b16 %v3545, %v3537
    %v4922 = vpack.c.b16 %v3546, %v3538
    %v4923 = vpack.c.b16 %v3547, %v3539
    %v4924 = vpack.c.b16 %v3548, %v3540
    %v4925 = vpack.c.b16 %v3549, %v3541
    %v4926 = vpack.c.b16 %v3550, %v3542
    %v4927 = vpack.c.b16 %v3551, %v3543
    %v4928 = vpack.c.b16 %v3552, %v3544
    %v4929 = vpack.c.b16 %v3561, %v3553
    %v4930 = vpack.c.b16 %v3562, %v3554
    %v4931 = vpack.c.b16 %v3563, %v3555
    %v4932 = vpack.c.b16 %v3564, %v3556
    %v4933 = vpack.c.b16 %v3565, %v3557
    %v4934 = vpack.c.b16 %v3566, %v3558
    %v4935 = vpack.c.b16 %v3567, %v3559
    %v4936 = vpack.c.b16 %v3568, %v3560
    %v4937 = vpack.c.b16 %v3577, %v3569
    %v4938 = vpack.c.b16 %v3578, %v3570
    %v4939 = vpack.c.b16 %v3579, %v3571
    %v4940 = vpack.c.b16 %v3580, %v3572
    %v4941 = vpack.c.b16 %v3581, %v3573
    %v4942 = vpack.c.b16 %v3582, %v3574
    %v4943 = vpack.c.b16 %v3583, %v3575
    %v4944 = vpack.c.b16 %v3584, %v3576
    %v4945 = vpack.c.b16 %v3593, %v3585
    %v4946 = vpack.c.b16 %v3594, %v3586
    %v4947 = vpack.c.b16 %v3595, %v3587
    %v4948 = vpack.c.b16 %v3596, %v3588
    %v4949 = vpack.c.b16 %v3597, %v3589
    %v4950 = vpack.c.b16 %v3598, %v3590
    %v4951 = vpack.c.b16 %v3599, %v3591
    %v4952 = vpack.c.b16 %v3600, %v3592
    %v4953 = vpack.c.b16 %v3609, %v3601
    %v4954 = vpack.c.b16 %v3610, %v3602
    %v4955 = vpack.c.b16 %v3611, %v3603
    %v4956 = vpack.c.b16 %v3612, %v3604
    %v4957 = vpack.c.b16 %v3613, %v3605
    %v4958 = vpack.c.b16 %v3614, %v3606
    %v4959 = vpack.c.b16 %v3615, %v3607
    %v4960 = vpack.c.b16 %v3616, %v3608
    %v4961 = vpack.c.b16 %v3625, %v3617
    %v4962 = vpack.c.b16 %v3626, %v3618
    %v4963 = vpack.c.b16 %v3627, %v3619
    %v4964 = vpack.c.b16 %v3628, %v3620
    %v4965 = vpack.c.b16 %v3629, %v3621
    %v4966 = vpack.c.b16 %v3630, %v3622
    %v4967 = vpack.c.b16 %v3631, %v3623
    %v4968 = vpack.c.b16 %v3632, %v3624
    %v4969 = vpack.c.b16 %v3641, %v3633
    %v4970 = vpack.c.b16 %v3642, %v3634
    %v4971 = vpack.c.b16 %v3643, %v3635
    %v4972 = vpack.c.b16 %v3644, %v3636
    %v4973 = vpack.c.b16 %v3645, %v3637
    %v4974 = vpack.c.b16 %v3646, %v3638
    %v4975 = vpack.c.b16 %v3647, %v3639
    %v4976 = vpack.c.b16 %v3648, %v3640
    %v4977 = vpack.c.b16 %v3657, %v3649
    %v4978 = vpack.c.b16 %v3658, %v3650
    %v4979 = vpack.c.b16 %v3659, %v3651
    %v4980 = vpack.c.b16 %v3660, %v3652
    %v4981 = vpack.c.b16 %v3661, %v3653
    %v4982 = vpack.c.b16 %v3662, %v3654
    %v4983 = vpack.c.b16 %v3663, %v3655
    %v4984 = vpack.c.b16 %v3664, %v3656
    %v4985 = vpack.c.b16 %v3673, %v3665
    %v4986 = vpack.c.b16 %v3674, %v3666
    %v4987 = vpack.c.b16 %v3675, %v3667
    %v4988 = vpack.c.b16 %v3676, %v3668
    %v4989 = vpack.c.b16 %v3677, %v3669
    %v4990 = vpack.c.b16 %v3678, %v3670
    %v4991 = vpack.c.b16 %v3679, %v3671
    %v4992 = vpack.c.b16 %v3680, %v3672
    %v4993 = vpack.c.b16 %v3689, %v3681
    %v4994 = vpack.c.b16 %v3690, %v3682
    %v4995 = vpack.c.b16 %v3691, %v3683
    %v4996 = vpack.c.b16 %v3692, %v3684
    %v4997 = vpack.c.b16 %v3693, %v3685
    %v4998 = vpack.c.b16 %v3694, %v3686
    %v4999 = vpack.c.b16 %v3695, %v3687
    %v5000 = vpack.c.b16 %v3696, %v3688
    %v5001 = vpack.c.b16 %v3705, %v3697
    %v5002 = vpack.c.b16 %v3706, %v3698
    %v5003 = vpack.c.b16 %v3707, %v3699
    %v5004 = vpack.c.b16 %v3708, %v3700
    %v5005 = vpack.c.b16 %v3709, %v3701
    %v5006 = vpack.c.b16 %v3710, %v3702
    %v5007 = vpack.c.b16 %v3711, %v3703
    %v5008 = vpack.c.b16 %v3712, %v3704
    %v5009 = vpack.c.b16 %v3721, %v3713
    %v5010 = vpack.c.b16 %v3722, %v3714
    %v5011 = vpack.c.b16 %v3723, %v3715
    %v5012 = vpack.c.b16 %v3724, %v3716
    %v5013 = vpack.c.b16 %v3725, %v3717
    %v5014 = vpack.c.b16 %v3726, %v3718
    %v5015 = vpack.c.b16 %v3727, %v3719
    %v5016 = vpack.c.b16 %v3728, %v3720
    %v5017 = vpack.c.b16 %v3737, %v3729
    %v5018 = vpack.c.b16 %v3738, %v3730
    %v5019 = vpack.c.b16 %v3739, %v3731
    %v5020 = vpack.c.b16 %v3740, %v3732
    %v5021 = vpack.c.b16 %v3741, %v3733
    %v5022 = vpack.c.b16 %v3742, %v3734
    %v5023 = vpack.c.b16 %v3743, %v3735
    %v5024 = vpack.c.b16 %v3744, %v3736
    %v5025 = vpack.c.b16 %v3753, %v3745
    %v5026 = vpack.c.b16 %v3754, %v3746
    %v5027 = vpack.c.b16 %v3755, %v3747
    %v5028 = vpack.c.b16 %v3756, %v3748
    %v5029 = vpack.c.b16 %v3757, %v3749
    %v5030 = vpack.c.b16 %v3758, %v3750
    %v5031 = vpack.c.b16 %v3759, %v3751
    %v5032 = vpack.c.b16 %v3760, %v3752
    %v5033 = vpack.c.b16 %v3769, %v3761
    %v5034 = vpack.c.b16 %v3770, %v3762
    %v5035 = vpack.c.b16 %v3771, %v3763
    %v5036 = vpack.c.b16 %v3772, %v3764
    %v5037 = vpack.c.b16 %v3773, %v3765
    %v5038 = vpack.c.b16 %v3774, %v3766
    %v5039 = vpack.c.b16 %v3775, %v3767
    %v5040 = vpack.c.b16 %v3776, %v3768
    %v5041 = vpack.c.b16 %v3785, %v3777
    %v5042 = vpack.c.b16 %v3786, %v3778
    %v5043 = vpack.c.b16 %v3787, %v3779
    %v5044 = vpack.c.b16 %v3788, %v3780
    %v5045 = vpack.c.b16 %v3789, %v3781
    %v5046 = vpack.c.b16 %v3790, %v3782
    %v5047 = vpack.c.b16 %v3791, %v3783
    %v5048 = vpack.c.b16 %v3792, %v3784
    %v5049 = vpack.c.b16 %v3801, %v3793
    %v5050 = vpack.c.b16 %v3802, %v3794
    %v5051 = vpack.c.b16 %v3803, %v3795
    %v5052 = vpack.c.b16 %v3804, %v3796
    %v5053 = vpack.c.b16 %v3805, %v3797
    %v5054 = vpack.c.b16 %v3806, %v3798
    %v5055 = vpack.c.b16 %v3807, %v3799
    %v5056 = vpack.c.b16 %v3808, %v3800
    %v5057 = vpack.c.b16 %v3817, %v3809
    %v5058 = vpack.c.b16 %v3818, %v3810
    %v5059 = vpack.c.b16 %v3819, %v3811
    %v5060 = vpack.c.b16 %v3820, %v3812
    %v5061 = vpack.c.b16 %v3821, %v3813
    %v5062 = vpack.c.b16 %v3822, %v3814
    %v5063 = vpack.c.b16 %v3823, %v3815
    %v5064 = vpack.c.b16 %v3824, %v3816
    %v5065 = vpack.c.b16 %v3833, %v3825
    %v5066 = vpack.c.b16 %v3834, %v3826
    %v5067 = vpack.c.b16 %v3835, %v3827
    %v5068 = vpack.c.b16 %v3836, %v3828
    %v5069 = vpack.c.b16 %v3837, %v3829
    %v5070 = vpack.c.b16 %v3838, %v3830
    %v5071 = vpack.c.b16 %v3839, %v3831
    %v5072 = vpack.c.b16 %v3840, %v3832
    %v5073 = vpack.c.b16 %v3849, %v3841
    %v5074 = vpack.c.b16 %v3850, %v3842
    %v5075 = vpack.c.b16 %v3851, %v3843
    %v5076 = vpack.c.b16 %v3852, %v3844
    %v5077 = vpack.c.b16 %v3853, %v3845
    %v5078 = vpack.c.b16 %v3854, %v3846
    %v5079 = vpack.c.b16 %v3855, %v3847
    %v5080 = vpack.c.b16 %v3856, %v3848
    %v5081 = vpack.c.b16 %v3865, %v3857
    %v5082 = vpack.c.b16 %v3866, %v3858
    %v5083 = vpack.c.b16 %v3867, %v3859
    %v5084 = vpack.c.b16 %v3868, %v3860
    %v5085 = vpack.c.b16 %v3869, %v3861
    %v5086 = vpack.c.b16 %v3870, %v3862
    %v5087 = vpack.c.b16 %v3871, %v3863
    %v5088 = vpack.c.b16 %v3872, %v3864
    %v5089 = vpack.c.b16 %v3881, %v3873
    %v5090 = vpack.c.b16 %v3882, %v3874
    %v5091 = vpack.c.b16 %v3883, %v3875
    %v5092 = vpack.c.b16 %v3884, %v3876
    %v5093 = vpack.c.b16 %v3885, %v3877
    %v5094 = vpack.c.b16 %v3886, %v3878
    %v5095 = vpack.c.b16 %v3887, %v3879
    %v5096 = vpack.c.b16 %v3888, %v3880
    %v5097 = vpack.c.b16 %v3897, %v3889
    %v5098 = vpack.c.b16 %v3898, %v3890
    %v5099 = vpack.c.b16 %v3899, %v3891
    %v5100 = vpack.c.b16 %v3900, %v3892
    %v5101 = vpack.c.b16 %v3901, %v3893
    %v5102 = vpack.c.b16 %v3902, %v3894
    %v5103 = vpack.c.b16 %v3903, %v3895
    %v5104 = vpack.c.b16 %v3904, %v3896
    %v5105 = vpack.c.b16 %v3913, %v3905
    %v5106 = vpack.c.b16 %v3914, %v3906
    %v5107 = vpack.c.b16 %v3915, %v3907
    %v5108 = vpack.c.b16 %v3916, %v3908
    %v5109 = vpack.c.b16 %v3917, %v3909
    %v5110 = vpack.c.b16 %v3918, %v3910
    %v5111 = vpack.c.b16 %v3919, %v3911
    %v5112 = vpack.c.b16 %v3920, %v3912
    %v5113 = vpack.c.b16 %v3929, %v3921
    %v5114 = vpack.c.b16 %v3930, %v3922
    %v5115 = vpack.c.b16 %v3931, %v3923
    %v5116 = vpack.c.b16 %v3932, %v3924
    %v5117 = vpack.c.b16 %v3933, %v3925
    %v5118 = vpack.c.b16 %v3934, %v3926
    %v5119 = vpack.c.b16 %v3935, %v3927
    %v5120 = vpack.c.b16 %v3936, %v3928
    %v5121 = vpack.c.b16 %v3945, %v3937
    %v5122 = vpack.c.b16 %v3946, %v3938
    %v5123 = vpack.c.b16 %v3947, %v3939
    %v5124 = vpack.c.b16 %v3948, %v3940
    %v5125 = vpack.c.b16 %v3949, %v3941
    %v5126 = vpack.c.b16 %v3950, %v3942
    %v5127 = vpack.c.b16 %v3951, %v3943
    %v5128 = vpack.c.b16 %v3952, %v3944
    %v5129 = vpack.c.b16 %v3961, %v3953
    %v5130 = vpack.c.b16 %v3962, %v3954
    %v5131 = vpack.c.b16 %v3963, %v3955
    %v5132 = vpack.c.b16 %v3964, %v3956
    %v5133 = vpack.c.b16 %v3965, %v3957
    %v5134 = vpack.c.b16 %v3966, %v3958
    %v5135 = vpack.c.b16 %v3967, %v3959
    %v5136 = vpack.c.b16 %v3968, %v3960
    %v5137 = vpack.c.b16 %v3977, %v3969
    %v5138 = vpack.c.b16 %v3978, %v3970
    %v5139 = vpack.c.b16 %v3979, %v3971
    %v5140 = vpack.c.b16 %v3980, %v3972
    %v5141 = vpack.c.b16 %v3981, %v3973
    %v5142 = vpack.c.b16 %v3982, %v3974
    %v5143 = vpack.c.b16 %v3983, %v3975
    %v5144 = vpack.c.b16 %v3984, %v3976
    %v5145 = vpack.c.b16 %v3993, %v3985
    %v5146 = vpack.c.b16 %v3994, %v3986
    %v5147 = vpack.c.b16 %v3995, %v3987
    %v5148 = vpack.c.b16 %v3996, %v3988
    %v5149 = vpack.c.b16 %v3997, %v3989
    %v5150 = vpack.c.b16 %v3998, %v3990
    %v5151 = vpack.c.b16 %v3999, %v3991
    %v5152 = vpack.c.b16 %v4000, %v3992
    %v5153 = vpack.c.b16 %v4009, %v4001
    %v5154 = vpack.c.b16 %v4010, %v4002
    %v5155 = vpack.c.b16 %v4011, %v4003
    %v5156 = vpack.c.b16 %v4012, %v4004
    %v5157 = vpack.c.b16 %v4013, %v4005
    %v5158 = vpack.c.b16 %v4014, %v4006
    %v5159 = vpack.c.b16 %v4015, %v4007
    %v5160 = vpack.c.b16 %v4016, %v4008
    %v5161 = vpack.c.b16 %v4025, %v4017
    %v5162 = vpack.c.b16 %v4026, %v4018
    %v5163 = vpack.c.b16 %v4027, %v4019
    %v5164 = vpack.c.b16 %v4028, %v4020
    %v5165 = vpack.c.b16 %v4029, %v4021
    %v5166 = vpack.c.b16 %v4030, %v4022
    %v5167 = vpack.c.b16 %v4031, %v4023
    %v5168 = vpack.c.b16 %v4032, %v4024
    %v5169 = vpack.c.b16 %v4041, %v4033
    %v5170 = vpack.c.b16 %v4042, %v4034
    %v5171 = vpack.c.b16 %v4043, %v4035
    %v5172 = vpack.c.b16 %v4044, %v4036
    %v5173 = vpack.c.b16 %v4045, %v4037
    %v5174 = vpack.c.b16 %v4046, %v4038
    %v5175 = vpack.c.b16 %v4047, %v4039
    %v5176 = vpack.c.b16 %v4048, %v4040
    %v5177 = vpack.c.b16 %v4057, %v4049
    %v5178 = vpack.c.b16 %v4058, %v4050
    %v5179 = vpack.c.b16 %v4059, %v4051
    %v5180 = vpack.c.b16 %v4060, %v4052
    %v5181 = vpack.c.b16 %v4061, %v4053
    %v5182 = vpack.c.b16 %v4062, %v4054
    %v5183 = vpack.c.b16 %v4063, %v4055
    %v5184 = vpack.c.b16 %v4064, %v4056
    %v5185 = vpack.c.b16 %v4073, %v4065
    %v5186 = vpack.c.b16 %v4074, %v4066
    %v5187 = vpack.c.b16 %v4075, %v4067
    %v5188 = vpack.c.b16 %v4076, %v4068
    %v5189 = vpack.c.b16 %v4077, %v4069
    %v5190 = vpack.c.b16 %v4078, %v4070
    %v5191 = vpack.c.b16 %v4079, %v4071
    %v5192 = vpack.c.b16 %v4080, %v4072
    %v5193 = vpack.c.b16 %v4089, %v4081
    %v5194 = vpack.c.b16 %v4090, %v4082
    %v5195 = vpack.c.b16 %v4091, %v4083
    %v5196 = vpack.c.b16 %v4092, %v4084
    %v5197 = vpack.c.b16 %v4093, %v4085
    %v5198 = vpack.c.b16 %v4094, %v4086
    %v5199 = vpack.c.b16 %v4095, %v4087
    %v5200 = vpack.c.b16 %v4096, %v4088
    %v5201 = vpack.c.b16 %v4105, %v4097
    %v5202 = vpack.c.b16 %v4106, %v4098
    %v5203 = vpack.c.b16 %v4107, %v4099
    %v5204 = vpack.c.b16 %v4108, %v4100
    %v5205 = vpack.c.b16 %v4109, %v4101
    %v5206 = vpack.c.b16 %v4110, %v4102
    %v5207 = vpack.c.b16 %v4111, %v4103
    %v5208 = vpack.c.b16 %v4112, %v4104
    %v5209 = vpack.c.b16 %v4121, %v4113
    %v5210 = vpack.c.b16 %v4122, %v4114
    %v5211 = vpack.c.b16 %v4123, %v4115
    %v5212 = vpack.c.b16 %v4124, %v4116
    %v5213 = vpack.c.b16 %v4125, %v4117
    %v5214 = vpack.c.b16 %v4126, %v4118
    %v5215 = vpack.c.b16 %v4127, %v4119
    %v5216 = vpack.c.b16 %v4128, %v4120
    %v5217 = vpack.c.b16 %v4137, %v4129
    %v5218 = vpack.c.b16 %v4138, %v4130
    %v5219 = vpack.c.b16 %v4139, %v4131
    %v5220 = vpack.c.b16 %v4140, %v4132
    %v5221 = vpack.c.b16 %v4141, %v4133
    %v5222 = vpack.c.b16 %v4142, %v4134
    %v5223 = vpack.c.b16 %v4143, %v4135
    %v5224 = vpack.c.b16 %v4144, %v4136
    %v5225 = vpack.c.b16 %v4153, %v4145
    %v5226 = vpack.c.b16 %v4154, %v4146
    %v5227 = vpack.c.b16 %v4155, %v4147
    %v5228 = vpack.c.b16 %v4156, %v4148
    %v5229 = vpack.c.b16 %v4157, %v4149
    %v5230 = vpack.c.b16 %v4158, %v4150
    %v5231 = vpack.c.b16 %v4159, %v4151
    %v5232 = vpack.c.b16 %v4160, %v4152
    %v5233 = vpack.c.b16 %v4169, %v4161
    %v5234 = vpack.c.b16 %v4170, %v4162
    %v5235 = vpack.c.b16 %v4171, %v4163
    %v5236 = vpack.c.b16 %v4172, %v4164
    %v5237 = vpack.c.b16 %v4173, %v4165
    %v5238 = vpack.c.b16 %v4174, %v4166
    %v5239 = vpack.c.b16 %v4175, %v4167
    %v5240 = vpack.c.b16 %v4176, %v4168
    %v5241 = vpack.c.b16 %v4185, %v4177
    %v5242 = vpack.c.b16 %v4186, %v4178
    %v5243 = vpack.c.b16 %v4187, %v4179
    %v5244 = vpack.c.b16 %v4188, %v4180
    %v5245 = vpack.c.b16 %v4189, %v4181
    %v5246 = vpack.c.b16 %v4190, %v4182
    %v5247 = vpack.c.b16 %v4191, %v4183
    %v5248 = vpack.c.b16 %v4192, %v4184
    %v5249 = vpack.c.b16 %v4201, %v4193
    %v5250 = vpack.c.b16 %v4202, %v4194
    %v5251 = vpack.c.b16 %v4203, %v4195
    %v5252 = vpack.c.b16 %v4204, %v4196
    %v5253 = vpack.c.b16 %v4205, %v4197
    %v5254 = vpack.c.b16 %v4206, %v4198
    %v5255 = vpack.c.b16 %v4207, %v4199
    %v5256 = vpack.c.b16 %v4208, %v4200
    %v5257 = vpack.c.b16 %v4217, %v4209
    %v5258 = vpack.c.b16 %v4218, %v4210
    %v5259 = vpack.c.b16 %v4219, %v4211
    %v5260 = vpack.c.b16 %v4220, %v4212
    %v5261 = vpack.c.b16 %v4221, %v4213
    %v5262 = vpack.c.b16 %v4222, %v4214
    %v5263 = vpack.c.b16 %v4223, %v4215
    %v5264 = vpack.c.b16 %v4224, %v4216
    %v5265 = vpack.c.b16 %v4233, %v4225
    %v5266 = vpack.c.b16 %v4234, %v4226
    %v5267 = vpack.c.b16 %v4235, %v4227
    %v5268 = vpack.c.b16 %v4236, %v4228
    %v5269 = vpack.c.b16 %v4237, %v4229
    %v5270 = vpack.c.b16 %v4238, %v4230
    %v5271 = vpack.c.b16 %v4239, %v4231
    %v5272 = vpack.c.b16 %v4240, %v4232
    %v5273 = vpack.c.b16 %v4249, %v4241
    %v5274 = vpack.c.b16 %v4250, %v4242
    %v5275 = vpack.c.b16 %v4251, %v4243
    %v5276 = vpack.c.b16 %v4252, %v4244
    %v5277 = vpack.c.b16 %v4253, %v4245
    %v5278 = vpack.c.b16 %v4254, %v4246
    %v5279 = vpack.c.b16 %v4255, %v4247
    %v5280 = vpack.c.b16 %v4256, %v4248
    %6305 = vmatpush.bf16.msra.mxu0 %v4313
    %6306 = vmatpush.bf16.msra.mxu0 %v4305
    %6307 = vmatpush.bf16.msra.mxu0 %v4297
    %6308 = vmatpush.bf16.msra.mxu0 %v4289
    %6309 = vmatpush.bf16.msra.mxu0 %v4281
    %6310 = vmatpush.bf16.msra.mxu0 %v4273
    %6311 = vmatpush.bf16.msra.mxu0 %v4265
    %6312 = vmatpush.bf16.msra.mxu0 %v4257
    %6313 = vmatmul.bf16.gmra.mxu0 %v1153
    %v6314 = vpop.f32.mrf.mxu0
    %v6315 = vadd.f32 %v1113, %v6314
    %v6316 = vpop.f32.mrf.mxu0
    %6317 = vdwg.mxu0
    %6318 = vmatpush.bf16.msra.mxu0 %v4377
    %6319 = vmatpush.bf16.msra.mxu0 %v4369
    %6320 = vmatpush.bf16.msra.mxu0 %v4361
    %6321 = vmatpush.bf16.msra.mxu0 %v4353
    %6322 = vmatpush.bf16.msra.mxu0 %v4345
    %6323 = vmatpush.bf16.msra.mxu0 %v4337
    %6324 = vmatpush.bf16.msra.mxu0 %v4329
    %6325 = vmatpush.bf16.msra.mxu0 %v4321
    %6326 = vmatmul.bf16.gmra.mxu0 %v1154
    %v6327 = vpop.f32.mrf.mxu0
    %v6328 = vadd.f32 %v6315, %v6327
    %v6329 = vpop.f32.mrf.mxu0
    %6330 = vdwg.mxu0
    %6331 = vmatpush.bf16.msra.mxu0 %v4441
    %6332 = vmatpush.bf16.msra.mxu0 %v4433
    %6333 = vmatpush.bf16.msra.mxu0 %v4425
    %6334 = vmatpush.bf16.msra.mxu0 %v4417
    %6335 = vmatpush.bf16.msra.mxu0 %v4409
    %6336 = vmatpush.bf16.msra.mxu0 %v4401
    %6337 = vmatpush.bf16.msra.mxu0 %v4393
    %6338 = vmatpush.bf16.msra.mxu0 %v4385
    %6339 = vmatmul.bf16.gmra.mxu0 %v1155
    %v6340 = vpop.f32.mrf.mxu0
    %v6341 = vadd.f32 %v6328, %v6340
    %v6342 = vpop.f32.mrf.mxu0
    %6343 = vdwg.mxu0
    %6344 = vmatpush.bf16.msra.mxu0 %v4505
    %6345 = vmatpush.bf16.msra.mxu0 %v4497
    %6346 = vmatpush.bf16.msra.mxu0 %v4489
    %6347 = vmatpush.bf16.msra.mxu0 %v4481
    %6348 = vmatpush.bf16.msra.mxu0 %v4473
    %6349 = vmatpush.bf16.msra.mxu0 %v4465
    %6350 = vmatpush.bf16.msra.mxu0 %v4457
    %6351 = vmatpush.bf16.msra.mxu0 %v4449
    %6352 = vmatmul.bf16.gmra.mxu0 %v1156
    %v6353 = vpop.f32.mrf.mxu0
    %v6354 = vadd.f32 %v6341, %v6353
    %v6355 = vpop.f32.mrf.mxu0
    %6356 = vdwg.mxu0
    %6357 = vmatpush.bf16.msra.mxu0 %v4569
    %6358 = vmatpush.bf16.msra.mxu0 %v4561
    %6359 = vmatpush.bf16.msra.mxu0 %v4553
    %6360 = vmatpush.bf16.msra.mxu0 %v4545
    %6361 = vmatpush.bf16.msra.mxu0 %v4537
    %6362 = vmatpush.bf16.msra.mxu0 %v4529
    %6363 = vmatpush.bf16.msra.mxu0 %v4521
    %6364 = vmatpush.bf16.msra.mxu0 %v4513
    %6365 = vmatmul.bf16.gmra.mxu0 %v1157
    %v6366 = vpop.f32.mrf.mxu0
    %v6367 = vadd.f32 %v6354, %v6366
    %v6368 = vpop.f32.mrf.mxu0
    %6369 = vdwg.mxu0
    %6370 = vmatpush.bf16.msra.mxu0 %v4633
    %6371 = vmatpush.bf16.msra.mxu0 %v4625
    %6372 = vmatpush.bf16.msra.mxu0 %v4617
    %6373 = vmatpush.bf16.msra.mxu0 %v4609
    %6374 = vmatpush.bf16.msra.mxu0 %v4601
    %6375 = vmatpush.bf16.msra.mxu0 %v4593
    %6376 = vmatpush.bf16.msra.mxu0 %v4585
    %6377 = vmatpush.bf16.msra.mxu0 %v4577
    %6378 = vmatmul.bf16.gmra.mxu0 %v1158
    %v6379 = vpop.f32.mrf.mxu0
    %v6380 = vadd.f32 %v6367, %v6379
    %v6381 = vpop.f32.mrf.mxu0
    %6382 = vdwg.mxu0
    %6383 = vmatpush.bf16.msra.mxu0 %v4697
    %6384 = vmatpush.bf16.msra.mxu0 %v4689
    %6385 = vmatpush.bf16.msra.mxu0 %v4681
    %6386 = vmatpush.bf16.msra.mxu0 %v4673
    %6387 = vmatpush.bf16.msra.mxu0 %v4665
    %6388 = vmatpush.bf16.msra.mxu0 %v4657
    %6389 = vmatpush.bf16.msra.mxu0 %v4649
    %6390 = vmatpush.bf16.msra.mxu0 %v4641
    %6391 = vmatmul.bf16.gmra.mxu0 %v1159
    %v6392 = vpop.f32.mrf.mxu0
    %v6393 = vadd.f32 %v6380, %v6392
    %v6394 = vpop.f32.mrf.mxu0
    %6395 = vdwg.mxu0
    %6396 = vmatpush.bf16.msra.mxu0 %v4761
    %6397 = vmatpush.bf16.msra.mxu0 %v4753
    %6398 = vmatpush.bf16.msra.mxu0 %v4745
    %6399 = vmatpush.bf16.msra.mxu0 %v4737
    %6400 = vmatpush.bf16.msra.mxu0 %v4729
    %6401 = vmatpush.bf16.msra.mxu0 %v4721
    %6402 = vmatpush.bf16.msra.mxu0 %v4713
    %6403 = vmatpush.bf16.msra.mxu0 %v4705
    %6404 = vmatmul.bf16.gmra.mxu0 %v1160
    %v6405 = vpop.f32.mrf.mxu0
    %v6406 = vadd.f32 %v6393, %v6405
    %v6407 = vpop.f32.mrf.mxu0
    %6408 = vdwg.mxu0
    %6409 = vmatpush.bf16.msra.mxu0 %v4825
    %6410 = vmatpush.bf16.msra.mxu0 %v4817
    %6411 = vmatpush.bf16.msra.mxu0 %v4809
    %6412 = vmatpush.bf16.msra.mxu0 %v4801
    %6413 = vmatpush.bf16.msra.mxu0 %v4793
    %6414 = vmatpush.bf16.msra.mxu0 %v4785
    %6415 = vmatpush.bf16.msra.mxu0 %v4777
    %6416 = vmatpush.bf16.msra.mxu0 %v4769
    %6417 = vmatmul.bf16.gmra.mxu0 %v1161
    %v6418 = vpop.f32.mrf.mxu0
    %v6419 = vadd.f32 %v6406, %v6418
    %v6420 = vpop.f32.mrf.mxu0
    %6421 = vdwg.mxu0
    %6422 = vmatpush.bf16.msra.mxu0 %v4889
    %6423 = vmatpush.bf16.msra.mxu0 %v4881
    %6424 = vmatpush.bf16.msra.mxu0 %v4873
    %6425 = vmatpush.bf16.msra.mxu0 %v4865
    %6426 = vmatpush.bf16.msra.mxu0 %v4857
    %6427 = vmatpush.bf16.msra.mxu0 %v4849
    %6428 = vmatpush.bf16.msra.mxu0 %v4841
    %6429 = vmatpush.bf16.msra.mxu0 %v4833
    %6430 = vmatmul.bf16.gmra.mxu0 %v1162
    %v6431 = vpop.f32.mrf.mxu0
    %v6432 = vadd.f32 %v6419, %v6431
    %v6433 = vpop.f32.mrf.mxu0
    %6434 = vdwg.mxu0
    %6435 = vmatpush.bf16.msra.mxu0 %v4953
    %6436 = vmatpush.bf16.msra.mxu0 %v4945
    %6437 = vmatpush.bf16.msra.mxu0 %v4937
    %6438 = vmatpush.bf16.msra.mxu0 %v4929
    %6439 = vmatpush.bf16.msra.mxu0 %v4921
    %6440 = vmatpush.bf16.msra.mxu0 %v4913
    %6441 = vmatpush.bf16.msra.mxu0 %v4905
    %6442 = vmatpush.bf16.msra.mxu0 %v4897
    %6443 = vmatmul.bf16.gmra.mxu0 %v1163
    %v6444 = vpop.f32.mrf.mxu0
    %v6445 = vadd.f32 %v6432, %v6444
    %v6446 = vpop.f32.mrf.mxu0
    %6447 = vdwg.mxu0
    %6448 = vmatpush.bf16.msra.mxu0 %v5017
    %6449 = vmatpush.bf16.msra.mxu0 %v5009
    %6450 = vmatpush.bf16.msra.mxu0 %v5001
    %6451 = vmatpush.bf16.msra.mxu0 %v4993
    %6452 = vmatpush.bf16.msra.mxu0 %v4985
    %6453 = vmatpush.bf16.msra.mxu0 %v4977
    %6454 = vmatpush.bf16.msra.mxu0 %v4969
    %6455 = vmatpush.bf16.msra.mxu0 %v4961
    %6456 = vmatmul.bf16.gmra.mxu0 %v1164
    %v6457 = vpop.f32.mrf.mxu0
    %v6458 = vadd.f32 %v6445, %v6457
    %v6459 = vpop.f32.mrf.mxu0
    %6460 = vdwg.mxu0
    %6461 = vmatpush.bf16.msra.mxu0 %v5081
    %6462 = vmatpush.bf16.msra.mxu0 %v5073
    %6463 = vmatpush.bf16.msra.mxu0 %v5065
    %6464 = vmatpush.bf16.msra.mxu0 %v5057
    %6465 = vmatpush.bf16.msra.mxu0 %v5049
    %6466 = vmatpush.bf16.msra.mxu0 %v5041
    %6467 = vmatpush.bf16.msra.mxu0 %v5033
    %6468 = vmatpush.bf16.msra.mxu0 %v5025
    %6469 = vmatmul.bf16.gmra.mxu0 %v1165
    %v6470 = vpop.f32.mrf.mxu0
    %v6471 = vadd.f32 %v6458, %v6470
    %v6472 = vpop.f32.mrf.mxu0
    %6473 = vdwg.mxu0
    %6474 = vmatpush.bf16.msra.mxu0 %v5145
    %6475 = vmatpush.bf16.msra.mxu0 %v5137
    %6476 = vmatpush.bf16.msra.mxu0 %v5129
    %6477 = vmatpush.bf16.msra.mxu0 %v5121
    %6478 = vmatpush.bf16.msra.mxu0 %v5113
    %6479 = vmatpush.bf16.msra.mxu0 %v5105
    %6480 = vmatpush.bf16.msra.mxu0 %v5097
    %6481 = vmatpush.bf16.msra.mxu0 %v5089
    %6482 = vmatmul.bf16.gmra.mxu0 %v1166
    %v6483 = vpop.f32.mrf.mxu0
    %v6484 = vadd.f32 %v6471, %v6483
    %v6485 = vpop.f32.mrf.mxu0
    %6486 = vdwg.mxu0
    %6487 = vmatpush.bf16.msra.mxu0 %v5209
    %6488 = vmatpush.bf16.msra.mxu0 %v5201
    %6489 = vmatpush.bf16.msra.mxu0 %v5193
    %6490 = vmatpush.bf16.msra.mxu0 %v5185
    %6491 = vmatpush.bf16.msra.mxu0 %v5177
    %6492 = vmatpush.bf16.msra.mxu0 %v5169
    %6493 = vmatpush.bf16.msra.mxu0 %v5161
    %6494 = vmatpush.bf16.msra.mxu0 %v5153
    %6495 = vmatmul.bf16.gmra.mxu0 %v1167
    %v6496 = vpop.f32.mrf.mxu0
    %v6497 = vadd.f32 %v6484, %v6496
    %v6498 = vpop.f32.mrf.mxu0
    %6499 = vdwg.mxu0
    %6500 = vmatpush.bf16.msra.mxu0 %v5273
    %6501 = vmatpush.bf16.msra.mxu0 %v5265
    %6502 = vmatpush.bf16.msra.mxu0 %v5257
    %6503 = vmatpush.bf16.msra.mxu0 %v5249
    %6504 = vmatpush.bf16.msra.mxu0 %v5241
    %6505 = vmatpush.bf16.msra.mxu0 %v5233
    %6506 = vmatpush.bf16.msra.mxu0 %v5225
    %6507 = vmatpush.bf16.msra.mxu0 %v5217
    %6508 = vmatmul.bf16.gmra.mxu0 %v1168
    %v6509 = vpop.f32.mrf.mxu0
    %v6510 = vadd.f32 %v6497, %v6509
    %v6511 = vpop.f32.mrf.mxu0
    %6512 = vdwg.mxu0
    %6513 = vmatpush.bf16.msra.mxu0 %v4314
    %6514 = vmatpush.bf16.msra.mxu0 %v4306
    %6515 = vmatpush.bf16.msra.mxu0 %v4298
    %6516 = vmatpush.bf16.msra.mxu0 %v4290
    %6517 = vmatpush.bf16.msra.mxu0 %v4282
    %6518 = vmatpush.bf16.msra.mxu0 %v4274
    %6519 = vmatpush.bf16.msra.mxu0 %v4266
    %6520 = vmatpush.bf16.msra.mxu0 %v4258
    %6521 = vmatmul.bf16.gmra.mxu0 %v1153
    %v6522 = vpop.f32.mrf.mxu0
    %v6523 = vadd.f32 %v1114, %v6522
    %v6524 = vpop.f32.mrf.mxu0
    %6525 = vdwg.mxu0
    %6526 = vmatpush.bf16.msra.mxu0 %v4378
    %6527 = vmatpush.bf16.msra.mxu0 %v4370
    %6528 = vmatpush.bf16.msra.mxu0 %v4362
    %6529 = vmatpush.bf16.msra.mxu0 %v4354
    %6530 = vmatpush.bf16.msra.mxu0 %v4346
    %6531 = vmatpush.bf16.msra.mxu0 %v4338
    %6532 = vmatpush.bf16.msra.mxu0 %v4330
    %6533 = vmatpush.bf16.msra.mxu0 %v4322
    %6534 = vmatmul.bf16.gmra.mxu0 %v1154
    %v6535 = vpop.f32.mrf.mxu0
    %v6536 = vadd.f32 %v6523, %v6535
    %v6537 = vpop.f32.mrf.mxu0
    %6538 = vdwg.mxu0
    %6539 = vmatpush.bf16.msra.mxu0 %v4442
    %6540 = vmatpush.bf16.msra.mxu0 %v4434
    %6541 = vmatpush.bf16.msra.mxu0 %v4426
    %6542 = vmatpush.bf16.msra.mxu0 %v4418
    %6543 = vmatpush.bf16.msra.mxu0 %v4410
    %6544 = vmatpush.bf16.msra.mxu0 %v4402
    %6545 = vmatpush.bf16.msra.mxu0 %v4394
    %6546 = vmatpush.bf16.msra.mxu0 %v4386
    %6547 = vmatmul.bf16.gmra.mxu0 %v1155
    %v6548 = vpop.f32.mrf.mxu0
    %v6549 = vadd.f32 %v6536, %v6548
    %v6550 = vpop.f32.mrf.mxu0
    %6551 = vdwg.mxu0
    %6552 = vmatpush.bf16.msra.mxu0 %v4506
    %6553 = vmatpush.bf16.msra.mxu0 %v4498
    %6554 = vmatpush.bf16.msra.mxu0 %v4490
    %6555 = vmatpush.bf16.msra.mxu0 %v4482
    %6556 = vmatpush.bf16.msra.mxu0 %v4474
    %6557 = vmatpush.bf16.msra.mxu0 %v4466
    %6558 = vmatpush.bf16.msra.mxu0 %v4458
    %6559 = vmatpush.bf16.msra.mxu0 %v4450
    %6560 = vmatmul.bf16.gmra.mxu0 %v1156
    %v6561 = vpop.f32.mrf.mxu0
    %v6562 = vadd.f32 %v6549, %v6561
    %v6563 = vpop.f32.mrf.mxu0
    %6564 = vdwg.mxu0
    %6565 = vmatpush.bf16.msra.mxu0 %v4570
    %6566 = vmatpush.bf16.msra.mxu0 %v4562
    %6567 = vmatpush.bf16.msra.mxu0 %v4554
    %6568 = vmatpush.bf16.msra.mxu0 %v4546
    %6569 = vmatpush.bf16.msra.mxu0 %v4538
    %6570 = vmatpush.bf16.msra.mxu0 %v4530
    %6571 = vmatpush.bf16.msra.mxu0 %v4522
    %6572 = vmatpush.bf16.msra.mxu0 %v4514
    %6573 = vmatmul.bf16.gmra.mxu0 %v1157
    %v6574 = vpop.f32.mrf.mxu0
    %v6575 = vadd.f32 %v6562, %v6574
    %v6576 = vpop.f32.mrf.mxu0
    %6577 = vdwg.mxu0
    %6578 = vmatpush.bf16.msra.mxu0 %v4634
    %6579 = vmatpush.bf16.msra.mxu0 %v4626
    %6580 = vmatpush.bf16.msra.mxu0 %v4618
    %6581 = vmatpush.bf16.msra.mxu0 %v4610
    %6582 = vmatpush.bf16.msra.mxu0 %v4602
    %6583 = vmatpush.bf16.msra.mxu0 %v4594
    %6584 = vmatpush.bf16.msra.mxu0 %v4586
    %6585 = vmatpush.bf16.msra.mxu0 %v4578
    %6586 = vmatmul.bf16.gmra.mxu0 %v1158
    %v6587 = vpop.f32.mrf.mxu0
    %v6588 = vadd.f32 %v6575, %v6587
    %v6589 = vpop.f32.mrf.mxu0
    %6590 = vdwg.mxu0
    %6591 = vmatpush.bf16.msra.mxu0 %v4698
    %6592 = vmatpush.bf16.msra.mxu0 %v4690
    %6593 = vmatpush.bf16.msra.mxu0 %v4682
    %6594 = vmatpush.bf16.msra.mxu0 %v4674
    %6595 = vmatpush.bf16.msra.mxu0 %v4666
    %6596 = vmatpush.bf16.msra.mxu0 %v4658
    %6597 = vmatpush.bf16.msra.mxu0 %v4650
    %6598 = vmatpush.bf16.msra.mxu0 %v4642
    %6599 = vmatmul.bf16.gmra.mxu0 %v1159
    %v6600 = vpop.f32.mrf.mxu0
    %v6601 = vadd.f32 %v6588, %v6600
    %v6602 = vpop.f32.mrf.mxu0
    %6603 = vdwg.mxu0
    %6604 = vmatpush.bf16.msra.mxu0 %v4762
    %6605 = vmatpush.bf16.msra.mxu0 %v4754
    %6606 = vmatpush.bf16.msra.mxu0 %v4746
    %6607 = vmatpush.bf16.msra.mxu0 %v4738
    %6608 = vmatpush.bf16.msra.mxu0 %v4730
    %6609 = vmatpush.bf16.msra.mxu0 %v4722
    %6610 = vmatpush.bf16.msra.mxu0 %v4714
    %6611 = vmatpush.bf16.msra.mxu0 %v4706
    %6612 = vmatmul.bf16.gmra.mxu0 %v1160
    %v6613 = vpop.f32.mrf.mxu0
    %v6614 = vadd.f32 %v6601, %v6613
    %v6615 = vpop.f32.mrf.mxu0
    %6616 = vdwg.mxu0
    %6617 = vmatpush.bf16.msra.mxu0 %v4826
    %6618 = vmatpush.bf16.msra.mxu0 %v4818
    %6619 = vmatpush.bf16.msra.mxu0 %v4810
    %6620 = vmatpush.bf16.msra.mxu0 %v4802
    %6621 = vmatpush.bf16.msra.mxu0 %v4794
    %6622 = vmatpush.bf16.msra.mxu0 %v4786
    %6623 = vmatpush.bf16.msra.mxu0 %v4778
    %6624 = vmatpush.bf16.msra.mxu0 %v4770
    %6625 = vmatmul.bf16.gmra.mxu0 %v1161
    %v6626 = vpop.f32.mrf.mxu0
    %v6627 = vadd.f32 %v6614, %v6626
    %v6628 = vpop.f32.mrf.mxu0
    %6629 = vdwg.mxu0
    %6630 = vmatpush.bf16.msra.mxu0 %v4890
    %6631 = vmatpush.bf16.msra.mxu0 %v4882
    %6632 = vmatpush.bf16.msra.mxu0 %v4874
    %6633 = vmatpush.bf16.msra.mxu0 %v4866
    %6634 = vmatpush.bf16.msra.mxu0 %v4858
    %6635 = vmatpush.bf16.msra.mxu0 %v4850
    %6636 = vmatpush.bf16.msra.mxu0 %v4842
    %6637 = vmatpush.bf16.msra.mxu0 %v4834
    %6638 = vmatmul.bf16.gmra.mxu0 %v1162
    %v6639 = vpop.f32.mrf.mxu0
    %v6640 = vadd.f32 %v6627, %v6639
    %v6641 = vpop.f32.mrf.mxu0
    %6642 = vdwg.mxu0
    %6643 = vmatpush.bf16.msra.mxu0 %v4954
    %6644 = vmatpush.bf16.msra.mxu0 %v4946
    %6645 = vmatpush.bf16.msra.mxu0 %v4938
    %6646 = vmatpush.bf16.msra.mxu0 %v4930
    %6647 = vmatpush.bf16.msra.mxu0 %v4922
    %6648 = vmatpush.bf16.msra.mxu0 %v4914
    %6649 = vmatpush.bf16.msra.mxu0 %v4906
    %6650 = vmatpush.bf16.msra.mxu0 %v4898
    %6651 = vmatmul.bf16.gmra.mxu0 %v1163
    %v6652 = vpop.f32.mrf.mxu0
    %v6653 = vadd.f32 %v6640, %v6652
    %v6654 = vpop.f32.mrf.mxu0
    %6655 = vdwg.mxu0
    %6656 = vmatpush.bf16.msra.mxu0 %v5018
    %6657 = vmatpush.bf16.msra.mxu0 %v5010
    %6658 = vmatpush.bf16.msra.mxu0 %v5002
    %6659 = vmatpush.bf16.msra.mxu0 %v4994
    %6660 = vmatpush.bf16.msra.mxu0 %v4986
    %6661 = vmatpush.bf16.msra.mxu0 %v4978
    %6662 = vmatpush.bf16.msra.mxu0 %v4970
    %6663 = vmatpush.bf16.msra.mxu0 %v4962
    %6664 = vmatmul.bf16.gmra.mxu0 %v1164
    %v6665 = vpop.f32.mrf.mxu0
    %v6666 = vadd.f32 %v6653, %v6665
    %v6667 = vpop.f32.mrf.mxu0
    %6668 = vdwg.mxu0
    %6669 = vmatpush.bf16.msra.mxu0 %v5082
    %6670 = vmatpush.bf16.msra.mxu0 %v5074
    %6671 = vmatpush.bf16.msra.mxu0 %v5066
    %6672 = vmatpush.bf16.msra.mxu0 %v5058
    %6673 = vmatpush.bf16.msra.mxu0 %v5050
    %6674 = vmatpush.bf16.msra.mxu0 %v5042
    %6675 = vmatpush.bf16.msra.mxu0 %v5034
    %6676 = vmatpush.bf16.msra.mxu0 %v5026
    %6677 = vmatmul.bf16.gmra.mxu0 %v1165
    %v6678 = vpop.f32.mrf.mxu0
    %v6679 = vadd.f32 %v6666, %v6678
    %v6680 = vpop.f32.mrf.mxu0
    %6681 = vdwg.mxu0
    %6682 = vmatpush.bf16.msra.mxu0 %v5146
    %6683 = vmatpush.bf16.msra.mxu0 %v5138
    %6684 = vmatpush.bf16.msra.mxu0 %v5130
    %6685 = vmatpush.bf16.msra.mxu0 %v5122
    %6686 = vmatpush.bf16.msra.mxu0 %v5114
    %6687 = vmatpush.bf16.msra.mxu0 %v5106
    %6688 = vmatpush.bf16.msra.mxu0 %v5098
    %6689 = vmatpush.bf16.msra.mxu0 %v5090
    %6690 = vmatmul.bf16.gmra.mxu0 %v1166
    %v6691 = vpop.f32.mrf.mxu0
    %v6692 = vadd.f32 %v6679, %v6691
    %v6693 = vpop.f32.mrf.mxu0
    %6694 = vdwg.mxu0
    %6695 = vmatpush.bf16.msra.mxu0 %v5210
    %6696 = vmatpush.bf16.msra.mxu0 %v5202
    %6697 = vmatpush.bf16.msra.mxu0 %v5194
    %6698 = vmatpush.bf16.msra.mxu0 %v5186
    %6699 = vmatpush.bf16.msra.mxu0 %v5178
    %6700 = vmatpush.bf16.msra.mxu0 %v5170
    %6701 = vmatpush.bf16.msra.mxu0 %v5162
    %6702 = vmatpush.bf16.msra.mxu0 %v5154
    %6703 = vmatmul.bf16.gmra.mxu0 %v1167
    %v6704 = vpop.f32.mrf.mxu0
    %v6705 = vadd.f32 %v6692, %v6704
    %v6706 = vpop.f32.mrf.mxu0
    %6707 = vdwg.mxu0
    %6708 = vmatpush.bf16.msra.mxu0 %v5274
    %6709 = vmatpush.bf16.msra.mxu0 %v5266
    %6710 = vmatpush.bf16.msra.mxu0 %v5258
    %6711 = vmatpush.bf16.msra.mxu0 %v5250
    %6712 = vmatpush.bf16.msra.mxu0 %v5242
    %6713 = vmatpush.bf16.msra.mxu0 %v5234
    %6714 = vmatpush.bf16.msra.mxu0 %v5226
    %6715 = vmatpush.bf16.msra.mxu0 %v5218
    %6716 = vmatmul.bf16.gmra.mxu0 %v1168
    %v6717 = vpop.f32.mrf.mxu0
    %v6718 = vadd.f32 %v6705, %v6717
    %v6719 = vpop.f32.mrf.mxu0
    %6720 = vdwg.mxu0
    %6721 = vmatpush.bf16.msra.mxu0 %v4315
    %6722 = vmatpush.bf16.msra.mxu0 %v4307
    %6723 = vmatpush.bf16.msra.mxu0 %v4299
    %6724 = vmatpush.bf16.msra.mxu0 %v4291
    %6725 = vmatpush.bf16.msra.mxu0 %v4283
    %6726 = vmatpush.bf16.msra.mxu0 %v4275
    %6727 = vmatpush.bf16.msra.mxu0 %v4267
    %6728 = vmatpush.bf16.msra.mxu0 %v4259
    %6729 = vmatmul.bf16.gmra.mxu0 %v1153
    %v6730 = vpop.f32.mrf.mxu0
    %v6731 = vadd.f32 %v1115, %v6730
    %v6732 = vpop.f32.mrf.mxu0
    %6733 = vdwg.mxu0
    %6734 = vmatpush.bf16.msra.mxu0 %v4379
    %6735 = vmatpush.bf16.msra.mxu0 %v4371
    %6736 = vmatpush.bf16.msra.mxu0 %v4363
    %6737 = vmatpush.bf16.msra.mxu0 %v4355
    %6738 = vmatpush.bf16.msra.mxu0 %v4347
    %6739 = vmatpush.bf16.msra.mxu0 %v4339
    %6740 = vmatpush.bf16.msra.mxu0 %v4331
    %6741 = vmatpush.bf16.msra.mxu0 %v4323
    %6742 = vmatmul.bf16.gmra.mxu0 %v1154
    %v6743 = vpop.f32.mrf.mxu0
    %v6744 = vadd.f32 %v6731, %v6743
    %v6745 = vpop.f32.mrf.mxu0
    %6746 = vdwg.mxu0
    %6747 = vmatpush.bf16.msra.mxu0 %v4443
    %6748 = vmatpush.bf16.msra.mxu0 %v4435
    %6749 = vmatpush.bf16.msra.mxu0 %v4427
    %6750 = vmatpush.bf16.msra.mxu0 %v4419
    %6751 = vmatpush.bf16.msra.mxu0 %v4411
    %6752 = vmatpush.bf16.msra.mxu0 %v4403
    %6753 = vmatpush.bf16.msra.mxu0 %v4395
    %6754 = vmatpush.bf16.msra.mxu0 %v4387
    %6755 = vmatmul.bf16.gmra.mxu0 %v1155
    %v6756 = vpop.f32.mrf.mxu0
    %v6757 = vadd.f32 %v6744, %v6756
    %v6758 = vpop.f32.mrf.mxu0
    %6759 = vdwg.mxu0
    %6760 = vmatpush.bf16.msra.mxu0 %v4507
    %6761 = vmatpush.bf16.msra.mxu0 %v4499
    %6762 = vmatpush.bf16.msra.mxu0 %v4491
    %6763 = vmatpush.bf16.msra.mxu0 %v4483
    %6764 = vmatpush.bf16.msra.mxu0 %v4475
    %6765 = vmatpush.bf16.msra.mxu0 %v4467
    %6766 = vmatpush.bf16.msra.mxu0 %v4459
    %6767 = vmatpush.bf16.msra.mxu0 %v4451
    %6768 = vmatmul.bf16.gmra.mxu0 %v1156
    %v6769 = vpop.f32.mrf.mxu0
    %v6770 = vadd.f32 %v6757, %v6769
    %v6771 = vpop.f32.mrf.mxu0
    %6772 = vdwg.mxu0
    %6773 = vmatpush.bf16.msra.mxu0 %v4571
    %6774 = vmatpush.bf16.msra.mxu0 %v4563
    %6775 = vmatpush.bf16.msra.mxu0 %v4555
    %6776 = vmatpush.bf16.msra.mxu0 %v4547
    %6777 = vmatpush.bf16.msra.mxu0 %v4539
    %6778 = vmatpush.bf16.msra.mxu0 %v4531
    %6779 = vmatpush.bf16.msra.mxu0 %v4523
    %6780 = vmatpush.bf16.msra.mxu0 %v4515
    %6781 = vmatmul.bf16.gmra.mxu0 %v1157
    %v6782 = vpop.f32.mrf.mxu0
    %v6783 = vadd.f32 %v6770, %v6782
    %v6784 = vpop.f32.mrf.mxu0
    %6785 = vdwg.mxu0
    %6786 = vmatpush.bf16.msra.mxu0 %v4635
    %6787 = vmatpush.bf16.msra.mxu0 %v4627
    %6788 = vmatpush.bf16.msra.mxu0 %v4619
    %6789 = vmatpush.bf16.msra.mxu0 %v4611
    %6790 = vmatpush.bf16.msra.mxu0 %v4603
    %6791 = vmatpush.bf16.msra.mxu0 %v4595
    %6792 = vmatpush.bf16.msra.mxu0 %v4587
    %6793 = vmatpush.bf16.msra.mxu0 %v4579
    %6794 = vmatmul.bf16.gmra.mxu0 %v1158
    %v6795 = vpop.f32.mrf.mxu0
    %v6796 = vadd.f32 %v6783, %v6795
    %v6797 = vpop.f32.mrf.mxu0
    %6798 = vdwg.mxu0
    %6799 = vmatpush.bf16.msra.mxu0 %v4699
    %6800 = vmatpush.bf16.msra.mxu0 %v4691
    %6801 = vmatpush.bf16.msra.mxu0 %v4683
    %6802 = vmatpush.bf16.msra.mxu0 %v4675
    %6803 = vmatpush.bf16.msra.mxu0 %v4667
    %6804 = vmatpush.bf16.msra.mxu0 %v4659
    %6805 = vmatpush.bf16.msra.mxu0 %v4651
    %6806 = vmatpush.bf16.msra.mxu0 %v4643
    %6807 = vmatmul.bf16.gmra.mxu0 %v1159
    %v6808 = vpop.f32.mrf.mxu0
    %v6809 = vadd.f32 %v6796, %v6808
    %v6810 = vpop.f32.mrf.mxu0
    %6811 = vdwg.mxu0
    %6812 = vmatpush.bf16.msra.mxu0 %v4763
    %6813 = vmatpush.bf16.msra.mxu0 %v4755
    %6814 = vmatpush.bf16.msra.mxu0 %v4747
    %6815 = vmatpush.bf16.msra.mxu0 %v4739
    %6816 = vmatpush.bf16.msra.mxu0 %v4731
    %6817 = vmatpush.bf16.msra.mxu0 %v4723
    %6818 = vmatpush.bf16.msra.mxu0 %v4715
    %6819 = vmatpush.bf16.msra.mxu0 %v4707
    %6820 = vmatmul.bf16.gmra.mxu0 %v1160
    %v6821 = vpop.f32.mrf.mxu0
    %v6822 = vadd.f32 %v6809, %v6821
    %v6823 = vpop.f32.mrf.mxu0
    %6824 = vdwg.mxu0
    %6825 = vmatpush.bf16.msra.mxu0 %v4827
    %6826 = vmatpush.bf16.msra.mxu0 %v4819
    %6827 = vmatpush.bf16.msra.mxu0 %v4811
    %6828 = vmatpush.bf16.msra.mxu0 %v4803
    %6829 = vmatpush.bf16.msra.mxu0 %v4795
    %6830 = vmatpush.bf16.msra.mxu0 %v4787
    %6831 = vmatpush.bf16.msra.mxu0 %v4779
    %6832 = vmatpush.bf16.msra.mxu0 %v4771
    %6833 = vmatmul.bf16.gmra.mxu0 %v1161
    %v6834 = vpop.f32.mrf.mxu0
    %v6835 = vadd.f32 %v6822, %v6834
    %v6836 = vpop.f32.mrf.mxu0
    %6837 = vdwg.mxu0
    %6838 = vmatpush.bf16.msra.mxu0 %v4891
    %6839 = vmatpush.bf16.msra.mxu0 %v4883
    %6840 = vmatpush.bf16.msra.mxu0 %v4875
    %6841 = vmatpush.bf16.msra.mxu0 %v4867
    %6842 = vmatpush.bf16.msra.mxu0 %v4859
    %6843 = vmatpush.bf16.msra.mxu0 %v4851
    %6844 = vmatpush.bf16.msra.mxu0 %v4843
    %6845 = vmatpush.bf16.msra.mxu0 %v4835
    %6846 = vmatmul.bf16.gmra.mxu0 %v1162
    %v6847 = vpop.f32.mrf.mxu0
    %v6848 = vadd.f32 %v6835, %v6847
    %v6849 = vpop.f32.mrf.mxu0
    %6850 = vdwg.mxu0
    %6851 = vmatpush.bf16.msra.mxu0 %v4955
    %6852 = vmatpush.bf16.msra.mxu0 %v4947
    %6853 = vmatpush.bf16.msra.mxu0 %v4939
    %6854 = vmatpush.bf16.msra.mxu0 %v4931
    %6855 = vmatpush.bf16.msra.mxu0 %v4923
    %6856 = vmatpush.bf16.msra.mxu0 %v4915
    %6857 = vmatpush.bf16.msra.mxu0 %v4907
    %6858 = vmatpush.bf16.msra.mxu0 %v4899
    %6859 = vmatmul.bf16.gmra.mxu0 %v1163
    %v6860 = vpop.f32.mrf.mxu0
    %v6861 = vadd.f32 %v6848, %v6860
    %v6862 = vpop.f32.mrf.mxu0
    %6863 = vdwg.mxu0
    %6864 = vmatpush.bf16.msra.mxu0 %v5019
    %6865 = vmatpush.bf16.msra.mxu0 %v5011
    %6866 = vmatpush.bf16.msra.mxu0 %v5003
    %6867 = vmatpush.bf16.msra.mxu0 %v4995
    %6868 = vmatpush.bf16.msra.mxu0 %v4987
    %6869 = vmatpush.bf16.msra.mxu0 %v4979
    %6870 = vmatpush.bf16.msra.mxu0 %v4971
    %6871 = vmatpush.bf16.msra.mxu0 %v4963
    %6872 = vmatmul.bf16.gmra.mxu0 %v1164
    %v6873 = vpop.f32.mrf.mxu0
    %v6874 = vadd.f32 %v6861, %v6873
    %v6875 = vpop.f32.mrf.mxu0
    %6876 = vdwg.mxu0
    %6877 = vmatpush.bf16.msra.mxu0 %v5083
    %6878 = vmatpush.bf16.msra.mxu0 %v5075
    %6879 = vmatpush.bf16.msra.mxu0 %v5067
    %6880 = vmatpush.bf16.msra.mxu0 %v5059
    %6881 = vmatpush.bf16.msra.mxu0 %v5051
    %6882 = vmatpush.bf16.msra.mxu0 %v5043
    %6883 = vmatpush.bf16.msra.mxu0 %v5035
    %6884 = vmatpush.bf16.msra.mxu0 %v5027
    %6885 = vmatmul.bf16.gmra.mxu0 %v1165
    %v6886 = vpop.f32.mrf.mxu0
    %v6887 = vadd.f32 %v6874, %v6886
    %v6888 = vpop.f32.mrf.mxu0
    %6889 = vdwg.mxu0
    %6890 = vmatpush.bf16.msra.mxu0 %v5147
    %6891 = vmatpush.bf16.msra.mxu0 %v5139
    %6892 = vmatpush.bf16.msra.mxu0 %v5131
    %6893 = vmatpush.bf16.msra.mxu0 %v5123
    %6894 = vmatpush.bf16.msra.mxu0 %v5115
    %6895 = vmatpush.bf16.msra.mxu0 %v5107
    %6896 = vmatpush.bf16.msra.mxu0 %v5099
    %6897 = vmatpush.bf16.msra.mxu0 %v5091
    %6898 = vmatmul.bf16.gmra.mxu0 %v1166
    %v6899 = vpop.f32.mrf.mxu0
    %v6900 = vadd.f32 %v6887, %v6899
    %v6901 = vpop.f32.mrf.mxu0
    %6902 = vdwg.mxu0
    %6903 = vmatpush.bf16.msra.mxu0 %v5211
    %6904 = vmatpush.bf16.msra.mxu0 %v5203
    %6905 = vmatpush.bf16.msra.mxu0 %v5195
    %6906 = vmatpush.bf16.msra.mxu0 %v5187
    %6907 = vmatpush.bf16.msra.mxu0 %v5179
    %6908 = vmatpush.bf16.msra.mxu0 %v5171
    %6909 = vmatpush.bf16.msra.mxu0 %v5163
    %6910 = vmatpush.bf16.msra.mxu0 %v5155
    %6911 = vmatmul.bf16.gmra.mxu0 %v1167
    %v6912 = vpop.f32.mrf.mxu0
    %v6913 = vadd.f32 %v6900, %v6912
    %v6914 = vpop.f32.mrf.mxu0
    %6915 = vdwg.mxu0
    %6916 = vmatpush.bf16.msra.mxu0 %v5275
    %6917 = vmatpush.bf16.msra.mxu0 %v5267
    %6918 = vmatpush.bf16.msra.mxu0 %v5259
    %6919 = vmatpush.bf16.msra.mxu0 %v5251
    %6920 = vmatpush.bf16.msra.mxu0 %v5243
    %6921 = vmatpush.bf16.msra.mxu0 %v5235
    %6922 = vmatpush.bf16.msra.mxu0 %v5227
    %6923 = vmatpush.bf16.msra.mxu0 %v5219
    %6924 = vmatmul.bf16.gmra.mxu0 %v1168
    %v6925 = vpop.f32.mrf.mxu0
    %v6926 = vadd.f32 %v6913, %v6925
    %v6927 = vpop.f32.mrf.mxu0
    %6928 = vdwg.mxu0
    %6929 = vmatpush.bf16.msra.mxu0 %v4316
    %6930 = vmatpush.bf16.msra.mxu0 %v4308
    %6931 = vmatpush.bf16.msra.mxu0 %v4300
    %6932 = vmatpush.bf16.msra.mxu0 %v4292
    %6933 = vmatpush.bf16.msra.mxu0 %v4284
    %6934 = vmatpush.bf16.msra.mxu0 %v4276
    %6935 = vmatpush.bf16.msra.mxu0 %v4268
    %6936 = vmatpush.bf16.msra.mxu0 %v4260
    %6937 = vmatmul.bf16.gmra.mxu0 %v1153
    %v6938 = vpop.f32.mrf.mxu0
    %v6939 = vadd.f32 %v1116, %v6938
    %v6940 = vpop.f32.mrf.mxu0
    %6941 = vdwg.mxu0
    %6942 = vmatpush.bf16.msra.mxu0 %v4380
    %6943 = vmatpush.bf16.msra.mxu0 %v4372
    %6944 = vmatpush.bf16.msra.mxu0 %v4364
    %6945 = vmatpush.bf16.msra.mxu0 %v4356
    %6946 = vmatpush.bf16.msra.mxu0 %v4348
    %6947 = vmatpush.bf16.msra.mxu0 %v4340
    %6948 = vmatpush.bf16.msra.mxu0 %v4332
    %6949 = vmatpush.bf16.msra.mxu0 %v4324
    %6950 = vmatmul.bf16.gmra.mxu0 %v1154
    %v6951 = vpop.f32.mrf.mxu0
    %v6952 = vadd.f32 %v6939, %v6951
    %v6953 = vpop.f32.mrf.mxu0
    %6954 = vdwg.mxu0
    %6955 = vmatpush.bf16.msra.mxu0 %v4444
    %6956 = vmatpush.bf16.msra.mxu0 %v4436
    %6957 = vmatpush.bf16.msra.mxu0 %v4428
    %6958 = vmatpush.bf16.msra.mxu0 %v4420
    %6959 = vmatpush.bf16.msra.mxu0 %v4412
    %6960 = vmatpush.bf16.msra.mxu0 %v4404
    %6961 = vmatpush.bf16.msra.mxu0 %v4396
    %6962 = vmatpush.bf16.msra.mxu0 %v4388
    %6963 = vmatmul.bf16.gmra.mxu0 %v1155
    %v6964 = vpop.f32.mrf.mxu0
    %v6965 = vadd.f32 %v6952, %v6964
    %v6966 = vpop.f32.mrf.mxu0
    %6967 = vdwg.mxu0
    %6968 = vmatpush.bf16.msra.mxu0 %v4508
    %6969 = vmatpush.bf16.msra.mxu0 %v4500
    %6970 = vmatpush.bf16.msra.mxu0 %v4492
    %6971 = vmatpush.bf16.msra.mxu0 %v4484
    %6972 = vmatpush.bf16.msra.mxu0 %v4476
    %6973 = vmatpush.bf16.msra.mxu0 %v4468
    %6974 = vmatpush.bf16.msra.mxu0 %v4460
    %6975 = vmatpush.bf16.msra.mxu0 %v4452
    %6976 = vmatmul.bf16.gmra.mxu0 %v1156
    %v6977 = vpop.f32.mrf.mxu0
    %v6978 = vadd.f32 %v6965, %v6977
    %v6979 = vpop.f32.mrf.mxu0
    %6980 = vdwg.mxu0
    %6981 = vmatpush.bf16.msra.mxu0 %v4572
    %6982 = vmatpush.bf16.msra.mxu0 %v4564
    %6983 = vmatpush.bf16.msra.mxu0 %v4556
    %6984 = vmatpush.bf16.msra.mxu0 %v4548
    %6985 = vmatpush.bf16.msra.mxu0 %v4540
    %6986 = vmatpush.bf16.msra.mxu0 %v4532
    %6987 = vmatpush.bf16.msra.mxu0 %v4524
    %6988 = vmatpush.bf16.msra.mxu0 %v4516
    %6989 = vmatmul.bf16.gmra.mxu0 %v1157
    %v6990 = vpop.f32.mrf.mxu0
    %v6991 = vadd.f32 %v6978, %v6990
    %v6992 = vpop.f32.mrf.mxu0
    %6993 = vdwg.mxu0
    %6994 = vmatpush.bf16.msra.mxu0 %v4636
    %6995 = vmatpush.bf16.msra.mxu0 %v4628
    %6996 = vmatpush.bf16.msra.mxu0 %v4620
    %6997 = vmatpush.bf16.msra.mxu0 %v4612
    %6998 = vmatpush.bf16.msra.mxu0 %v4604
    %6999 = vmatpush.bf16.msra.mxu0 %v4596
    %7000 = vmatpush.bf16.msra.mxu0 %v4588
    %7001 = vmatpush.bf16.msra.mxu0 %v4580
    %7002 = vmatmul.bf16.gmra.mxu0 %v1158
    %v7003 = vpop.f32.mrf.mxu0
    %v7004 = vadd.f32 %v6991, %v7003
    %v7005 = vpop.f32.mrf.mxu0
    %7006 = vdwg.mxu0
    %7007 = vmatpush.bf16.msra.mxu0 %v4700
    %7008 = vmatpush.bf16.msra.mxu0 %v4692
    %7009 = vmatpush.bf16.msra.mxu0 %v4684
    %7010 = vmatpush.bf16.msra.mxu0 %v4676
    %7011 = vmatpush.bf16.msra.mxu0 %v4668
    %7012 = vmatpush.bf16.msra.mxu0 %v4660
    %7013 = vmatpush.bf16.msra.mxu0 %v4652
    %7014 = vmatpush.bf16.msra.mxu0 %v4644
    %7015 = vmatmul.bf16.gmra.mxu0 %v1159
    %v7016 = vpop.f32.mrf.mxu0
    %v7017 = vadd.f32 %v7004, %v7016
    %v7018 = vpop.f32.mrf.mxu0
    %7019 = vdwg.mxu0
    %7020 = vmatpush.bf16.msra.mxu0 %v4764
    %7021 = vmatpush.bf16.msra.mxu0 %v4756
    %7022 = vmatpush.bf16.msra.mxu0 %v4748
    %7023 = vmatpush.bf16.msra.mxu0 %v4740
    %7024 = vmatpush.bf16.msra.mxu0 %v4732
    %7025 = vmatpush.bf16.msra.mxu0 %v4724
    %7026 = vmatpush.bf16.msra.mxu0 %v4716
    %7027 = vmatpush.bf16.msra.mxu0 %v4708
    %7028 = vmatmul.bf16.gmra.mxu0 %v1160
    %v7029 = vpop.f32.mrf.mxu0
    %v7030 = vadd.f32 %v7017, %v7029
    %v7031 = vpop.f32.mrf.mxu0
    %7032 = vdwg.mxu0
    %7033 = vmatpush.bf16.msra.mxu0 %v4828
    %7034 = vmatpush.bf16.msra.mxu0 %v4820
    %7035 = vmatpush.bf16.msra.mxu0 %v4812
    %7036 = vmatpush.bf16.msra.mxu0 %v4804
    %7037 = vmatpush.bf16.msra.mxu0 %v4796
    %7038 = vmatpush.bf16.msra.mxu0 %v4788
    %7039 = vmatpush.bf16.msra.mxu0 %v4780
    %7040 = vmatpush.bf16.msra.mxu0 %v4772
    %7041 = vmatmul.bf16.gmra.mxu0 %v1161
    %v7042 = vpop.f32.mrf.mxu0
    %v7043 = vadd.f32 %v7030, %v7042
    %v7044 = vpop.f32.mrf.mxu0
    %7045 = vdwg.mxu0
    %7046 = vmatpush.bf16.msra.mxu0 %v4892
    %7047 = vmatpush.bf16.msra.mxu0 %v4884
    %7048 = vmatpush.bf16.msra.mxu0 %v4876
    %7049 = vmatpush.bf16.msra.mxu0 %v4868
    %7050 = vmatpush.bf16.msra.mxu0 %v4860
    %7051 = vmatpush.bf16.msra.mxu0 %v4852
    %7052 = vmatpush.bf16.msra.mxu0 %v4844
    %7053 = vmatpush.bf16.msra.mxu0 %v4836
    %7054 = vmatmul.bf16.gmra.mxu0 %v1162
    %v7055 = vpop.f32.mrf.mxu0
    %v7056 = vadd.f32 %v7043, %v7055
    %v7057 = vpop.f32.mrf.mxu0
    %7058 = vdwg.mxu0
    %7059 = vmatpush.bf16.msra.mxu0 %v4956
    %7060 = vmatpush.bf16.msra.mxu0 %v4948
    %7061 = vmatpush.bf16.msra.mxu0 %v4940
    %7062 = vmatpush.bf16.msra.mxu0 %v4932
    %7063 = vmatpush.bf16.msra.mxu0 %v4924
    %7064 = vmatpush.bf16.msra.mxu0 %v4916
    %7065 = vmatpush.bf16.msra.mxu0 %v4908
    %7066 = vmatpush.bf16.msra.mxu0 %v4900
    %7067 = vmatmul.bf16.gmra.mxu0 %v1163
    %v7068 = vpop.f32.mrf.mxu0
    %v7069 = vadd.f32 %v7056, %v7068
    %v7070 = vpop.f32.mrf.mxu0
    %7071 = vdwg.mxu0
    %7072 = vmatpush.bf16.msra.mxu0 %v5020
    %7073 = vmatpush.bf16.msra.mxu0 %v5012
    %7074 = vmatpush.bf16.msra.mxu0 %v5004
    %7075 = vmatpush.bf16.msra.mxu0 %v4996
    %7076 = vmatpush.bf16.msra.mxu0 %v4988
    %7077 = vmatpush.bf16.msra.mxu0 %v4980
    %7078 = vmatpush.bf16.msra.mxu0 %v4972
    %7079 = vmatpush.bf16.msra.mxu0 %v4964
    %7080 = vmatmul.bf16.gmra.mxu0 %v1164
    %v7081 = vpop.f32.mrf.mxu0
    %v7082 = vadd.f32 %v7069, %v7081
    %v7083 = vpop.f32.mrf.mxu0
    %7084 = vdwg.mxu0
    %7085 = vmatpush.bf16.msra.mxu0 %v5084
    %7086 = vmatpush.bf16.msra.mxu0 %v5076
    %7087 = vmatpush.bf16.msra.mxu0 %v5068
    %7088 = vmatpush.bf16.msra.mxu0 %v5060
    %7089 = vmatpush.bf16.msra.mxu0 %v5052
    %7090 = vmatpush.bf16.msra.mxu0 %v5044
    %7091 = vmatpush.bf16.msra.mxu0 %v5036
    %7092 = vmatpush.bf16.msra.mxu0 %v5028
    %7093 = vmatmul.bf16.gmra.mxu0 %v1165
    %v7094 = vpop.f32.mrf.mxu0
    %v7095 = vadd.f32 %v7082, %v7094
    %v7096 = vpop.f32.mrf.mxu0
    %7097 = vdwg.mxu0
    %7098 = vmatpush.bf16.msra.mxu0 %v5148
    %7099 = vmatpush.bf16.msra.mxu0 %v5140
    %7100 = vmatpush.bf16.msra.mxu0 %v5132
    %7101 = vmatpush.bf16.msra.mxu0 %v5124
    %7102 = vmatpush.bf16.msra.mxu0 %v5116
    %7103 = vmatpush.bf16.msra.mxu0 %v5108
    %7104 = vmatpush.bf16.msra.mxu0 %v5100
    %7105 = vmatpush.bf16.msra.mxu0 %v5092
    %7106 = vmatmul.bf16.gmra.mxu0 %v1166
    %v7107 = vpop.f32.mrf.mxu0
    %v7108 = vadd.f32 %v7095, %v7107
    %v7109 = vpop.f32.mrf.mxu0
    %7110 = vdwg.mxu0
    %7111 = vmatpush.bf16.msra.mxu0 %v5212
    %7112 = vmatpush.bf16.msra.mxu0 %v5204
    %7113 = vmatpush.bf16.msra.mxu0 %v5196
    %7114 = vmatpush.bf16.msra.mxu0 %v5188
    %7115 = vmatpush.bf16.msra.mxu0 %v5180
    %7116 = vmatpush.bf16.msra.mxu0 %v5172
    %7117 = vmatpush.bf16.msra.mxu0 %v5164
    %7118 = vmatpush.bf16.msra.mxu0 %v5156
    %7119 = vmatmul.bf16.gmra.mxu0 %v1167
    %v7120 = vpop.f32.mrf.mxu0
    %v7121 = vadd.f32 %v7108, %v7120
    %v7122 = vpop.f32.mrf.mxu0
    %7123 = vdwg.mxu0
    %7124 = vmatpush.bf16.msra.mxu0 %v5276
    %7125 = vmatpush.bf16.msra.mxu0 %v5268
    %7126 = vmatpush.bf16.msra.mxu0 %v5260
    %7127 = vmatpush.bf16.msra.mxu0 %v5252
    %7128 = vmatpush.bf16.msra.mxu0 %v5244
    %7129 = vmatpush.bf16.msra.mxu0 %v5236
    %7130 = vmatpush.bf16.msra.mxu0 %v5228
    %7131 = vmatpush.bf16.msra.mxu0 %v5220
    %7132 = vmatmul.bf16.gmra.mxu0 %v1168
    %v7133 = vpop.f32.mrf.mxu0
    %v7134 = vadd.f32 %v7121, %v7133
    %v7135 = vpop.f32.mrf.mxu0
    %7136 = vdwg.mxu0
    %7137 = vmatpush.bf16.msra.mxu0 %v4317
    %7138 = vmatpush.bf16.msra.mxu0 %v4309
    %7139 = vmatpush.bf16.msra.mxu0 %v4301
    %7140 = vmatpush.bf16.msra.mxu0 %v4293
    %7141 = vmatpush.bf16.msra.mxu0 %v4285
    %7142 = vmatpush.bf16.msra.mxu0 %v4277
    %7143 = vmatpush.bf16.msra.mxu0 %v4269
    %7144 = vmatpush.bf16.msra.mxu0 %v4261
    %7145 = vmatmul.bf16.gmra.mxu0 %v1153
    %v7146 = vpop.f32.mrf.mxu0
    %v7147 = vadd.f32 %v1117, %v7146
    %v7148 = vpop.f32.mrf.mxu0
    %7149 = vdwg.mxu0
    %7150 = vmatpush.bf16.msra.mxu0 %v4381
    %7151 = vmatpush.bf16.msra.mxu0 %v4373
    %7152 = vmatpush.bf16.msra.mxu0 %v4365
    %7153 = vmatpush.bf16.msra.mxu0 %v4357
    %7154 = vmatpush.bf16.msra.mxu0 %v4349
    %7155 = vmatpush.bf16.msra.mxu0 %v4341
    %7156 = vmatpush.bf16.msra.mxu0 %v4333
    %7157 = vmatpush.bf16.msra.mxu0 %v4325
    %7158 = vmatmul.bf16.gmra.mxu0 %v1154
    %v7159 = vpop.f32.mrf.mxu0
    %v7160 = vadd.f32 %v7147, %v7159
    %v7161 = vpop.f32.mrf.mxu0
    %7162 = vdwg.mxu0
    %7163 = vmatpush.bf16.msra.mxu0 %v4445
    %7164 = vmatpush.bf16.msra.mxu0 %v4437
    %7165 = vmatpush.bf16.msra.mxu0 %v4429
    %7166 = vmatpush.bf16.msra.mxu0 %v4421
    %7167 = vmatpush.bf16.msra.mxu0 %v4413
    %7168 = vmatpush.bf16.msra.mxu0 %v4405
    %7169 = vmatpush.bf16.msra.mxu0 %v4397
    %7170 = vmatpush.bf16.msra.mxu0 %v4389
    %7171 = vmatmul.bf16.gmra.mxu0 %v1155
    %v7172 = vpop.f32.mrf.mxu0
    %v7173 = vadd.f32 %v7160, %v7172
    %v7174 = vpop.f32.mrf.mxu0
    %7175 = vdwg.mxu0
    %7176 = vmatpush.bf16.msra.mxu0 %v4509
    %7177 = vmatpush.bf16.msra.mxu0 %v4501
    %7178 = vmatpush.bf16.msra.mxu0 %v4493
    %7179 = vmatpush.bf16.msra.mxu0 %v4485
    %7180 = vmatpush.bf16.msra.mxu0 %v4477
    %7181 = vmatpush.bf16.msra.mxu0 %v4469
    %7182 = vmatpush.bf16.msra.mxu0 %v4461
    %7183 = vmatpush.bf16.msra.mxu0 %v4453
    %7184 = vmatmul.bf16.gmra.mxu0 %v1156
    %v7185 = vpop.f32.mrf.mxu0
    %v7186 = vadd.f32 %v7173, %v7185
    %v7187 = vpop.f32.mrf.mxu0
    %7188 = vdwg.mxu0
    %7189 = vmatpush.bf16.msra.mxu0 %v4573
    %7190 = vmatpush.bf16.msra.mxu0 %v4565
    %7191 = vmatpush.bf16.msra.mxu0 %v4557
    %7192 = vmatpush.bf16.msra.mxu0 %v4549
    %7193 = vmatpush.bf16.msra.mxu0 %v4541
    %7194 = vmatpush.bf16.msra.mxu0 %v4533
    %7195 = vmatpush.bf16.msra.mxu0 %v4525
    %7196 = vmatpush.bf16.msra.mxu0 %v4517
    %7197 = vmatmul.bf16.gmra.mxu0 %v1157
    %v7198 = vpop.f32.mrf.mxu0
    %v7199 = vadd.f32 %v7186, %v7198
    %v7200 = vpop.f32.mrf.mxu0
    %7201 = vdwg.mxu0
    %7202 = vmatpush.bf16.msra.mxu0 %v4637
    %7203 = vmatpush.bf16.msra.mxu0 %v4629
    %7204 = vmatpush.bf16.msra.mxu0 %v4621
    %7205 = vmatpush.bf16.msra.mxu0 %v4613
    %7206 = vmatpush.bf16.msra.mxu0 %v4605
    %7207 = vmatpush.bf16.msra.mxu0 %v4597
    %7208 = vmatpush.bf16.msra.mxu0 %v4589
    %7209 = vmatpush.bf16.msra.mxu0 %v4581
    %7210 = vmatmul.bf16.gmra.mxu0 %v1158
    %v7211 = vpop.f32.mrf.mxu0
    %v7212 = vadd.f32 %v7199, %v7211
    %v7213 = vpop.f32.mrf.mxu0
    %7214 = vdwg.mxu0
    %7215 = vmatpush.bf16.msra.mxu0 %v4701
    %7216 = vmatpush.bf16.msra.mxu0 %v4693
    %7217 = vmatpush.bf16.msra.mxu0 %v4685
    %7218 = vmatpush.bf16.msra.mxu0 %v4677
    %7219 = vmatpush.bf16.msra.mxu0 %v4669
    %7220 = vmatpush.bf16.msra.mxu0 %v4661
    %7221 = vmatpush.bf16.msra.mxu0 %v4653
    %7222 = vmatpush.bf16.msra.mxu0 %v4645
    %7223 = vmatmul.bf16.gmra.mxu0 %v1159
    %v7224 = vpop.f32.mrf.mxu0
    %v7225 = vadd.f32 %v7212, %v7224
    %v7226 = vpop.f32.mrf.mxu0
    %7227 = vdwg.mxu0
    %7228 = vmatpush.bf16.msra.mxu0 %v4765
    %7229 = vmatpush.bf16.msra.mxu0 %v4757
    %7230 = vmatpush.bf16.msra.mxu0 %v4749
    %7231 = vmatpush.bf16.msra.mxu0 %v4741
    %7232 = vmatpush.bf16.msra.mxu0 %v4733
    %7233 = vmatpush.bf16.msra.mxu0 %v4725
    %7234 = vmatpush.bf16.msra.mxu0 %v4717
    %7235 = vmatpush.bf16.msra.mxu0 %v4709
    %7236 = vmatmul.bf16.gmra.mxu0 %v1160
    %v7237 = vpop.f32.mrf.mxu0
    %v7238 = vadd.f32 %v7225, %v7237
    %v7239 = vpop.f32.mrf.mxu0
    %7240 = vdwg.mxu0
    %7241 = vmatpush.bf16.msra.mxu0 %v4829
    %7242 = vmatpush.bf16.msra.mxu0 %v4821
    %7243 = vmatpush.bf16.msra.mxu0 %v4813
    %7244 = vmatpush.bf16.msra.mxu0 %v4805
    %7245 = vmatpush.bf16.msra.mxu0 %v4797
    %7246 = vmatpush.bf16.msra.mxu0 %v4789
    %7247 = vmatpush.bf16.msra.mxu0 %v4781
    %7248 = vmatpush.bf16.msra.mxu0 %v4773
    %7249 = vmatmul.bf16.gmra.mxu0 %v1161
    %v7250 = vpop.f32.mrf.mxu0
    %v7251 = vadd.f32 %v7238, %v7250
    %v7252 = vpop.f32.mrf.mxu0
    %7253 = vdwg.mxu0
    %7254 = vmatpush.bf16.msra.mxu0 %v4893
    %7255 = vmatpush.bf16.msra.mxu0 %v4885
    %7256 = vmatpush.bf16.msra.mxu0 %v4877
    %7257 = vmatpush.bf16.msra.mxu0 %v4869
    %7258 = vmatpush.bf16.msra.mxu0 %v4861
    %7259 = vmatpush.bf16.msra.mxu0 %v4853
    %7260 = vmatpush.bf16.msra.mxu0 %v4845
    %7261 = vmatpush.bf16.msra.mxu0 %v4837
    %7262 = vmatmul.bf16.gmra.mxu0 %v1162
    %v7263 = vpop.f32.mrf.mxu0
    %v7264 = vadd.f32 %v7251, %v7263
    %v7265 = vpop.f32.mrf.mxu0
    %7266 = vdwg.mxu0
    %7267 = vmatpush.bf16.msra.mxu0 %v4957
    %7268 = vmatpush.bf16.msra.mxu0 %v4949
    %7269 = vmatpush.bf16.msra.mxu0 %v4941
    %7270 = vmatpush.bf16.msra.mxu0 %v4933
    %7271 = vmatpush.bf16.msra.mxu0 %v4925
    %7272 = vmatpush.bf16.msra.mxu0 %v4917
    %7273 = vmatpush.bf16.msra.mxu0 %v4909
    %7274 = vmatpush.bf16.msra.mxu0 %v4901
    %7275 = vmatmul.bf16.gmra.mxu0 %v1163
    %v7276 = vpop.f32.mrf.mxu0
    %v7277 = vadd.f32 %v7264, %v7276
    %v7278 = vpop.f32.mrf.mxu0
    %7279 = vdwg.mxu0
    %7280 = vmatpush.bf16.msra.mxu0 %v5021
    %7281 = vmatpush.bf16.msra.mxu0 %v5013
    %7282 = vmatpush.bf16.msra.mxu0 %v5005
    %7283 = vmatpush.bf16.msra.mxu0 %v4997
    %7284 = vmatpush.bf16.msra.mxu0 %v4989
    %7285 = vmatpush.bf16.msra.mxu0 %v4981
    %7286 = vmatpush.bf16.msra.mxu0 %v4973
    %7287 = vmatpush.bf16.msra.mxu0 %v4965
    %7288 = vmatmul.bf16.gmra.mxu0 %v1164
    %v7289 = vpop.f32.mrf.mxu0
    %v7290 = vadd.f32 %v7277, %v7289
    %v7291 = vpop.f32.mrf.mxu0
    %7292 = vdwg.mxu0
    %7293 = vmatpush.bf16.msra.mxu0 %v5085
    %7294 = vmatpush.bf16.msra.mxu0 %v5077
    %7295 = vmatpush.bf16.msra.mxu0 %v5069
    %7296 = vmatpush.bf16.msra.mxu0 %v5061
    %7297 = vmatpush.bf16.msra.mxu0 %v5053
    %7298 = vmatpush.bf16.msra.mxu0 %v5045
    %7299 = vmatpush.bf16.msra.mxu0 %v5037
    %7300 = vmatpush.bf16.msra.mxu0 %v5029
    %7301 = vmatmul.bf16.gmra.mxu0 %v1165
    %v7302 = vpop.f32.mrf.mxu0
    %v7303 = vadd.f32 %v7290, %v7302
    %v7304 = vpop.f32.mrf.mxu0
    %7305 = vdwg.mxu0
    %7306 = vmatpush.bf16.msra.mxu0 %v5149
    %7307 = vmatpush.bf16.msra.mxu0 %v5141
    %7308 = vmatpush.bf16.msra.mxu0 %v5133
    %7309 = vmatpush.bf16.msra.mxu0 %v5125
    %7310 = vmatpush.bf16.msra.mxu0 %v5117
    %7311 = vmatpush.bf16.msra.mxu0 %v5109
    %7312 = vmatpush.bf16.msra.mxu0 %v5101
    %7313 = vmatpush.bf16.msra.mxu0 %v5093
    %7314 = vmatmul.bf16.gmra.mxu0 %v1166
    %v7315 = vpop.f32.mrf.mxu0
    %v7316 = vadd.f32 %v7303, %v7315
    %v7317 = vpop.f32.mrf.mxu0
    %7318 = vdwg.mxu0
    %7319 = vmatpush.bf16.msra.mxu0 %v5213
    %7320 = vmatpush.bf16.msra.mxu0 %v5205
    %7321 = vmatpush.bf16.msra.mxu0 %v5197
    %7322 = vmatpush.bf16.msra.mxu0 %v5189
    %7323 = vmatpush.bf16.msra.mxu0 %v5181
    %7324 = vmatpush.bf16.msra.mxu0 %v5173
    %7325 = vmatpush.bf16.msra.mxu0 %v5165
    %7326 = vmatpush.bf16.msra.mxu0 %v5157
    %7327 = vmatmul.bf16.gmra.mxu0 %v1167
    %v7328 = vpop.f32.mrf.mxu0
    %v7329 = vadd.f32 %v7316, %v7328
    %v7330 = vpop.f32.mrf.mxu0
    %7331 = vdwg.mxu0
    %7332 = vmatpush.bf16.msra.mxu0 %v5277
    %7333 = vmatpush.bf16.msra.mxu0 %v5269
    %7334 = vmatpush.bf16.msra.mxu0 %v5261
    %7335 = vmatpush.bf16.msra.mxu0 %v5253
    %7336 = vmatpush.bf16.msra.mxu0 %v5245
    %7337 = vmatpush.bf16.msra.mxu0 %v5237
    %7338 = vmatpush.bf16.msra.mxu0 %v5229
    %7339 = vmatpush.bf16.msra.mxu0 %v5221
    %7340 = vmatmul.bf16.gmra.mxu0 %v1168
    %v7341 = vpop.f32.mrf.mxu0
    %v7342 = vadd.f32 %v7329, %v7341
    %v7343 = vpop.f32.mrf.mxu0
    %7344 = vdwg.mxu0
    %7345 = vmatpush.bf16.msra.mxu0 %v4318
    %7346 = vmatpush.bf16.msra.mxu0 %v4310
    %7347 = vmatpush.bf16.msra.mxu0 %v4302
    %7348 = vmatpush.bf16.msra.mxu0 %v4294
    %7349 = vmatpush.bf16.msra.mxu0 %v4286
    %7350 = vmatpush.bf16.msra.mxu0 %v4278
    %7351 = vmatpush.bf16.msra.mxu0 %v4270
    %7352 = vmatpush.bf16.msra.mxu0 %v4262
    %7353 = vmatmul.bf16.gmra.mxu0 %v1153
    %v7354 = vpop.f32.mrf.mxu0
    %v7355 = vadd.f32 %v1118, %v7354
    %v7356 = vpop.f32.mrf.mxu0
    %7357 = vdwg.mxu0
    %7358 = vmatpush.bf16.msra.mxu0 %v4382
    %7359 = vmatpush.bf16.msra.mxu0 %v4374
    %7360 = vmatpush.bf16.msra.mxu0 %v4366
    %7361 = vmatpush.bf16.msra.mxu0 %v4358
    %7362 = vmatpush.bf16.msra.mxu0 %v4350
    %7363 = vmatpush.bf16.msra.mxu0 %v4342
    %7364 = vmatpush.bf16.msra.mxu0 %v4334
    %7365 = vmatpush.bf16.msra.mxu0 %v4326
    %7366 = vmatmul.bf16.gmra.mxu0 %v1154
    %v7367 = vpop.f32.mrf.mxu0
    %v7368 = vadd.f32 %v7355, %v7367
    %v7369 = vpop.f32.mrf.mxu0
    %7370 = vdwg.mxu0
    %7371 = vmatpush.bf16.msra.mxu0 %v4446
    %7372 = vmatpush.bf16.msra.mxu0 %v4438
    %7373 = vmatpush.bf16.msra.mxu0 %v4430
    %7374 = vmatpush.bf16.msra.mxu0 %v4422
    %7375 = vmatpush.bf16.msra.mxu0 %v4414
    %7376 = vmatpush.bf16.msra.mxu0 %v4406
    %7377 = vmatpush.bf16.msra.mxu0 %v4398
    %7378 = vmatpush.bf16.msra.mxu0 %v4390
    %7379 = vmatmul.bf16.gmra.mxu0 %v1155
    %v7380 = vpop.f32.mrf.mxu0
    %v7381 = vadd.f32 %v7368, %v7380
    %v7382 = vpop.f32.mrf.mxu0
    %7383 = vdwg.mxu0
    %7384 = vmatpush.bf16.msra.mxu0 %v4510
    %7385 = vmatpush.bf16.msra.mxu0 %v4502
    %7386 = vmatpush.bf16.msra.mxu0 %v4494
    %7387 = vmatpush.bf16.msra.mxu0 %v4486
    %7388 = vmatpush.bf16.msra.mxu0 %v4478
    %7389 = vmatpush.bf16.msra.mxu0 %v4470
    %7390 = vmatpush.bf16.msra.mxu0 %v4462
    %7391 = vmatpush.bf16.msra.mxu0 %v4454
    %7392 = vmatmul.bf16.gmra.mxu0 %v1156
    %v7393 = vpop.f32.mrf.mxu0
    %v7394 = vadd.f32 %v7381, %v7393
    %v7395 = vpop.f32.mrf.mxu0
    %7396 = vdwg.mxu0
    %7397 = vmatpush.bf16.msra.mxu0 %v4574
    %7398 = vmatpush.bf16.msra.mxu0 %v4566
    %7399 = vmatpush.bf16.msra.mxu0 %v4558
    %7400 = vmatpush.bf16.msra.mxu0 %v4550
    %7401 = vmatpush.bf16.msra.mxu0 %v4542
    %7402 = vmatpush.bf16.msra.mxu0 %v4534
    %7403 = vmatpush.bf16.msra.mxu0 %v4526
    %7404 = vmatpush.bf16.msra.mxu0 %v4518
    %7405 = vmatmul.bf16.gmra.mxu0 %v1157
    %v7406 = vpop.f32.mrf.mxu0
    %v7407 = vadd.f32 %v7394, %v7406
    %v7408 = vpop.f32.mrf.mxu0
    %7409 = vdwg.mxu0
    %7410 = vmatpush.bf16.msra.mxu0 %v4638
    %7411 = vmatpush.bf16.msra.mxu0 %v4630
    %7412 = vmatpush.bf16.msra.mxu0 %v4622
    %7413 = vmatpush.bf16.msra.mxu0 %v4614
    %7414 = vmatpush.bf16.msra.mxu0 %v4606
    %7415 = vmatpush.bf16.msra.mxu0 %v4598
    %7416 = vmatpush.bf16.msra.mxu0 %v4590
    %7417 = vmatpush.bf16.msra.mxu0 %v4582
    %7418 = vmatmul.bf16.gmra.mxu0 %v1158
    %v7419 = vpop.f32.mrf.mxu0
    %v7420 = vadd.f32 %v7407, %v7419
    %v7421 = vpop.f32.mrf.mxu0
    %7422 = vdwg.mxu0
    %7423 = vmatpush.bf16.msra.mxu0 %v4702
    %7424 = vmatpush.bf16.msra.mxu0 %v4694
    %7425 = vmatpush.bf16.msra.mxu0 %v4686
    %7426 = vmatpush.bf16.msra.mxu0 %v4678
    %7427 = vmatpush.bf16.msra.mxu0 %v4670
    %7428 = vmatpush.bf16.msra.mxu0 %v4662
    %7429 = vmatpush.bf16.msra.mxu0 %v4654
    %7430 = vmatpush.bf16.msra.mxu0 %v4646
    %7431 = vmatmul.bf16.gmra.mxu0 %v1159
    %v7432 = vpop.f32.mrf.mxu0
    %v7433 = vadd.f32 %v7420, %v7432
    %v7434 = vpop.f32.mrf.mxu0
    %7435 = vdwg.mxu0
    %7436 = vmatpush.bf16.msra.mxu0 %v4766
    %7437 = vmatpush.bf16.msra.mxu0 %v4758
    %7438 = vmatpush.bf16.msra.mxu0 %v4750
    %7439 = vmatpush.bf16.msra.mxu0 %v4742
    %7440 = vmatpush.bf16.msra.mxu0 %v4734
    %7441 = vmatpush.bf16.msra.mxu0 %v4726
    %7442 = vmatpush.bf16.msra.mxu0 %v4718
    %7443 = vmatpush.bf16.msra.mxu0 %v4710
    %7444 = vmatmul.bf16.gmra.mxu0 %v1160
    %v7445 = vpop.f32.mrf.mxu0
    %v7446 = vadd.f32 %v7433, %v7445
    %v7447 = vpop.f32.mrf.mxu0
    %7448 = vdwg.mxu0
    %7449 = vmatpush.bf16.msra.mxu0 %v4830
    %7450 = vmatpush.bf16.msra.mxu0 %v4822
    %7451 = vmatpush.bf16.msra.mxu0 %v4814
    %7452 = vmatpush.bf16.msra.mxu0 %v4806
    %7453 = vmatpush.bf16.msra.mxu0 %v4798
    %7454 = vmatpush.bf16.msra.mxu0 %v4790
    %7455 = vmatpush.bf16.msra.mxu0 %v4782
    %7456 = vmatpush.bf16.msra.mxu0 %v4774
    %7457 = vmatmul.bf16.gmra.mxu0 %v1161
    %v7458 = vpop.f32.mrf.mxu0
    %v7459 = vadd.f32 %v7446, %v7458
    %v7460 = vpop.f32.mrf.mxu0
    %7461 = vdwg.mxu0
    %7462 = vmatpush.bf16.msra.mxu0 %v4894
    %7463 = vmatpush.bf16.msra.mxu0 %v4886
    %7464 = vmatpush.bf16.msra.mxu0 %v4878
    %7465 = vmatpush.bf16.msra.mxu0 %v4870
    %7466 = vmatpush.bf16.msra.mxu0 %v4862
    %7467 = vmatpush.bf16.msra.mxu0 %v4854
    %7468 = vmatpush.bf16.msra.mxu0 %v4846
    %7469 = vmatpush.bf16.msra.mxu0 %v4838
    %7470 = vmatmul.bf16.gmra.mxu0 %v1162
    %v7471 = vpop.f32.mrf.mxu0
    %v7472 = vadd.f32 %v7459, %v7471
    %v7473 = vpop.f32.mrf.mxu0
    %7474 = vdwg.mxu0
    %7475 = vmatpush.bf16.msra.mxu0 %v4958
    %7476 = vmatpush.bf16.msra.mxu0 %v4950
    %7477 = vmatpush.bf16.msra.mxu0 %v4942
    %7478 = vmatpush.bf16.msra.mxu0 %v4934
    %7479 = vmatpush.bf16.msra.mxu0 %v4926
    %7480 = vmatpush.bf16.msra.mxu0 %v4918
    %7481 = vmatpush.bf16.msra.mxu0 %v4910
    %7482 = vmatpush.bf16.msra.mxu0 %v4902
    %7483 = vmatmul.bf16.gmra.mxu0 %v1163
    %v7484 = vpop.f32.mrf.mxu0
    %v7485 = vadd.f32 %v7472, %v7484
    %v7486 = vpop.f32.mrf.mxu0
    %7487 = vdwg.mxu0
    %7488 = vmatpush.bf16.msra.mxu0 %v5022
    %7489 = vmatpush.bf16.msra.mxu0 %v5014
    %7490 = vmatpush.bf16.msra.mxu0 %v5006
    %7491 = vmatpush.bf16.msra.mxu0 %v4998
    %7492 = vmatpush.bf16.msra.mxu0 %v4990
    %7493 = vmatpush.bf16.msra.mxu0 %v4982
    %7494 = vmatpush.bf16.msra.mxu0 %v4974
    %7495 = vmatpush.bf16.msra.mxu0 %v4966
    %7496 = vmatmul.bf16.gmra.mxu0 %v1164
    %v7497 = vpop.f32.mrf.mxu0
    %v7498 = vadd.f32 %v7485, %v7497
    %v7499 = vpop.f32.mrf.mxu0
    %7500 = vdwg.mxu0
    %7501 = vmatpush.bf16.msra.mxu0 %v5086
    %7502 = vmatpush.bf16.msra.mxu0 %v5078
    %7503 = vmatpush.bf16.msra.mxu0 %v5070
    %7504 = vmatpush.bf16.msra.mxu0 %v5062
    %7505 = vmatpush.bf16.msra.mxu0 %v5054
    %7506 = vmatpush.bf16.msra.mxu0 %v5046
    %7507 = vmatpush.bf16.msra.mxu0 %v5038
    %7508 = vmatpush.bf16.msra.mxu0 %v5030
    %7509 = vmatmul.bf16.gmra.mxu0 %v1165
    %v7510 = vpop.f32.mrf.mxu0
    %v7511 = vadd.f32 %v7498, %v7510
    %v7512 = vpop.f32.mrf.mxu0
    %7513 = vdwg.mxu0
    %7514 = vmatpush.bf16.msra.mxu0 %v5150
    %7515 = vmatpush.bf16.msra.mxu0 %v5142
    %7516 = vmatpush.bf16.msra.mxu0 %v5134
    %7517 = vmatpush.bf16.msra.mxu0 %v5126
    %7518 = vmatpush.bf16.msra.mxu0 %v5118
    %7519 = vmatpush.bf16.msra.mxu0 %v5110
    %7520 = vmatpush.bf16.msra.mxu0 %v5102
    %7521 = vmatpush.bf16.msra.mxu0 %v5094
    %7522 = vmatmul.bf16.gmra.mxu0 %v1166
    %v7523 = vpop.f32.mrf.mxu0
    %v7524 = vadd.f32 %v7511, %v7523
    %v7525 = vpop.f32.mrf.mxu0
    %7526 = vdwg.mxu0
    %7527 = vmatpush.bf16.msra.mxu0 %v5214
    %7528 = vmatpush.bf16.msra.mxu0 %v5206
    %7529 = vmatpush.bf16.msra.mxu0 %v5198
    %7530 = vmatpush.bf16.msra.mxu0 %v5190
    %7531 = vmatpush.bf16.msra.mxu0 %v5182
    %7532 = vmatpush.bf16.msra.mxu0 %v5174
    %7533 = vmatpush.bf16.msra.mxu0 %v5166
    %7534 = vmatpush.bf16.msra.mxu0 %v5158
    %7535 = vmatmul.bf16.gmra.mxu0 %v1167
    %v7536 = vpop.f32.mrf.mxu0
    %v7537 = vadd.f32 %v7524, %v7536
    %v7538 = vpop.f32.mrf.mxu0
    %7539 = vdwg.mxu0
    %7540 = vmatpush.bf16.msra.mxu0 %v5278
    %7541 = vmatpush.bf16.msra.mxu0 %v5270
    %7542 = vmatpush.bf16.msra.mxu0 %v5262
    %7543 = vmatpush.bf16.msra.mxu0 %v5254
    %7544 = vmatpush.bf16.msra.mxu0 %v5246
    %7545 = vmatpush.bf16.msra.mxu0 %v5238
    %7546 = vmatpush.bf16.msra.mxu0 %v5230
    %7547 = vmatpush.bf16.msra.mxu0 %v5222
    %7548 = vmatmul.bf16.gmra.mxu0 %v1168
    %v7549 = vpop.f32.mrf.mxu0
    %v7550 = vadd.f32 %v7537, %v7549
    %v7551 = vpop.f32.mrf.mxu0
    %7552 = vdwg.mxu0
    %7553 = vmatpush.bf16.msra.mxu0 %v4319
    %7554 = vmatpush.bf16.msra.mxu0 %v4311
    %7555 = vmatpush.bf16.msra.mxu0 %v4303
    %7556 = vmatpush.bf16.msra.mxu0 %v4295
    %7557 = vmatpush.bf16.msra.mxu0 %v4287
    %7558 = vmatpush.bf16.msra.mxu0 %v4279
    %7559 = vmatpush.bf16.msra.mxu0 %v4271
    %7560 = vmatpush.bf16.msra.mxu0 %v4263
    %7561 = vmatmul.bf16.gmra.mxu0 %v1153
    %v7562 = vpop.f32.mrf.mxu0
    %v7563 = vadd.f32 %v1119, %v7562
    %v7564 = vpop.f32.mrf.mxu0
    %7565 = vdwg.mxu0
    %7566 = vmatpush.bf16.msra.mxu0 %v4383
    %7567 = vmatpush.bf16.msra.mxu0 %v4375
    %7568 = vmatpush.bf16.msra.mxu0 %v4367
    %7569 = vmatpush.bf16.msra.mxu0 %v4359
    %7570 = vmatpush.bf16.msra.mxu0 %v4351
    %7571 = vmatpush.bf16.msra.mxu0 %v4343
    %7572 = vmatpush.bf16.msra.mxu0 %v4335
    %7573 = vmatpush.bf16.msra.mxu0 %v4327
    %7574 = vmatmul.bf16.gmra.mxu0 %v1154
    %v7575 = vpop.f32.mrf.mxu0
    %v7576 = vadd.f32 %v7563, %v7575
    %v7577 = vpop.f32.mrf.mxu0
    %7578 = vdwg.mxu0
    %7579 = vmatpush.bf16.msra.mxu0 %v4447
    %7580 = vmatpush.bf16.msra.mxu0 %v4439
    %7581 = vmatpush.bf16.msra.mxu0 %v4431
    %7582 = vmatpush.bf16.msra.mxu0 %v4423
    %7583 = vmatpush.bf16.msra.mxu0 %v4415
    %7584 = vmatpush.bf16.msra.mxu0 %v4407
    %7585 = vmatpush.bf16.msra.mxu0 %v4399
    %7586 = vmatpush.bf16.msra.mxu0 %v4391
    %7587 = vmatmul.bf16.gmra.mxu0 %v1155
    %v7588 = vpop.f32.mrf.mxu0
    %v7589 = vadd.f32 %v7576, %v7588
    %v7590 = vpop.f32.mrf.mxu0
    %7591 = vdwg.mxu0
    %7592 = vmatpush.bf16.msra.mxu0 %v4511
    %7593 = vmatpush.bf16.msra.mxu0 %v4503
    %7594 = vmatpush.bf16.msra.mxu0 %v4495
    %7595 = vmatpush.bf16.msra.mxu0 %v4487
    %7596 = vmatpush.bf16.msra.mxu0 %v4479
    %7597 = vmatpush.bf16.msra.mxu0 %v4471
    %7598 = vmatpush.bf16.msra.mxu0 %v4463
    %7599 = vmatpush.bf16.msra.mxu0 %v4455
    %7600 = vmatmul.bf16.gmra.mxu0 %v1156
    %v7601 = vpop.f32.mrf.mxu0
    %v7602 = vadd.f32 %v7589, %v7601
    %v7603 = vpop.f32.mrf.mxu0
    %7604 = vdwg.mxu0
    %7605 = vmatpush.bf16.msra.mxu0 %v4575
    %7606 = vmatpush.bf16.msra.mxu0 %v4567
    %7607 = vmatpush.bf16.msra.mxu0 %v4559
    %7608 = vmatpush.bf16.msra.mxu0 %v4551
    %7609 = vmatpush.bf16.msra.mxu0 %v4543
    %7610 = vmatpush.bf16.msra.mxu0 %v4535
    %7611 = vmatpush.bf16.msra.mxu0 %v4527
    %7612 = vmatpush.bf16.msra.mxu0 %v4519
    %7613 = vmatmul.bf16.gmra.mxu0 %v1157
    %v7614 = vpop.f32.mrf.mxu0
    %v7615 = vadd.f32 %v7602, %v7614
    %v7616 = vpop.f32.mrf.mxu0
    %7617 = vdwg.mxu0
    %7618 = vmatpush.bf16.msra.mxu0 %v4639
    %7619 = vmatpush.bf16.msra.mxu0 %v4631
    %7620 = vmatpush.bf16.msra.mxu0 %v4623
    %7621 = vmatpush.bf16.msra.mxu0 %v4615
    %7622 = vmatpush.bf16.msra.mxu0 %v4607
    %7623 = vmatpush.bf16.msra.mxu0 %v4599
    %7624 = vmatpush.bf16.msra.mxu0 %v4591
    %7625 = vmatpush.bf16.msra.mxu0 %v4583
    %7626 = vmatmul.bf16.gmra.mxu0 %v1158
    %v7627 = vpop.f32.mrf.mxu0
    %v7628 = vadd.f32 %v7615, %v7627
    %v7629 = vpop.f32.mrf.mxu0
    %7630 = vdwg.mxu0
    %7631 = vmatpush.bf16.msra.mxu0 %v4703
    %7632 = vmatpush.bf16.msra.mxu0 %v4695
    %7633 = vmatpush.bf16.msra.mxu0 %v4687
    %7634 = vmatpush.bf16.msra.mxu0 %v4679
    %7635 = vmatpush.bf16.msra.mxu0 %v4671
    %7636 = vmatpush.bf16.msra.mxu0 %v4663
    %7637 = vmatpush.bf16.msra.mxu0 %v4655
    %7638 = vmatpush.bf16.msra.mxu0 %v4647
    %7639 = vmatmul.bf16.gmra.mxu0 %v1159
    %v7640 = vpop.f32.mrf.mxu0
    %v7641 = vadd.f32 %v7628, %v7640
    %v7642 = vpop.f32.mrf.mxu0
    %7643 = vdwg.mxu0
    %7644 = vmatpush.bf16.msra.mxu0 %v4767
    %7645 = vmatpush.bf16.msra.mxu0 %v4759
    %7646 = vmatpush.bf16.msra.mxu0 %v4751
    %7647 = vmatpush.bf16.msra.mxu0 %v4743
    %7648 = vmatpush.bf16.msra.mxu0 %v4735
    %7649 = vmatpush.bf16.msra.mxu0 %v4727
    %7650 = vmatpush.bf16.msra.mxu0 %v4719
    %7651 = vmatpush.bf16.msra.mxu0 %v4711
    %7652 = vmatmul.bf16.gmra.mxu0 %v1160
    %v7653 = vpop.f32.mrf.mxu0
    %v7654 = vadd.f32 %v7641, %v7653
    %v7655 = vpop.f32.mrf.mxu0
    %7656 = vdwg.mxu0
    %7657 = vmatpush.bf16.msra.mxu0 %v4831
    %7658 = vmatpush.bf16.msra.mxu0 %v4823
    %7659 = vmatpush.bf16.msra.mxu0 %v4815
    %7660 = vmatpush.bf16.msra.mxu0 %v4807
    %7661 = vmatpush.bf16.msra.mxu0 %v4799
    %7662 = vmatpush.bf16.msra.mxu0 %v4791
    %7663 = vmatpush.bf16.msra.mxu0 %v4783
    %7664 = vmatpush.bf16.msra.mxu0 %v4775
    %7665 = vmatmul.bf16.gmra.mxu0 %v1161
    %v7666 = vpop.f32.mrf.mxu0
    %v7667 = vadd.f32 %v7654, %v7666
    %v7668 = vpop.f32.mrf.mxu0
    %7669 = vdwg.mxu0
    %7670 = vmatpush.bf16.msra.mxu0 %v4895
    %7671 = vmatpush.bf16.msra.mxu0 %v4887
    %7672 = vmatpush.bf16.msra.mxu0 %v4879
    %7673 = vmatpush.bf16.msra.mxu0 %v4871
    %7674 = vmatpush.bf16.msra.mxu0 %v4863
    %7675 = vmatpush.bf16.msra.mxu0 %v4855
    %7676 = vmatpush.bf16.msra.mxu0 %v4847
    %7677 = vmatpush.bf16.msra.mxu0 %v4839
    %7678 = vmatmul.bf16.gmra.mxu0 %v1162
    %v7679 = vpop.f32.mrf.mxu0
    %v7680 = vadd.f32 %v7667, %v7679
    %v7681 = vpop.f32.mrf.mxu0
    %7682 = vdwg.mxu0
    %7683 = vmatpush.bf16.msra.mxu0 %v4959
    %7684 = vmatpush.bf16.msra.mxu0 %v4951
    %7685 = vmatpush.bf16.msra.mxu0 %v4943
    %7686 = vmatpush.bf16.msra.mxu0 %v4935
    %7687 = vmatpush.bf16.msra.mxu0 %v4927
    %7688 = vmatpush.bf16.msra.mxu0 %v4919
    %7689 = vmatpush.bf16.msra.mxu0 %v4911
    %7690 = vmatpush.bf16.msra.mxu0 %v4903
    %7691 = vmatmul.bf16.gmra.mxu0 %v1163
    %v7692 = vpop.f32.mrf.mxu0
    %v7693 = vadd.f32 %v7680, %v7692
    %v7694 = vpop.f32.mrf.mxu0
    %7695 = vdwg.mxu0
    %7696 = vmatpush.bf16.msra.mxu0 %v5023
    %7697 = vmatpush.bf16.msra.mxu0 %v5015
    %7698 = vmatpush.bf16.msra.mxu0 %v5007
    %7699 = vmatpush.bf16.msra.mxu0 %v4999
    %7700 = vmatpush.bf16.msra.mxu0 %v4991
    %7701 = vmatpush.bf16.msra.mxu0 %v4983
    %7702 = vmatpush.bf16.msra.mxu0 %v4975
    %7703 = vmatpush.bf16.msra.mxu0 %v4967
    %7704 = vmatmul.bf16.gmra.mxu0 %v1164
    %v7705 = vpop.f32.mrf.mxu0
    %v7706 = vadd.f32 %v7693, %v7705
    %v7707 = vpop.f32.mrf.mxu0
    %7708 = vdwg.mxu0
    %7709 = vmatpush.bf16.msra.mxu0 %v5087
    %7710 = vmatpush.bf16.msra.mxu0 %v5079
    %7711 = vmatpush.bf16.msra.mxu0 %v5071
    %7712 = vmatpush.bf16.msra.mxu0 %v5063
    %7713 = vmatpush.bf16.msra.mxu0 %v5055
    %7714 = vmatpush.bf16.msra.mxu0 %v5047
    %7715 = vmatpush.bf16.msra.mxu0 %v5039
    %7716 = vmatpush.bf16.msra.mxu0 %v5031
    %7717 = vmatmul.bf16.gmra.mxu0 %v1165
    %v7718 = vpop.f32.mrf.mxu0
    %v7719 = vadd.f32 %v7706, %v7718
    %v7720 = vpop.f32.mrf.mxu0
    %7721 = vdwg.mxu0
    %7722 = vmatpush.bf16.msra.mxu0 %v5151
    %7723 = vmatpush.bf16.msra.mxu0 %v5143
    %7724 = vmatpush.bf16.msra.mxu0 %v5135
    %7725 = vmatpush.bf16.msra.mxu0 %v5127
    %7726 = vmatpush.bf16.msra.mxu0 %v5119
    %7727 = vmatpush.bf16.msra.mxu0 %v5111
    %7728 = vmatpush.bf16.msra.mxu0 %v5103
    %7729 = vmatpush.bf16.msra.mxu0 %v5095
    %7730 = vmatmul.bf16.gmra.mxu0 %v1166
    %v7731 = vpop.f32.mrf.mxu0
    %v7732 = vadd.f32 %v7719, %v7731
    %v7733 = vpop.f32.mrf.mxu0
    %7734 = vdwg.mxu0
    %7735 = vmatpush.bf16.msra.mxu0 %v5215
    %7736 = vmatpush.bf16.msra.mxu0 %v5207
    %7737 = vmatpush.bf16.msra.mxu0 %v5199
    %7738 = vmatpush.bf16.msra.mxu0 %v5191
    %7739 = vmatpush.bf16.msra.mxu0 %v5183
    %7740 = vmatpush.bf16.msra.mxu0 %v5175
    %7741 = vmatpush.bf16.msra.mxu0 %v5167
    %7742 = vmatpush.bf16.msra.mxu0 %v5159
    %7743 = vmatmul.bf16.gmra.mxu0 %v1167
    %v7744 = vpop.f32.mrf.mxu0
    %v7745 = vadd.f32 %v7732, %v7744
    %v7746 = vpop.f32.mrf.mxu0
    %7747 = vdwg.mxu0
    %7748 = vmatpush.bf16.msra.mxu0 %v5279
    %7749 = vmatpush.bf16.msra.mxu0 %v5271
    %7750 = vmatpush.bf16.msra.mxu0 %v5263
    %7751 = vmatpush.bf16.msra.mxu0 %v5255
    %7752 = vmatpush.bf16.msra.mxu0 %v5247
    %7753 = vmatpush.bf16.msra.mxu0 %v5239
    %7754 = vmatpush.bf16.msra.mxu0 %v5231
    %7755 = vmatpush.bf16.msra.mxu0 %v5223
    %7756 = vmatmul.bf16.gmra.mxu0 %v1168
    %v7757 = vpop.f32.mrf.mxu0
    %v7758 = vadd.f32 %v7745, %v7757
    %v7759 = vpop.f32.mrf.mxu0
    %7760 = vdwg.mxu0
    %7761 = vmatpush.bf16.msra.mxu0 %v4320
    %7762 = vmatpush.bf16.msra.mxu0 %v4312
    %7763 = vmatpush.bf16.msra.mxu0 %v4304
    %7764 = vmatpush.bf16.msra.mxu0 %v4296
    %7765 = vmatpush.bf16.msra.mxu0 %v4288
    %7766 = vmatpush.bf16.msra.mxu0 %v4280
    %7767 = vmatpush.bf16.msra.mxu0 %v4272
    %7768 = vmatpush.bf16.msra.mxu0 %v4264
    %7769 = vmatmul.bf16.gmra.mxu0 %v1153
    %v7770 = vpop.f32.mrf.mxu0
    %v7771 = vadd.f32 %v1120, %v7770
    %v7772 = vpop.f32.mrf.mxu0
    %7773 = vdwg.mxu0
    %7774 = vmatpush.bf16.msra.mxu0 %v4384
    %7775 = vmatpush.bf16.msra.mxu0 %v4376
    %7776 = vmatpush.bf16.msra.mxu0 %v4368
    %7777 = vmatpush.bf16.msra.mxu0 %v4360
    %7778 = vmatpush.bf16.msra.mxu0 %v4352
    %7779 = vmatpush.bf16.msra.mxu0 %v4344
    %7780 = vmatpush.bf16.msra.mxu0 %v4336
    %7781 = vmatpush.bf16.msra.mxu0 %v4328
    %7782 = vmatmul.bf16.gmra.mxu0 %v1154
    %v7783 = vpop.f32.mrf.mxu0
    %v7784 = vadd.f32 %v7771, %v7783
    %v7785 = vpop.f32.mrf.mxu0
    %7786 = vdwg.mxu0
    %7787 = vmatpush.bf16.msra.mxu0 %v4448
    %7788 = vmatpush.bf16.msra.mxu0 %v4440
    %7789 = vmatpush.bf16.msra.mxu0 %v4432
    %7790 = vmatpush.bf16.msra.mxu0 %v4424
    %7791 = vmatpush.bf16.msra.mxu0 %v4416
    %7792 = vmatpush.bf16.msra.mxu0 %v4408
    %7793 = vmatpush.bf16.msra.mxu0 %v4400
    %7794 = vmatpush.bf16.msra.mxu0 %v4392
    %7795 = vmatmul.bf16.gmra.mxu0 %v1155
    %v7796 = vpop.f32.mrf.mxu0
    %v7797 = vadd.f32 %v7784, %v7796
    %v7798 = vpop.f32.mrf.mxu0
    %7799 = vdwg.mxu0
    %7800 = vmatpush.bf16.msra.mxu0 %v4512
    %7801 = vmatpush.bf16.msra.mxu0 %v4504
    %7802 = vmatpush.bf16.msra.mxu0 %v4496
    %7803 = vmatpush.bf16.msra.mxu0 %v4488
    %7804 = vmatpush.bf16.msra.mxu0 %v4480
    %7805 = vmatpush.bf16.msra.mxu0 %v4472
    %7806 = vmatpush.bf16.msra.mxu0 %v4464
    %7807 = vmatpush.bf16.msra.mxu0 %v4456
    %7808 = vmatmul.bf16.gmra.mxu0 %v1156
    %v7809 = vpop.f32.mrf.mxu0
    %v7810 = vadd.f32 %v7797, %v7809
    %v7811 = vpop.f32.mrf.mxu0
    %7812 = vdwg.mxu0
    %7813 = vmatpush.bf16.msra.mxu0 %v4576
    %7814 = vmatpush.bf16.msra.mxu0 %v4568
    %7815 = vmatpush.bf16.msra.mxu0 %v4560
    %7816 = vmatpush.bf16.msra.mxu0 %v4552
    %7817 = vmatpush.bf16.msra.mxu0 %v4544
    %7818 = vmatpush.bf16.msra.mxu0 %v4536
    %7819 = vmatpush.bf16.msra.mxu0 %v4528
    %7820 = vmatpush.bf16.msra.mxu0 %v4520
    %7821 = vmatmul.bf16.gmra.mxu0 %v1157
    %v7822 = vpop.f32.mrf.mxu0
    %v7823 = vadd.f32 %v7810, %v7822
    %v7824 = vpop.f32.mrf.mxu0
    %7825 = vdwg.mxu0
    %7826 = vmatpush.bf16.msra.mxu0 %v4640
    %7827 = vmatpush.bf16.msra.mxu0 %v4632
    %7828 = vmatpush.bf16.msra.mxu0 %v4624
    %7829 = vmatpush.bf16.msra.mxu0 %v4616
    %7830 = vmatpush.bf16.msra.mxu0 %v4608
    %7831 = vmatpush.bf16.msra.mxu0 %v4600
    %7832 = vmatpush.bf16.msra.mxu0 %v4592
    %7833 = vmatpush.bf16.msra.mxu0 %v4584
    %7834 = vmatmul.bf16.gmra.mxu0 %v1158
    %v7835 = vpop.f32.mrf.mxu0
    %v7836 = vadd.f32 %v7823, %v7835
    %v7837 = vpop.f32.mrf.mxu0
    %7838 = vdwg.mxu0
    %7839 = vmatpush.bf16.msra.mxu0 %v4704
    %7840 = vmatpush.bf16.msra.mxu0 %v4696
    %7841 = vmatpush.bf16.msra.mxu0 %v4688
    %7842 = vmatpush.bf16.msra.mxu0 %v4680
    %7843 = vmatpush.bf16.msra.mxu0 %v4672
    %7844 = vmatpush.bf16.msra.mxu0 %v4664
    %7845 = vmatpush.bf16.msra.mxu0 %v4656
    %7846 = vmatpush.bf16.msra.mxu0 %v4648
    %7847 = vmatmul.bf16.gmra.mxu0 %v1159
    %v7848 = vpop.f32.mrf.mxu0
    %v7849 = vadd.f32 %v7836, %v7848
    %v7850 = vpop.f32.mrf.mxu0
    %7851 = vdwg.mxu0
    %7852 = vmatpush.bf16.msra.mxu0 %v4768
    %7853 = vmatpush.bf16.msra.mxu0 %v4760
    %7854 = vmatpush.bf16.msra.mxu0 %v4752
    %7855 = vmatpush.bf16.msra.mxu0 %v4744
    %7856 = vmatpush.bf16.msra.mxu0 %v4736
    %7857 = vmatpush.bf16.msra.mxu0 %v4728
    %7858 = vmatpush.bf16.msra.mxu0 %v4720
    %7859 = vmatpush.bf16.msra.mxu0 %v4712
    %7860 = vmatmul.bf16.gmra.mxu0 %v1160
    %v7861 = vpop.f32.mrf.mxu0
    %v7862 = vadd.f32 %v7849, %v7861
    %v7863 = vpop.f32.mrf.mxu0
    %7864 = vdwg.mxu0
    %7865 = vmatpush.bf16.msra.mxu0 %v4832
    %7866 = vmatpush.bf16.msra.mxu0 %v4824
    %7867 = vmatpush.bf16.msra.mxu0 %v4816
    %7868 = vmatpush.bf16.msra.mxu0 %v4808
    %7869 = vmatpush.bf16.msra.mxu0 %v4800
    %7870 = vmatpush.bf16.msra.mxu0 %v4792
    %7871 = vmatpush.bf16.msra.mxu0 %v4784
    %7872 = vmatpush.bf16.msra.mxu0 %v4776
    %7873 = vmatmul.bf16.gmra.mxu0 %v1161
    %v7874 = vpop.f32.mrf.mxu0
    %v7875 = vadd.f32 %v7862, %v7874
    %v7876 = vpop.f32.mrf.mxu0
    %7877 = vdwg.mxu0
    %7878 = vmatpush.bf16.msra.mxu0 %v4896
    %7879 = vmatpush.bf16.msra.mxu0 %v4888
    %7880 = vmatpush.bf16.msra.mxu0 %v4880
    %7881 = vmatpush.bf16.msra.mxu0 %v4872
    %7882 = vmatpush.bf16.msra.mxu0 %v4864
    %7883 = vmatpush.bf16.msra.mxu0 %v4856
    %7884 = vmatpush.bf16.msra.mxu0 %v4848
    %7885 = vmatpush.bf16.msra.mxu0 %v4840
    %7886 = vmatmul.bf16.gmra.mxu0 %v1162
    %v7887 = vpop.f32.mrf.mxu0
    %v7888 = vadd.f32 %v7875, %v7887
    %v7889 = vpop.f32.mrf.mxu0
    %7890 = vdwg.mxu0
    %7891 = vmatpush.bf16.msra.mxu0 %v4960
    %7892 = vmatpush.bf16.msra.mxu0 %v4952
    %7893 = vmatpush.bf16.msra.mxu0 %v4944
    %7894 = vmatpush.bf16.msra.mxu0 %v4936
    %7895 = vmatpush.bf16.msra.mxu0 %v4928
    %7896 = vmatpush.bf16.msra.mxu0 %v4920
    %7897 = vmatpush.bf16.msra.mxu0 %v4912
    %7898 = vmatpush.bf16.msra.mxu0 %v4904
    %7899 = vmatmul.bf16.gmra.mxu0 %v1163
    %v7900 = vpop.f32.mrf.mxu0
    %v7901 = vadd.f32 %v7888, %v7900
    %v7902 = vpop.f32.mrf.mxu0
    %7903 = vdwg.mxu0
    %7904 = vmatpush.bf16.msra.mxu0 %v5024
    %7905 = vmatpush.bf16.msra.mxu0 %v5016
    %7906 = vmatpush.bf16.msra.mxu0 %v5008
    %7907 = vmatpush.bf16.msra.mxu0 %v5000
    %7908 = vmatpush.bf16.msra.mxu0 %v4992
    %7909 = vmatpush.bf16.msra.mxu0 %v4984
    %7910 = vmatpush.bf16.msra.mxu0 %v4976
    %7911 = vmatpush.bf16.msra.mxu0 %v4968
    %7912 = vmatmul.bf16.gmra.mxu0 %v1164
    %v7913 = vpop.f32.mrf.mxu0
    %v7914 = vadd.f32 %v7901, %v7913
    %v7915 = vpop.f32.mrf.mxu0
    %7916 = vdwg.mxu0
    %7917 = vmatpush.bf16.msra.mxu0 %v5088
    %7918 = vmatpush.bf16.msra.mxu0 %v5080
    %7919 = vmatpush.bf16.msra.mxu0 %v5072
    %7920 = vmatpush.bf16.msra.mxu0 %v5064
    %7921 = vmatpush.bf16.msra.mxu0 %v5056
    %7922 = vmatpush.bf16.msra.mxu0 %v5048
    %7923 = vmatpush.bf16.msra.mxu0 %v5040
    %7924 = vmatpush.bf16.msra.mxu0 %v5032
    %7925 = vmatmul.bf16.gmra.mxu0 %v1165
    %v7926 = vpop.f32.mrf.mxu0
    %v7927 = vadd.f32 %v7914, %v7926
    %v7928 = vpop.f32.mrf.mxu0
    %7929 = vdwg.mxu0
    %7930 = vmatpush.bf16.msra.mxu0 %v5152
    %7931 = vmatpush.bf16.msra.mxu0 %v5144
    %7932 = vmatpush.bf16.msra.mxu0 %v5136
    %7933 = vmatpush.bf16.msra.mxu0 %v5128
    %7934 = vmatpush.bf16.msra.mxu0 %v5120
    %7935 = vmatpush.bf16.msra.mxu0 %v5112
    %7936 = vmatpush.bf16.msra.mxu0 %v5104
    %7937 = vmatpush.bf16.msra.mxu0 %v5096
    %7938 = vmatmul.bf16.gmra.mxu0 %v1166
    %v7939 = vpop.f32.mrf.mxu0
    %v7940 = vadd.f32 %v7927, %v7939
    %v7941 = vpop.f32.mrf.mxu0
    %7942 = vdwg.mxu0
    %7943 = vmatpush.bf16.msra.mxu0 %v5216
    %7944 = vmatpush.bf16.msra.mxu0 %v5208
    %7945 = vmatpush.bf16.msra.mxu0 %v5200
    %7946 = vmatpush.bf16.msra.mxu0 %v5192
    %7947 = vmatpush.bf16.msra.mxu0 %v5184
    %7948 = vmatpush.bf16.msra.mxu0 %v5176
    %7949 = vmatpush.bf16.msra.mxu0 %v5168
    %7950 = vmatpush.bf16.msra.mxu0 %v5160
    %7951 = vmatmul.bf16.gmra.mxu0 %v1167
    %v7952 = vpop.f32.mrf.mxu0
    %v7953 = vadd.f32 %v7940, %v7952
    %v7954 = vpop.f32.mrf.mxu0
    %7955 = vdwg.mxu0
    %7956 = vmatpush.bf16.msra.mxu0 %v5280
    %7957 = vmatpush.bf16.msra.mxu0 %v5272
    %7958 = vmatpush.bf16.msra.mxu0 %v5264
    %7959 = vmatpush.bf16.msra.mxu0 %v5256
    %7960 = vmatpush.bf16.msra.mxu0 %v5248
    %7961 = vmatpush.bf16.msra.mxu0 %v5240
    %7962 = vmatpush.bf16.msra.mxu0 %v5232
    %7963 = vmatpush.bf16.msra.mxu0 %v5224
    %7964 = vmatmul.bf16.gmra.mxu0 %v1168
    %v7965 = vpop.f32.mrf.mxu0
    %v7966 = vadd.f32 %v7953, %v7965
    %v7967 = vpop.f32.mrf.mxu0
    %7968 = vdwg.mxu0
    %v7969 = vmax.f32 %v6510, 0.0
    %v7970 = vmax.f32 %v6718, 0.0
    %v7971 = vmax.f32 %v6926, 0.0
    %v7972 = vmax.f32 %v7134, 0.0
    %v7973 = vmax.f32 %v7342, 0.0
    %v7974 = vmax.f32 %v7550, 0.0
    %v7975 = vmax.f32 %v7758, 0.0
    %v7976 = vmax.f32 %v7966, 0.0
    %v7977 = vpack.c.bf16 %v7969, %v7969
    %v7978 = vpack.c.bf16 %v7970, %v7970
    %v7979 = vpack.c.bf16 %v7971, %v7971
    %v7980 = vpack.c.bf16 %v7972, %v7972
    %v7981 = vpack.c.bf16 %v7973, %v7973
    %v7982 = vpack.c.bf16 %v7974, %v7974
    %v7983 = vpack.c.bf16 %v7975, %v7975
    %v7984 = vpack.c.bf16 %v7976, %v7976
    %v7985 = vld [vmem:[#allocation6] sm:$0xf]
    %v7986 = vld [vmem:[#allocation6 + $0x4] sm:$0xf]
    %v7987 = vld [vmem:[#allocation6 + $0x8] sm:$0xf]
    %v7988 = vld [vmem:[#allocation6 + $0xc] sm:$0xf]
    %v7989 = vld [vmem:[#allocation6 + $0x10] sm:$0xf]
    %v7990 = vld [vmem:[#allocation6 + $0x14] sm:$0xf]
    %v7991 = vld [vmem:[#allocation6 + $0x18] sm:$0xf]
    %v7992 = vld [vmem:[#allocation6 + $0x1c] sm:$0xf]
    %v7993 = vld [vmem:[#allocation6 + $0x20] sm:$0xf]
    %v7994 = vld [vmem:[#allocation6 + $0x24] sm:$0xf]
    %v7995 = vld [vmem:[#allocation6 + $0x28] sm:$0xf]
    %v7996 = vld [vmem:[#allocation6 + $0x2c] sm:$0xf]
    %v7997 = vld [vmem:[#allocation6 + $0x30] sm:$0xf]
    %v7998 = vld [vmem:[#allocation6 + $0x34] sm:$0xf]
    %v7999 = vld [vmem:[#allocation6 + $0x38] sm:$0xf]
    %v8000 = vld [vmem:[#allocation6 + $0x3c] sm:$0xf]
    %v8001 = vld [vmem:[#allocation6 + $0x40] sm:$0xf]
    %v8002 = vld [vmem:[#allocation6 + $0x44] sm:$0xf]
    %v8003 = vld [vmem:[#allocation6 + $0x48] sm:$0xf]
    %v8004 = vld [vmem:[#allocation6 + $0x4c] sm:$0xf]
    %v8005 = vld [vmem:[#allocation6 + $0x50] sm:$0xf]
    %v8006 = vld [vmem:[#allocation6 + $0x54] sm:$0xf]
    %v8007 = vld [vmem:[#allocation6 + $0x58] sm:$0xf]
    %v8008 = vld [vmem:[#allocation6 + $0x5c] sm:$0xf]
    %v8009 = vld [vmem:[#allocation6 + $0x60] sm:$0xf]
    %v8010 = vld [vmem:[#allocation6 + $0x64] sm:$0xf]
    %v8011 = vld [vmem:[#allocation6 + $0x68] sm:$0xf]
    %v8012 = vld [vmem:[#allocation6 + $0x6c] sm:$0xf]
    %v8013 = vld [vmem:[#allocation6 + $0x70] sm:$0xf]
    %v8014 = vld [vmem:[#allocation6 + $0x74] sm:$0xf]
    %v8015 = vld [vmem:[#allocation6 + $0x78] sm:$0xf]
    %v8016 = vld [vmem:[#allocation6 + $0x7c] sm:$0xf]
    %v8017 = vld [vmem:[#allocation6 + $0x80] sm:$0xf]
    %v8018 = vld [vmem:[#allocation6 + $0x84] sm:$0xf]
    %v8019 = vld [vmem:[#allocation6 + $0x88] sm:$0xf]
    %v8020 = vld [vmem:[#allocation6 + $0x8c] sm:$0xf]
    %v8021 = vld [vmem:[#allocation6 + $0x90] sm:$0xf]
    %v8022 = vld [vmem:[#allocation6 + $0x94] sm:$0xf]
    %v8023 = vld [vmem:[#allocation6 + $0x98] sm:$0xf]
    %v8024 = vld [vmem:[#allocation6 + $0x9c] sm:$0xf]
    %v8025 = vld [vmem:[#allocation6 + $0xa0] sm:$0xf]
    %v8026 = vld [vmem:[#allocation6 + $0xa4] sm:$0xf]
    %v8027 = vld [vmem:[#allocation6 + $0xa8] sm:$0xf]
    %v8028 = vld [vmem:[#allocation6 + $0xac] sm:$0xf]
    %v8029 = vld [vmem:[#allocation6 + $0xb0] sm:$0xf]
    %v8030 = vld [vmem:[#allocation6 + $0xb4] sm:$0xf]
    %v8031 = vld [vmem:[#allocation6 + $0xb8] sm:$0xf]
    %v8032 = vld [vmem:[#allocation6 + $0xbc] sm:$0xf]
    %v8033 = vld [vmem:[#allocation6 + $0xc0] sm:$0xf]
    %v8034 = vld [vmem:[#allocation6 + $0xc4] sm:$0xf]
    %v8035 = vld [vmem:[#allocation6 + $0xc8] sm:$0xf]
    %v8036 = vld [vmem:[#allocation6 + $0xcc] sm:$0xf]
    %v8037 = vld [vmem:[#allocation6 + $0xd0] sm:$0xf]
    %v8038 = vld [vmem:[#allocation6 + $0xd4] sm:$0xf]
    %v8039 = vld [vmem:[#allocation6 + $0xd8] sm:$0xf]
    %v8040 = vld [vmem:[#allocation6 + $0xdc] sm:$0xf]
    %v8041 = vld [vmem:[#allocation6 + $0xe0] sm:$0xf]
    %v8042 = vld [vmem:[#allocation6 + $0xe4] sm:$0xf]
    %v8043 = vld [vmem:[#allocation6 + $0xe8] sm:$0xf]
    %v8044 = vld [vmem:[#allocation6 + $0xec] sm:$0xf]
    %v8045 = vld [vmem:[#allocation6 + $0xf0] sm:$0xf]
    %v8046 = vld [vmem:[#allocation6 + $0xf4] sm:$0xf]
    %v8047 = vld [vmem:[#allocation6 + $0xf8] sm:$0xf]
    %v8048 = vld [vmem:[#allocation6 + $0xfc] sm:$0xf]
    %v8049 = vld [vmem:[#allocation6 + $0x100] sm:$0xf]
    %v8050 = vld [vmem:[#allocation6 + $0x104] sm:$0xf]
    %v8051 = vld [vmem:[#allocation6 + $0x108] sm:$0xf]
    %v8052 = vld [vmem:[#allocation6 + $0x10c] sm:$0xf]
    %v8053 = vld [vmem:[#allocation6 + $0x110] sm:$0xf]
    %v8054 = vld [vmem:[#allocation6 + $0x114] sm:$0xf]
    %v8055 = vld [vmem:[#allocation6 + $0x118] sm:$0xf]
    %v8056 = vld [vmem:[#allocation6 + $0x11c] sm:$0xf]
    %v8057 = vld [vmem:[#allocation6 + $0x120] sm:$0xf]
    %v8058 = vld [vmem:[#allocation6 + $0x124] sm:$0xf]
    %v8059 = vld [vmem:[#allocation6 + $0x128] sm:$0xf]
    %v8060 = vld [vmem:[#allocation6 + $0x12c] sm:$0xf]
    %v8061 = vld [vmem:[#allocation6 + $0x130] sm:$0xf]
    %v8062 = vld [vmem:[#allocation6 + $0x134] sm:$0xf]
    %v8063 = vld [vmem:[#allocation6 + $0x138] sm:$0xf]
    %v8064 = vld [vmem:[#allocation6 + $0x13c] sm:$0xf]
    %v8065 = vld [vmem:[#allocation6 + $0x140] sm:$0xf]
    %v8066 = vld [vmem:[#allocation6 + $0x144] sm:$0xf]
    %v8067 = vld [vmem:[#allocation6 + $0x148] sm:$0xf]
    %v8068 = vld [vmem:[#allocation6 + $0x14c] sm:$0xf]
    %v8069 = vld [vmem:[#allocation6 + $0x150] sm:$0xf]
    %v8070 = vld [vmem:[#allocation6 + $0x154] sm:$0xf]
    %v8071 = vld [vmem:[#allocation6 + $0x158] sm:$0xf]
    %v8072 = vld [vmem:[#allocation6 + $0x15c] sm:$0xf]
    %v8073 = vld [vmem:[#allocation6 + $0x160] sm:$0xf]
    %v8074 = vld [vmem:[#allocation6 + $0x164] sm:$0xf]
    %v8075 = vld [vmem:[#allocation6 + $0x168] sm:$0xf]
    %v8076 = vld [vmem:[#allocation6 + $0x16c] sm:$0xf]
    %v8077 = vld [vmem:[#allocation6 + $0x170] sm:$0xf]
    %v8078 = vld [vmem:[#allocation6 + $0x174] sm:$0xf]
    %v8079 = vld [vmem:[#allocation6 + $0x178] sm:$0xf]
    %v8080 = vld [vmem:[#allocation6 + $0x17c] sm:$0xf]
    %v8081 = vld [vmem:[#allocation6 + $0x180] sm:$0xf]
    %v8082 = vld [vmem:[#allocation6 + $0x184] sm:$0xf]
    %v8083 = vld [vmem:[#allocation6 + $0x188] sm:$0xf]
    %v8084 = vld [vmem:[#allocation6 + $0x18c] sm:$0xf]
    %v8085 = vld [vmem:[#allocation6 + $0x190] sm:$0xf]
    %v8086 = vld [vmem:[#allocation6 + $0x194] sm:$0xf]
    %v8087 = vld [vmem:[#allocation6 + $0x198] sm:$0xf]
    %v8088 = vld [vmem:[#allocation6 + $0x19c] sm:$0xf]
    %v8089 = vld [vmem:[#allocation6 + $0x1a0] sm:$0xf]
    %v8090 = vld [vmem:[#allocation6 + $0x1a4] sm:$0xf]
    %v8091 = vld [vmem:[#allocation6 + $0x1a8] sm:$0xf]
    %v8092 = vld [vmem:[#allocation6 + $0x1ac] sm:$0xf]
    %v8093 = vld [vmem:[#allocation6 + $0x1b0] sm:$0xf]
    %v8094 = vld [vmem:[#allocation6 + $0x1b4] sm:$0xf]
    %v8095 = vld [vmem:[#allocation6 + $0x1b8] sm:$0xf]
    %v8096 = vld [vmem:[#allocation6 + $0x1bc] sm:$0xf]
    %v8097 = vld [vmem:[#allocation6 + $0x1c0] sm:$0xf]
    %v8098 = vld [vmem:[#allocation6 + $0x1c4] sm:$0xf]
    %v8099 = vld [vmem:[#allocation6 + $0x1c8] sm:$0xf]
    %v8100 = vld [vmem:[#allocation6 + $0x1cc] sm:$0xf]
    %v8101 = vld [vmem:[#allocation6 + $0x1d0] sm:$0xf]
    %v8102 = vld [vmem:[#allocation6 + $0x1d4] sm:$0xf]
    %v8103 = vld [vmem:[#allocation6 + $0x1d8] sm:$0xf]
    %v8104 = vld [vmem:[#allocation6 + $0x1dc] sm:$0xf]
    %v8105 = vld [vmem:[#allocation6 + $0x1e0] sm:$0xf]
    %v8106 = vld [vmem:[#allocation6 + $0x1e4] sm:$0xf]
    %v8107 = vld [vmem:[#allocation6 + $0x1e8] sm:$0xf]
    %v8108 = vld [vmem:[#allocation6 + $0x1ec] sm:$0xf]
    %v8109 = vld [vmem:[#allocation6 + $0x1f0] sm:$0xf]
    %v8110 = vld [vmem:[#allocation6 + $0x1f4] sm:$0xf]
    %v8111 = vld [vmem:[#allocation6 + $0x1f8] sm:$0xf]
    %v8112 = vld [vmem:[#allocation6 + $0x1fc] sm:$0xf]
    %v8113 = vld [vmem:[#allocation7] sm:$0x1]
    %v8115 = vperm.slane %v8113, 0
    %v8245 = vunpack.c.l.b16 %v7985
    %v8246 = vunpack.c.l.b16 %v7986
    %v8247 = vunpack.c.l.b16 %v7987
    %v8248 = vunpack.c.l.b16 %v7988
    %v8249 = vunpack.c.l.b16 %v7989
    %v8250 = vunpack.c.l.b16 %v7990
    %v8251 = vunpack.c.l.b16 %v7991
    %v8252 = vunpack.c.l.b16 %v7992
    %v8253 = vunpack.c.l.b16 %v7993
    %v8254 = vunpack.c.l.b16 %v7994
    %v8255 = vunpack.c.l.b16 %v7995
    %v8256 = vunpack.c.l.b16 %v7996
    %v8257 = vunpack.c.l.b16 %v7997
    %v8258 = vunpack.c.l.b16 %v7998
    %v8259 = vunpack.c.l.b16 %v7999
    %v8260 = vunpack.c.l.b16 %v8000
    %v8261 = vunpack.c.l.b16 %v8001
    %v8262 = vunpack.c.l.b16 %v8002
    %v8263 = vunpack.c.l.b16 %v8003
    %v8264 = vunpack.c.l.b16 %v8004
    %v8265 = vunpack.c.l.b16 %v8005
    %v8266 = vunpack.c.l.b16 %v8006
    %v8267 = vunpack.c.l.b16 %v8007
    %v8268 = vunpack.c.l.b16 %v8008
    %v8269 = vunpack.c.l.b16 %v8009
    %v8270 = vunpack.c.l.b16 %v8010
    %v8271 = vunpack.c.l.b16 %v8011
    %v8272 = vunpack.c.l.b16 %v8012
    %v8273 = vunpack.c.l.b16 %v8013
    %v8274 = vunpack.c.l.b16 %v8014
    %v8275 = vunpack.c.l.b16 %v8015
    %v8276 = vunpack.c.l.b16 %v8016
    %v8277 = vunpack.c.l.b16 %v8017
    %v8278 = vunpack.c.l.b16 %v8018
    %v8279 = vunpack.c.l.b16 %v8019
    %v8280 = vunpack.c.l.b16 %v8020
    %v8281 = vunpack.c.l.b16 %v8021
    %v8282 = vunpack.c.l.b16 %v8022
    %v8283 = vunpack.c.l.b16 %v8023
    %v8284 = vunpack.c.l.b16 %v8024
    %v8285 = vunpack.c.l.b16 %v8025
    %v8286 = vunpack.c.l.b16 %v8026
    %v8287 = vunpack.c.l.b16 %v8027
    %v8288 = vunpack.c.l.b16 %v8028
    %v8289 = vunpack.c.l.b16 %v8029
    %v8290 = vunpack.c.l.b16 %v8030
    %v8291 = vunpack.c.l.b16 %v8031
    %v8292 = vunpack.c.l.b16 %v8032
    %v8293 = vunpack.c.l.b16 %v8033
    %v8294 = vunpack.c.l.b16 %v8034
    %v8295 = vunpack.c.l.b16 %v8035
    %v8296 = vunpack.c.l.b16 %v8036
    %v8297 = vunpack.c.l.b16 %v8037
    %v8298 = vunpack.c.l.b16 %v8038
    %v8299 = vunpack.c.l.b16 %v8039
    %v8300 = vunpack.c.l.b16 %v8040
    %v8301 = vunpack.c.l.b16 %v8041
    %v8302 = vunpack.c.l.b16 %v8042
    %v8303 = vunpack.c.l.b16 %v8043
    %v8304 = vunpack.c.l.b16 %v8044
    %v8305 = vunpack.c.l.b16 %v8045
    %v8306 = vunpack.c.l.b16 %v8046
    %v8307 = vunpack.c.l.b16 %v8047
    %v8308 = vunpack.c.l.b16 %v8048
    %v8309 = vunpack.c.l.b16 %v8049
    %v8310 = vunpack.c.l.b16 %v8050
    %v8311 = vunpack.c.l.b16 %v8051
    %v8312 = vunpack.c.l.b16 %v8052
    %v8313 = vunpack.c.l.b16 %v8053
    %v8314 = vunpack.c.l.b16 %v8054
    %v8315 = vunpack.c.l.b16 %v8055
    %v8316 = vunpack.c.l.b16 %v8056
    %v8317 = vunpack.c.l.b16 %v8057
    %v8318 = vunpack.c.l.b16 %v8058
    %v8319 = vunpack.c.l.b16 %v8059
    %v8320 = vunpack.c.l.b16 %v8060
    %v8321 = vunpack.c.l.b16 %v8061
    %v8322 = vunpack.c.l.b16 %v8062
    %v8323 = vunpack.c.l.b16 %v8063
    %v8324 = vunpack.c.l.b16 %v8064
    %v8325 = vunpack.c.l.b16 %v8065
    %v8326 = vunpack.c.l.b16 %v8066
    %v8327 = vunpack.c.l.b16 %v8067
    %v8328 = vunpack.c.l.b16 %v8068
    %v8329 = vunpack.c.l.b16 %v8069
    %v8330 = vunpack.c.l.b16 %v8070
    %v8331 = vunpack.c.l.b16 %v8071
    %v8332 = vunpack.c.l.b16 %v8072
    %v8333 = vunpack.c.l.b16 %v8073
    %v8334 = vunpack.c.l.b16 %v8074
    %v8335 = vunpack.c.l.b16 %v8075
    %v8336 = vunpack.c.l.b16 %v8076
    %v8337 = vunpack.c.l.b16 %v8077
    %v8338 = vunpack.c.l.b16 %v8078
    %v8339 = vunpack.c.l.b16 %v8079
    %v8340 = vunpack.c.l.b16 %v8080
    %v8341 = vunpack.c.l.b16 %v8081
    %v8342 = vunpack.c.l.b16 %v8082
    %v8343 = vunpack.c.l.b16 %v8083
    %v8344 = vunpack.c.l.b16 %v8084
    %v8345 = vunpack.c.l.b16 %v8085
    %v8346 = vunpack.c.l.b16 %v8086
    %v8347 = vunpack.c.l.b16 %v8087
    %v8348 = vunpack.c.l.b16 %v8088
    %v8349 = vunpack.c.l.b16 %v8089
    %v8350 = vunpack.c.l.b16 %v8090
    %v8351 = vunpack.c.l.b16 %v8091
    %v8352 = vunpack.c.l.b16 %v8092
    %v8353 = vunpack.c.l.b16 %v8093
    %v8354 = vunpack.c.l.b16 %v8094
    %v8355 = vunpack.c.l.b16 %v8095
    %v8356 = vunpack.c.l.b16 %v8096
    %v8357 = vunpack.c.l.b16 %v8097
    %v8358 = vunpack.c.l.b16 %v8098
    %v8359 = vunpack.c.l.b16 %v8099
    %v8360 = vunpack.c.l.b16 %v8100
    %v8361 = vunpack.c.l.b16 %v8101
    %v8362 = vunpack.c.l.b16 %v8102
    %v8363 = vunpack.c.l.b16 %v8103
    %v8364 = vunpack.c.l.b16 %v8104
    %v8365 = vunpack.c.l.b16 %v8105
    %v8366 = vunpack.c.l.b16 %v8106
    %v8367 = vunpack.c.l.b16 %v8107
    %v8368 = vunpack.c.l.b16 %v8108
    %v8369 = vunpack.c.l.b16 %v8109
    %v8370 = vunpack.c.l.b16 %v8110
    %v8371 = vunpack.c.l.b16 %v8111
    %v8372 = vunpack.c.l.b16 %v8112
    %v8373 = vpack.c.b16 %v8246, %v8245
    %v8374 = vpack.c.b16 %v8248, %v8247
    %v8375 = vpack.c.b16 %v8250, %v8249
    %v8376 = vpack.c.b16 %v8252, %v8251
    %v8377 = vpack.c.b16 %v8254, %v8253
    %v8378 = vpack.c.b16 %v8256, %v8255
    %v8379 = vpack.c.b16 %v8258, %v8257
    %v8380 = vpack.c.b16 %v8260, %v8259
    %v8381 = vpack.c.b16 %v8262, %v8261
    %v8382 = vpack.c.b16 %v8264, %v8263
    %v8383 = vpack.c.b16 %v8266, %v8265
    %v8384 = vpack.c.b16 %v8268, %v8267
    %v8385 = vpack.c.b16 %v8270, %v8269
    %v8386 = vpack.c.b16 %v8272, %v8271
    %v8387 = vpack.c.b16 %v8274, %v8273
    %v8388 = vpack.c.b16 %v8276, %v8275
    %v8389 = vpack.c.b16 %v8278, %v8277
    %v8390 = vpack.c.b16 %v8280, %v8279
    %v8391 = vpack.c.b16 %v8282, %v8281
    %v8392 = vpack.c.b16 %v8284, %v8283
    %v8393 = vpack.c.b16 %v8286, %v8285
    %v8394 = vpack.c.b16 %v8288, %v8287
    %v8395 = vpack.c.b16 %v8290, %v8289
    %v8396 = vpack.c.b16 %v8292, %v8291
    %v8397 = vpack.c.b16 %v8294, %v8293
    %v8398 = vpack.c.b16 %v8296, %v8295
    %v8399 = vpack.c.b16 %v8298, %v8297
    %v8400 = vpack.c.b16 %v8300, %v8299
    %v8401 = vpack.c.b16 %v8302, %v8301
    %v8402 = vpack.c.b16 %v8304, %v8303
    %v8403 = vpack.c.b16 %v8306, %v8305
    %v8404 = vpack.c.b16 %v8308, %v8307
    %v8405 = vpack.c.b16 %v8310, %v8309
    %v8406 = vpack.c.b16 %v8312, %v8311
    %v8407 = vpack.c.b16 %v8314, %v8313
    %v8408 = vpack.c.b16 %v8316, %v8315
    %v8409 = vpack.c.b16 %v8318, %v8317
    %v8410 = vpack.c.b16 %v8320, %v8319
    %v8411 = vpack.c.b16 %v8322, %v8321
    %v8412 = vpack.c.b16 %v8324, %v8323
    %v8413 = vpack.c.b16 %v8326, %v8325
    %v8414 = vpack.c.b16 %v8328, %v8327
    %v8415 = vpack.c.b16 %v8330, %v8329
    %v8416 = vpack.c.b16 %v8332, %v8331
    %v8417 = vpack.c.b16 %v8334, %v8333
    %v8418 = vpack.c.b16 %v8336, %v8335
    %v8419 = vpack.c.b16 %v8338, %v8337
    %v8420 = vpack.c.b16 %v8340, %v8339
    %v8421 = vpack.c.b16 %v8342, %v8341
    %v8422 = vpack.c.b16 %v8344, %v8343
    %v8423 = vpack.c.b16 %v8346, %v8345
    %v8424 = vpack.c.b16 %v8348, %v8347
    %v8425 = vpack.c.b16 %v8350, %v8349
    %v8426 = vpack.c.b16 %v8352, %v8351
    %v8427 = vpack.c.b16 %v8354, %v8353
    %v8428 = vpack.c.b16 %v8356, %v8355
    %v8429 = vpack.c.b16 %v8358, %v8357
    %v8430 = vpack.c.b16 %v8360, %v8359
    %v8431 = vpack.c.b16 %v8362, %v8361
    %v8432 = vpack.c.b16 %v8364, %v8363
    %v8433 = vpack.c.b16 %v8366, %v8365
    %v8434 = vpack.c.b16 %v8368, %v8367
    %v8435 = vpack.c.b16 %v8370, %v8369
    %v8436 = vpack.c.b16 %v8372, %v8371
    %8501 = vmatpush.bf16.msra.mxu0 %v8380
    %8502 = vmatpush.bf16.msra.mxu0 %v8379
    %8503 = vmatpush.bf16.msra.mxu0 %v8378
    %8504 = vmatpush.bf16.msra.mxu0 %v8377
    %8505 = vmatpush.bf16.msra.mxu0 %v8376
    %8506 = vmatpush.bf16.msra.mxu0 %v8375
    %8507 = vmatpush.bf16.msra.mxu0 %v8374
    %8508 = vmatpush.bf16.msra.mxu0 %v8373
    %8509 = vmatmul.bf16.gmra.mxu0 %v7977
    %v8510 = vpop.f32.mrf.mxu0
    %v8511 = vadd.f32 %v8115, %v8510
    %v8512 = vpop.f32.mrf.mxu0
    %8513 = vdwg.mxu0
    %8514 = vmatpush.bf16.msra.mxu0 %v8388
    %8515 = vmatpush.bf16.msra.mxu0 %v8387
    %8516 = vmatpush.bf16.msra.mxu0 %v8386
    %8517 = vmatpush.bf16.msra.mxu0 %v8385
    %8518 = vmatpush.bf16.msra.mxu0 %v8384
    %8519 = vmatpush.bf16.msra.mxu0 %v8383
    %8520 = vmatpush.bf16.msra.mxu0 %v8382
    %8521 = vmatpush.bf16.msra.mxu0 %v8381
    %8522 = vmatmul.bf16.gmra.mxu0 %v7978
    %v8523 = vpop.f32.mrf.mxu0
    %v8524 = vadd.f32 %v8511, %v8523
    %v8525 = vpop.f32.mrf.mxu0
    %8526 = vdwg.mxu0
    %8527 = vmatpush.bf16.msra.mxu0 %v8396
    %8528 = vmatpush.bf16.msra.mxu0 %v8395
    %8529 = vmatpush.bf16.msra.mxu0 %v8394
    %8530 = vmatpush.bf16.msra.mxu0 %v8393
    %8531 = vmatpush.bf16.msra.mxu0 %v8392
    %8532 = vmatpush.bf16.msra.mxu0 %v8391
    %8533 = vmatpush.bf16.msra.mxu0 %v8390
    %8534 = vmatpush.bf16.msra.mxu0 %v8389
    %8535 = vmatmul.bf16.gmra.mxu0 %v7979
    %v8536 = vpop.f32.mrf.mxu0
    %v8537 = vadd.f32 %v8524, %v8536
    %v8538 = vpop.f32.mrf.mxu0
    %8539 = vdwg.mxu0
    %8540 = vmatpush.bf16.msra.mxu0 %v8404
    %8541 = vmatpush.bf16.msra.mxu0 %v8403
    %8542 = vmatpush.bf16.msra.mxu0 %v8402
    %8543 = vmatpush.bf16.msra.mxu0 %v8401
    %8544 = vmatpush.bf16.msra.mxu0 %v8400
    %8545 = vmatpush.bf16.msra.mxu0 %v8399
    %8546 = vmatpush.bf16.msra.mxu0 %v8398
    %8547 = vmatpush.bf16.msra.mxu0 %v8397
    %8548 = vmatmul.bf16.gmra.mxu0 %v7980
    %v8549 = vpop.f32.mrf.mxu0
    %v8550 = vadd.f32 %v8537, %v8549
    %v8551 = vpop.f32.mrf.mxu0
    %8552 = vdwg.mxu0
    %8553 = vmatpush.bf16.msra.mxu0 %v8412
    %8554 = vmatpush.bf16.msra.mxu0 %v8411
    %8555 = vmatpush.bf16.msra.mxu0 %v8410
    %8556 = vmatpush.bf16.msra.mxu0 %v8409
    %8557 = vmatpush.bf16.msra.mxu0 %v8408
    %8558 = vmatpush.bf16.msra.mxu0 %v8407
    %8559 = vmatpush.bf16.msra.mxu0 %v8406
    %8560 = vmatpush.bf16.msra.mxu0 %v8405
    %8561 = vmatmul.bf16.gmra.mxu0 %v7981
    %v8562 = vpop.f32.mrf.mxu0
    %v8563 = vadd.f32 %v8550, %v8562
    %v8564 = vpop.f32.mrf.mxu0
    %8565 = vdwg.mxu0
    %8566 = vmatpush.bf16.msra.mxu0 %v8420
    %8567 = vmatpush.bf16.msra.mxu0 %v8419
    %8568 = vmatpush.bf16.msra.mxu0 %v8418
    %8569 = vmatpush.bf16.msra.mxu0 %v8417
    %8570 = vmatpush.bf16.msra.mxu0 %v8416
    %8571 = vmatpush.bf16.msra.mxu0 %v8415
    %8572 = vmatpush.bf16.msra.mxu0 %v8414
    %8573 = vmatpush.bf16.msra.mxu0 %v8413
    %8574 = vmatmul.bf16.gmra.mxu0 %v7982
    %v8575 = vpop.f32.mrf.mxu0
    %v8576 = vadd.f32 %v8563, %v8575
    %v8577 = vpop.f32.mrf.mxu0
    %8578 = vdwg.mxu0
    %8579 = vmatpush.bf16.msra.mxu0 %v8428
    %8580 = vmatpush.bf16.msra.mxu0 %v8427
    %8581 = vmatpush.bf16.msra.mxu0 %v8426
    %8582 = vmatpush.bf16.msra.mxu0 %v8425
    %8583 = vmatpush.bf16.msra.mxu0 %v8424
    %8584 = vmatpush.bf16.msra.mxu0 %v8423
    %8585 = vmatpush.bf16.msra.mxu0 %v8422
    %8586 = vmatpush.bf16.msra.mxu0 %v8421
    %8587 = vmatmul.bf16.gmra.mxu0 %v7983
    %v8588 = vpop.f32.mrf.mxu0
    %v8589 = vadd.f32 %v8576, %v8588
    %v8590 = vpop.f32.mrf.mxu0
    %8591 = vdwg.mxu0
    %8592 = vmatpush.bf16.msra.mxu0 %v8436
    %8593 = vmatpush.bf16.msra.mxu0 %v8435
    %8594 = vmatpush.bf16.msra.mxu0 %v8434
    %8595 = vmatpush.bf16.msra.mxu0 %v8433
    %8596 = vmatpush.bf16.msra.mxu0 %v8432
    %8597 = vmatpush.bf16.msra.mxu0 %v8431
    %8598 = vmatpush.bf16.msra.mxu0 %v8430
    %8599 = vmatpush.bf16.msra.mxu0 %v8429
    %8600 = vmatmul.bf16.gmra.mxu0 %v7984
    %v8601 = vpop.f32.mrf.mxu0
    %v8602 = vadd.f32 %v8589, %v8601
    %v8603 = vpop.f32.mrf.mxu0
    %8604 = vdwg.mxu0
    %8605 = vst [vmem:[%s5] sm:$0xff] %v8602
    // Predicated region
    $region38: #{cnn_forward.3} parent=1 // pred_check
      _
    $region39: #{cnn_forward.3} parent=1 // pred_check_branch
      %8607 = sbr.rel (0) target = $region41
    $region40: #{cnn_forward.3} parent=1 // pred_region
      _
    $region41: #{cnn_forward.3} parent=1 // pred_fallthru
      _
    // Predicated region
    $region42: #{cnn_forward.3} parent=1 // pred_check
      _
    $region43: #{cnn_forward.3} parent=1 // pred_check_branch
      %8609 = sbr.rel (0) target = $region45
    $region44: #{cnn_forward.3} parent=1 // pred_region
      _
    $region45: #{cnn_forward.3} parent=1 // pred_fallthru
      _
    %8610 = vsyncpa [#allocation3], 1
    %8611 = vsyncpa [#allocation5], 1
    %8612 = vsyncpa [#allocation8], 1

</llo_original>
